<compile_context>
chip_gen: v6e
topology: v6e:2x2x1
jax: 0.10.0
libtpu: 0.0.40
codegen_flags: <defaults>
</compile_context>

<pallas_src>
import jax
import jax.numpy as jnp
from jax.experimental import pallas as pl
from jax.experimental.pallas import tpu as pltpu

DIM = 2048
HALF = DIM // 2          # 1024
REDUCTION = 4
BOT = HALF // REDUCTION  # 256


def _round_up(x, m):
    return (x + m - 1) // m * m


def _vmem_limit_bytes():
    """Generation-aware scoped-VMEM limit (v7x has only 64 MiB physical/TC)."""
    cap = None
    try:
        cap = getattr(pltpu.get_tpu_info(), "vmem_capacity_bytes", None)
    except Exception:
        cap = None
    if not cap:
        cap = 64 << 20  # conservative: v7x per-core VMEM
    # bf16 weights double-buffered are ~10 MiB + activation tiles; this leaves
    # ample compiler headroom on every generation while staying > v5e's 16 MiB
    # default and < v7x's 64 MiB physical budget.
    return min(cap // 2, 48 << 20)


def _mlp_chain_kernel(x_ref, w1_ref, b1_ref, w2_ref, b2_ref,
                      w3_ref, b3_ref, w4_ref, b4_ref, o_ref):
    # bf16 operands into the MXU, f32 accumulation; bias + ReLU in f32.
    x = x_ref[0]                                                   # (tm, HALF) bf16
    h1 = jnp.dot(x, w1_ref[0], preferred_element_type=jnp.float32) + b1_ref[0]
    h1 = jnp.maximum(h1, 0.0).astype(jnp.bfloat16)                 # encoder Linear + ReLU
    z = (jnp.dot(h1, w2_ref[0], preferred_element_type=jnp.float32)
         + b2_ref[0]).astype(jnp.bfloat16)                         # encoder bottleneck
    h2 = jnp.dot(z, w3_ref[0], preferred_element_type=jnp.float32) + b3_ref[0]
    h2 = jnp.maximum(h2, 0.0).astype(jnp.bfloat16)                 # decoder Linear + ReLU
    y = jnp.dot(h2, w4_ref[0], preferred_element_type=jnp.float32) + b4_ref[0]
    o_ref[0] = y.astype(o_ref.dtype)


def _run_branches(x_stacked, w1, b1, w2, b2, w3, b3, w4, b4, *, tile_m):
    """x_stacked: (2, n_pad, HALF) bf16. Weights (2, in, out) bf16, biases (2, 1, out) f32."""
    n_pad = x_stacked.shape[1]
    n_tiles = n_pad // tile_m
    wmap = lambda b, i: (b, 0, 0)   # weights: invariant along batch axis -> resident per branch
    xmap = lambda b, i: (b, i, 0)   # activations / outputs: streamed per batch tile
    return pl.pallas_call(
        _mlp_chain_kernel,
        out_shape=jax.ShapeDtypeStruct((2, n_pad, HALF), jnp.float32),
        grid_spec=pltpu.PrefetchScalarGridSpec(
            num_scalar_prefetch=0,
            grid=(2, n_tiles),                       # branch outer, batch inner
            in_specs=[
                pl.BlockSpec((1, tile_m, HALF), xmap),   # x
                pl.BlockSpec((1, HALF, HALF), wmap),     # w1 (enc L1)
                pl.BlockSpec((1, 1, HALF), wmap),        # b1
                pl.BlockSpec((1, HALF, BOT), wmap),      # w2 (enc L2)
                pl.BlockSpec((1, 1, BOT), wmap),         # b2
                pl.BlockSpec((1, BOT, HALF), wmap),      # w3 (dec L1)
                pl.BlockSpec((1, 1, HALF), wmap),        # b3
                pl.BlockSpec((1, HALF, HALF), wmap),     # w4 (dec L2)
                pl.BlockSpec((1, 1, HALF), wmap),        # b4
            ],
            out_specs=pl.BlockSpec((1, tile_m, HALF), xmap),
        ),
        compiler_params=pltpu.CompilerParams(
            dimension_semantics=("parallel", "parallel"),   # branches/tiles fully independent
            vmem_limit_bytes=_vmem_limit_bytes(),
        ),
    )(x_stacked, w1, b1, w2, b2, w3, b3, w4, b4)


def init_params(key):
    """Deterministic init matching nn.Linear shapes (weights stored (in,out), bf16)."""
    def linear(k, fan_in, fan_out):
        kw, kb = jax.random.split(k)
        bound = 1.0 / jnp.sqrt(fan_in)
        w = jax.random.uniform(kw, (fan_in, fan_out), jnp.float32, -bound, bound)
        b = jax.random.uniform(kb, (1, fan_out), jnp.float32, -bound, bound)
        return w, b

    keys = jax.random.split(key, 8)
    # encoder1: Linear(1024,1024), Linear(1024,256); decoder1: Linear(256,1024), Linear(1024,1024)
    e1_w1, e1_b1 = linear(keys[0], HALF, HALF)
    e1_w2, e1_b2 = linear(keys[1], HALF, BOT)
    d1_w1, d1_b1 = linear(keys[2], BOT, HALF)
    d1_w2, d1_b2 = linear(keys[3], HALF, HALF)
    # encoder2 / decoder2
    e2_w1, e2_b1 = linear(keys[4], HALF, HALF)
    e2_w2, e2_b2 = linear(keys[5], HALF, BOT)
    d2_w1, d2_b1 = linear(keys[6], BOT, HALF)
    d2_w2, d2_b2 = linear(keys[7], HALF, HALF)

    stack_w = lambda a, b: jnp.stack([a, b], axis=0).astype(jnp.bfloat16)  # bf16 weight stream
    stack_b = lambda a, b: jnp.stack([a, b], axis=0)                       # f32 biases (tiny)
    return dict(
        w1=stack_w(e1_w1, e2_w1), b1=stack_b(e1_b1, e2_b1),
        w2=stack_w(e1_w2, e2_w2), b2=stack_b(e1_b2, e2_b2),
        w3=stack_w(d1_w1, d2_w1), b3=stack_b(d1_b1, d2_b1),
        w4=stack_w(d1_w2, d2_w2), b4=stack_b(d1_b2, d2_b2),
    )


def netfc2_forward(data, params):
    """data: NCHW (n, c, 32, w) with c*16*w == 1024. Returns (dataX_hat, dataY_hat), each (n, c, 16, w)."""
    n, c, h_full, w = data.shape
    assert h_full == 32 and c * 16 * w == HALF, "c*w must be 64 and H must be 32"
    dataX = data[:, :, 0:16, :].reshape(n, -1)   # (n, 1024)
    dataY = data[:, :, 16:32, :].reshape(n, -1)  # (n, 1024)
    # Stack fused inside the jit; bf16 halves the extra activation pass.
    # TODO(synk): the interleaved X/Y row layout can't be expressed by a single
    # rectangular BlockSpec on `data`, so a (fused, bf16) stack is kept here.
    x_stacked = jnp.stack([dataX, dataY], axis=0).astype(jnp.bfloat16)  # (2, n, 1024)

    # Batch tiling: >=8 rows (unmasked sublane stores), 256-row tiles for big n.
    tile_m = 256 if n >= 256 else _round_up(max(n, 1), 8)
    n_pad = _round_up(n, tile_m)
    if n_pad != n:
        x_stacked = jnp.pad(x_stacked, ((0, 0), (0, n_pad - n), (0, 0)))

    out = _run_branches(x_stacked,
                        params["w1"], params["b1"], params["w2"], params["b2"],
                        params["w3"], params["b3"], params["w4"], params["b4"],
                        tile_m=tile_m)
    dataX_hat = out[0, :n].reshape(n, c, 16, w)
    dataY_hat = out[1, :n].reshape(n, c, 16, w)
    return dataX_hat, dataY_hat


def _reference_forward_bf16(data, params):
    """Pure-JAX reference mirroring the kernel's bf16/f32 mixed precision."""
    n, c, _, w = data.shape
    dataX = data[:, :, 0:16, :].reshape(n, -1)
    dataY = data[:, :, 16:32, :].reshape(n, -1)
    outs = []
    for b, x in enumerate([dataX, dataY]):
        xb = x.astype(jnp.bfloat16)
        h1 = jnp.dot(xb, params["w1"][b], preferred_element_type=jnp.float32) + params["b1"][b]
        h1 = jnp.maximum(h1, 0.0).astype(jnp.bfloat16)
        z = (jnp.dot(h1, params["w2"][b], preferred_element_type=jnp.float32)
             + params["b2"][b]).astype(jnp.bfloat16)
        h2 = jnp.dot(z, params["w3"][b], preferred_element_type=jnp.float32) + params["b3"][b]
        h2 = jnp.maximum(h2, 0.0).astype(jnp.bfloat16)
        y = jnp.dot(h2, params["w4"][b], preferred_element_type=jnp.float32) + params["b4"][b]
        outs.append(y.reshape(n, c, 16, w))
    return tuple(outs)


def _reference_forward_f32(data, params):
    """Full-f32 reference (original module semantics) for a loose sanity check."""
    n, c, _, w = data.shape
    dataX = data[:, :, 0:16, :].reshape(n, -1)
    dataY = data[:, :, 16:32, :].reshape(n, -1)
    outs = []
    for b, x in enumerate([dataX, dataY]):
        w1 = params["w1"][b].astype(jnp.float32)
        w2 = params["w2"][b].astype(jnp.float32)
        w3 = params["w3"][b].astype(jnp.float32)
        w4 = params["w4"][b].astype(jnp.float32)
        h1 = jnp.maximum(x @ w1 + params["b1"][b], 0.0)
        z = h1 @ w2 + params["b2"][b]
        h2 = jnp.maximum(z @ w3 + params["b3"][b], 0.0)
        y = h2 @ w4 + params["b4"][b]
        outs.append(y.reshape(n, c, 16, w))
    return tuple(outs)


if __name__ == "__main__":
    key = jax.random.PRNGKey(0)
    k_data, k_param = jax.random.split(key)

    # batch=2, channels=4, H=32 (split into two 16-row halves), W=16 -> c*16*w = 1024
    data = jax.random.normal(k_data, (2, 4, 32, 16), dtype=jnp.float32)
    params = init_params(k_param)

    fwd = jax.jit(netfc2_forward)
    dataX_hat, dataY_hat = fwd(data, params)
    jax.block_until_ready((dataX_hat, dataY_hat))

    assert dataX_hat.shape == (2, 4, 16, 16) and dataY_hat.shape == (2, 4, 16, 16)

    # Tight check against a reference with identical mixed precision.
    refX, refY = _reference_forward_bf16(data, params)
    assert jnp.allclose(dataX_hat, refX, atol=2e-2, rtol=2e-2)
    assert jnp.allclose(dataY_hat, refY, atol=2e-2, rtol=2e-2)

    # Loose sanity check against the full-f32 module semantics (bf16 weights
    # introduce ~0.5-1% error, which is expected and accepted per perf review).
    refX32, refY32 = _reference_forward_f32(data, params)
    assert jnp.allclose(dataX_hat, refX32, atol=1e-1, rtol=1e-1)
    assert jnp.allclose(dataY_hat, refY32, atol=1e-1, rtol=1e-1)

    print("KERNEL_OK")
</pallas_src>

<mosaic_0001>
module attributes {stable_mosaic.version = 11 : i64} {
  func.func @_mlp_chain_kernel(%arg0: i32, %arg1: i32, %arg2: memref<1x8x1024xbf16, #tpu.memory_space<vmem>>, %arg3: memref<1x1024x1024xbf16, #tpu.memory_space<vmem>>, %arg4: memref<1x1x1024xf32, #tpu.memory_space<vmem>>, %arg5: memref<1x1024x256xbf16, #tpu.memory_space<vmem>>, %arg6: memref<1x1x256xf32, #tpu.memory_space<vmem>>, %arg7: memref<1x256x1024xbf16, #tpu.memory_space<vmem>>, %arg8: memref<1x1x1024xf32, #tpu.memory_space<vmem>>, %arg9: memref<1x1024x1024xbf16, #tpu.memory_space<vmem>>, %arg10: memref<1x1x1024xf32, #tpu.memory_space<vmem>>, %arg11: memref<1x8x1024xf32, #tpu.memory_space<vmem>>) attributes {dimension_semantics = [#tpu.dimension_semantics<parallel>, #tpu.dimension_semantics<parallel>], iteration_bounds = array<i64: 2, 1>, scalar_prefetch = 0 : i64, scratch_operands = 0 : i64, tpu.core_type = #tpu.core_type<tc>, window_params = [{transform_indices = @transform_0, window_bounds = array<i64: 1, 8, 1024>}, {transform_indices = @transform_1, window_bounds = array<i64: 1, 1024, 1024>}, {transform_indices = @transform_2, window_bounds = array<i64: 1, 1, 1024>}, {transform_indices = @transform_3, window_bounds = array<i64: 1, 1024, 256>}, {transform_indices = @transform_4, window_bounds = array<i64: 1, 1, 256>}, {transform_indices = @transform_5, window_bounds = array<i64: 1, 256, 1024>}, {transform_indices = @transform_6, window_bounds = array<i64: 1, 1, 1024>}, {transform_indices = @transform_7, window_bounds = array<i64: 1, 1024, 1024>}, {transform_indices = @transform_8, window_bounds = array<i64: 1, 1, 1024>}, {transform_indices = @transform_9, window_bounds = array<i64: 1, 8, 1024>}]} {
    %c0 = arith.constant 0 : index
    %c0_0 = arith.constant 0 : index
    %c0_1 = arith.constant 0 : index
    %0 = vector.load %arg2[%c0, %c0_0, %c0_1] : memref<1x8x1024xbf16, #tpu.memory_space<vmem>>, vector<1x8x1024xbf16>
    %1 = vector.shape_cast %0 : vector<1x8x1024xbf16> to vector<8x1024xbf16>
    %c0_2 = arith.constant 0 : index
    %c0_3 = arith.constant 0 : index
    %c0_4 = arith.constant 0 : index
    %2 = vector.load %arg3[%c0_2, %c0_3, %c0_4] : memref<1x1024x1024xbf16, #tpu.memory_space<vmem>>, vector<1x1024x1024xbf16>
    %3 = vector.shape_cast %2 : vector<1x1024x1024xbf16> to vector<1024x1024xbf16>
    %cst = arith.constant dense<0.000000e+00> : vector<8x1024xf32>
    %4 = tpu.matmul %1, %3, %cst {dimension_numbers = #tpu.dot_dimension_numbers<[1], [0], [0], [1], [0, 0, 1, 1], [], []>} : vector<8x1024xbf16>, vector<1024x1024xbf16>, vector<8x1024xf32> -> vector<8x1024xf32>
    %c0_5 = arith.constant 0 : index
    %c0_6 = arith.constant 0 : index
    %c0_7 = arith.constant 0 : index
    %5 = vector.load %arg4[%c0_5, %c0_6, %c0_7] : memref<1x1x1024xf32, #tpu.memory_space<vmem>>, vector<1x1x1024xf32>
    %6 = vector.shape_cast %5 : vector<1x1x1024xf32> to vector<1x1024xf32>
    %7 = vector.broadcast %6 : vector<1x1024xf32> to vector<8x1024xf32>
    %8 = arith.addf %4, %7 : vector<8x1024xf32>
    %cst_8 = arith.constant 0.000000e+00 : f32
    %9 = vector.broadcast %cst_8 : f32 to vector<8x1024xf32>
    %10 = arith.maximumf %8, %9 : vector<8x1024xf32>
    %11 = arith.truncf %10 : vector<8x1024xf32> to vector<8x1024xbf16>
    %c0_9 = arith.constant 0 : index
    %c0_10 = arith.constant 0 : index
    %c0_11 = arith.constant 0 : index
    %12 = vector.load %arg5[%c0_9, %c0_10, %c0_11] : memref<1x1024x256xbf16, #tpu.memory_space<vmem>>, vector<1x1024x256xbf16>
    %13 = vector.shape_cast %12 : vector<1x1024x256xbf16> to vector<1024x256xbf16>
    %cst_12 = arith.constant dense<0.000000e+00> : vector<8x256xf32>
    %14 = tpu.matmul %11, %13, %cst_12 {dimension_numbers = #tpu.dot_dimension_numbers<[1], [0], [0], [1], [0, 0, 1, 1], [], []>} : vector<8x1024xbf16>, vector<1024x256xbf16>, vector<8x256xf32> -> vector<8x256xf32>
    %c0_13 = arith.constant 0 : index
    %c0_14 = arith.constant 0 : index
    %c0_15 = arith.constant 0 : index
    %15 = vector.load %arg6[%c0_13, %c0_14, %c0_15] : memref<1x1x256xf32, #tpu.memory_space<vmem>>, vector<1x1x256xf32>
    %16 = vector.shape_cast %15 : vector<1x1x256xf32> to vector<1x256xf32>
    %17 = vector.broadcast %16 : vector<1x256xf32> to vector<8x256xf32>
    %18 = arith.addf %14, %17 : vector<8x256xf32>
    %19 = arith.truncf %18 : vector<8x256xf32> to vector<8x256xbf16>
    %c0_16 = arith.constant 0 : index
    %c0_17 = arith.constant 0 : index
    %c0_18 = arith.constant 0 : index
    %20 = vector.load %arg7[%c0_16, %c0_17, %c0_18] : memref<1x256x1024xbf16, #tpu.memory_space<vmem>>, vector<1x256x1024xbf16>
    %21 = vector.shape_cast %20 : vector<1x256x1024xbf16> to vector<256x1024xbf16>
    %cst_19 = arith.constant dense<0.000000e+00> : vector<8x1024xf32>
    %22 = tpu.matmul %19, %21, %cst_19 {dimension_numbers = #tpu.dot_dimension_numbers<[1], [0], [0], [1], [0, 0, 1, 1], [], []>} : vector<8x256xbf16>, vector<256x1024xbf16>, vector<8x1024xf32> -> vector<8x1024xf32>
    %c0_20 = arith.constant 0 : index
    %c0_21 = arith.constant 0 : index
    %c0_22 = arith.constant 0 : index
    %23 = vector.load %arg8[%c0_20, %c0_21, %c0_22] : memref<1x1x1024xf32, #tpu.memory_space<vmem>>, vector<1x1x1024xf32>
    %24 = vector.shape_cast %23 : vector<1x1x1024xf32> to vector<1x1024xf32>
    %25 = vector.broadcast %24 : vector<1x1024xf32> to vector<8x1024xf32>
    %26 = arith.addf %22, %25 : vector<8x1024xf32>
    %cst_23 = arith.constant 0.000000e+00 : f32
    %27 = vector.broadcast %cst_23 : f32 to vector<8x1024xf32>
    %28 = arith.maximumf %26, %27 : vector<8x1024xf32>
    %29 = arith.truncf %28 : vector<8x1024xf32> to vector<8x1024xbf16>
    %c0_24 = arith.constant 0 : index
    %c0_25 = arith.constant 0 : index
    %c0_26 = arith.constant 0 : index
    %30 = vector.load %arg9[%c0_24, %c0_25, %c0_26] : memref<1x1024x1024xbf16, #tpu.memory_space<vmem>>, vector<1x1024x1024xbf16>
    %31 = vector.shape_cast %30 : vector<1x1024x1024xbf16> to vector<1024x1024xbf16>
    %cst_27 = arith.constant dense<0.000000e+00> : vector<8x1024xf32>
    %32 = tpu.matmul %29, %31, %cst_27 {dimension_numbers = #tpu.dot_dimension_numbers<[1], [0], [0], [1], [0, 0, 1, 1], [], []>} : vector<8x1024xbf16>, vector<1024x1024xbf16>, vector<8x1024xf32> -> vector<8x1024xf32>
    %c0_28 = arith.constant 0 : index
    %c0_29 = arith.constant 0 : index
    %c0_30 = arith.constant 0 : index
    %33 = vector.load %arg10[%c0_28, %c0_29, %c0_30] : memref<1x1x1024xf32, #tpu.memory_space<vmem>>, vector<1x1x1024xf32>
    %34 = vector.shape_cast %33 : vector<1x1x1024xf32> to vector<1x1024xf32>
    %35 = vector.broadcast %34 : vector<1x1024xf32> to vector<8x1024xf32>
    %36 = arith.addf %32, %35 : vector<8x1024xf32>
    %c0_31 = arith.constant 0 : index
    %c0_32 = arith.constant 0 : index
    %c0_33 = arith.constant 0 : index
    %37 = vector.load %arg11[%c0_31, %c0_32, %c0_33] : memref<1x8x1024xf32, #tpu.memory_space<vmem>>, vector<1x8x1024xf32>
    %38 = vector.shape_cast %37 : vector<1x8x1024xf32> to vector<8x1024xf32>
    %39 = vector.shape_cast %36 : vector<8x1024xf32> to vector<1x8x1024xf32>
    tpu.vector_store %arg11[%c0_31, %c0_32, %c0_33], %39 {strides = array<i32>} : memref<1x8x1024xf32, #tpu.memory_space<vmem>>, vector<1x8x1024xf32>,
    return
  }
  func.func @transform_0(%arg0: i32, %arg1: i32) -> (i32, i32, i32) {
    %c0_i32 = arith.constant 0 : i32
    %c0_i32_0 = arith.constant 0 : i32
    return %arg0, %arg1, %c0_i32 : i32, i32, i32
  }
  func.func @transform_1(%arg0: i32, %arg1: i32) -> (i32, i32, i32) {
    %c0_i32 = arith.constant 0 : i32
    %c0_i32_0 = arith.constant 0 : i32
    %c0_i32_1 = arith.constant 0 : i32
    return %arg0, %c0_i32, %c0_i32_0 : i32, i32, i32
  }
  func.func @transform_2(%arg0: i32, %arg1: i32) -> (i32, i32, i32) {
    %c0_i32 = arith.constant 0 : i32
    %c0_i32_0 = arith.constant 0 : i32
    %c0_i32_1 = arith.constant 0 : i32
    return %arg0, %c0_i32, %c0_i32_0 : i32, i32, i32
  }
  func.func @transform_3(%arg0: i32, %arg1: i32) -> (i32, i32, i32) {
    %c0_i32 = arith.constant 0 : i32
    %c0_i32_0 = arith.constant 0 : i32
    %c0_i32_1 = arith.constant 0 : i32
    return %arg0, %c0_i32, %c0_i32_0 : i32, i32, i32
  }
  func.func @transform_4(%arg0: i32, %arg1: i32) -> (i32, i32, i32) {
    %c0_i32 = arith.constant 0 : i32
    %c0_i32_0 = arith.constant 0 : i32
    %c0_i32_1 = arith.constant 0 : i32
    return %arg0, %c0_i32, %c0_i32_0 : i32, i32, i32
  }
  func.func @transform_5(%arg0: i32, %arg1: i32) -> (i32, i32, i32) {
    %c0_i32 = arith.constant 0 : i32
    %c0_i32_0 = arith.constant 0 : i32
    %c0_i32_1 = arith.constant 0 : i32
    return %arg0, %c0_i32, %c0_i32_0 : i32, i32, i32
  }
  func.func @transform_6(%arg0: i32, %arg1: i32) -> (i32, i32, i32) {
    %c0_i32 = arith.constant 0 : i32
    %c0_i32_0 = arith.constant 0 : i32
    %c0_i32_1 = arith.constant 0 : i32
    return %arg0, %c0_i32, %c0_i32_0 : i32, i32, i32
  }
  func.func @transform_7(%arg0: i32, %arg1: i32) -> (i32, i32, i32) {
    %c0_i32 = arith.constant 0 : i32
    %c0_i32_0 = arith.constant 0 : i32
    %c0_i32_1 = arith.constant 0 : i32
    return %arg0, %c0_i32, %c0_i32_0 : i32, i32, i32
  }
  func.func @transform_8(%arg0: i32, %arg1: i32) -> (i32, i32, i32) {
    %c0_i32 = arith.constant 0 : i32
    %c0_i32_0 = arith.constant 0 : i32
    %c0_i32_1 = arith.constant 0 : i32
    return %arg0, %c0_i32, %c0_i32_0 : i32, i32, i32
  }
  func.func @transform_9(%arg0: i32, %arg1: i32) -> (i32, i32, i32) {
    %c0_i32 = arith.constant 0 : i32
    %c0_i32_0 = arith.constant 0 : i32
    return %arg0, %arg1, %c0_i32 : i32, i32, i32
  }
}

</mosaic_0001>

<llo_original>
// kernel: squeeze.3
$region0: #{squeeze.3}
  %s0 = inlined_call_operand.vmem [shape: f32[1,2,1024], index: 0, kind: input, shape index: {}]
  %s1 = inlined_call_operand.hbm [shape: f32[2,4,16,16], index: 1, kind: output, shape index: {}]
  $region1: #{squeeze.3} parent=0
    #allocation0 [shape = 'u8[65536]{0}', space=vmem, size = 0x10000, scoped, tag = 'operand span for operand 1']
    #allocation1 [shape = 's32[1]{0}', space=sflag, size = 0x4, scoped, tag = 'scoped memory for squeeze.3']
    #allocation2 [shape = 'u8[32768]{0}', space=vmem, size = 0x8000, scoped, tag = 'scoped mem for input reshape']
    %2 = vsyncpa [#allocation1], 0
    %s4 = sshll.u32 1, 2
    %s5 = ssub.s32 %s4, 1
    %s6 = smul.addr 2, 7
    %s7 = scalar_lea.vmem %s0, %s6
    %v8 = vld [vmem:[%s7] sm:%s5]
    %s9 = scalar_lea.vmem [#allocation2], 56
    %10 = vst [vmem:[%s9] sm:%s5] %v8
    %s11 = smul.addr 2, 6
    %s12 = scalar_lea.vmem %s0, %s11
    %v13 = vld [vmem:[%s12] sm:%s5]
    %s14 = scalar_lea.vmem [#allocation2], 48
    %15 = vst [vmem:[%s14] sm:%s5] %v13
    %s16 = smul.addr 2, 5
    %s17 = scalar_lea.vmem %s0, %s16
    %v18 = vld [vmem:[%s17] sm:%s5]
    %s19 = scalar_lea.vmem [#allocation2], 40
    %20 = vst [vmem:[%s19] sm:%s5] %v18
    %s21 = smul.addr 2, 4
    %s22 = scalar_lea.vmem %s0, %s21
    %v23 = vld [vmem:[%s22] sm:%s5]
    %s24 = scalar_lea.vmem [#allocation2], 32
    %25 = vst [vmem:[%s24] sm:%s5] %v23
    %s26 = smul.addr 2, 3
    %s27 = scalar_lea.vmem %s0, %s26
    %v28 = vld [vmem:[%s27] sm:%s5]
    %s29 = scalar_lea.vmem [#allocation2], 24
    %30 = vst [vmem:[%s29] sm:%s5] %v28
    %s31 = smul.addr 2, 2
    %s32 = scalar_lea.vmem %s0, %s31
    %v33 = vld [vmem:[%s32] sm:%s5]
    %s34 = scalar_lea.vmem [#allocation2], 16
    %35 = vst [vmem:[%s34] sm:%s5] %v33
    %s36 = scalar_lea.vmem %s0, 2
    %v37 = vld [vmem:[%s36] sm:%s5]
    %s38 = scalar_lea.vmem [#allocation2], 8
    %39 = vst [vmem:[%s38] sm:%s5] %v37
    %v40 = vld [vmem:[%s0] sm:%s5]
    %41 = vst [vmem:[#allocation2] sm:%s5] %v40
    %v42 = vld [vmem:[#allocation2] sm:$0x3]
    %vm43 = vcmask 130048
    %44 = vst.msk [vmem:[#allocation0] sm:$0x1] %vm43, %v42
    %s45 = scalar_lea.vmem [#allocation0], 63
    %46 = vst.msk [vmem:[%s45] sm:$0x2] %vm43, %v42
    %s47 = scalar_lea.vmem [#allocation2], 8
    %v48 = vld [vmem:[%s47] sm:$0x3]
    %vm49 = vcmask 130048
    %s50 = scalar_lea.vmem [#allocation0], 8
    %51 = vst.msk [vmem:[%s50] sm:$0x1] %vm49, %v48
    %s52 = scalar_lea.vmem [#allocation0], 71
    %53 = vst.msk [vmem:[%s52] sm:$0x2] %vm49, %v48
    %s54 = scalar_lea.vmem [#allocation2], 16
    %v55 = vld [vmem:[%s54] sm:$0x3]
    %vm56 = vcmask 130048
    %s57 = scalar_lea.vmem [#allocation0], 16
    %58 = vst.msk [vmem:[%s57] sm:$0x1] %vm56, %v55
    %s59 = scalar_lea.vmem [#allocation0], 79
    %60 = vst.msk [vmem:[%s59] sm:$0x2] %vm56, %v55
    %s61 = scalar_lea.vmem [#allocation2], 24
    %v62 = vld [vmem:[%s61] sm:$0x3]
    %vm63 = vcmask 130048
    %s64 = scalar_lea.vmem [#allocation0], 24
    %65 = vst.msk [vmem:[%s64] sm:$0x1] %vm63, %v62
    %s66 = scalar_lea.vmem [#allocation0], 87
    %67 = vst.msk [vmem:[%s66] sm:$0x2] %vm63, %v62
    %s68 = scalar_lea.vmem [#allocation2], 32
    %v69 = vld [vmem:[%s68] sm:$0x3]
    %vm70 = vcmask 130048
    %s71 = scalar_lea.vmem [#allocation0], 32
    %72 = vst.msk [vmem:[%s71] sm:$0x1] %vm70, %v69
    %s73 = scalar_lea.vmem [#allocation0], 95
    %74 = vst.msk [vmem:[%s73] sm:$0x2] %vm70, %v69
    %s75 = scalar_lea.vmem [#allocation2], 40
    %v76 = vld [vmem:[%s75] sm:$0x3]
    %vm77 = vcmask 130048
    %s78 = scalar_lea.vmem [#allocation0], 40
    %79 = vst.msk [vmem:[%s78] sm:$0x1] %vm77, %v76
    %s80 = scalar_lea.vmem [#allocation0], 103
    %81 = vst.msk [vmem:[%s80] sm:$0x2] %vm77, %v76
    %s82 = scalar_lea.vmem [#allocation2], 48
    %v83 = vld [vmem:[%s82] sm:$0x3]
    %vm84 = vcmask 130048
    %s85 = scalar_lea.vmem [#allocation0], 48
    %86 = vst.msk [vmem:[%s85] sm:$0x1] %vm84, %v83
    %s87 = scalar_lea.vmem [#allocation0], 111
    %88 = vst.msk [vmem:[%s87] sm:$0x2] %vm84, %v83
    %s89 = scalar_lea.vmem [#allocation2], 56
    %v90 = vld [vmem:[%s89] sm:$0x3]
    %vm91 = vcmask 130048
    %s92 = scalar_lea.vmem [#allocation0], 56
    %93 = vst.msk [vmem:[%s92] sm:$0x1] %vm91, %v90
    %s94 = scalar_lea.vmem [#allocation0], 119
    %95 = vst.msk [vmem:[%s94] sm:$0x2] %vm91, %v90
    %v96 = vld [vmem:[#allocation2] ss:$8 sm:$0xf]
    %s97 = scalar_lea.vmem [#allocation2], 4294967265
    %v98 = vld [vmem:[%s97] ss:$8 sm:$0xf0]
    %vm99 = vcmask 1047556
    %v100 = vsel %vm99, %v98, %v96
    %101 = vrot.lane.b32.xlu0 %v100, 112
    %v102 = vpop.permute.xlu0 %101
    %vm103 = vcmask 130048
    %s104 = scalar_lea.vmem [#allocation0], 1
    %105 = vst.msk [vmem:[%s104] ss:$8 sm:$0xf] %vm103, %v102
    %s106 = scalar_lea.vmem [#allocation0], 33
    %107 = vst.msk [vmem:[%s106] ss:$8 sm:$0xf0] %vm103, %v102
    %s108 = scalar_lea.vmem [#allocation2], 32
    %v109 = vld [vmem:[%s108] ss:$8 sm:$0xf]
    %s110 = scalar_lea.vmem [#allocation2], 1
    %v111 = vld [vmem:[%s110] ss:$8 sm:$0xf0]
    %vm112 = vcmask 1047556
    %v113 = vsel %vm112, %v111, %v109
    %114 = vrot.lane.b32.xlu0 %v113, 112
    %v115 = vpop.permute.xlu0 %114
    %vm116 = vcmask 130048
    %s117 = scalar_lea.vmem [#allocation0], 33
    %118 = vst.msk [vmem:[%s117] ss:$8 sm:$0xf] %vm116, %v115
    %s119 = scalar_lea.vmem [#allocation0], 65
    %120 = vst.msk [vmem:[%s119] ss:$8 sm:$0xf0] %vm116, %v115
    %v121 = vld [vmem:[#allocation2] ss:$8 sm:$0xf]
    %s122 = scalar_lea.vmem [#allocation2], 4294967265
    %v123 = vld [vmem:[%s122] ss:$8 sm:$0xf0]
    %vm124 = vcmask 1047556
    %v125 = vsel %vm124, %v123, %v121
    %126 = vrot.lane.b32.xlu0 %v125, 96
    %v127 = vpop.permute.xlu0 %126
    %vm128 = vcmask 130048
    %s129 = scalar_lea.vmem [#allocation0], 2
    %130 = vst.msk [vmem:[%s129] ss:$8 sm:$0xf] %vm128, %v127
    %s131 = scalar_lea.vmem [#allocation0], 34
    %132 = vst.msk [vmem:[%s131] ss:$8 sm:$0xf0] %vm128, %v127
    %s133 = scalar_lea.vmem [#allocation2], 32
    %v134 = vld [vmem:[%s133] ss:$8 sm:$0xf]
    %s135 = scalar_lea.vmem [#allocation2], 1
    %v136 = vld [vmem:[%s135] ss:$8 sm:$0xf0]
    %vm137 = vcmask 1047556
    %v138 = vsel %vm137, %v136, %v134
    %139 = vrot.lane.b32.xlu0 %v138, 96
    %v140 = vpop.permute.xlu0 %139
    %vm141 = vcmask 130048
    %s142 = scalar_lea.vmem [#allocation0], 34
    %143 = vst.msk [vmem:[%s142] ss:$8 sm:$0xf] %vm141, %v140
    %s144 = scalar_lea.vmem [#allocation0], 66
    %145 = vst.msk [vmem:[%s144] ss:$8 sm:$0xf0] %vm141, %v140
    %v146 = vld [vmem:[#allocation2] ss:$8 sm:$0xf]
    %s147 = scalar_lea.vmem [#allocation2], 4294967265
    %v148 = vld [vmem:[%s147] ss:$8 sm:$0xf0]
    %vm149 = vcmask 1047556
    %v150 = vsel %vm149, %v148, %v146
    %151 = vrot.lane.b32.xlu0 %v150, 80
    %v152 = vpop.permute.xlu0 %151
    %vm153 = vcmask 130048
    %s154 = scalar_lea.vmem [#allocation0], 3
    %155 = vst.msk [vmem:[%s154] ss:$8 sm:$0xf] %vm153, %v152
    %s156 = scalar_lea.vmem [#allocation0], 35
    %157 = vst.msk [vmem:[%s156] ss:$8 sm:$0xf0] %vm153, %v152
    %s158 = scalar_lea.vmem [#allocation2], 32
    %v159 = vld [vmem:[%s158] ss:$8 sm:$0xf]
    %s160 = scalar_lea.vmem [#allocation2], 1
    %v161 = vld [vmem:[%s160] ss:$8 sm:$0xf0]
    %vm162 = vcmask 1047556
    %v163 = vsel %vm162, %v161, %v159
    %164 = vrot.lane.b32.xlu0 %v163, 80
    %v165 = vpop.permute.xlu0 %164
    %vm166 = vcmask 130048
    %s167 = scalar_lea.vmem [#allocation0], 35
    %168 = vst.msk [vmem:[%s167] ss:$8 sm:$0xf] %vm166, %v165
    %s169 = scalar_lea.vmem [#allocation0], 67
    %170 = vst.msk [vmem:[%s169] ss:$8 sm:$0xf0] %vm166, %v165
    %v171 = vld [vmem:[#allocation2] ss:$8 sm:$0xf]
    %s172 = scalar_lea.vmem [#allocation2], 4294967265
    %v173 = vld [vmem:[%s172] ss:$8 sm:$0xf0]
    %vm174 = vcmask 1047556
    %v175 = vsel %vm174, %v173, %v171
    %176 = vrot.lane.b32.xlu0 %v175, 64
    %v177 = vpop.permute.xlu0 %176
    %vm178 = vcmask 130048
    %s179 = scalar_lea.vmem [#allocation0], 4
    %180 = vst.msk [vmem:[%s179] ss:$8 sm:$0xf] %vm178, %v177
    %s181 = scalar_lea.vmem [#allocation0], 36
    %182 = vst.msk [vmem:[%s181] ss:$8 sm:$0xf0] %vm178, %v177
    %s183 = scalar_lea.vmem [#allocation2], 32
    %v184 = vld [vmem:[%s183] ss:$8 sm:$0xf]
    %s185 = scalar_lea.vmem [#allocation2], 1
    %v186 = vld [vmem:[%s185] ss:$8 sm:$0xf0]
    %vm187 = vcmask 1047556
    %v188 = vsel %vm187, %v186, %v184
    %189 = vrot.lane.b32.xlu0 %v188, 64
    %v190 = vpop.permute.xlu0 %189
    %vm191 = vcmask 130048
    %s192 = scalar_lea.vmem [#allocation0], 36
    %193 = vst.msk [vmem:[%s192] ss:$8 sm:$0xf] %vm191, %v190
    %s194 = scalar_lea.vmem [#allocation0], 68
    %195 = vst.msk [vmem:[%s194] ss:$8 sm:$0xf0] %vm191, %v190
    %v196 = vld [vmem:[#allocation2] ss:$8 sm:$0xf]
    %s197 = scalar_lea.vmem [#allocation2], 4294967265
    %v198 = vld [vmem:[%s197] ss:$8 sm:$0xf0]
    %vm199 = vcmask 1047556
    %v200 = vsel %vm199, %v198, %v196
    %201 = vrot.lane.b32.xlu0 %v200, 48
    %v202 = vpop.permute.xlu0 %201
    %vm203 = vcmask 130048
    %s204 = scalar_lea.vmem [#allocation0], 5
    %205 = vst.msk [vmem:[%s204] ss:$8 sm:$0xf] %vm203, %v202
    %s206 = scalar_lea.vmem [#allocation0], 37
    %207 = vst.msk [vmem:[%s206] ss:$8 sm:$0xf0] %vm203, %v202
    %s208 = scalar_lea.vmem [#allocation2], 32
    %v209 = vld [vmem:[%s208] ss:$8 sm:$0xf]
    %s210 = scalar_lea.vmem [#allocation2], 1
    %v211 = vld [vmem:[%s210] ss:$8 sm:$0xf0]
    %vm212 = vcmask 1047556
    %v213 = vsel %vm212, %v211, %v209
    %214 = vrot.lane.b32.xlu0 %v213, 48
    %v215 = vpop.permute.xlu0 %214
    %vm216 = vcmask 130048
    %s217 = scalar_lea.vmem [#allocation0], 37
    %218 = vst.msk [vmem:[%s217] ss:$8 sm:$0xf] %vm216, %v215
    %s219 = scalar_lea.vmem [#allocation0], 69
    %220 = vst.msk [vmem:[%s219] ss:$8 sm:$0xf0] %vm216, %v215
    %v221 = vld [vmem:[#allocation2] ss:$8 sm:$0xf]
    %s222 = scalar_lea.vmem [#allocation2], 4294967265
    %v223 = vld [vmem:[%s222] ss:$8 sm:$0xf0]
    %vm224 = vcmask 1047556
    %v225 = vsel %vm224, %v223, %v221
    %226 = vrot.lane.b32.xlu0 %v225, 32
    %v227 = vpop.permute.xlu0 %226
    %vm228 = vcmask 130048
    %s229 = scalar_lea.vmem [#allocation0], 6
    %230 = vst.msk [vmem:[%s229] ss:$8 sm:$0xf] %vm228, %v227
    %s231 = scalar_lea.vmem [#allocation0], 38
    %232 = vst.msk [vmem:[%s231] ss:$8 sm:$0xf0] %vm228, %v227
    %s233 = scalar_lea.vmem [#allocation2], 32
    %v234 = vld [vmem:[%s233] ss:$8 sm:$0xf]
    %s235 = scalar_lea.vmem [#allocation2], 1
    %v236 = vld [vmem:[%s235] ss:$8 sm:$0xf0]
    %vm237 = vcmask 1047556
    %v238 = vsel %vm237, %v236, %v234
    %239 = vrot.lane.b32.xlu0 %v238, 32
    %v240 = vpop.permute.xlu0 %239
    %vm241 = vcmask 130048
    %s242 = scalar_lea.vmem [#allocation0], 38
    %243 = vst.msk [vmem:[%s242] ss:$8 sm:$0xf] %vm241, %v240
    %s244 = scalar_lea.vmem [#allocation0], 70
    %245 = vst.msk [vmem:[%s244] ss:$8 sm:$0xf0] %vm241, %v240
    %v246 = vld [vmem:[#allocation2] ss:$8 sm:$0xf]
    %s247 = scalar_lea.vmem [#allocation2], 4294967265
    %v248 = vld [vmem:[%s247] ss:$8 sm:$0xf0]
    %vm249 = vcmask 1047556
    %v250 = vsel %vm249, %v248, %v246
    %251 = vrot.lane.b32.xlu0 %v250, 16
    %v252 = vpop.permute.xlu0 %251
    %vm253 = vcmask 130048
    %s254 = scalar_lea.vmem [#allocation0], 7
    %255 = vst.msk [vmem:[%s254] ss:$8 sm:$0xf] %vm253, %v252
    %s256 = scalar_lea.vmem [#allocation0], 39
    %257 = vst.msk [vmem:[%s256] ss:$8 sm:$0xf0] %vm253, %v252
    %s258 = scalar_lea.vmem [#allocation2], 32
    %v259 = vld [vmem:[%s258] ss:$8 sm:$0xf]
    %s260 = scalar_lea.vmem [#allocation2], 1
    %v261 = vld [vmem:[%s260] ss:$8 sm:$0xf0]
    %vm262 = vcmask 1047556
    %v263 = vsel %vm262, %v261, %v259
    %264 = vrot.lane.b32.xlu0 %v263, 16
    %v265 = vpop.permute.xlu0 %264
    %vm266 = vcmask 130048
    %s267 = scalar_lea.vmem [#allocation0], 39
    %268 = vst.msk [vmem:[%s267] ss:$8 sm:$0xf] %vm266, %v265
    %s269 = scalar_lea.vmem [#allocation0], 71
    %270 = vst.msk [vmem:[%s269] ss:$8 sm:$0xf0] %vm266, %v265
    %s272 = ssub.s32 2048, 2048
    %273 = vsyncadd [#allocation1], %s272
    %s275 = sshll.u32 [#allocation0], 4
    %s276 = int_to_ptr.vmem [resolvable:$true] %s275
    %278 = dma.vmem_to_hbm [thread:$0]  %s276, 2048, %s1, [#allocation1]
    %279 = dma.done [#allocation1], 2048
    %280 = vsyncpa [#allocation1], 1

// kernel: netfc2_forward.1
$region0: #{netfc2_forward.1}
  #allocation0 [shape = 'u32[]', space=smem, size = 0x4, offset = 0x4, fixed_abs, tag = 'smem constant byte address 0x4 - core index']
  #allocation1 [shape = 'u32[144,128]{1,0:T(1,128)}', space=vmem, size = 0x12000, scoped, tag = 'internal scratch']
  %s0 = inlined_call_operand.vmem [shape: bf16[2,8,1024], index: 0, kind: input, shape index: {}]
  %s1 = inlined_call_operand.hbm [shape: bf16[2,1024,1024], index: 1, kind: input, shape index: {}]
  %s2 = inlined_call_operand.hbm [shape: f32[2,1,1024], index: 2, kind: input, shape index: {}]
  %s3 = inlined_call_operand.hbm [shape: bf16[2,1024,256], index: 3, kind: input, shape index: {}]
  %s4 = inlined_call_operand.hbm [shape: f32[2,1,256], index: 4, kind: input, shape index: {}]
  %s5 = inlined_call_operand.hbm [shape: bf16[2,256,1024], index: 5, kind: input, shape index: {}]
  %s6 = inlined_call_operand.hbm [shape: f32[2,1,1024], index: 6, kind: input, shape index: {}]
  %s7 = inlined_call_operand.hbm [shape: bf16[2,1024,1024], index: 7, kind: input, shape index: {}]
  %s8 = inlined_call_operand.hbm [shape: f32[2,1,1024], index: 8, kind: input, shape index: {}]
  %s9 = inlined_call_operand.vmem [shape: f32[2,8,1024], index: 9, kind: output, shape index: {}]
  %s10 = sld [smem:[#allocation0]]
  $region101: #{netfc2_forward.1} parent=0
    _
  %s12 = ssub.s32 1, %s10
  %s13 = scalar_select 0, %s12, %s10
  $region1: #{netfc2_forward.1} parent=0
    #allocation2 [shape = 'u8[4194304]{0}', space=vmem, size = 0x400000, scoped, tag = 'input window, operand 1']
    #allocation3 [shape = 's32[2]{0}', space=sflag, size = 0x8, scoped, tag = 'scoped memory for netfc2_forward.1']
    #allocation4 [shape = 'u8[8192]{0}', space=vmem, size = 0x2000, scoped, tag = 'input window, operand 2']
    #allocation5 [shape = 's32[2]{0}', space=sflag, size = 0x8, scoped, tag = 'scoped memory for netfc2_forward.1']
    #allocation6 [shape = 'u8[1048576]{0}', space=vmem, size = 0x100000, scoped, tag = 'input window, operand 3']
    #allocation7 [shape = 'u8[2048]{0}', space=vmem, size = 0x800, scoped, tag = 'input window, operand 4']
    #allocation8 [shape = 's32[2]{0}', space=sflag, size = 0x8, scoped, tag = 'scoped memory for netfc2_forward.1']
    #allocation9 [shape = 'u8[1048576]{0}', space=vmem, size = 0x100000, scoped, tag = 'input window, operand 5']
    #allocation10 [shape = 'u8[8192]{0}', space=vmem, size = 0x2000, scoped, tag = 'input window, operand 6']
    #allocation11 [shape = 's32[2]{0}', space=sflag, size = 0x8, scoped, tag = 'scoped memory for netfc2_forward.1']
    #allocation12 [shape = 'u8[4194304]{0}', space=vmem, size = 0x400000, scoped, tag = 'input window, operand 7']
    #allocation13 [shape = 'u8[8192]{0}', space=vmem, size = 0x2000, scoped, tag = 'input window, operand 8']
    #allocation14 [shape = 's32[2]{0}', space=sflag, size = 0x8, scoped, tag = 'scoped memory for netfc2_forward.1']
    %14 = vsyncpa [#allocation3], 0
    %s15 = scalar_lea.sflag [#allocation3], 1
    %16 = vsyncpa %s15, 0
    %17 = vsyncpa [#allocation5], 0
    %s18 = scalar_lea.sflag [#allocation5], 1
    %19 = vsyncpa %s18, 0
    %20 = vsyncpa [#allocation8], 0
    %s21 = scalar_lea.sflag [#allocation8], 1
    %22 = vsyncpa %s21, 0
    %23 = vsyncpa [#allocation11], 0
    %s24 = scalar_lea.sflag [#allocation11], 1
    %25 = vsyncpa %s24, 0
    %26 = vsyncpa [#allocation14], 0
    %s27 = scalar_lea.sflag [#allocation14], 1
    %28 = vsyncpa %s27, 0
    loop: start=0, step=1, limit=4
    $region2: #{netfc2_forward.1} parent=1 // loop_pre_header
      _
    $region3: #{netfc2_forward.1} parent=1 // loop_header
      %s30 = sphi 0, %s34
      %p31 = scmp.ge.s32.totalorder %s30, 4
      %s37 = sphi 0, %s49
      %s38 = sphi 0, %s45
      %s39 = sphi 0, %s37
      %s40 = sphi 0, %s38
      %s41 = sphi 0, %s39
      %s42 = sphi 0, %s40
      %s54 = sphi 0, %s56
      %s57 = sphi 0, %s54
      %s58 = sphi 0, %s57
      %s74 = sphi 0, %s58
      %s80 = sphi 0, %s82
      %s83 = sphi 0, %s80
      %s84 = sphi 0, %s83
      %s100 = sphi 0, %s84
      %s106 = sphi 0, %s108
      %s109 = sphi 0, %s106
      %s110 = sphi 0, %s109
      %s126 = sphi 0, %s110
      %s132 = sphi 0, %s134
      %s135 = sphi 0, %s132
      %s136 = sphi 0, %s135
      %s152 = sphi 0, %s136
      %s158 = sphi 0, %s160
      %s161 = sphi 0, %s158
      %s162 = sphi 0, %s161
      %s178 = sphi 0, %s162
      %s184 = sphi 0, %s186
      %s187 = sphi 0, %s184
      %s188 = sphi 0, %s187
      %s204 = sphi 0, %s188
      %s210 = sphi 0, %s212
      %s213 = sphi 0, %s210
      %s214 = sphi 0, %s213
      %s230 = sphi 0, %s214
      %s236 = sphi 0, %s238
      %s239 = sphi 0, %s236
      %s240 = sphi 0, %s239
      %s256 = sphi 0, %s240
      %s262 = sphi 0, %s264
      %s265 = sphi 0, %s262
      %s266 = sphi 0, %s265
      %s282 = sphi 0, %s266
      %s290 = sphi 0, %s292
      %s293 = sphi 0, %s290
      %s294 = sphi 0, %s293
      %s310 = sphi 0, %s294
    $region4: #{netfc2_forward.1} parent=1 // loop_header_branch
      %33 = sbr.rel (%p31) target = $region8
    $region5: #{netfc2_forward.1} parent=1 // loop_body
      %s35 = ssub.s32 %s30, 1
      %s36 = ssub.s32 %s30, 2
      %s43 = sadd.s32 1, %s38
      %p44 = scmp.ge.s32.totalorder %s43, 1
      %s45 = scalar_select %p44, 0, %s43
      %s46 = sadd.s32 1, %s37
      %s47 = scalar_select %p44, %s46, %s37
      %p48 = scmp.ge.s32.totalorder %s47, 2
      %s49 = scalar_select %p48, 0, %s47
      %s50 = ssub.s32 %s37, %s49
      %s51 = ssub.s32 %s38, %s45
      %s52 = sor.u32 %s50, %s51
      %p53 = scmp.eq.s32.totalorder %s52, 0
      %s55 = sadd.s32 %s54, 1
      %s56 = scalar_select %p53, %s54, %s55
      %p59 = pneg %p53
      %p60 = scmp.eq.s32.totalorder %s30, 1
      %p61 = por %p59, %p60
      %p62 = scmp.ne.s32.totalorder %s54, %s57
      %p63 = scmp.eq.s32.totalorder %s30, 0
      %p64 = por %p62, %p63
      %p65 = scmp.ne.s32.totalorder %s54, %s57
      %p66 = scmp.eq.s32.totalorder %s35, 1
      %p67 = por %p65, %p66
      %p68 = scmp.ne.s32.totalorder %s57, %s58
      %p69 = scmp.eq.s32.totalorder %s35, 0
      %p70 = por %p68, %p69
      %p71 = scmp.ne.s32.totalorder %s57, %s58
      %p72 = scmp.eq.s32.totalorder %s36, 1
      %p73 = por %p71, %p72
      %p75 = scmp.ne.s32.totalorder %s58, %s74
      %p76 = scmp.eq.s32.totalorder %s36, 0
      %p77 = por %p75, %p76
      %s78 = ssub.s32 %s37, %s49
      %p79 = scmp.eq.s32.totalorder %s78, 0
      %s81 = sadd.s32 %s80, 1
      %s82 = scalar_select %p79, %s80, %s81
      %p85 = pneg %p79
      %p86 = scmp.eq.s32.totalorder %s30, 1
      %p87 = por %p85, %p86
      %p88 = scmp.ne.s32.totalorder %s80, %s83
      %p89 = scmp.eq.s32.totalorder %s30, 0
      %p90 = por %p88, %p89
      %p91 = scmp.ne.s32.totalorder %s80, %s83
      %p92 = scmp.eq.s32.totalorder %s35, 1
      %p93 = por %p91, %p92
      %p94 = scmp.ne.s32.totalorder %s83, %s84
      %p95 = scmp.eq.s32.totalorder %s35, 0
      %p96 = por %p94, %p95
      %p97 = scmp.ne.s32.totalorder %s83, %s84
      %p98 = scmp.eq.s32.totalorder %s36, 1
      %p99 = por %p97, %p98
      %p101 = scmp.ne.s32.totalorder %s84, %s100
      %p102 = scmp.eq.s32.totalorder %s36, 0
      %p103 = por %p101, %p102
      %s104 = ssub.s32 %s37, %s49
      %p105 = scmp.eq.s32.totalorder %s104, 0
      %s107 = sadd.s32 %s106, 1
      %s108 = scalar_select %p105, %s106, %s107
      %p111 = pneg %p105
      %p112 = scmp.eq.s32.totalorder %s30, 1
      %p113 = por %p111, %p112
      %p114 = scmp.ne.s32.totalorder %s106, %s109
      %p115 = scmp.eq.s32.totalorder %s30, 0
      %p116 = por %p114, %p115
      %p117 = scmp.ne.s32.totalorder %s106, %s109
      %p118 = scmp.eq.s32.totalorder %s35, 1
      %p119 = por %p117, %p118
      %p120 = scmp.ne.s32.totalorder %s109, %s110
      %p121 = scmp.eq.s32.totalorder %s35, 0
      %p122 = por %p120, %p121
      %p123 = scmp.ne.s32.totalorder %s109, %s110
      %p124 = scmp.eq.s32.totalorder %s36, 1
      %p125 = por %p123, %p124
      %p127 = scmp.ne.s32.totalorder %s110, %s126
      %p128 = scmp.eq.s32.totalorder %s36, 0
      %p129 = por %p127, %p128
      %s130 = ssub.s32 %s37, %s49
      %p131 = scmp.eq.s32.totalorder %s130, 0
      %s133 = sadd.s32 %s132, 1
      %s134 = scalar_select %p131, %s132, %s133
      %p137 = pneg %p131
      %p138 = scmp.eq.s32.totalorder %s30, 1
      %p139 = por %p137, %p138
      %p140 = scmp.ne.s32.totalorder %s132, %s135
      %p141 = scmp.eq.s32.totalorder %s30, 0
      %p142 = por %p140, %p141
      %p143 = scmp.ne.s32.totalorder %s132, %s135
      %p144 = scmp.eq.s32.totalorder %s35, 1
      %p145 = por %p143, %p144
      %p146 = scmp.ne.s32.totalorder %s135, %s136
      %p147 = scmp.eq.s32.totalorder %s35, 0
      %p148 = por %p146, %p147
      %p149 = scmp.ne.s32.totalorder %s135, %s136
      %p150 = scmp.eq.s32.totalorder %s36, 1
      %p151 = por %p149, %p150
      %p153 = scmp.ne.s32.totalorder %s136, %s152
      %p154 = scmp.eq.s32.totalorder %s36, 0
      %p155 = por %p153, %p154
      %s156 = ssub.s32 %s37, %s49
      %p157 = scmp.eq.s32.totalorder %s156, 0
      %s159 = sadd.s32 %s158, 1
      %s160 = scalar_select %p157, %s158, %s159
      %p163 = pneg %p157
      %p164 = scmp.eq.s32.totalorder %s30, 1
      %p165 = por %p163, %p164
      %p166 = scmp.ne.s32.totalorder %s158, %s161
      %p167 = scmp.eq.s32.totalorder %s30, 0
      %p168 = por %p166, %p167
      %p169 = scmp.ne.s32.totalorder %s158, %s161
      %p170 = scmp.eq.s32.totalorder %s35, 1
      %p171 = por %p169, %p170
      %p172 = scmp.ne.s32.totalorder %s161, %s162
      %p173 = scmp.eq.s32.totalorder %s35, 0
      %p174 = por %p172, %p173
      %p175 = scmp.ne.s32.totalorder %s161, %s162
      %p176 = scmp.eq.s32.totalorder %s36, 1
      %p177 = por %p175, %p176
      %p179 = scmp.ne.s32.totalorder %s162, %s178
      %p180 = scmp.eq.s32.totalorder %s36, 0
      %p181 = por %p179, %p180
      %s182 = ssub.s32 %s37, %s49
      %p183 = scmp.eq.s32.totalorder %s182, 0
      %s185 = sadd.s32 %s184, 1
      %s186 = scalar_select %p183, %s184, %s185
      %p189 = pneg %p183
      %p190 = scmp.eq.s32.totalorder %s30, 1
      %p191 = por %p189, %p190
      %p192 = scmp.ne.s32.totalorder %s184, %s187
      %p193 = scmp.eq.s32.totalorder %s30, 0
      %p194 = por %p192, %p193
      %p195 = scmp.ne.s32.totalorder %s184, %s187
      %p196 = scmp.eq.s32.totalorder %s35, 1
      %p197 = por %p195, %p196
      %p198 = scmp.ne.s32.totalorder %s187, %s188
      %p199 = scmp.eq.s32.totalorder %s35, 0
      %p200 = por %p198, %p199
      %p201 = scmp.ne.s32.totalorder %s187, %s188
      %p202 = scmp.eq.s32.totalorder %s36, 1
      %p203 = por %p201, %p202
      %p205 = scmp.ne.s32.totalorder %s188, %s204
      %p206 = scmp.eq.s32.totalorder %s36, 0
      %p207 = por %p205, %p206
      %s208 = ssub.s32 %s37, %s49
      %p209 = scmp.eq.s32.totalorder %s208, 0
      %s211 = sadd.s32 %s210, 1
      %s212 = scalar_select %p209, %s210, %s211
      %p215 = pneg %p209
      %p216 = scmp.eq.s32.totalorder %s30, 1
      %p217 = por %p215, %p216
      %p218 = scmp.ne.s32.totalorder %s210, %s213
      %p219 = scmp.eq.s32.totalorder %s30, 0
      %p220 = por %p218, %p219
      %p221 = scmp.ne.s32.totalorder %s210, %s213
      %p222 = scmp.eq.s32.totalorder %s35, 1
      %p223 = por %p221, %p222
      %p224 = scmp.ne.s32.totalorder %s213, %s214
      %p225 = scmp.eq.s32.totalorder %s35, 0
      %p226 = por %p224, %p225
      %p227 = scmp.ne.s32.totalorder %s213, %s214
      %p228 = scmp.eq.s32.totalorder %s36, 1
      %p229 = por %p227, %p228
      %p231 = scmp.ne.s32.totalorder %s214, %s230
      %p232 = scmp.eq.s32.totalorder %s36, 0
      %p233 = por %p231, %p232
      %s234 = ssub.s32 %s37, %s49
      %p235 = scmp.eq.s32.totalorder %s234, 0
      %s237 = sadd.s32 %s236, 1
      %s238 = scalar_select %p235, %s236, %s237
      %p241 = pneg %p235
      %p242 = scmp.eq.s32.totalorder %s30, 1
      %p243 = por %p241, %p242
      %p244 = scmp.ne.s32.totalorder %s236, %s239
      %p245 = scmp.eq.s32.totalorder %s30, 0
      %p246 = por %p244, %p245
      %p247 = scmp.ne.s32.totalorder %s236, %s239
      %p248 = scmp.eq.s32.totalorder %s35, 1
      %p249 = por %p247, %p248
      %p250 = scmp.ne.s32.totalorder %s239, %s240
      %p251 = scmp.eq.s32.totalorder %s35, 0
      %p252 = por %p250, %p251
      %p253 = scmp.ne.s32.totalorder %s239, %s240
      %p254 = scmp.eq.s32.totalorder %s36, 1
      %p255 = por %p253, %p254
      %p257 = scmp.ne.s32.totalorder %s240, %s256
      %p258 = scmp.eq.s32.totalorder %s36, 0
      %p259 = por %p257, %p258
      %s260 = ssub.s32 %s37, %s49
      %p261 = scmp.eq.s32.totalorder %s260, 0
      %s263 = sadd.s32 %s262, 1
      %s264 = scalar_select %p261, %s262, %s263
      %p267 = pneg %p261
      %p268 = scmp.eq.s32.totalorder %s30, 1
      %p269 = por %p267, %p268
      %p270 = scmp.ne.s32.totalorder %s262, %s265
      %p271 = scmp.eq.s32.totalorder %s30, 0
      %p272 = por %p270, %p271
      %p273 = scmp.ne.s32.totalorder %s262, %s265
      %p274 = scmp.eq.s32.totalorder %s35, 1
      %p275 = por %p273, %p274
      %p276 = scmp.ne.s32.totalorder %s265, %s266
      %p277 = scmp.eq.s32.totalorder %s35, 0
      %p278 = por %p276, %p277
      %p279 = scmp.ne.s32.totalorder %s265, %s266
      %p280 = scmp.eq.s32.totalorder %s36, 1
      %p281 = por %p279, %p280
      %p283 = scmp.ne.s32.totalorder %s266, %s282
      %p284 = scmp.eq.s32.totalorder %s36, 0
      %p285 = por %p283, %p284
      %s286 = ssub.s32 %s37, %s49
      %s287 = ssub.s32 %s38, %s45
      %s288 = sor.u32 %s286, %s287
      %p289 = scmp.eq.s32.totalorder %s288, 0
      %s291 = sadd.s32 %s290, 1
      %s292 = scalar_select %p289, %s290, %s291
      %p295 = pneg %p289
      %p296 = scmp.eq.s32.totalorder %s30, 1
      %p297 = por %p295, %p296
      %p298 = scmp.ne.s32.totalorder %s290, %s293
      %p299 = scmp.eq.s32.totalorder %s30, 0
      %p300 = por %p298, %p299
      %p301 = scmp.ne.s32.totalorder %s290, %s293
      %p302 = scmp.eq.s32.totalorder %s35, 1
      %p303 = por %p301, %p302
      %p304 = scmp.ne.s32.totalorder %s293, %s294
      %p305 = scmp.eq.s32.totalorder %s35, 0
      %p306 = por %p304, %p305
      %p307 = scmp.ne.s32.totalorder %s293, %s294
      %p308 = scmp.eq.s32.totalorder %s36, 1
      %p309 = por %p307, %p308
      %p311 = scmp.ne.s32.totalorder %s294, %s310
      %p312 = scmp.eq.s32.totalorder %s36, 0
      %p313 = por %p311, %p312
      %p314 = scmp.le.s32.totalorder 1, %s30
      %p315 = scmp.lt.s32.totalorder %s30, 3
      %p316 = pnand %p314, %p315
      %p317 = pneg %p316
      // Predicated region
      $region9: #{netfc2_forward.1} parent=5 // pred_check
        _
      $region10: #{netfc2_forward.1} parent=5 // pred_check_branch
        %319 = sbr.rel (%p316) target = $region12
      $region11: #{netfc2_forward.1} parent=5 // pred_region
        %s320 = ssub.s32 %s30, 1
      $region12: #{netfc2_forward.1} parent=5 // pred_fallthru
        _
      %p321 = scmp.lt.s32.totalorder %s30, 2
      // Predicated region
      $region13: #{netfc2_forward.1} parent=5 // pred_check
        %p322 = pneg %p321
      $region14: #{netfc2_forward.1} parent=5 // pred_check_branch
        %324 = sbr.rel (%p322) target = $region16
      $region15: #{netfc2_forward.1} parent=5 // pred_region
        // Predicated region
        $region17: #{netfc2_forward.1} parent=15 // pred_check
          %p325 = pneg %p64
        $region18: #{netfc2_forward.1} parent=15 // pred_check_branch
          %327 = sbr.rel (%p325) target = $region20
        $region19: #{netfc2_forward.1} parent=15 // pred_region
          %p328 = scmp.lt.s32.totalorder %s37, 1
          %s329 = scalar_select %p328, %s37, 1
          %p330 = scmp.lt.s32.totalorder %s38, 0
          %s331 = scalar_select %p330, %s38, 0
          %s332 = smul.addr %s331, 8
          %s333 = smul.addr %s329, 8
          %s334 = sadd.s32 %s332, %s333
          %s335 = smul.addr %s334, 4
          %s336 = scalar_lea.vmem %s0, %s335
        $region20: #{netfc2_forward.1} parent=15 // pred_fallthru
          _
        // Predicated region
        $region21: #{netfc2_forward.1} parent=15 // pred_check
          %p337 = pneg %p90
        $region22: #{netfc2_forward.1} parent=15 // pred_check_branch
          %339 = sbr.rel (%p337) target = $region24
        $region23: #{netfc2_forward.1} parent=15 // pred_region
          %s340 = sand.u32 %s80, 1
          %s341 = scalar_lea.sflag [#allocation3], %s340
          %s342 = sand.u32 %s80, 1
          %s343 = smul.addr %s342, 4096
          %s344 = scalar_lea.vmem [#allocation2], %s343
          %s346 = ssub.s32 65536, 65536
          %347 = vsyncadd %s341, %s346
          %s348 = smul.addr %s37, 1024
          %s349 = smul.addr %s348, 64
          %s350 = scalar_lea.hbm %s1, %s349
          %s351 = sshll.u32 %s344, 4
          %s352 = int_to_ptr.vmem [resolvable:$true] %s351
          %357 = dma.hbm_to_vmem [thread:$0]  %s350, 65536, %s352, %s341, 512, 512, 32
        $region24: #{netfc2_forward.1} parent=15 // pred_fallthru
          _
        // Predicated region
        $region25: #{netfc2_forward.1} parent=15 // pred_check
          %p358 = pneg %p116
        $region26: #{netfc2_forward.1} parent=15 // pred_check_branch
          %360 = sbr.rel (%p358) target = $region28
        $region27: #{netfc2_forward.1} parent=15 // pred_region
          %s361 = sand.u32 %s30, 1
          %s362 = scalar_lea.sflag [#allocation5], %s361
          %s363 = sand.u32 %s106, 1
          %s364 = smul.addr %s363, 8
          %s365 = scalar_lea.vmem [#allocation4], %s364
          %s367 = ssub.s32 128, 128
          %368 = vsyncadd %s362, %s367
          %s369 = smul.addr %s37, 8
          %s370 = smul.addr %s369, 16
          %s371 = scalar_lea.hbm %s2, %s370
          %s373 = sshll.u32 %s365, 4
          %s374 = int_to_ptr.vmem [resolvable:$true] %s373
          %376 = dma.hbm_to_vmem [thread:$0]  %s371, 128, %s374, %s362
        $region28: #{netfc2_forward.1} parent=15 // pred_fallthru
          _
        // Predicated region
        $region29: #{netfc2_forward.1} parent=15 // pred_check
          %p377 = pneg %p142
        $region30: #{netfc2_forward.1} parent=15 // pred_check_branch
          %379 = sbr.rel (%p377) target = $region32
        $region31: #{netfc2_forward.1} parent=15 // pred_region
          %s380 = sand.u32 %s30, 1
          %s381 = scalar_lea.sflag [#allocation5], %s380
          %s382 = sand.u32 %s132, 1
          %s383 = smul.addr %s382, 1024
          %s384 = scalar_lea.vmem [#allocation6], %s383
          %s386 = ssub.s32 16384, 16384
          %387 = vsyncadd %s381, %s386
          %s388 = smul.addr %s37, 256
          %s389 = smul.addr %s388, 64
          %s390 = scalar_lea.hbm %s3, %s389
          %s391 = sshll.u32 %s384, 4
          %s392 = int_to_ptr.vmem [resolvable:$true] %s391
          %397 = dma.hbm_to_vmem [thread:$0]  %s390, 16384, %s392, %s381, 128, 128, 8
        $region32: #{netfc2_forward.1} parent=15 // pred_fallthru
          _
        // Predicated region
        $region33: #{netfc2_forward.1} parent=15 // pred_check
          %p398 = pneg %p168
        $region34: #{netfc2_forward.1} parent=15 // pred_check_branch
          %400 = sbr.rel (%p398) target = $region36
        $region35: #{netfc2_forward.1} parent=15 // pred_region
          %s401 = sand.u32 %s30, 1
          %s402 = scalar_lea.sflag [#allocation8], %s401
          %s403 = sand.u32 %s158, 1
          %s404 = smul.addr %s403, 2
          %s405 = scalar_lea.vmem [#allocation7], %s404
          %s407 = ssub.s32 32, 32
          %408 = vsyncadd %s402, %s407
          %s409 = smul.addr %s37, 2
          %s410 = smul.addr %s409, 16
          %s411 = scalar_lea.hbm %s4, %s410
          %s413 = sshll.u32 %s405, 4
          %s414 = int_to_ptr.vmem [resolvable:$true] %s413
          %416 = dma.hbm_to_vmem [thread:$0]  %s411, 32, %s414, %s402
        $region36: #{netfc2_forward.1} parent=15 // pred_fallthru
          _
        // Predicated region
        $region37: #{netfc2_forward.1} parent=15 // pred_check
          %p417 = pneg %p194
        $region38: #{netfc2_forward.1} parent=15 // pred_check_branch
          %419 = sbr.rel (%p417) target = $region40
        $region39: #{netfc2_forward.1} parent=15 // pred_region
          %s420 = sand.u32 %s30, 1
          %s421 = scalar_lea.sflag [#allocation8], %s420
          %s422 = sand.u32 %s184, 1
          %s423 = smul.addr %s422, 1024
          %s424 = scalar_lea.vmem [#allocation9], %s423
          %s426 = ssub.s32 16384, 16384
          %427 = vsyncadd %s421, %s426
          %s428 = smul.addr %s37, 256
          %s429 = smul.addr %s428, 64
          %s430 = scalar_lea.hbm %s5, %s429
          %s431 = sshll.u32 %s424, 4
          %s432 = int_to_ptr.vmem [resolvable:$true] %s431
          %437 = dma.hbm_to_vmem [thread:$0]  %s430, 16384, %s432, %s421, 512, 512, 32
        $region40: #{netfc2_forward.1} parent=15 // pred_fallthru
          _
        // Predicated region
        $region41: #{netfc2_forward.1} parent=15 // pred_check
          %p438 = pneg %p220
        $region42: #{netfc2_forward.1} parent=15 // pred_check_branch
          %440 = sbr.rel (%p438) target = $region44
        $region43: #{netfc2_forward.1} parent=15 // pred_region
          %s441 = sand.u32 %s30, 1
          %s442 = scalar_lea.sflag [#allocation11], %s441
          %s443 = sand.u32 %s210, 1
          %s444 = smul.addr %s443, 8
          %s445 = scalar_lea.vmem [#allocation10], %s444
          %s447 = ssub.s32 128, 128
          %448 = vsyncadd %s442, %s447
          %s449 = smul.addr %s37, 8
          %s450 = smul.addr %s449, 16
          %s451 = scalar_lea.hbm %s6, %s450
          %s453 = sshll.u32 %s445, 4
          %s454 = int_to_ptr.vmem [resolvable:$true] %s453
          %456 = dma.hbm_to_vmem [thread:$0]  %s451, 128, %s454, %s442
        $region44: #{netfc2_forward.1} parent=15 // pred_fallthru
          _
        // Predicated region
        $region45: #{netfc2_forward.1} parent=15 // pred_check
          %p457 = pneg %p246
        $region46: #{netfc2_forward.1} parent=15 // pred_check_branch
          %459 = sbr.rel (%p457) target = $region48
        $region47: #{netfc2_forward.1} parent=15 // pred_region
          %s460 = sand.u32 %s30, 1
          %s461 = scalar_lea.sflag [#allocation11], %s460
          %s462 = sand.u32 %s236, 1
          %s463 = smul.addr %s462, 4096
          %s464 = scalar_lea.vmem [#allocation12], %s463
          %s466 = ssub.s32 65536, 65536
          %467 = vsyncadd %s461, %s466
          %s468 = smul.addr %s37, 1024
          %s469 = smul.addr %s468, 64
          %s470 = scalar_lea.hbm %s7, %s469
          %s471 = sshll.u32 %s464, 4
          %s472 = int_to_ptr.vmem [resolvable:$true] %s471
          %477 = dma.hbm_to_vmem [thread:$0]  %s470, 65536, %s472, %s461, 512, 512, 32
        $region48: #{netfc2_forward.1} parent=15 // pred_fallthru
          _
        // Predicated region
        $region49: #{netfc2_forward.1} parent=15 // pred_check
          %p478 = pneg %p272
        $region50: #{netfc2_forward.1} parent=15 // pred_check_branch
          %480 = sbr.rel (%p478) target = $region52
        $region51: #{netfc2_forward.1} parent=15 // pred_region
          %s481 = sand.u32 %s262, 1
          %s482 = scalar_lea.sflag [#allocation14], %s481
          %s483 = sand.u32 %s262, 1
          %s484 = smul.addr %s483, 8
          %s485 = scalar_lea.vmem [#allocation13], %s484
          %s487 = ssub.s32 128, 128
          %488 = vsyncadd %s482, %s487
          %s489 = smul.addr %s37, 8
          %s490 = smul.addr %s489, 16
          %s491 = scalar_lea.hbm %s8, %s490
          %s493 = sshll.u32 %s485, 4
          %s494 = int_to_ptr.vmem [resolvable:$true] %s493
          %496 = dma.hbm_to_vmem [thread:$0]  %s491, 128, %s494, %s482
        $region52: #{netfc2_forward.1} parent=15 // pred_fallthru
          _
      $region16: #{netfc2_forward.1} parent=5 // pred_fallthru
        _
      %p497 = scmp.le.s32.totalorder 1, %s30
      %p498 = scmp.lt.s32.totalorder %s30, 3
      %p499 = pnand %p497, %p498
      %p500 = pneg %p499
      // Predicated region
      $region53: #{netfc2_forward.1} parent=5 // pred_check
        _
      $region54: #{netfc2_forward.1} parent=5 // pred_check_branch
        %502 = sbr.rel (%p499) target = $region56
      $region55: #{netfc2_forward.1} parent=5 // pred_region
        %s503 = ssub.s32 %s30, 1
        %s504 = sand.u32 %s83, 1
        %s505 = scalar_lea.sflag [#allocation3], %s504
        %s506 = sand.u32 %s83, 1
        %s507 = smul.addr %s506, 4096
        %s508 = scalar_lea.vmem [#allocation2], %s507
        // Predicated region
        $region57: #{netfc2_forward.1} parent=55 // pred_check
          %p509 = pneg %p96
        $region58: #{netfc2_forward.1} parent=55 // pred_check_branch
          %511 = sbr.rel (%p509) target = $region60
        $region59: #{netfc2_forward.1} parent=55 // pred_region
          %512 = dma.done %s505, 65536
        $region60: #{netfc2_forward.1} parent=55 // pred_fallthru
          _
        %s513 = sand.u32 %s35, 1
        %s514 = scalar_lea.sflag [#allocation5], %s513
        %s515 = sand.u32 %s109, 1
        %s516 = smul.addr %s515, 8
        %s517 = scalar_lea.vmem [#allocation4], %s516
        // Predicated region
        $region61: #{netfc2_forward.1} parent=55 // pred_check
          %p518 = pneg %p122
        $region62: #{netfc2_forward.1} parent=55 // pred_check_branch
          %520 = sbr.rel (%p518) target = $region64
        $region63: #{netfc2_forward.1} parent=55 // pred_region
          %521 = dma.done %s514, 128
        $region64: #{netfc2_forward.1} parent=55 // pred_fallthru
          _
        %s522 = sand.u32 %s35, 1
        %s523 = scalar_lea.sflag [#allocation5], %s522
        %s524 = sand.u32 %s135, 1
        %s525 = smul.addr %s524, 1024
        %s526 = scalar_lea.vmem [#allocation6], %s525
        // Predicated region
        $region65: #{netfc2_forward.1} parent=55 // pred_check
          %p527 = pneg %p148
        $region66: #{netfc2_forward.1} parent=55 // pred_check_branch
          %529 = sbr.rel (%p527) target = $region68
        $region67: #{netfc2_forward.1} parent=55 // pred_region
          %530 = dma.done %s523, 16384
        $region68: #{netfc2_forward.1} parent=55 // pred_fallthru
          _
        %s531 = sand.u32 %s35, 1
        %s532 = scalar_lea.sflag [#allocation8], %s531
        %s533 = sand.u32 %s161, 1
        %s534 = smul.addr %s533, 2
        %s535 = scalar_lea.vmem [#allocation7], %s534
        // Predicated region
        $region69: #{netfc2_forward.1} parent=55 // pred_check
          %p536 = pneg %p174
        $region70: #{netfc2_forward.1} parent=55 // pred_check_branch
          %538 = sbr.rel (%p536) target = $region72
        $region71: #{netfc2_forward.1} parent=55 // pred_region
          %539 = dma.done %s532, 32
        $region72: #{netfc2_forward.1} parent=55 // pred_fallthru
          _
        %s540 = sand.u32 %s35, 1
        %s541 = scalar_lea.sflag [#allocation8], %s540
        %s542 = sand.u32 %s187, 1
        %s543 = smul.addr %s542, 1024
        %s544 = scalar_lea.vmem [#allocation9], %s543
        // Predicated region
        $region73: #{netfc2_forward.1} parent=55 // pred_check
          %p545 = pneg %p200
        $region74: #{netfc2_forward.1} parent=55 // pred_check_branch
          %547 = sbr.rel (%p545) target = $region76
        $region75: #{netfc2_forward.1} parent=55 // pred_region
          %548 = dma.done %s541, 16384
        $region76: #{netfc2_forward.1} parent=55 // pred_fallthru
          _
        %s549 = sand.u32 %s35, 1
        %s550 = scalar_lea.sflag [#allocation11], %s549
        %s551 = sand.u32 %s213, 1
        %s552 = smul.addr %s551, 8
        %s553 = scalar_lea.vmem [#allocation10], %s552
        // Predicated region
        $region77: #{netfc2_forward.1} parent=55 // pred_check
          %p554 = pneg %p226
        $region78: #{netfc2_forward.1} parent=55 // pred_check_branch
          %556 = sbr.rel (%p554) target = $region80
        $region79: #{netfc2_forward.1} parent=55 // pred_region
          %557 = dma.done %s550, 128
        $region80: #{netfc2_forward.1} parent=55 // pred_fallthru
          _
        %s558 = sand.u32 %s35, 1
        %s559 = scalar_lea.sflag [#allocation11], %s558
        %s560 = sand.u32 %s239, 1
        %s561 = smul.addr %s560, 4096
        %s562 = scalar_lea.vmem [#allocation12], %s561
        // Predicated region
        $region81: #{netfc2_forward.1} parent=55 // pred_check
          %p563 = pneg %p252
        $region82: #{netfc2_forward.1} parent=55 // pred_check_branch
          %565 = sbr.rel (%p563) target = $region84
        $region83: #{netfc2_forward.1} parent=55 // pred_region
          %566 = dma.done %s559, 65536
        $region84: #{netfc2_forward.1} parent=55 // pred_fallthru
          _
        %s567 = sand.u32 %s265, 1
        %s568 = scalar_lea.sflag [#allocation14], %s567
        %s569 = sand.u32 %s265, 1
        %s570 = smul.addr %s569, 8
        %s571 = scalar_lea.vmem [#allocation13], %s570
        // Predicated region
        $region85: #{netfc2_forward.1} parent=55 // pred_check
          %p572 = pneg %p278
        $region86: #{netfc2_forward.1} parent=55 // pred_check_branch
          %574 = sbr.rel (%p572) target = $region88
        $region87: #{netfc2_forward.1} parent=55 // pred_region
          %575 = dma.done %s568, 128
        $region88: #{netfc2_forward.1} parent=55 // pred_fallthru
          _
        %p576 = scmp.lt.s32.totalorder %s39, 1
        %s577 = scalar_select %p576, %s39, 1
        %p578 = scmp.lt.s32.totalorder %s40, 0
        %s579 = scalar_select %p578, %s40, 0
        %s580 = smul.addr %s579, 8
        %s581 = smul.addr %s577, 8
        %s582 = sadd.s32 %s580, %s581
        %s583 = smul.addr %s582, 4
        %s584 = scalar_lea.vmem %s0, %s583
        %p585 = pneg %p70
        %p586 = pneg %p67
        %s587 = sand.u32 %s83, 1
        %s588 = scalar_lea.sflag [#allocation3], %s587
        %s589 = sand.u32 %s83, 1
        %s590 = smul.addr %s589, 4096
        %s591 = scalar_lea.vmem [#allocation2], %s590
        %p592 = pneg %p96
        %p593 = pneg %p93
        %s594 = sand.u32 %s35, 1
        %s595 = scalar_lea.sflag [#allocation5], %s594
        %s596 = sand.u32 %s109, 1
        %s597 = smul.addr %s596, 8
        %s598 = scalar_lea.vmem [#allocation4], %s597
        %p599 = pneg %p122
        %p600 = pneg %p119
        %s601 = sand.u32 %s35, 1
        %s602 = scalar_lea.sflag [#allocation5], %s601
        %s603 = sand.u32 %s135, 1
        %s604 = smul.addr %s603, 1024
        %s605 = scalar_lea.vmem [#allocation6], %s604
        %p606 = pneg %p148
        %p607 = pneg %p145
        %s608 = sand.u32 %s35, 1
        %s609 = scalar_lea.sflag [#allocation8], %s608
        %s610 = sand.u32 %s161, 1
        %s611 = smul.addr %s610, 2
        %s612 = scalar_lea.vmem [#allocation7], %s611
        %p613 = pneg %p174
        %p614 = pneg %p171
        %s615 = sand.u32 %s35, 1
        %s616 = scalar_lea.sflag [#allocation8], %s615
        %s617 = sand.u32 %s187, 1
        %s618 = smul.addr %s617, 1024
        %s619 = scalar_lea.vmem [#allocation9], %s618
        %p620 = pneg %p200
        %p621 = pneg %p197
        %s622 = sand.u32 %s35, 1
        %s623 = scalar_lea.sflag [#allocation11], %s622
        %s624 = sand.u32 %s213, 1
        %s625 = smul.addr %s624, 8
        %s626 = scalar_lea.vmem [#allocation10], %s625
        %p627 = pneg %p226
        %p628 = pneg %p223
        %s629 = sand.u32 %s35, 1
        %s630 = scalar_lea.sflag [#allocation11], %s629
        %s631 = sand.u32 %s239, 1
        %s632 = smul.addr %s631, 4096
        %s633 = scalar_lea.vmem [#allocation12], %s632
        %p634 = pneg %p252
        %p635 = pneg %p249
        %s636 = sand.u32 %s265, 1
        %s637 = scalar_lea.sflag [#allocation14], %s636
        %s638 = sand.u32 %s265, 1
        %s639 = smul.addr %s638, 8
        %s640 = scalar_lea.vmem [#allocation13], %s639
        %p641 = pneg %p278
        %p642 = pneg %p275
        %p643 = pneg %p306
        %p644 = pneg %p303
        %p645 = scmp.lt.s32.totalorder %s39, 1
        %s646 = scalar_select %p645, %s39, 1
        %p647 = scmp.lt.s32.totalorder %s40, 0
        %s648 = scalar_select %p647, %s40, 0
        %s649 = smul.addr %s648, 8
        %s650 = smul.addr %s646, 8
        %s651 = sadd.s32 %s649, %s650
        %s652 = smul.addr %s651, 8
        %s653 = scalar_lea.vmem %s9, %s652
        %p654 = scmp.lt.s32.totalorder %s39, 1
        %s655 = scalar_select %p654, %s39, 1
        %p656 = scmp.lt.s32.totalorder %s40, 0
        %s657 = scalar_select %p656, %s40, 0
        %s658 = smul.addr %s657, 8
        %s659 = smul.addr %s655, 8
        %s660 = sadd.s32 %s658, %s659
        %s661 = smul.addr %s660, 4
        %s662 = scalar_lea.vmem %s0, %s661
        %p663 = scmp.lt.s32.totalorder %s39, 1
        %s664 = scalar_select %p663, %s39, 1
        %p665 = scmp.lt.s32.totalorder %s40, 0
        %s666 = scalar_select %p665, %s40, 0
        %s667 = smul.addr %s666, 8
        %s668 = smul.addr %s664, 8
        %s669 = sadd.s32 %s667, %s668
        %s670 = smul.addr %s669, 8
        %s671 = scalar_lea.vmem %s9, %s670
        %v672 = vld [vmem:[%s662] sm:$0xff]
        %v673 = vld [vmem:[%s662 + $0x8] sm:$0xff]
        %v674 = vld [vmem:[%s662 + $0x10] sm:$0xff]
        %v675 = vld [vmem:[%s662 + $0x18] sm:$0xff]
        %v676 = vld [vmem:[%s508] sm:$0xff]
        %v677 = vld [vmem:[%s508 + $0x8] sm:$0xff]
        %v678 = vld [vmem:[%s508 + $0x10] sm:$0xff]
        %v679 = vld [vmem:[%s508 + $0x18] sm:$0xff]
        %v680 = vld [vmem:[%s508 + $0x20] sm:$0xff]
        %v681 = vld [vmem:[%s508 + $0x28] sm:$0xff]
        %v682 = vld [vmem:[%s508 + $0x30] sm:$0xff]
        %v683 = vld [vmem:[%s508 + $0x38] sm:$0xff]
        %v684 = vld [vmem:[%s508 + $0x40] sm:$0xff]
        %v685 = vld [vmem:[%s508 + $0x48] sm:$0xff]
        %v686 = vld [vmem:[%s508 + $0x50] sm:$0xff]
        %v687 = vld [vmem:[%s508 + $0x58] sm:$0xff]
        %v688 = vld [vmem:[%s508 + $0x60] sm:$0xff]
        %v689 = vld [vmem:[%s508 + $0x68] sm:$0xff]
        %v690 = vld [vmem:[%s508 + $0x70] sm:$0xff]
        %v691 = vld [vmem:[%s508 + $0x78] sm:$0xff]
        %v692 = vld [vmem:[%s508 + $0x80] sm:$0xff]
        %v693 = vld [vmem:[%s508 + $0x88] sm:$0xff]
        %v694 = vld [vmem:[%s508 + $0x90] sm:$0xff]
        %v695 = vld [vmem:[%s508 + $0x98] sm:$0xff]
        %v696 = vld [vmem:[%s508 + $0xa0] sm:$0xff]
        %v697 = vld [vmem:[%s508 + $0xa8] sm:$0xff]
        %v698 = vld [vmem:[%s508 + $0xb0] sm:$0xff]
        %v699 = vld [vmem:[%s508 + $0xb8] sm:$0xff]
        %v700 = vld [vmem:[%s508 + $0xc0] sm:$0xff]
        %v701 = vld [vmem:[%s508 + $0xc8] sm:$0xff]
        %v702 = vld [vmem:[%s508 + $0xd0] sm:$0xff]
        %v703 = vld [vmem:[%s508 + $0xd8] sm:$0xff]
        %v704 = vld [vmem:[%s508 + $0xe0] sm:$0xff]
        %v705 = vld [vmem:[%s508 + $0xe8] sm:$0xff]
        %v706 = vld [vmem:[%s508 + $0xf0] sm:$0xff]
        %v707 = vld [vmem:[%s508 + $0xf8] sm:$0xff]
        %v708 = vld [vmem:[%s508 + $0x100] sm:$0xff]
        %v709 = vld [vmem:[%s508 + $0x108] sm:$0xff]
        %v710 = vld [vmem:[%s508 + $0x110] sm:$0xff]
        %v711 = vld [vmem:[%s508 + $0x118] sm:$0xff]
        %v712 = vld [vmem:[%s508 + $0x120] sm:$0xff]
        %v713 = vld [vmem:[%s508 + $0x128] sm:$0xff]
        %v714 = vld [vmem:[%s508 + $0x130] sm:$0xff]
        %v715 = vld [vmem:[%s508 + $0x138] sm:$0xff]
        %v716 = vld [vmem:[%s508 + $0x140] sm:$0xff]
        %v717 = vld [vmem:[%s508 + $0x148] sm:$0xff]
        %v718 = vld [vmem:[%s508 + $0x150] sm:$0xff]
        %v719 = vld [vmem:[%s508 + $0x158] sm:$0xff]
        %v720 = vld [vmem:[%s508 + $0x160] sm:$0xff]
        %v721 = vld [vmem:[%s508 + $0x168] sm:$0xff]
        %v722 = vld [vmem:[%s508 + $0x170] sm:$0xff]
        %v723 = vld [vmem:[%s508 + $0x178] sm:$0xff]
        %v724 = vld [vmem:[%s508 + $0x180] sm:$0xff]
        %v725 = vld [vmem:[%s508 + $0x188] sm:$0xff]
        %v726 = vld [vmem:[%s508 + $0x190] sm:$0xff]
        %v727 = vld [vmem:[%s508 + $0x198] sm:$0xff]
        %v728 = vld [vmem:[%s508 + $0x1a0] sm:$0xff]
        %v729 = vld [vmem:[%s508 + $0x1a8] sm:$0xff]
        %v730 = vld [vmem:[%s508 + $0x1b0] sm:$0xff]
        %v731 = vld [vmem:[%s508 + $0x1b8] sm:$0xff]
        %v732 = vld [vmem:[%s508 + $0x1c0] sm:$0xff]
        %v733 = vld [vmem:[%s508 + $0x1c8] sm:$0xff]
        %v734 = vld [vmem:[%s508 + $0x1d0] sm:$0xff]
        %v735 = vld [vmem:[%s508 + $0x1d8] sm:$0xff]
        %v736 = vld [vmem:[%s508 + $0x1e0] sm:$0xff]
        %v737 = vld [vmem:[%s508 + $0x1e8] sm:$0xff]
        %v738 = vld [vmem:[%s508 + $0x1f0] sm:$0xff]
        %v739 = vld [vmem:[%s508 + $0x1f8] sm:$0xff]
        %v740 = vld [vmem:[%s508 + $0x200] sm:$0xff]
        %v741 = vld [vmem:[%s508 + $0x208] sm:$0xff]
        %v742 = vld [vmem:[%s508 + $0x210] sm:$0xff]
        %v743 = vld [vmem:[%s508 + $0x218] sm:$0xff]
        %v744 = vld [vmem:[%s508 + $0x220] sm:$0xff]
        %v745 = vld [vmem:[%s508 + $0x228] sm:$0xff]
        %v746 = vld [vmem:[%s508 + $0x230] sm:$0xff]
        %v747 = vld [vmem:[%s508 + $0x238] sm:$0xff]
        %v748 = vld [vmem:[%s508 + $0x240] sm:$0xff]
        %v749 = vld [vmem:[%s508 + $0x248] sm:$0xff]
        %v750 = vld [vmem:[%s508 + $0x250] sm:$0xff]
        %v751 = vld [vmem:[%s508 + $0x258] sm:$0xff]
        %v752 = vld [vmem:[%s508 + $0x260] sm:$0xff]
        %v753 = vld [vmem:[%s508 + $0x268] sm:$0xff]
        %v754 = vld [vmem:[%s508 + $0x270] sm:$0xff]
        %v755 = vld [vmem:[%s508 + $0x278] sm:$0xff]
        %v756 = vld [vmem:[%s508 + $0x280] sm:$0xff]
        %v757 = vld [vmem:[%s508 + $0x288] sm:$0xff]
        %v758 = vld [vmem:[%s508 + $0x290] sm:$0xff]
        %v759 = vld [vmem:[%s508 + $0x298] sm:$0xff]
        %v760 = vld [vmem:[%s508 + $0x2a0] sm:$0xff]
        %v761 = vld [vmem:[%s508 + $0x2a8] sm:$0xff]
        %v762 = vld [vmem:[%s508 + $0x2b0] sm:$0xff]
        %v763 = vld [vmem:[%s508 + $0x2b8] sm:$0xff]
        %v764 = vld [vmem:[%s508 + $0x2c0] sm:$0xff]
        %v765 = vld [vmem:[%s508 + $0x2c8] sm:$0xff]
        %v766 = vld [vmem:[%s508 + $0x2d0] sm:$0xff]
        %v767 = vld [vmem:[%s508 + $0x2d8] sm:$0xff]
        %v768 = vld [vmem:[%s508 + $0x2e0] sm:$0xff]
        %v769 = vld [vmem:[%s508 + $0x2e8] sm:$0xff]
        %v770 = vld [vmem:[%s508 + $0x2f0] sm:$0xff]
        %v771 = vld [vmem:[%s508 + $0x2f8] sm:$0xff]
        %v772 = vld [vmem:[%s508 + $0x300] sm:$0xff]
        %v773 = vld [vmem:[%s508 + $0x308] sm:$0xff]
        %v774 = vld [vmem:[%s508 + $0x310] sm:$0xff]
        %v775 = vld [vmem:[%s508 + $0x318] sm:$0xff]
        %v776 = vld [vmem:[%s508 + $0x320] sm:$0xff]
        %v777 = vld [vmem:[%s508 + $0x328] sm:$0xff]
        %v778 = vld [vmem:[%s508 + $0x330] sm:$0xff]
        %v779 = vld [vmem:[%s508 + $0x338] sm:$0xff]
        %v780 = vld [vmem:[%s508 + $0x340] sm:$0xff]
        %v781 = vld [vmem:[%s508 + $0x348] sm:$0xff]
        %v782 = vld [vmem:[%s508 + $0x350] sm:$0xff]
        %v783 = vld [vmem:[%s508 + $0x358] sm:$0xff]
        %v784 = vld [vmem:[%s508 + $0x360] sm:$0xff]
        %v785 = vld [vmem:[%s508 + $0x368] sm:$0xff]
        %v786 = vld [vmem:[%s508 + $0x370] sm:$0xff]
        %v787 = vld [vmem:[%s508 + $0x378] sm:$0xff]
        %v788 = vld [vmem:[%s508 + $0x380] sm:$0xff]
        %v789 = vld [vmem:[%s508 + $0x388] sm:$0xff]
        %v790 = vld [vmem:[%s508 + $0x390] sm:$0xff]
        %v791 = vld [vmem:[%s508 + $0x398] sm:$0xff]
        %v792 = vld [vmem:[%s508 + $0x3a0] sm:$0xff]
        %v793 = vld [vmem:[%s508 + $0x3a8] sm:$0xff]
        %v794 = vld [vmem:[%s508 + $0x3b0] sm:$0xff]
        %v795 = vld [vmem:[%s508 + $0x3b8] sm:$0xff]
        %v796 = vld [vmem:[%s508 + $0x3c0] sm:$0xff]
        %v797 = vld [vmem:[%s508 + $0x3c8] sm:$0xff]
        %v798 = vld [vmem:[%s508 + $0x3d0] sm:$0xff]
        %v799 = vld [vmem:[%s508 + $0x3d8] sm:$0xff]
        %v800 = vld [vmem:[%s508 + $0x3e0] sm:$0xff]
        %v801 = vld [vmem:[%s508 + $0x3e8] sm:$0xff]
        %v802 = vld [vmem:[%s508 + $0x3f0] sm:$0xff]
        %v803 = vld [vmem:[%s508 + $0x3f8] sm:$0xff]
        %v804 = vld [vmem:[%s508 + $0x400] sm:$0xff]
        %v805 = vld [vmem:[%s508 + $0x408] sm:$0xff]
        %v806 = vld [vmem:[%s508 + $0x410] sm:$0xff]
        %v807 = vld [vmem:[%s508 + $0x418] sm:$0xff]
        %v808 = vld [vmem:[%s508 + $0x420] sm:$0xff]
        %v809 = vld [vmem:[%s508 + $0x428] sm:$0xff]
        %v810 = vld [vmem:[%s508 + $0x430] sm:$0xff]
        %v811 = vld [vmem:[%s508 + $0x438] sm:$0xff]
        %v812 = vld [vmem:[%s508 + $0x440] sm:$0xff]
        %v813 = vld [vmem:[%s508 + $0x448] sm:$0xff]
        %v814 = vld [vmem:[%s508 + $0x450] sm:$0xff]
        %v815 = vld [vmem:[%s508 + $0x458] sm:$0xff]
        %v816 = vld [vmem:[%s508 + $0x460] sm:$0xff]
        %v817 = vld [vmem:[%s508 + $0x468] sm:$0xff]
        %v818 = vld [vmem:[%s508 + $0x470] sm:$0xff]
        %v819 = vld [vmem:[%s508 + $0x478] sm:$0xff]
        %v820 = vld [vmem:[%s508 + $0x480] sm:$0xff]
        %v821 = vld [vmem:[%s508 + $0x488] sm:$0xff]
        %v822 = vld [vmem:[%s508 + $0x490] sm:$0xff]
        %v823 = vld [vmem:[%s508 + $0x498] sm:$0xff]
        %v824 = vld [vmem:[%s508 + $0x4a0] sm:$0xff]
        %v825 = vld [vmem:[%s508 + $0x4a8] sm:$0xff]
        %v826 = vld [vmem:[%s508 + $0x4b0] sm:$0xff]
        %v827 = vld [vmem:[%s508 + $0x4b8] sm:$0xff]
        %v828 = vld [vmem:[%s508 + $0x4c0] sm:$0xff]
        %v829 = vld [vmem:[%s508 + $0x4c8] sm:$0xff]
        %v830 = vld [vmem:[%s508 + $0x4d0] sm:$0xff]
        %v831 = vld [vmem:[%s508 + $0x4d8] sm:$0xff]
        %v832 = vld [vmem:[%s508 + $0x4e0] sm:$0xff]
        %v833 = vld [vmem:[%s508 + $0x4e8] sm:$0xff]
        %v834 = vld [vmem:[%s508 + $0x4f0] sm:$0xff]
        %v835 = vld [vmem:[%s508 + $0x4f8] sm:$0xff]
        %v836 = vld [vmem:[%s508 + $0x500] sm:$0xff]
        %v837 = vld [vmem:[%s508 + $0x508] sm:$0xff]
        %v838 = vld [vmem:[%s508 + $0x510] sm:$0xff]
        %v839 = vld [vmem:[%s508 + $0x518] sm:$0xff]
        %v840 = vld [vmem:[%s508 + $0x520] sm:$0xff]
        %v841 = vld [vmem:[%s508 + $0x528] sm:$0xff]
        %v842 = vld [vmem:[%s508 + $0x530] sm:$0xff]
        %v843 = vld [vmem:[%s508 + $0x538] sm:$0xff]
        %v844 = vld [vmem:[%s508 + $0x540] sm:$0xff]
        %v845 = vld [vmem:[%s508 + $0x548] sm:$0xff]
        %v846 = vld [vmem:[%s508 + $0x550] sm:$0xff]
        %v847 = vld [vmem:[%s508 + $0x558] sm:$0xff]
        %v848 = vld [vmem:[%s508 + $0x560] sm:$0xff]
        %v849 = vld [vmem:[%s508 + $0x568] sm:$0xff]
        %v850 = vld [vmem:[%s508 + $0x570] sm:$0xff]
        %v851 = vld [vmem:[%s508 + $0x578] sm:$0xff]
        %v852 = vld [vmem:[%s508 + $0x580] sm:$0xff]
        %v853 = vld [vmem:[%s508 + $0x588] sm:$0xff]
        %v854 = vld [vmem:[%s508 + $0x590] sm:$0xff]
        %v855 = vld [vmem:[%s508 + $0x598] sm:$0xff]
        %v856 = vld [vmem:[%s508 + $0x5a0] sm:$0xff]
        %v857 = vld [vmem:[%s508 + $0x5a8] sm:$0xff]
        %v858 = vld [vmem:[%s508 + $0x5b0] sm:$0xff]
        %v859 = vld [vmem:[%s508 + $0x5b8] sm:$0xff]
        %v860 = vld [vmem:[%s508 + $0x5c0] sm:$0xff]
        %v861 = vld [vmem:[%s508 + $0x5c8] sm:$0xff]
        %v862 = vld [vmem:[%s508 + $0x5d0] sm:$0xff]
        %v863 = vld [vmem:[%s508 + $0x5d8] sm:$0xff]
        %v864 = vld [vmem:[%s508 + $0x5e0] sm:$0xff]
        %v865 = vld [vmem:[%s508 + $0x5e8] sm:$0xff]
        %v866 = vld [vmem:[%s508 + $0x5f0] sm:$0xff]
        %v867 = vld [vmem:[%s508 + $0x5f8] sm:$0xff]
        %v868 = vld [vmem:[%s508 + $0x600] sm:$0xff]
        %v869 = vld [vmem:[%s508 + $0x608] sm:$0xff]
        %v870 = vld [vmem:[%s508 + $0x610] sm:$0xff]
        %v871 = vld [vmem:[%s508 + $0x618] sm:$0xff]
        %v872 = vld [vmem:[%s508 + $0x620] sm:$0xff]
        %v873 = vld [vmem:[%s508 + $0x628] sm:$0xff]
        %v874 = vld [vmem:[%s508 + $0x630] sm:$0xff]
        %v875 = vld [vmem:[%s508 + $0x638] sm:$0xff]
        %v876 = vld [vmem:[%s508 + $0x640] sm:$0xff]
        %v877 = vld [vmem:[%s508 + $0x648] sm:$0xff]
        %v878 = vld [vmem:[%s508 + $0x650] sm:$0xff]
        %v879 = vld [vmem:[%s508 + $0x658] sm:$0xff]
        %v880 = vld [vmem:[%s508 + $0x660] sm:$0xff]
        %v881 = vld [vmem:[%s508 + $0x668] sm:$0xff]
        %v882 = vld [vmem:[%s508 + $0x670] sm:$0xff]
        %v883 = vld [vmem:[%s508 + $0x678] sm:$0xff]
        %v884 = vld [vmem:[%s508 + $0x680] sm:$0xff]
        %v885 = vld [vmem:[%s508 + $0x688] sm:$0xff]
        %v886 = vld [vmem:[%s508 + $0x690] sm:$0xff]
        %v887 = vld [vmem:[%s508 + $0x698] sm:$0xff]
        %v888 = vld [vmem:[%s508 + $0x6a0] sm:$0xff]
        %v889 = vld [vmem:[%s508 + $0x6a8] sm:$0xff]
        %v890 = vld [vmem:[%s508 + $0x6b0] sm:$0xff]
        %v891 = vld [vmem:[%s508 + $0x6b8] sm:$0xff]
        %v892 = vld [vmem:[%s508 + $0x6c0] sm:$0xff]
        %v893 = vld [vmem:[%s508 + $0x6c8] sm:$0xff]
        %v894 = vld [vmem:[%s508 + $0x6d0] sm:$0xff]
        %v895 = vld [vmem:[%s508 + $0x6d8] sm:$0xff]
        %v896 = vld [vmem:[%s508 + $0x6e0] sm:$0xff]
        %v897 = vld [vmem:[%s508 + $0x6e8] sm:$0xff]
        %v898 = vld [vmem:[%s508 + $0x6f0] sm:$0xff]
        %v899 = vld [vmem:[%s508 + $0x6f8] sm:$0xff]
        %v900 = vld [vmem:[%s508 + $0x700] sm:$0xff]
        %v901 = vld [vmem:[%s508 + $0x708] sm:$0xff]
        %v902 = vld [vmem:[%s508 + $0x710] sm:$0xff]
        %v903 = vld [vmem:[%s508 + $0x718] sm:$0xff]
        %v904 = vld [vmem:[%s508 + $0x720] sm:$0xff]
        %v905 = vld [vmem:[%s508 + $0x728] sm:$0xff]
        %v906 = vld [vmem:[%s508 + $0x730] sm:$0xff]
        %v907 = vld [vmem:[%s508 + $0x738] sm:$0xff]
        %v908 = vld [vmem:[%s508 + $0x740] sm:$0xff]
        %v909 = vld [vmem:[%s508 + $0x748] sm:$0xff]
        %v910 = vld [vmem:[%s508 + $0x750] sm:$0xff]
        %v911 = vld [vmem:[%s508 + $0x758] sm:$0xff]
        %v912 = vld [vmem:[%s508 + $0x760] sm:$0xff]
        %v913 = vld [vmem:[%s508 + $0x768] sm:$0xff]
        %v914 = vld [vmem:[%s508 + $0x770] sm:$0xff]
        %v915 = vld [vmem:[%s508 + $0x778] sm:$0xff]
        %v916 = vld [vmem:[%s508 + $0x780] sm:$0xff]
        %v917 = vld [vmem:[%s508 + $0x788] sm:$0xff]
        %v918 = vld [vmem:[%s508 + $0x790] sm:$0xff]
        %v919 = vld [vmem:[%s508 + $0x798] sm:$0xff]
        %v920 = vld [vmem:[%s508 + $0x7a0] sm:$0xff]
        %v921 = vld [vmem:[%s508 + $0x7a8] sm:$0xff]
        %v922 = vld [vmem:[%s508 + $0x7b0] sm:$0xff]
        %v923 = vld [vmem:[%s508 + $0x7b8] sm:$0xff]
        %v924 = vld [vmem:[%s508 + $0x7c0] sm:$0xff]
        %v925 = vld [vmem:[%s508 + $0x7c8] sm:$0xff]
        %v926 = vld [vmem:[%s508 + $0x7d0] sm:$0xff]
        %v927 = vld [vmem:[%s508 + $0x7d8] sm:$0xff]
        %v928 = vld [vmem:[%s508 + $0x7e0] sm:$0xff]
        %v929 = vld [vmem:[%s508 + $0x7e8] sm:$0xff]
        %v930 = vld [vmem:[%s508 + $0x7f0] sm:$0xff]
        %v931 = vld [vmem:[%s508 + $0x7f8] sm:$0xff]
        %v932 = vld [vmem:[%s508 + $0x800] sm:$0xff]
        %v933 = vld [vmem:[%s508 + $0x808] sm:$0xff]
        %v934 = vld [vmem:[%s508 + $0x810] sm:$0xff]
        %v935 = vld [vmem:[%s508 + $0x818] sm:$0xff]
        %v936 = vld [vmem:[%s508 + $0x820] sm:$0xff]
        %v937 = vld [vmem:[%s508 + $0x828] sm:$0xff]
        %v938 = vld [vmem:[%s508 + $0x830] sm:$0xff]
        %v939 = vld [vmem:[%s508 + $0x838] sm:$0xff]
        %v940 = vld [vmem:[%s508 + $0x840] sm:$0xff]
        %v941 = vld [vmem:[%s508 + $0x848] sm:$0xff]
        %v942 = vld [vmem:[%s508 + $0x850] sm:$0xff]
        %v943 = vld [vmem:[%s508 + $0x858] sm:$0xff]
        %v944 = vld [vmem:[%s508 + $0x860] sm:$0xff]
        %v945 = vld [vmem:[%s508 + $0x868] sm:$0xff]
        %v946 = vld [vmem:[%s508 + $0x870] sm:$0xff]
        %v947 = vld [vmem:[%s508 + $0x878] sm:$0xff]
        %v948 = vld [vmem:[%s508 + $0x880] sm:$0xff]
        %v949 = vld [vmem:[%s508 + $0x888] sm:$0xff]
        %v950 = vld [vmem:[%s508 + $0x890] sm:$0xff]
        %v951 = vld [vmem:[%s508 + $0x898] sm:$0xff]
        %v952 = vld [vmem:[%s508 + $0x8a0] sm:$0xff]
        %v953 = vld [vmem:[%s508 + $0x8a8] sm:$0xff]
        %v954 = vld [vmem:[%s508 + $0x8b0] sm:$0xff]
        %v955 = vld [vmem:[%s508 + $0x8b8] sm:$0xff]
        %v956 = vld [vmem:[%s508 + $0x8c0] sm:$0xff]
        %v957 = vld [vmem:[%s508 + $0x8c8] sm:$0xff]
        %v958 = vld [vmem:[%s508 + $0x8d0] sm:$0xff]
        %v959 = vld [vmem:[%s508 + $0x8d8] sm:$0xff]
        %v960 = vld [vmem:[%s508 + $0x8e0] sm:$0xff]
        %v961 = vld [vmem:[%s508 + $0x8e8] sm:$0xff]
        %v962 = vld [vmem:[%s508 + $0x8f0] sm:$0xff]
        %v963 = vld [vmem:[%s508 + $0x8f8] sm:$0xff]
        %v964 = vld [vmem:[%s508 + $0x900] sm:$0xff]
        %v965 = vld [vmem:[%s508 + $0x908] sm:$0xff]
        %v966 = vld [vmem:[%s508 + $0x910] sm:$0xff]
        %v967 = vld [vmem:[%s508 + $0x918] sm:$0xff]
        %v968 = vld [vmem:[%s508 + $0x920] sm:$0xff]
        %v969 = vld [vmem:[%s508 + $0x928] sm:$0xff]
        %v970 = vld [vmem:[%s508 + $0x930] sm:$0xff]
        %v971 = vld [vmem:[%s508 + $0x938] sm:$0xff]
        %v972 = vld [vmem:[%s508 + $0x940] sm:$0xff]
        %v973 = vld [vmem:[%s508 + $0x948] sm:$0xff]
        %v974 = vld [vmem:[%s508 + $0x950] sm:$0xff]
        %v975 = vld [vmem:[%s508 + $0x958] sm:$0xff]
        %v976 = vld [vmem:[%s508 + $0x960] sm:$0xff]
        %v977 = vld [vmem:[%s508 + $0x968] sm:$0xff]
        %v978 = vld [vmem:[%s508 + $0x970] sm:$0xff]
        %v979 = vld [vmem:[%s508 + $0x978] sm:$0xff]
        %v980 = vld [vmem:[%s508 + $0x980] sm:$0xff]
        %v981 = vld [vmem:[%s508 + $0x988] sm:$0xff]
        %v982 = vld [vmem:[%s508 + $0x990] sm:$0xff]
        %v983 = vld [vmem:[%s508 + $0x998] sm:$0xff]
        %v984 = vld [vmem:[%s508 + $0x9a0] sm:$0xff]
        %v985 = vld [vmem:[%s508 + $0x9a8] sm:$0xff]
        %v986 = vld [vmem:[%s508 + $0x9b0] sm:$0xff]
        %v987 = vld [vmem:[%s508 + $0x9b8] sm:$0xff]
        %v988 = vld [vmem:[%s508 + $0x9c0] sm:$0xff]
        %v989 = vld [vmem:[%s508 + $0x9c8] sm:$0xff]
        %v990 = vld [vmem:[%s508 + $0x9d0] sm:$0xff]
        %v991 = vld [vmem:[%s508 + $0x9d8] sm:$0xff]
        %v992 = vld [vmem:[%s508 + $0x9e0] sm:$0xff]
        %v993 = vld [vmem:[%s508 + $0x9e8] sm:$0xff]
        %v994 = vld [vmem:[%s508 + $0x9f0] sm:$0xff]
        %v995 = vld [vmem:[%s508 + $0x9f8] sm:$0xff]
        %v996 = vld [vmem:[%s508 + $0xa00] sm:$0xff]
        %v997 = vld [vmem:[%s508 + $0xa08] sm:$0xff]
        %v998 = vld [vmem:[%s508 + $0xa10] sm:$0xff]
        %v999 = vld [vmem:[%s508 + $0xa18] sm:$0xff]
        %v1000 = vld [vmem:[%s508 + $0xa20] sm:$0xff]
        %v1001 = vld [vmem:[%s508 + $0xa28] sm:$0xff]
        %v1002 = vld [vmem:[%s508 + $0xa30] sm:$0xff]
        %v1003 = vld [vmem:[%s508 + $0xa38] sm:$0xff]
        %v1004 = vld [vmem:[%s508 + $0xa40] sm:$0xff]
        %v1005 = vld [vmem:[%s508 + $0xa48] sm:$0xff]
        %v1006 = vld [vmem:[%s508 + $0xa50] sm:$0xff]
        %v1007 = vld [vmem:[%s508 + $0xa58] sm:$0xff]
        %v1008 = vld [vmem:[%s508 + $0xa60] sm:$0xff]
        %v1009 = vld [vmem:[%s508 + $0xa68] sm:$0xff]
        %v1010 = vld [vmem:[%s508 + $0xa70] sm:$0xff]
        %v1011 = vld [vmem:[%s508 + $0xa78] sm:$0xff]
        %v1012 = vld [vmem:[%s508 + $0xa80] sm:$0xff]
        %v1013 = vld [vmem:[%s508 + $0xa88] sm:$0xff]
        %v1014 = vld [vmem:[%s508 + $0xa90] sm:$0xff]
        %v1015 = vld [vmem:[%s508 + $0xa98] sm:$0xff]
        %v1016 = vld [vmem:[%s508 + $0xaa0] sm:$0xff]
        %v1017 = vld [vmem:[%s508 + $0xaa8] sm:$0xff]
        %v1018 = vld [vmem:[%s508 + $0xab0] sm:$0xff]
        %v1019 = vld [vmem:[%s508 + $0xab8] sm:$0xff]
        %v1020 = vld [vmem:[%s508 + $0xac0] sm:$0xff]
        %v1021 = vld [vmem:[%s508 + $0xac8] sm:$0xff]
        %v1022 = vld [vmem:[%s508 + $0xad0] sm:$0xff]
        %v1023 = vld [vmem:[%s508 + $0xad8] sm:$0xff]
        %v1024 = vld [vmem:[%s508 + $0xae0] sm:$0xff]
        %v1025 = vld [vmem:[%s508 + $0xae8] sm:$0xff]
        %v1026 = vld [vmem:[%s508 + $0xaf0] sm:$0xff]
        %v1027 = vld [vmem:[%s508 + $0xaf8] sm:$0xff]
        %v1028 = vld [vmem:[%s508 + $0xb00] sm:$0xff]
        %v1029 = vld [vmem:[%s508 + $0xb08] sm:$0xff]
        %v1030 = vld [vmem:[%s508 + $0xb10] sm:$0xff]
        %v1031 = vld [vmem:[%s508 + $0xb18] sm:$0xff]
        %v1032 = vld [vmem:[%s508 + $0xb20] sm:$0xff]
        %v1033 = vld [vmem:[%s508 + $0xb28] sm:$0xff]
        %v1034 = vld [vmem:[%s508 + $0xb30] sm:$0xff]
        %v1035 = vld [vmem:[%s508 + $0xb38] sm:$0xff]
        %v1036 = vld [vmem:[%s508 + $0xb40] sm:$0xff]
        %v1037 = vld [vmem:[%s508 + $0xb48] sm:$0xff]
        %v1038 = vld [vmem:[%s508 + $0xb50] sm:$0xff]
        %v1039 = vld [vmem:[%s508 + $0xb58] sm:$0xff]
        %v1040 = vld [vmem:[%s508 + $0xb60] sm:$0xff]
        %v1041 = vld [vmem:[%s508 + $0xb68] sm:$0xff]
        %v1042 = vld [vmem:[%s508 + $0xb70] sm:$0xff]
        %v1043 = vld [vmem:[%s508 + $0xb78] sm:$0xff]
        %v1044 = vld [vmem:[%s508 + $0xb80] sm:$0xff]
        %v1045 = vld [vmem:[%s508 + $0xb88] sm:$0xff]
        %v1046 = vld [vmem:[%s508 + $0xb90] sm:$0xff]
        %v1047 = vld [vmem:[%s508 + $0xb98] sm:$0xff]
        %v1048 = vld [vmem:[%s508 + $0xba0] sm:$0xff]
        %v1049 = vld [vmem:[%s508 + $0xba8] sm:$0xff]
        %v1050 = vld [vmem:[%s508 + $0xbb0] sm:$0xff]
        %v1051 = vld [vmem:[%s508 + $0xbb8] sm:$0xff]
        %v1052 = vld [vmem:[%s508 + $0xbc0] sm:$0xff]
        %v1053 = vld [vmem:[%s508 + $0xbc8] sm:$0xff]
        %v1054 = vld [vmem:[%s508 + $0xbd0] sm:$0xff]
        %v1055 = vld [vmem:[%s508 + $0xbd8] sm:$0xff]
        %v1056 = vld [vmem:[%s508 + $0xbe0] sm:$0xff]
        %v1057 = vld [vmem:[%s508 + $0xbe8] sm:$0xff]
        %v1058 = vld [vmem:[%s508 + $0xbf0] sm:$0xff]
        %v1059 = vld [vmem:[%s508 + $0xbf8] sm:$0xff]
        %v1060 = vld [vmem:[%s508 + $0xc00] sm:$0xff]
        %v1061 = vld [vmem:[%s508 + $0xc08] sm:$0xff]
        %v1062 = vld [vmem:[%s508 + $0xc10] sm:$0xff]
        %v1063 = vld [vmem:[%s508 + $0xc18] sm:$0xff]
        %v1064 = vld [vmem:[%s508 + $0xc20] sm:$0xff]
        %v1065 = vld [vmem:[%s508 + $0xc28] sm:$0xff]
        %v1066 = vld [vmem:[%s508 + $0xc30] sm:$0xff]
        %v1067 = vld [vmem:[%s508 + $0xc38] sm:$0xff]
        %v1068 = vld [vmem:[%s508 + $0xc40] sm:$0xff]
        %v1069 = vld [vmem:[%s508 + $0xc48] sm:$0xff]
        %v1070 = vld [vmem:[%s508 + $0xc50] sm:$0xff]
        %v1071 = vld [vmem:[%s508 + $0xc58] sm:$0xff]
        %v1072 = vld [vmem:[%s508 + $0xc60] sm:$0xff]
        %v1073 = vld [vmem:[%s508 + $0xc68] sm:$0xff]
        %v1074 = vld [vmem:[%s508 + $0xc70] sm:$0xff]
        %v1075 = vld [vmem:[%s508 + $0xc78] sm:$0xff]
        %v1076 = vld [vmem:[%s508 + $0xc80] sm:$0xff]
        %v1077 = vld [vmem:[%s508 + $0xc88] sm:$0xff]
        %v1078 = vld [vmem:[%s508 + $0xc90] sm:$0xff]
        %v1079 = vld [vmem:[%s508 + $0xc98] sm:$0xff]
        %v1080 = vld [vmem:[%s508 + $0xca0] sm:$0xff]
        %v1081 = vld [vmem:[%s508 + $0xca8] sm:$0xff]
        %v1082 = vld [vmem:[%s508 + $0xcb0] sm:$0xff]
        %v1083 = vld [vmem:[%s508 + $0xcb8] sm:$0xff]
        %v1084 = vld [vmem:[%s508 + $0xcc0] sm:$0xff]
        %v1085 = vld [vmem:[%s508 + $0xcc8] sm:$0xff]
        %v1086 = vld [vmem:[%s508 + $0xcd0] sm:$0xff]
        %v1087 = vld [vmem:[%s508 + $0xcd8] sm:$0xff]
        %v1088 = vld [vmem:[%s508 + $0xce0] sm:$0xff]
        %v1089 = vld [vmem:[%s508 + $0xce8] sm:$0xff]
        %v1090 = vld [vmem:[%s508 + $0xcf0] sm:$0xff]
        %v1091 = vld [vmem:[%s508 + $0xcf8] sm:$0xff]
        %v1092 = vld [vmem:[%s508 + $0xd00] sm:$0xff]
        %v1093 = vld [vmem:[%s508 + $0xd08] sm:$0xff]
        %v1094 = vld [vmem:[%s508 + $0xd10] sm:$0xff]
        %v1095 = vld [vmem:[%s508 + $0xd18] sm:$0xff]
        %v1096 = vld [vmem:[%s508 + $0xd20] sm:$0xff]
        %v1097 = vld [vmem:[%s508 + $0xd28] sm:$0xff]
        %v1098 = vld [vmem:[%s508 + $0xd30] sm:$0xff]
        %v1099 = vld [vmem:[%s508 + $0xd38] sm:$0xff]
        %v1100 = vld [vmem:[%s508 + $0xd40] sm:$0xff]
        %v1101 = vld [vmem:[%s508 + $0xd48] sm:$0xff]
        %v1102 = vld [vmem:[%s508 + $0xd50] sm:$0xff]
        %v1103 = vld [vmem:[%s508 + $0xd58] sm:$0xff]
        %v1104 = vld [vmem:[%s508 + $0xd60] sm:$0xff]
        %v1105 = vld [vmem:[%s508 + $0xd68] sm:$0xff]
        %v1106 = vld [vmem:[%s508 + $0xd70] sm:$0xff]
        %v1107 = vld [vmem:[%s508 + $0xd78] sm:$0xff]
        %v1108 = vld [vmem:[%s508 + $0xd80] sm:$0xff]
        %v1109 = vld [vmem:[%s508 + $0xd88] sm:$0xff]
        %v1110 = vld [vmem:[%s508 + $0xd90] sm:$0xff]
        %v1111 = vld [vmem:[%s508 + $0xd98] sm:$0xff]
        %v1112 = vld [vmem:[%s508 + $0xda0] sm:$0xff]
        %v1113 = vld [vmem:[%s508 + $0xda8] sm:$0xff]
        %v1114 = vld [vmem:[%s508 + $0xdb0] sm:$0xff]
        %v1115 = vld [vmem:[%s508 + $0xdb8] sm:$0xff]
        %v1116 = vld [vmem:[%s508 + $0xdc0] sm:$0xff]
        %v1117 = vld [vmem:[%s508 + $0xdc8] sm:$0xff]
        %v1118 = vld [vmem:[%s508 + $0xdd0] sm:$0xff]
        %v1119 = vld [vmem:[%s508 + $0xdd8] sm:$0xff]
        %v1120 = vld [vmem:[%s508 + $0xde0] sm:$0xff]
        %v1121 = vld [vmem:[%s508 + $0xde8] sm:$0xff]
        %v1122 = vld [vmem:[%s508 + $0xdf0] sm:$0xff]
        %v1123 = vld [vmem:[%s508 + $0xdf8] sm:$0xff]
        %v1124 = vld [vmem:[%s508 + $0xe00] sm:$0xff]
        %v1125 = vld [vmem:[%s508 + $0xe08] sm:$0xff]
        %v1126 = vld [vmem:[%s508 + $0xe10] sm:$0xff]
        %v1127 = vld [vmem:[%s508 + $0xe18] sm:$0xff]
        %v1128 = vld [vmem:[%s508 + $0xe20] sm:$0xff]
        %v1129 = vld [vmem:[%s508 + $0xe28] sm:$0xff]
        %v1130 = vld [vmem:[%s508 + $0xe30] sm:$0xff]
        %v1131 = vld [vmem:[%s508 + $0xe38] sm:$0xff]
        %v1132 = vld [vmem:[%s508 + $0xe40] sm:$0xff]
        %v1133 = vld [vmem:[%s508 + $0xe48] sm:$0xff]
        %v1134 = vld [vmem:[%s508 + $0xe50] sm:$0xff]
        %v1135 = vld [vmem:[%s508 + $0xe58] sm:$0xff]
        %v1136 = vld [vmem:[%s508 + $0xe60] sm:$0xff]
        %v1137 = vld [vmem:[%s508 + $0xe68] sm:$0xff]
        %v1138 = vld [vmem:[%s508 + $0xe70] sm:$0xff]
        %v1139 = vld [vmem:[%s508 + $0xe78] sm:$0xff]
        %v1140 = vld [vmem:[%s508 + $0xe80] sm:$0xff]
        %v1141 = vld [vmem:[%s508 + $0xe88] sm:$0xff]
        %v1142 = vld [vmem:[%s508 + $0xe90] sm:$0xff]
        %v1143 = vld [vmem:[%s508 + $0xe98] sm:$0xff]
        %v1144 = vld [vmem:[%s508 + $0xea0] sm:$0xff]
        %v1145 = vld [vmem:[%s508 + $0xea8] sm:$0xff]
        %v1146 = vld [vmem:[%s508 + $0xeb0] sm:$0xff]
        %v1147 = vld [vmem:[%s508 + $0xeb8] sm:$0xff]
        %v1148 = vld [vmem:[%s508 + $0xec0] sm:$0xff]
        %v1149 = vld [vmem:[%s508 + $0xec8] sm:$0xff]
        %v1150 = vld [vmem:[%s508 + $0xed0] sm:$0xff]
        %v1151 = vld [vmem:[%s508 + $0xed8] sm:$0xff]
        %v1152 = vld [vmem:[%s508 + $0xee0] sm:$0xff]
        %v1153 = vld [vmem:[%s508 + $0xee8] sm:$0xff]
        %v1154 = vld [vmem:[%s508 + $0xef0] sm:$0xff]
        %v1155 = vld [vmem:[%s508 + $0xef8] sm:$0xff]
        %v1156 = vld [vmem:[%s508 + $0xf00] sm:$0xff]
        %v1157 = vld [vmem:[%s508 + $0xf08] sm:$0xff]
        %v1158 = vld [vmem:[%s508 + $0xf10] sm:$0xff]
        %v1159 = vld [vmem:[%s508 + $0xf18] sm:$0xff]
        %v1160 = vld [vmem:[%s508 + $0xf20] sm:$0xff]
        %v1161 = vld [vmem:[%s508 + $0xf28] sm:$0xff]
        %v1162 = vld [vmem:[%s508 + $0xf30] sm:$0xff]
        %v1163 = vld [vmem:[%s508 + $0xf38] sm:$0xff]
        %v1164 = vld [vmem:[%s508 + $0xf40] sm:$0xff]
        %v1165 = vld [vmem:[%s508 + $0xf48] sm:$0xff]
        %v1166 = vld [vmem:[%s508 + $0xf50] sm:$0xff]
        %v1167 = vld [vmem:[%s508 + $0xf58] sm:$0xff]
        %v1168 = vld [vmem:[%s508 + $0xf60] sm:$0xff]
        %v1169 = vld [vmem:[%s508 + $0xf68] sm:$0xff]
        %v1170 = vld [vmem:[%s508 + $0xf70] sm:$0xff]
        %v1171 = vld [vmem:[%s508 + $0xf78] sm:$0xff]
        %v1172 = vld [vmem:[%s508 + $0xf80] sm:$0xff]
        %v1173 = vld [vmem:[%s508 + $0xf88] sm:$0xff]
        %v1174 = vld [vmem:[%s508 + $0xf90] sm:$0xff]
        %v1175 = vld [vmem:[%s508 + $0xf98] sm:$0xff]
        %v1176 = vld [vmem:[%s508 + $0xfa0] sm:$0xff]
        %v1177 = vld [vmem:[%s508 + $0xfa8] sm:$0xff]
        %v1178 = vld [vmem:[%s508 + $0xfb0] sm:$0xff]
        %v1179 = vld [vmem:[%s508 + $0xfb8] sm:$0xff]
        %v1180 = vld [vmem:[%s508 + $0xfc0] sm:$0xff]
        %v1181 = vld [vmem:[%s508 + $0xfc8] sm:$0xff]
        %v1182 = vld [vmem:[%s508 + $0xfd0] sm:$0xff]
        %v1183 = vld [vmem:[%s508 + $0xfd8] sm:$0xff]
        %v1184 = vld [vmem:[%s508 + $0xfe0] sm:$0xff]
        %v1185 = vld [vmem:[%s508 + $0xfe8] sm:$0xff]
        %v1186 = vld [vmem:[%s508 + $0xff0] sm:$0xff]
        %v1187 = vld [vmem:[%s508 + $0xff8] sm:$0xff]
        %v1188 = vld [vmem:[%s517] sm:$0xff]
        %v1190 = vlaneseq
        %v1191 = vshrl.u32 %v1190, 7
        %v1192 = vsub.s32 0, %v1191
        %v1193 = vrot.slane %v1188, %v1192
        %v1194 = vlaneseq
        %v1195 = vshrl.u32 %v1194, 7
        %v1196 = vsub.s32 1, %v1195
        %v1197 = vrot.slane %v1188, %v1196
        %v1198 = vlaneseq
        %v1199 = vshrl.u32 %v1198, 7
        %v1200 = vsub.s32 2, %v1199
        %v1201 = vrot.slane %v1188, %v1200
        %v1202 = vlaneseq
        %v1203 = vshrl.u32 %v1202, 7
        %v1204 = vsub.s32 3, %v1203
        %v1205 = vrot.slane %v1188, %v1204
        %v1206 = vlaneseq
        %v1207 = vshrl.u32 %v1206, 7
        %v1208 = vsub.s32 4, %v1207
        %v1209 = vrot.slane %v1188, %v1208
        %v1210 = vlaneseq
        %v1211 = vshrl.u32 %v1210, 7
        %v1212 = vsub.s32 5, %v1211
        %v1213 = vrot.slane %v1188, %v1212
        %v1214 = vlaneseq
        %v1215 = vshrl.u32 %v1214, 7
        %v1216 = vsub.s32 6, %v1215
        %v1217 = vrot.slane %v1188, %v1216
        %v1218 = vlaneseq
        %v1219 = vshrl.u32 %v1218, 7
        %v1220 = vsub.s32 7, %v1219
        %v1221 = vrot.slane %v1188, %v1220
        %v1234 = vunpack.c.l.b16 %v672
        %v1235 = vunpack.c.h.b16 %v672
        %v1236 = vunpack.c.l.b16 %v673
        %v1237 = vunpack.c.h.b16 %v673
        %v1238 = vunpack.c.l.b16 %v674
        %v1239 = vunpack.c.h.b16 %v674
        %v1240 = vunpack.c.l.b16 %v675
        %v1241 = vunpack.c.h.b16 %v675
        %v1242 = vpack.c.b16 %v1234, %v1234
        %v1243 = vpack.c.b16 %v1235, %v1235
        %v1244 = vpack.c.b16 %v1236, %v1236
        %v1245 = vpack.c.b16 %v1237, %v1237
        %v1246 = vpack.c.b16 %v1238, %v1238
        %v1247 = vpack.c.b16 %v1239, %v1239
        %v1248 = vpack.c.b16 %v1240, %v1240
        %v1249 = vpack.c.b16 %v1241, %v1241
        %v1770 = vunpack.c.l.b16 %v676
        %v1771 = vunpack.c.h.b16 %v676
        %v1772 = vunpack.c.l.b16 %v677
        %v1773 = vunpack.c.h.b16 %v677
        %v1774 = vunpack.c.l.b16 %v678
        %v1775 = vunpack.c.h.b16 %v678
        %v1776 = vunpack.c.l.b16 %v679
        %v1777 = vunpack.c.h.b16 %v679
        %v1778 = vunpack.c.l.b16 %v680
        %v1779 = vunpack.c.h.b16 %v680
        %v1780 = vunpack.c.l.b16 %v681
        %v1781 = vunpack.c.h.b16 %v681
        %v1782 = vunpack.c.l.b16 %v682
        %v1783 = vunpack.c.h.b16 %v682
        %v1784 = vunpack.c.l.b16 %v683
        %v1785 = vunpack.c.h.b16 %v683
        %v1786 = vunpack.c.l.b16 %v684
        %v1787 = vunpack.c.h.b16 %v684
        %v1788 = vunpack.c.l.b16 %v685
        %v1789 = vunpack.c.h.b16 %v685
        %v1790 = vunpack.c.l.b16 %v686
        %v1791 = vunpack.c.h.b16 %v686
        %v1792 = vunpack.c.l.b16 %v687
        %v1793 = vunpack.c.h.b16 %v687
        %v1794 = vunpack.c.l.b16 %v688
        %v1795 = vunpack.c.h.b16 %v688
        %v1796 = vunpack.c.l.b16 %v689
        %v1797 = vunpack.c.h.b16 %v689
        %v1798 = vunpack.c.l.b16 %v690
        %v1799 = vunpack.c.h.b16 %v690
        %v1800 = vunpack.c.l.b16 %v691
        %v1801 = vunpack.c.h.b16 %v691
        %v1802 = vunpack.c.l.b16 %v692
        %v1803 = vunpack.c.h.b16 %v692
        %v1804 = vunpack.c.l.b16 %v693
        %v1805 = vunpack.c.h.b16 %v693
        %v1806 = vunpack.c.l.b16 %v694
        %v1807 = vunpack.c.h.b16 %v694
        %v1808 = vunpack.c.l.b16 %v695
        %v1809 = vunpack.c.h.b16 %v695
        %v1810 = vunpack.c.l.b16 %v696
        %v1811 = vunpack.c.h.b16 %v696
        %v1812 = vunpack.c.l.b16 %v697
        %v1813 = vunpack.c.h.b16 %v697
        %v1814 = vunpack.c.l.b16 %v698
        %v1815 = vunpack.c.h.b16 %v698
        %v1816 = vunpack.c.l.b16 %v699
        %v1817 = vunpack.c.h.b16 %v699
        %v1818 = vunpack.c.l.b16 %v700
        %v1819 = vunpack.c.h.b16 %v700
        %v1820 = vunpack.c.l.b16 %v701
        %v1821 = vunpack.c.h.b16 %v701
        %v1822 = vunpack.c.l.b16 %v702
        %v1823 = vunpack.c.h.b16 %v702
        %v1824 = vunpack.c.l.b16 %v703
        %v1825 = vunpack.c.h.b16 %v703
        %v1826 = vunpack.c.l.b16 %v704
        %v1827 = vunpack.c.h.b16 %v704
        %v1828 = vunpack.c.l.b16 %v705
        %v1829 = vunpack.c.h.b16 %v705
        %v1830 = vunpack.c.l.b16 %v706
        %v1831 = vunpack.c.h.b16 %v706
        %v1832 = vunpack.c.l.b16 %v707
        %v1833 = vunpack.c.h.b16 %v707
        %v1834 = vunpack.c.l.b16 %v708
        %v1835 = vunpack.c.h.b16 %v708
        %v1836 = vunpack.c.l.b16 %v709
        %v1837 = vunpack.c.h.b16 %v709
        %v1838 = vunpack.c.l.b16 %v710
        %v1839 = vunpack.c.h.b16 %v710
        %v1840 = vunpack.c.l.b16 %v711
        %v1841 = vunpack.c.h.b16 %v711
        %v1842 = vunpack.c.l.b16 %v712
        %v1843 = vunpack.c.h.b16 %v712
        %v1844 = vunpack.c.l.b16 %v713
        %v1845 = vunpack.c.h.b16 %v713
        %v1846 = vunpack.c.l.b16 %v714
        %v1847 = vunpack.c.h.b16 %v714
        %v1848 = vunpack.c.l.b16 %v715
        %v1849 = vunpack.c.h.b16 %v715
        %v1850 = vunpack.c.l.b16 %v716
        %v1851 = vunpack.c.h.b16 %v716
        %v1852 = vunpack.c.l.b16 %v717
        %v1853 = vunpack.c.h.b16 %v717
        %v1854 = vunpack.c.l.b16 %v718
        %v1855 = vunpack.c.h.b16 %v718
        %v1856 = vunpack.c.l.b16 %v719
        %v1857 = vunpack.c.h.b16 %v719
        %v1858 = vunpack.c.l.b16 %v720
        %v1859 = vunpack.c.h.b16 %v720
        %v1860 = vunpack.c.l.b16 %v721
        %v1861 = vunpack.c.h.b16 %v721
        %v1862 = vunpack.c.l.b16 %v722
        %v1863 = vunpack.c.h.b16 %v722
        %v1864 = vunpack.c.l.b16 %v723
        %v1865 = vunpack.c.h.b16 %v723
        %v1866 = vunpack.c.l.b16 %v724
        %v1867 = vunpack.c.h.b16 %v724
        %v1868 = vunpack.c.l.b16 %v725
        %v1869 = vunpack.c.h.b16 %v725
        %v1870 = vunpack.c.l.b16 %v726
        %v1871 = vunpack.c.h.b16 %v726
        %v1872 = vunpack.c.l.b16 %v727
        %v1873 = vunpack.c.h.b16 %v727
        %v1874 = vunpack.c.l.b16 %v728
        %v1875 = vunpack.c.h.b16 %v728
        %v1876 = vunpack.c.l.b16 %v729
        %v1877 = vunpack.c.h.b16 %v729
        %v1878 = vunpack.c.l.b16 %v730
        %v1879 = vunpack.c.h.b16 %v730
        %v1880 = vunpack.c.l.b16 %v731
        %v1881 = vunpack.c.h.b16 %v731
        %v1882 = vunpack.c.l.b16 %v732
        %v1883 = vunpack.c.h.b16 %v732
        %v1884 = vunpack.c.l.b16 %v733
        %v1885 = vunpack.c.h.b16 %v733
        %v1886 = vunpack.c.l.b16 %v734
        %v1887 = vunpack.c.h.b16 %v734
        %v1888 = vunpack.c.l.b16 %v735
        %v1889 = vunpack.c.h.b16 %v735
        %v1890 = vunpack.c.l.b16 %v736
        %v1891 = vunpack.c.h.b16 %v736
        %v1892 = vunpack.c.l.b16 %v737
        %v1893 = vunpack.c.h.b16 %v737
        %v1894 = vunpack.c.l.b16 %v738
        %v1895 = vunpack.c.h.b16 %v738
        %v1896 = vunpack.c.l.b16 %v739
        %v1897 = vunpack.c.h.b16 %v739
        %v1898 = vunpack.c.l.b16 %v740
        %v1899 = vunpack.c.h.b16 %v740
        %v1900 = vunpack.c.l.b16 %v741
        %v1901 = vunpack.c.h.b16 %v741
        %v1902 = vunpack.c.l.b16 %v742
        %v1903 = vunpack.c.h.b16 %v742
        %v1904 = vunpack.c.l.b16 %v743
        %v1905 = vunpack.c.h.b16 %v743
        %v1906 = vunpack.c.l.b16 %v744
        %v1907 = vunpack.c.h.b16 %v744
        %v1908 = vunpack.c.l.b16 %v745
        %v1909 = vunpack.c.h.b16 %v745
        %v1910 = vunpack.c.l.b16 %v746
        %v1911 = vunpack.c.h.b16 %v746
        %v1912 = vunpack.c.l.b16 %v747
        %v1913 = vunpack.c.h.b16 %v747
        %v1914 = vunpack.c.l.b16 %v748
        %v1915 = vunpack.c.h.b16 %v748
        %v1916 = vunpack.c.l.b16 %v749
        %v1917 = vunpack.c.h.b16 %v749
        %v1918 = vunpack.c.l.b16 %v750
        %v1919 = vunpack.c.h.b16 %v750
        %v1920 = vunpack.c.l.b16 %v751
        %v1921 = vunpack.c.h.b16 %v751
        %v1922 = vunpack.c.l.b16 %v752
        %v1923 = vunpack.c.h.b16 %v752
        %v1924 = vunpack.c.l.b16 %v753
        %v1925 = vunpack.c.h.b16 %v753
        %v1926 = vunpack.c.l.b16 %v754
        %v1927 = vunpack.c.h.b16 %v754
        %v1928 = vunpack.c.l.b16 %v755
        %v1929 = vunpack.c.h.b16 %v755
        %v1930 = vunpack.c.l.b16 %v756
        %v1931 = vunpack.c.h.b16 %v756
        %v1932 = vunpack.c.l.b16 %v757
        %v1933 = vunpack.c.h.b16 %v757
        %v1934 = vunpack.c.l.b16 %v758
        %v1935 = vunpack.c.h.b16 %v758
        %v1936 = vunpack.c.l.b16 %v759
        %v1937 = vunpack.c.h.b16 %v759
        %v1938 = vunpack.c.l.b16 %v760
        %v1939 = vunpack.c.h.b16 %v760
        %v1940 = vunpack.c.l.b16 %v761
        %v1941 = vunpack.c.h.b16 %v761
        %v1942 = vunpack.c.l.b16 %v762
        %v1943 = vunpack.c.h.b16 %v762
        %v1944 = vunpack.c.l.b16 %v763
        %v1945 = vunpack.c.h.b16 %v763
        %v1946 = vunpack.c.l.b16 %v764
        %v1947 = vunpack.c.h.b16 %v764
        %v1948 = vunpack.c.l.b16 %v765
        %v1949 = vunpack.c.h.b16 %v765
        %v1950 = vunpack.c.l.b16 %v766
        %v1951 = vunpack.c.h.b16 %v766
        %v1952 = vunpack.c.l.b16 %v767
        %v1953 = vunpack.c.h.b16 %v767
        %v1954 = vunpack.c.l.b16 %v768
        %v1955 = vunpack.c.h.b16 %v768
        %v1956 = vunpack.c.l.b16 %v769
        %v1957 = vunpack.c.h.b16 %v769
        %v1958 = vunpack.c.l.b16 %v770
        %v1959 = vunpack.c.h.b16 %v770
        %v1960 = vunpack.c.l.b16 %v771
        %v1961 = vunpack.c.h.b16 %v771
        %v1962 = vunpack.c.l.b16 %v772
        %v1963 = vunpack.c.h.b16 %v772
        %v1964 = vunpack.c.l.b16 %v773
        %v1965 = vunpack.c.h.b16 %v773
        %v1966 = vunpack.c.l.b16 %v774
        %v1967 = vunpack.c.h.b16 %v774
        %v1968 = vunpack.c.l.b16 %v775
        %v1969 = vunpack.c.h.b16 %v775
        %v1970 = vunpack.c.l.b16 %v776
        %v1971 = vunpack.c.h.b16 %v776
        %v1972 = vunpack.c.l.b16 %v777
        %v1973 = vunpack.c.h.b16 %v777
        %v1974 = vunpack.c.l.b16 %v778
        %v1975 = vunpack.c.h.b16 %v778
        %v1976 = vunpack.c.l.b16 %v779
        %v1977 = vunpack.c.h.b16 %v779
        %v1978 = vunpack.c.l.b16 %v780
        %v1979 = vunpack.c.h.b16 %v780
        %v1980 = vunpack.c.l.b16 %v781
        %v1981 = vunpack.c.h.b16 %v781
        %v1982 = vunpack.c.l.b16 %v782
        %v1983 = vunpack.c.h.b16 %v782
        %v1984 = vunpack.c.l.b16 %v783
        %v1985 = vunpack.c.h.b16 %v783
        %v1986 = vunpack.c.l.b16 %v784
        %v1987 = vunpack.c.h.b16 %v784
        %v1988 = vunpack.c.l.b16 %v785
        %v1989 = vunpack.c.h.b16 %v785
        %v1990 = vunpack.c.l.b16 %v786
        %v1991 = vunpack.c.h.b16 %v786
        %v1992 = vunpack.c.l.b16 %v787
        %v1993 = vunpack.c.h.b16 %v787
        %v1994 = vunpack.c.l.b16 %v788
        %v1995 = vunpack.c.h.b16 %v788
        %v1996 = vunpack.c.l.b16 %v789
        %v1997 = vunpack.c.h.b16 %v789
        %v1998 = vunpack.c.l.b16 %v790
        %v1999 = vunpack.c.h.b16 %v790
        %v2000 = vunpack.c.l.b16 %v791
        %v2001 = vunpack.c.h.b16 %v791
        %v2002 = vunpack.c.l.b16 %v792
        %v2003 = vunpack.c.h.b16 %v792
        %v2004 = vunpack.c.l.b16 %v793
        %v2005 = vunpack.c.h.b16 %v793
        %v2006 = vunpack.c.l.b16 %v794
        %v2007 = vunpack.c.h.b16 %v794
        %v2008 = vunpack.c.l.b16 %v795
        %v2009 = vunpack.c.h.b16 %v795
        %v2010 = vunpack.c.l.b16 %v796
        %v2011 = vunpack.c.h.b16 %v796
        %v2012 = vunpack.c.l.b16 %v797
        %v2013 = vunpack.c.h.b16 %v797
        %v2014 = vunpack.c.l.b16 %v798
        %v2015 = vunpack.c.h.b16 %v798
        %v2016 = vunpack.c.l.b16 %v799
        %v2017 = vunpack.c.h.b16 %v799
        %v2018 = vunpack.c.l.b16 %v800
        %v2019 = vunpack.c.h.b16 %v800
        %v2020 = vunpack.c.l.b16 %v801
        %v2021 = vunpack.c.h.b16 %v801
        %v2022 = vunpack.c.l.b16 %v802
        %v2023 = vunpack.c.h.b16 %v802
        %v2024 = vunpack.c.l.b16 %v803
        %v2025 = vunpack.c.h.b16 %v803
        %v2026 = vunpack.c.l.b16 %v804
        %v2027 = vunpack.c.h.b16 %v804
        %v2028 = vunpack.c.l.b16 %v805
        %v2029 = vunpack.c.h.b16 %v805
        %v2030 = vunpack.c.l.b16 %v806
        %v2031 = vunpack.c.h.b16 %v806
        %v2032 = vunpack.c.l.b16 %v807
        %v2033 = vunpack.c.h.b16 %v807
        %v2034 = vunpack.c.l.b16 %v808
        %v2035 = vunpack.c.h.b16 %v808
        %v2036 = vunpack.c.l.b16 %v809
        %v2037 = vunpack.c.h.b16 %v809
        %v2038 = vunpack.c.l.b16 %v810
        %v2039 = vunpack.c.h.b16 %v810
        %v2040 = vunpack.c.l.b16 %v811
        %v2041 = vunpack.c.h.b16 %v811
        %v2042 = vunpack.c.l.b16 %v812
        %v2043 = vunpack.c.h.b16 %v812
        %v2044 = vunpack.c.l.b16 %v813
        %v2045 = vunpack.c.h.b16 %v813
        %v2046 = vunpack.c.l.b16 %v814
        %v2047 = vunpack.c.h.b16 %v814
        %v2048 = vunpack.c.l.b16 %v815
        %v2049 = vunpack.c.h.b16 %v815
        %v2050 = vunpack.c.l.b16 %v816
        %v2051 = vunpack.c.h.b16 %v816
        %v2052 = vunpack.c.l.b16 %v817
        %v2053 = vunpack.c.h.b16 %v817
        %v2054 = vunpack.c.l.b16 %v818
        %v2055 = vunpack.c.h.b16 %v818
        %v2056 = vunpack.c.l.b16 %v819
        %v2057 = vunpack.c.h.b16 %v819
        %v2058 = vunpack.c.l.b16 %v820
        %v2059 = vunpack.c.h.b16 %v820
        %v2060 = vunpack.c.l.b16 %v821
        %v2061 = vunpack.c.h.b16 %v821
        %v2062 = vunpack.c.l.b16 %v822
        %v2063 = vunpack.c.h.b16 %v822
        %v2064 = vunpack.c.l.b16 %v823
        %v2065 = vunpack.c.h.b16 %v823
        %v2066 = vunpack.c.l.b16 %v824
        %v2067 = vunpack.c.h.b16 %v824
        %v2068 = vunpack.c.l.b16 %v825
        %v2069 = vunpack.c.h.b16 %v825
        %v2070 = vunpack.c.l.b16 %v826
        %v2071 = vunpack.c.h.b16 %v826
        %v2072 = vunpack.c.l.b16 %v827
        %v2073 = vunpack.c.h.b16 %v827
        %v2074 = vunpack.c.l.b16 %v828
        %v2075 = vunpack.c.h.b16 %v828
        %v2076 = vunpack.c.l.b16 %v829
        %v2077 = vunpack.c.h.b16 %v829
        %v2078 = vunpack.c.l.b16 %v830
        %v2079 = vunpack.c.h.b16 %v830
        %v2080 = vunpack.c.l.b16 %v831
        %v2081 = vunpack.c.h.b16 %v831
        %v2082 = vunpack.c.l.b16 %v832
        %v2083 = vunpack.c.h.b16 %v832
        %v2084 = vunpack.c.l.b16 %v833
        %v2085 = vunpack.c.h.b16 %v833
        %v2086 = vunpack.c.l.b16 %v834
        %v2087 = vunpack.c.h.b16 %v834
        %v2088 = vunpack.c.l.b16 %v835
        %v2089 = vunpack.c.h.b16 %v835
        %v2090 = vunpack.c.l.b16 %v836
        %v2091 = vunpack.c.h.b16 %v836
        %v2092 = vunpack.c.l.b16 %v837
        %v2093 = vunpack.c.h.b16 %v837
        %v2094 = vunpack.c.l.b16 %v838
        %v2095 = vunpack.c.h.b16 %v838
        %v2096 = vunpack.c.l.b16 %v839
        %v2097 = vunpack.c.h.b16 %v839
        %v2098 = vunpack.c.l.b16 %v840
        %v2099 = vunpack.c.h.b16 %v840
        %v2100 = vunpack.c.l.b16 %v841
        %v2101 = vunpack.c.h.b16 %v841
        %v2102 = vunpack.c.l.b16 %v842
        %v2103 = vunpack.c.h.b16 %v842
        %v2104 = vunpack.c.l.b16 %v843
        %v2105 = vunpack.c.h.b16 %v843
        %v2106 = vunpack.c.l.b16 %v844
        %v2107 = vunpack.c.h.b16 %v844
        %v2108 = vunpack.c.l.b16 %v845
        %v2109 = vunpack.c.h.b16 %v845
        %v2110 = vunpack.c.l.b16 %v846
        %v2111 = vunpack.c.h.b16 %v846
        %v2112 = vunpack.c.l.b16 %v847
        %v2113 = vunpack.c.h.b16 %v847
        %v2114 = vunpack.c.l.b16 %v848
        %v2115 = vunpack.c.h.b16 %v848
        %v2116 = vunpack.c.l.b16 %v849
        %v2117 = vunpack.c.h.b16 %v849
        %v2118 = vunpack.c.l.b16 %v850
        %v2119 = vunpack.c.h.b16 %v850
        %v2120 = vunpack.c.l.b16 %v851
        %v2121 = vunpack.c.h.b16 %v851
        %v2122 = vunpack.c.l.b16 %v852
        %v2123 = vunpack.c.h.b16 %v852
        %v2124 = vunpack.c.l.b16 %v853
        %v2125 = vunpack.c.h.b16 %v853
        %v2126 = vunpack.c.l.b16 %v854
        %v2127 = vunpack.c.h.b16 %v854
        %v2128 = vunpack.c.l.b16 %v855
        %v2129 = vunpack.c.h.b16 %v855
        %v2130 = vunpack.c.l.b16 %v856
        %v2131 = vunpack.c.h.b16 %v856
        %v2132 = vunpack.c.l.b16 %v857
        %v2133 = vunpack.c.h.b16 %v857
        %v2134 = vunpack.c.l.b16 %v858
        %v2135 = vunpack.c.h.b16 %v858
        %v2136 = vunpack.c.l.b16 %v859
        %v2137 = vunpack.c.h.b16 %v859
        %v2138 = vunpack.c.l.b16 %v860
        %v2139 = vunpack.c.h.b16 %v860
        %v2140 = vunpack.c.l.b16 %v861
        %v2141 = vunpack.c.h.b16 %v861
        %v2142 = vunpack.c.l.b16 %v862
        %v2143 = vunpack.c.h.b16 %v862
        %v2144 = vunpack.c.l.b16 %v863
        %v2145 = vunpack.c.h.b16 %v863
        %v2146 = vunpack.c.l.b16 %v864
        %v2147 = vunpack.c.h.b16 %v864
        %v2148 = vunpack.c.l.b16 %v865
        %v2149 = vunpack.c.h.b16 %v865
        %v2150 = vunpack.c.l.b16 %v866
        %v2151 = vunpack.c.h.b16 %v866
        %v2152 = vunpack.c.l.b16 %v867
        %v2153 = vunpack.c.h.b16 %v867
        %v2154 = vunpack.c.l.b16 %v868
        %v2155 = vunpack.c.h.b16 %v868
        %v2156 = vunpack.c.l.b16 %v869
        %v2157 = vunpack.c.h.b16 %v869
        %v2158 = vunpack.c.l.b16 %v870
        %v2159 = vunpack.c.h.b16 %v870
        %v2160 = vunpack.c.l.b16 %v871
        %v2161 = vunpack.c.h.b16 %v871
        %v2162 = vunpack.c.l.b16 %v872
        %v2163 = vunpack.c.h.b16 %v872
        %v2164 = vunpack.c.l.b16 %v873
        %v2165 = vunpack.c.h.b16 %v873
        %v2166 = vunpack.c.l.b16 %v874
        %v2167 = vunpack.c.h.b16 %v874
        %v2168 = vunpack.c.l.b16 %v875
        %v2169 = vunpack.c.h.b16 %v875
        %v2170 = vunpack.c.l.b16 %v876
        %v2171 = vunpack.c.h.b16 %v876
        %v2172 = vunpack.c.l.b16 %v877
        %v2173 = vunpack.c.h.b16 %v877
        %v2174 = vunpack.c.l.b16 %v878
        %v2175 = vunpack.c.h.b16 %v878
        %v2176 = vunpack.c.l.b16 %v879
        %v2177 = vunpack.c.h.b16 %v879
        %v2178 = vunpack.c.l.b16 %v880
        %v2179 = vunpack.c.h.b16 %v880
        %v2180 = vunpack.c.l.b16 %v881
        %v2181 = vunpack.c.h.b16 %v881
        %v2182 = vunpack.c.l.b16 %v882
        %v2183 = vunpack.c.h.b16 %v882
        %v2184 = vunpack.c.l.b16 %v883
        %v2185 = vunpack.c.h.b16 %v883
        %v2186 = vunpack.c.l.b16 %v884
        %v2187 = vunpack.c.h.b16 %v884
        %v2188 = vunpack.c.l.b16 %v885
        %v2189 = vunpack.c.h.b16 %v885
        %v2190 = vunpack.c.l.b16 %v886
        %v2191 = vunpack.c.h.b16 %v886
        %v2192 = vunpack.c.l.b16 %v887
        %v2193 = vunpack.c.h.b16 %v887
        %v2194 = vunpack.c.l.b16 %v888
        %v2195 = vunpack.c.h.b16 %v888
        %v2196 = vunpack.c.l.b16 %v889
        %v2197 = vunpack.c.h.b16 %v889
        %v2198 = vunpack.c.l.b16 %v890
        %v2199 = vunpack.c.h.b16 %v890
        %v2200 = vunpack.c.l.b16 %v891
        %v2201 = vunpack.c.h.b16 %v891
        %v2202 = vunpack.c.l.b16 %v892
        %v2203 = vunpack.c.h.b16 %v892
        %v2204 = vunpack.c.l.b16 %v893
        %v2205 = vunpack.c.h.b16 %v893
        %v2206 = vunpack.c.l.b16 %v894
        %v2207 = vunpack.c.h.b16 %v894
        %v2208 = vunpack.c.l.b16 %v895
        %v2209 = vunpack.c.h.b16 %v895
        %v2210 = vunpack.c.l.b16 %v896
        %v2211 = vunpack.c.h.b16 %v896
        %v2212 = vunpack.c.l.b16 %v897
        %v2213 = vunpack.c.h.b16 %v897
        %v2214 = vunpack.c.l.b16 %v898
        %v2215 = vunpack.c.h.b16 %v898
        %v2216 = vunpack.c.l.b16 %v899
        %v2217 = vunpack.c.h.b16 %v899
        %v2218 = vunpack.c.l.b16 %v900
        %v2219 = vunpack.c.h.b16 %v900
        %v2220 = vunpack.c.l.b16 %v901
        %v2221 = vunpack.c.h.b16 %v901
        %v2222 = vunpack.c.l.b16 %v902
        %v2223 = vunpack.c.h.b16 %v902
        %v2224 = vunpack.c.l.b16 %v903
        %v2225 = vunpack.c.h.b16 %v903
        %v2226 = vunpack.c.l.b16 %v904
        %v2227 = vunpack.c.h.b16 %v904
        %v2228 = vunpack.c.l.b16 %v905
        %v2229 = vunpack.c.h.b16 %v905
        %v2230 = vunpack.c.l.b16 %v906
        %v2231 = vunpack.c.h.b16 %v906
        %v2232 = vunpack.c.l.b16 %v907
        %v2233 = vunpack.c.h.b16 %v907
        %v2234 = vunpack.c.l.b16 %v908
        %v2235 = vunpack.c.h.b16 %v908
        %v2236 = vunpack.c.l.b16 %v909
        %v2237 = vunpack.c.h.b16 %v909
        %v2238 = vunpack.c.l.b16 %v910
        %v2239 = vunpack.c.h.b16 %v910
        %v2240 = vunpack.c.l.b16 %v911
        %v2241 = vunpack.c.h.b16 %v911
        %v2242 = vunpack.c.l.b16 %v912
        %v2243 = vunpack.c.h.b16 %v912
        %v2244 = vunpack.c.l.b16 %v913
        %v2245 = vunpack.c.h.b16 %v913
        %v2246 = vunpack.c.l.b16 %v914
        %v2247 = vunpack.c.h.b16 %v914
        %v2248 = vunpack.c.l.b16 %v915
        %v2249 = vunpack.c.h.b16 %v915
        %v2250 = vunpack.c.l.b16 %v916
        %v2251 = vunpack.c.h.b16 %v916
        %v2252 = vunpack.c.l.b16 %v917
        %v2253 = vunpack.c.h.b16 %v917
        %v2254 = vunpack.c.l.b16 %v918
        %v2255 = vunpack.c.h.b16 %v918
        %v2256 = vunpack.c.l.b16 %v919
        %v2257 = vunpack.c.h.b16 %v919
        %v2258 = vunpack.c.l.b16 %v920
        %v2259 = vunpack.c.h.b16 %v920
        %v2260 = vunpack.c.l.b16 %v921
        %v2261 = vunpack.c.h.b16 %v921
        %v2262 = vunpack.c.l.b16 %v922
        %v2263 = vunpack.c.h.b16 %v922
        %v2264 = vunpack.c.l.b16 %v923
        %v2265 = vunpack.c.h.b16 %v923
        %v2266 = vunpack.c.l.b16 %v924
        %v2267 = vunpack.c.h.b16 %v924
        %v2268 = vunpack.c.l.b16 %v925
        %v2269 = vunpack.c.h.b16 %v925
        %v2270 = vunpack.c.l.b16 %v926
        %v2271 = vunpack.c.h.b16 %v926
        %v2272 = vunpack.c.l.b16 %v927
        %v2273 = vunpack.c.h.b16 %v927
        %v2274 = vunpack.c.l.b16 %v928
        %v2275 = vunpack.c.h.b16 %v928
        %v2276 = vunpack.c.l.b16 %v929
        %v2277 = vunpack.c.h.b16 %v929
        %v2278 = vunpack.c.l.b16 %v930
        %v2279 = vunpack.c.h.b16 %v930
        %v2280 = vunpack.c.l.b16 %v931
        %v2281 = vunpack.c.h.b16 %v931
        %v2282 = vunpack.c.l.b16 %v932
        %v2283 = vunpack.c.h.b16 %v932
        %v2284 = vunpack.c.l.b16 %v933
        %v2285 = vunpack.c.h.b16 %v933
        %v2286 = vunpack.c.l.b16 %v934
        %v2287 = vunpack.c.h.b16 %v934
        %v2288 = vunpack.c.l.b16 %v935
        %v2289 = vunpack.c.h.b16 %v935
        %v2290 = vunpack.c.l.b16 %v936
        %v2291 = vunpack.c.h.b16 %v936
        %v2292 = vunpack.c.l.b16 %v937
        %v2293 = vunpack.c.h.b16 %v937
        %v2294 = vunpack.c.l.b16 %v938
        %v2295 = vunpack.c.h.b16 %v938
        %v2296 = vunpack.c.l.b16 %v939
        %v2297 = vunpack.c.h.b16 %v939
        %v2298 = vunpack.c.l.b16 %v940
        %v2299 = vunpack.c.h.b16 %v940
        %v2300 = vunpack.c.l.b16 %v941
        %v2301 = vunpack.c.h.b16 %v941
        %v2302 = vunpack.c.l.b16 %v942
        %v2303 = vunpack.c.h.b16 %v942
        %v2304 = vunpack.c.l.b16 %v943
        %v2305 = vunpack.c.h.b16 %v943
        %v2306 = vunpack.c.l.b16 %v944
        %v2307 = vunpack.c.h.b16 %v944
        %v2308 = vunpack.c.l.b16 %v945
        %v2309 = vunpack.c.h.b16 %v945
        %v2310 = vunpack.c.l.b16 %v946
        %v2311 = vunpack.c.h.b16 %v946
        %v2312 = vunpack.c.l.b16 %v947
        %v2313 = vunpack.c.h.b16 %v947
        %v2314 = vunpack.c.l.b16 %v948
        %v2315 = vunpack.c.h.b16 %v948
        %v2316 = vunpack.c.l.b16 %v949
        %v2317 = vunpack.c.h.b16 %v949
        %v2318 = vunpack.c.l.b16 %v950
        %v2319 = vunpack.c.h.b16 %v950
        %v2320 = vunpack.c.l.b16 %v951
        %v2321 = vunpack.c.h.b16 %v951
        %v2322 = vunpack.c.l.b16 %v952
        %v2323 = vunpack.c.h.b16 %v952
        %v2324 = vunpack.c.l.b16 %v953
        %v2325 = vunpack.c.h.b16 %v953
        %v2326 = vunpack.c.l.b16 %v954
        %v2327 = vunpack.c.h.b16 %v954
        %v2328 = vunpack.c.l.b16 %v955
        %v2329 = vunpack.c.h.b16 %v955
        %v2330 = vunpack.c.l.b16 %v956
        %v2331 = vunpack.c.h.b16 %v956
        %v2332 = vunpack.c.l.b16 %v957
        %v2333 = vunpack.c.h.b16 %v957
        %v2334 = vunpack.c.l.b16 %v958
        %v2335 = vunpack.c.h.b16 %v958
        %v2336 = vunpack.c.l.b16 %v959
        %v2337 = vunpack.c.h.b16 %v959
        %v2338 = vunpack.c.l.b16 %v960
        %v2339 = vunpack.c.h.b16 %v960
        %v2340 = vunpack.c.l.b16 %v961
        %v2341 = vunpack.c.h.b16 %v961
        %v2342 = vunpack.c.l.b16 %v962
        %v2343 = vunpack.c.h.b16 %v962
        %v2344 = vunpack.c.l.b16 %v963
        %v2345 = vunpack.c.h.b16 %v963
        %v2346 = vunpack.c.l.b16 %v964
        %v2347 = vunpack.c.h.b16 %v964
        %v2348 = vunpack.c.l.b16 %v965
        %v2349 = vunpack.c.h.b16 %v965
        %v2350 = vunpack.c.l.b16 %v966
        %v2351 = vunpack.c.h.b16 %v966
        %v2352 = vunpack.c.l.b16 %v967
        %v2353 = vunpack.c.h.b16 %v967
        %v2354 = vunpack.c.l.b16 %v968
        %v2355 = vunpack.c.h.b16 %v968
        %v2356 = vunpack.c.l.b16 %v969
        %v2357 = vunpack.c.h.b16 %v969
        %v2358 = vunpack.c.l.b16 %v970
        %v2359 = vunpack.c.h.b16 %v970
        %v2360 = vunpack.c.l.b16 %v971
        %v2361 = vunpack.c.h.b16 %v971
        %v2362 = vunpack.c.l.b16 %v972
        %v2363 = vunpack.c.h.b16 %v972
        %v2364 = vunpack.c.l.b16 %v973
        %v2365 = vunpack.c.h.b16 %v973
        %v2366 = vunpack.c.l.b16 %v974
        %v2367 = vunpack.c.h.b16 %v974
        %v2368 = vunpack.c.l.b16 %v975
        %v2369 = vunpack.c.h.b16 %v975
        %v2370 = vunpack.c.l.b16 %v976
        %v2371 = vunpack.c.h.b16 %v976
        %v2372 = vunpack.c.l.b16 %v977
        %v2373 = vunpack.c.h.b16 %v977
        %v2374 = vunpack.c.l.b16 %v978
        %v2375 = vunpack.c.h.b16 %v978
        %v2376 = vunpack.c.l.b16 %v979
        %v2377 = vunpack.c.h.b16 %v979
        %v2378 = vunpack.c.l.b16 %v980
        %v2379 = vunpack.c.h.b16 %v980
        %v2380 = vunpack.c.l.b16 %v981
        %v2381 = vunpack.c.h.b16 %v981
        %v2382 = vunpack.c.l.b16 %v982
        %v2383 = vunpack.c.h.b16 %v982
        %v2384 = vunpack.c.l.b16 %v983
        %v2385 = vunpack.c.h.b16 %v983
        %v2386 = vunpack.c.l.b16 %v984
        %v2387 = vunpack.c.h.b16 %v984
        %v2388 = vunpack.c.l.b16 %v985
        %v2389 = vunpack.c.h.b16 %v985
        %v2390 = vunpack.c.l.b16 %v986
        %v2391 = vunpack.c.h.b16 %v986
        %v2392 = vunpack.c.l.b16 %v987
        %v2393 = vunpack.c.h.b16 %v987
        %v2394 = vunpack.c.l.b16 %v988
        %v2395 = vunpack.c.h.b16 %v988
        %v2396 = vunpack.c.l.b16 %v989
        %v2397 = vunpack.c.h.b16 %v989
        %v2398 = vunpack.c.l.b16 %v990
        %v2399 = vunpack.c.h.b16 %v990
        %v2400 = vunpack.c.l.b16 %v991
        %v2401 = vunpack.c.h.b16 %v991
        %v2402 = vunpack.c.l.b16 %v992
        %v2403 = vunpack.c.h.b16 %v992
        %v2404 = vunpack.c.l.b16 %v993
        %v2405 = vunpack.c.h.b16 %v993
        %v2406 = vunpack.c.l.b16 %v994
        %v2407 = vunpack.c.h.b16 %v994
        %v2408 = vunpack.c.l.b16 %v995
        %v2409 = vunpack.c.h.b16 %v995
        %v2410 = vunpack.c.l.b16 %v996
        %v2411 = vunpack.c.h.b16 %v996
        %v2412 = vunpack.c.l.b16 %v997
        %v2413 = vunpack.c.h.b16 %v997
        %v2414 = vunpack.c.l.b16 %v998
        %v2415 = vunpack.c.h.b16 %v998
        %v2416 = vunpack.c.l.b16 %v999
        %v2417 = vunpack.c.h.b16 %v999
        %v2418 = vunpack.c.l.b16 %v1000
        %v2419 = vunpack.c.h.b16 %v1000
        %v2420 = vunpack.c.l.b16 %v1001
        %v2421 = vunpack.c.h.b16 %v1001
        %v2422 = vunpack.c.l.b16 %v1002
        %v2423 = vunpack.c.h.b16 %v1002
        %v2424 = vunpack.c.l.b16 %v1003
        %v2425 = vunpack.c.h.b16 %v1003
        %v2426 = vunpack.c.l.b16 %v1004
        %v2427 = vunpack.c.h.b16 %v1004
        %v2428 = vunpack.c.l.b16 %v1005
        %v2429 = vunpack.c.h.b16 %v1005
        %v2430 = vunpack.c.l.b16 %v1006
        %v2431 = vunpack.c.h.b16 %v1006
        %v2432 = vunpack.c.l.b16 %v1007
        %v2433 = vunpack.c.h.b16 %v1007
        %v2434 = vunpack.c.l.b16 %v1008
        %v2435 = vunpack.c.h.b16 %v1008
        %v2436 = vunpack.c.l.b16 %v1009
        %v2437 = vunpack.c.h.b16 %v1009
        %v2438 = vunpack.c.l.b16 %v1010
        %v2439 = vunpack.c.h.b16 %v1010
        %v2440 = vunpack.c.l.b16 %v1011
        %v2441 = vunpack.c.h.b16 %v1011
        %v2442 = vunpack.c.l.b16 %v1012
        %v2443 = vunpack.c.h.b16 %v1012
        %v2444 = vunpack.c.l.b16 %v1013
        %v2445 = vunpack.c.h.b16 %v1013
        %v2446 = vunpack.c.l.b16 %v1014
        %v2447 = vunpack.c.h.b16 %v1014
        %v2448 = vunpack.c.l.b16 %v1015
        %v2449 = vunpack.c.h.b16 %v1015
        %v2450 = vunpack.c.l.b16 %v1016
        %v2451 = vunpack.c.h.b16 %v1016
        %v2452 = vunpack.c.l.b16 %v1017
        %v2453 = vunpack.c.h.b16 %v1017
        %v2454 = vunpack.c.l.b16 %v1018
        %v2455 = vunpack.c.h.b16 %v1018
        %v2456 = vunpack.c.l.b16 %v1019
        %v2457 = vunpack.c.h.b16 %v1019
        %v2458 = vunpack.c.l.b16 %v1020
        %v2459 = vunpack.c.h.b16 %v1020
        %v2460 = vunpack.c.l.b16 %v1021
        %v2461 = vunpack.c.h.b16 %v1021
        %v2462 = vunpack.c.l.b16 %v1022
        %v2463 = vunpack.c.h.b16 %v1022
        %v2464 = vunpack.c.l.b16 %v1023
        %v2465 = vunpack.c.h.b16 %v1023
        %v2466 = vunpack.c.l.b16 %v1024
        %v2467 = vunpack.c.h.b16 %v1024
        %v2468 = vunpack.c.l.b16 %v1025
        %v2469 = vunpack.c.h.b16 %v1025
        %v2470 = vunpack.c.l.b16 %v1026
        %v2471 = vunpack.c.h.b16 %v1026
        %v2472 = vunpack.c.l.b16 %v1027
        %v2473 = vunpack.c.h.b16 %v1027
        %v2474 = vunpack.c.l.b16 %v1028
        %v2475 = vunpack.c.h.b16 %v1028
        %v2476 = vunpack.c.l.b16 %v1029
        %v2477 = vunpack.c.h.b16 %v1029
        %v2478 = vunpack.c.l.b16 %v1030
        %v2479 = vunpack.c.h.b16 %v1030
        %v2480 = vunpack.c.l.b16 %v1031
        %v2481 = vunpack.c.h.b16 %v1031
        %v2482 = vunpack.c.l.b16 %v1032
        %v2483 = vunpack.c.h.b16 %v1032
        %v2484 = vunpack.c.l.b16 %v1033
        %v2485 = vunpack.c.h.b16 %v1033
        %v2486 = vunpack.c.l.b16 %v1034
        %v2487 = vunpack.c.h.b16 %v1034
        %v2488 = vunpack.c.l.b16 %v1035
        %v2489 = vunpack.c.h.b16 %v1035
        %v2490 = vunpack.c.l.b16 %v1036
        %v2491 = vunpack.c.h.b16 %v1036
        %v2492 = vunpack.c.l.b16 %v1037
        %v2493 = vunpack.c.h.b16 %v1037
        %v2494 = vunpack.c.l.b16 %v1038
        %v2495 = vunpack.c.h.b16 %v1038
        %v2496 = vunpack.c.l.b16 %v1039
        %v2497 = vunpack.c.h.b16 %v1039
        %v2498 = vunpack.c.l.b16 %v1040
        %v2499 = vunpack.c.h.b16 %v1040
        %v2500 = vunpack.c.l.b16 %v1041
        %v2501 = vunpack.c.h.b16 %v1041
        %v2502 = vunpack.c.l.b16 %v1042
        %v2503 = vunpack.c.h.b16 %v1042
        %v2504 = vunpack.c.l.b16 %v1043
        %v2505 = vunpack.c.h.b16 %v1043
        %v2506 = vunpack.c.l.b16 %v1044
        %v2507 = vunpack.c.h.b16 %v1044
        %v2508 = vunpack.c.l.b16 %v1045
        %v2509 = vunpack.c.h.b16 %v1045
        %v2510 = vunpack.c.l.b16 %v1046
        %v2511 = vunpack.c.h.b16 %v1046
        %v2512 = vunpack.c.l.b16 %v1047
        %v2513 = vunpack.c.h.b16 %v1047
        %v2514 = vunpack.c.l.b16 %v1048
        %v2515 = vunpack.c.h.b16 %v1048
        %v2516 = vunpack.c.l.b16 %v1049
        %v2517 = vunpack.c.h.b16 %v1049
        %v2518 = vunpack.c.l.b16 %v1050
        %v2519 = vunpack.c.h.b16 %v1050
        %v2520 = vunpack.c.l.b16 %v1051
        %v2521 = vunpack.c.h.b16 %v1051
        %v2522 = vunpack.c.l.b16 %v1052
        %v2523 = vunpack.c.h.b16 %v1052
        %v2524 = vunpack.c.l.b16 %v1053
        %v2525 = vunpack.c.h.b16 %v1053
        %v2526 = vunpack.c.l.b16 %v1054
        %v2527 = vunpack.c.h.b16 %v1054
        %v2528 = vunpack.c.l.b16 %v1055
        %v2529 = vunpack.c.h.b16 %v1055
        %v2530 = vunpack.c.l.b16 %v1056
        %v2531 = vunpack.c.h.b16 %v1056
        %v2532 = vunpack.c.l.b16 %v1057
        %v2533 = vunpack.c.h.b16 %v1057
        %v2534 = vunpack.c.l.b16 %v1058
        %v2535 = vunpack.c.h.b16 %v1058
        %v2536 = vunpack.c.l.b16 %v1059
        %v2537 = vunpack.c.h.b16 %v1059
        %v2538 = vunpack.c.l.b16 %v1060
        %v2539 = vunpack.c.h.b16 %v1060
        %v2540 = vunpack.c.l.b16 %v1061
        %v2541 = vunpack.c.h.b16 %v1061
        %v2542 = vunpack.c.l.b16 %v1062
        %v2543 = vunpack.c.h.b16 %v1062
        %v2544 = vunpack.c.l.b16 %v1063
        %v2545 = vunpack.c.h.b16 %v1063
        %v2546 = vunpack.c.l.b16 %v1064
        %v2547 = vunpack.c.h.b16 %v1064
        %v2548 = vunpack.c.l.b16 %v1065
        %v2549 = vunpack.c.h.b16 %v1065
        %v2550 = vunpack.c.l.b16 %v1066
        %v2551 = vunpack.c.h.b16 %v1066
        %v2552 = vunpack.c.l.b16 %v1067
        %v2553 = vunpack.c.h.b16 %v1067
        %v2554 = vunpack.c.l.b16 %v1068
        %v2555 = vunpack.c.h.b16 %v1068
        %v2556 = vunpack.c.l.b16 %v1069
        %v2557 = vunpack.c.h.b16 %v1069
        %v2558 = vunpack.c.l.b16 %v1070
        %v2559 = vunpack.c.h.b16 %v1070
        %v2560 = vunpack.c.l.b16 %v1071
        %v2561 = vunpack.c.h.b16 %v1071
        %v2562 = vunpack.c.l.b16 %v1072
        %v2563 = vunpack.c.h.b16 %v1072
        %v2564 = vunpack.c.l.b16 %v1073
        %v2565 = vunpack.c.h.b16 %v1073
        %v2566 = vunpack.c.l.b16 %v1074
        %v2567 = vunpack.c.h.b16 %v1074
        %v2568 = vunpack.c.l.b16 %v1075
        %v2569 = vunpack.c.h.b16 %v1075
        %v2570 = vunpack.c.l.b16 %v1076
        %v2571 = vunpack.c.h.b16 %v1076
        %v2572 = vunpack.c.l.b16 %v1077
        %v2573 = vunpack.c.h.b16 %v1077
        %v2574 = vunpack.c.l.b16 %v1078
        %v2575 = vunpack.c.h.b16 %v1078
        %v2576 = vunpack.c.l.b16 %v1079
        %v2577 = vunpack.c.h.b16 %v1079
        %v2578 = vunpack.c.l.b16 %v1080
        %v2579 = vunpack.c.h.b16 %v1080
        %v2580 = vunpack.c.l.b16 %v1081
        %v2581 = vunpack.c.h.b16 %v1081
        %v2582 = vunpack.c.l.b16 %v1082
        %v2583 = vunpack.c.h.b16 %v1082
        %v2584 = vunpack.c.l.b16 %v1083
        %v2585 = vunpack.c.h.b16 %v1083
        %v2586 = vunpack.c.l.b16 %v1084
        %v2587 = vunpack.c.h.b16 %v1084
        %v2588 = vunpack.c.l.b16 %v1085
        %v2589 = vunpack.c.h.b16 %v1085
        %v2590 = vunpack.c.l.b16 %v1086
        %v2591 = vunpack.c.h.b16 %v1086
        %v2592 = vunpack.c.l.b16 %v1087
        %v2593 = vunpack.c.h.b16 %v1087
        %v2594 = vunpack.c.l.b16 %v1088
        %v2595 = vunpack.c.h.b16 %v1088
        %v2596 = vunpack.c.l.b16 %v1089
        %v2597 = vunpack.c.h.b16 %v1089
        %v2598 = vunpack.c.l.b16 %v1090
        %v2599 = vunpack.c.h.b16 %v1090
        %v2600 = vunpack.c.l.b16 %v1091
        %v2601 = vunpack.c.h.b16 %v1091
        %v2602 = vunpack.c.l.b16 %v1092
        %v2603 = vunpack.c.h.b16 %v1092
        %v2604 = vunpack.c.l.b16 %v1093
        %v2605 = vunpack.c.h.b16 %v1093
        %v2606 = vunpack.c.l.b16 %v1094
        %v2607 = vunpack.c.h.b16 %v1094
        %v2608 = vunpack.c.l.b16 %v1095
        %v2609 = vunpack.c.h.b16 %v1095
        %v2610 = vunpack.c.l.b16 %v1096
        %v2611 = vunpack.c.h.b16 %v1096
        %v2612 = vunpack.c.l.b16 %v1097
        %v2613 = vunpack.c.h.b16 %v1097
        %v2614 = vunpack.c.l.b16 %v1098
        %v2615 = vunpack.c.h.b16 %v1098
        %v2616 = vunpack.c.l.b16 %v1099
        %v2617 = vunpack.c.h.b16 %v1099
        %v2618 = vunpack.c.l.b16 %v1100
        %v2619 = vunpack.c.h.b16 %v1100
        %v2620 = vunpack.c.l.b16 %v1101
        %v2621 = vunpack.c.h.b16 %v1101
        %v2622 = vunpack.c.l.b16 %v1102
        %v2623 = vunpack.c.h.b16 %v1102
        %v2624 = vunpack.c.l.b16 %v1103
        %v2625 = vunpack.c.h.b16 %v1103
        %v2626 = vunpack.c.l.b16 %v1104
        %v2627 = vunpack.c.h.b16 %v1104
        %v2628 = vunpack.c.l.b16 %v1105
        %v2629 = vunpack.c.h.b16 %v1105
        %v2630 = vunpack.c.l.b16 %v1106
        %v2631 = vunpack.c.h.b16 %v1106
        %v2632 = vunpack.c.l.b16 %v1107
        %v2633 = vunpack.c.h.b16 %v1107
        %v2634 = vunpack.c.l.b16 %v1108
        %v2635 = vunpack.c.h.b16 %v1108
        %v2636 = vunpack.c.l.b16 %v1109
        %v2637 = vunpack.c.h.b16 %v1109
        %v2638 = vunpack.c.l.b16 %v1110
        %v2639 = vunpack.c.h.b16 %v1110
        %v2640 = vunpack.c.l.b16 %v1111
        %v2641 = vunpack.c.h.b16 %v1111
        %v2642 = vunpack.c.l.b16 %v1112
        %v2643 = vunpack.c.h.b16 %v1112
        %v2644 = vunpack.c.l.b16 %v1113
        %v2645 = vunpack.c.h.b16 %v1113
        %v2646 = vunpack.c.l.b16 %v1114
        %v2647 = vunpack.c.h.b16 %v1114
        %v2648 = vunpack.c.l.b16 %v1115
        %v2649 = vunpack.c.h.b16 %v1115
        %v2650 = vunpack.c.l.b16 %v1116
        %v2651 = vunpack.c.h.b16 %v1116
        %v2652 = vunpack.c.l.b16 %v1117
        %v2653 = vunpack.c.h.b16 %v1117
        %v2654 = vunpack.c.l.b16 %v1118
        %v2655 = vunpack.c.h.b16 %v1118
        %v2656 = vunpack.c.l.b16 %v1119
        %v2657 = vunpack.c.h.b16 %v1119
        %v2658 = vunpack.c.l.b16 %v1120
        %v2659 = vunpack.c.h.b16 %v1120
        %v2660 = vunpack.c.l.b16 %v1121
        %v2661 = vunpack.c.h.b16 %v1121
        %v2662 = vunpack.c.l.b16 %v1122
        %v2663 = vunpack.c.h.b16 %v1122
        %v2664 = vunpack.c.l.b16 %v1123
        %v2665 = vunpack.c.h.b16 %v1123
        %v2666 = vunpack.c.l.b16 %v1124
        %v2667 = vunpack.c.h.b16 %v1124
        %v2668 = vunpack.c.l.b16 %v1125
        %v2669 = vunpack.c.h.b16 %v1125
        %v2670 = vunpack.c.l.b16 %v1126
        %v2671 = vunpack.c.h.b16 %v1126
        %v2672 = vunpack.c.l.b16 %v1127
        %v2673 = vunpack.c.h.b16 %v1127
        %v2674 = vunpack.c.l.b16 %v1128
        %v2675 = vunpack.c.h.b16 %v1128
        %v2676 = vunpack.c.l.b16 %v1129
        %v2677 = vunpack.c.h.b16 %v1129
        %v2678 = vunpack.c.l.b16 %v1130
        %v2679 = vunpack.c.h.b16 %v1130
        %v2680 = vunpack.c.l.b16 %v1131
        %v2681 = vunpack.c.h.b16 %v1131
        %v2682 = vunpack.c.l.b16 %v1132
        %v2683 = vunpack.c.h.b16 %v1132
        %v2684 = vunpack.c.l.b16 %v1133
        %v2685 = vunpack.c.h.b16 %v1133
        %v2686 = vunpack.c.l.b16 %v1134
        %v2687 = vunpack.c.h.b16 %v1134
        %v2688 = vunpack.c.l.b16 %v1135
        %v2689 = vunpack.c.h.b16 %v1135
        %v2690 = vunpack.c.l.b16 %v1136
        %v2691 = vunpack.c.h.b16 %v1136
        %v2692 = vunpack.c.l.b16 %v1137
        %v2693 = vunpack.c.h.b16 %v1137
        %v2694 = vunpack.c.l.b16 %v1138
        %v2695 = vunpack.c.h.b16 %v1138
        %v2696 = vunpack.c.l.b16 %v1139
        %v2697 = vunpack.c.h.b16 %v1139
        %v2698 = vunpack.c.l.b16 %v1140
        %v2699 = vunpack.c.h.b16 %v1140
        %v2700 = vunpack.c.l.b16 %v1141
        %v2701 = vunpack.c.h.b16 %v1141
        %v2702 = vunpack.c.l.b16 %v1142
        %v2703 = vunpack.c.h.b16 %v1142
        %v2704 = vunpack.c.l.b16 %v1143
        %v2705 = vunpack.c.h.b16 %v1143
        %v2706 = vunpack.c.l.b16 %v1144
        %v2707 = vunpack.c.h.b16 %v1144
        %v2708 = vunpack.c.l.b16 %v1145
        %v2709 = vunpack.c.h.b16 %v1145
        %v2710 = vunpack.c.l.b16 %v1146
        %v2711 = vunpack.c.h.b16 %v1146
        %v2712 = vunpack.c.l.b16 %v1147
        %v2713 = vunpack.c.h.b16 %v1147
        %v2714 = vunpack.c.l.b16 %v1148
        %v2715 = vunpack.c.h.b16 %v1148
        %v2716 = vunpack.c.l.b16 %v1149
        %v2717 = vunpack.c.h.b16 %v1149
        %v2718 = vunpack.c.l.b16 %v1150
        %v2719 = vunpack.c.h.b16 %v1150
        %v2720 = vunpack.c.l.b16 %v1151
        %v2721 = vunpack.c.h.b16 %v1151
        %v2722 = vunpack.c.l.b16 %v1152
        %v2723 = vunpack.c.h.b16 %v1152
        %v2724 = vunpack.c.l.b16 %v1153
        %v2725 = vunpack.c.h.b16 %v1153
        %v2726 = vunpack.c.l.b16 %v1154
        %v2727 = vunpack.c.h.b16 %v1154
        %v2728 = vunpack.c.l.b16 %v1155
        %v2729 = vunpack.c.h.b16 %v1155
        %v2730 = vunpack.c.l.b16 %v1156
        %v2731 = vunpack.c.h.b16 %v1156
        %v2732 = vunpack.c.l.b16 %v1157
        %v2733 = vunpack.c.h.b16 %v1157
        %v2734 = vunpack.c.l.b16 %v1158
        %v2735 = vunpack.c.h.b16 %v1158
        %v2736 = vunpack.c.l.b16 %v1159
        %v2737 = vunpack.c.h.b16 %v1159
        %v2738 = vunpack.c.l.b16 %v1160
        %v2739 = vunpack.c.h.b16 %v1160
        %v2740 = vunpack.c.l.b16 %v1161
        %v2741 = vunpack.c.h.b16 %v1161
        %v2742 = vunpack.c.l.b16 %v1162
        %v2743 = vunpack.c.h.b16 %v1162
        %v2744 = vunpack.c.l.b16 %v1163
        %v2745 = vunpack.c.h.b16 %v1163
        %v2746 = vunpack.c.l.b16 %v1164
        %v2747 = vunpack.c.h.b16 %v1164
        %v2748 = vunpack.c.l.b16 %v1165
        %v2749 = vunpack.c.h.b16 %v1165
        %v2750 = vunpack.c.l.b16 %v1166
        %v2751 = vunpack.c.h.b16 %v1166
        %v2752 = vunpack.c.l.b16 %v1167
        %v2753 = vunpack.c.h.b16 %v1167
        %v2754 = vunpack.c.l.b16 %v1168
        %v2755 = vunpack.c.h.b16 %v1168
        %v2756 = vunpack.c.l.b16 %v1169
        %v2757 = vunpack.c.h.b16 %v1169
        %v2758 = vunpack.c.l.b16 %v1170
        %v2759 = vunpack.c.h.b16 %v1170
        %v2760 = vunpack.c.l.b16 %v1171
        %v2761 = vunpack.c.h.b16 %v1171
        %v2762 = vunpack.c.l.b16 %v1172
        %v2763 = vunpack.c.h.b16 %v1172
        %v2764 = vunpack.c.l.b16 %v1173
        %v2765 = vunpack.c.h.b16 %v1173
        %v2766 = vunpack.c.l.b16 %v1174
        %v2767 = vunpack.c.h.b16 %v1174
        %v2768 = vunpack.c.l.b16 %v1175
        %v2769 = vunpack.c.h.b16 %v1175
        %v2770 = vunpack.c.l.b16 %v1176
        %v2771 = vunpack.c.h.b16 %v1176
        %v2772 = vunpack.c.l.b16 %v1177
        %v2773 = vunpack.c.h.b16 %v1177
        %v2774 = vunpack.c.l.b16 %v1178
        %v2775 = vunpack.c.h.b16 %v1178
        %v2776 = vunpack.c.l.b16 %v1179
        %v2777 = vunpack.c.h.b16 %v1179
        %v2778 = vunpack.c.l.b16 %v1180
        %v2779 = vunpack.c.h.b16 %v1180
        %v2780 = vunpack.c.l.b16 %v1181
        %v2781 = vunpack.c.h.b16 %v1181
        %v2782 = vunpack.c.l.b16 %v1182
        %v2783 = vunpack.c.h.b16 %v1182
        %v2784 = vunpack.c.l.b16 %v1183
        %v2785 = vunpack.c.h.b16 %v1183
        %v2786 = vunpack.c.l.b16 %v1184
        %v2787 = vunpack.c.h.b16 %v1184
        %v2788 = vunpack.c.l.b16 %v1185
        %v2789 = vunpack.c.h.b16 %v1185
        %v2790 = vunpack.c.l.b16 %v1186
        %v2791 = vunpack.c.h.b16 %v1186
        %v2792 = vunpack.c.l.b16 %v1187
        %v2793 = vunpack.c.h.b16 %v1187
        %v2794 = vpack.c.b16 %v1778, %v1770
        %v2795 = vpack.c.b16 %v1779, %v1771
        %v2796 = vpack.c.b16 %v1780, %v1772
        %v2797 = vpack.c.b16 %v1781, %v1773
        %v2798 = vpack.c.b16 %v1782, %v1774
        %v2799 = vpack.c.b16 %v1783, %v1775
        %v2800 = vpack.c.b16 %v1784, %v1776
        %v2801 = vpack.c.b16 %v1785, %v1777
        %v2802 = vpack.c.b16 %v1794, %v1786
        %v2803 = vpack.c.b16 %v1795, %v1787
        %v2804 = vpack.c.b16 %v1796, %v1788
        %v2805 = vpack.c.b16 %v1797, %v1789
        %v2806 = vpack.c.b16 %v1798, %v1790
        %v2807 = vpack.c.b16 %v1799, %v1791
        %v2808 = vpack.c.b16 %v1800, %v1792
        %v2809 = vpack.c.b16 %v1801, %v1793
        %v2810 = vpack.c.b16 %v1810, %v1802
        %v2811 = vpack.c.b16 %v1811, %v1803
        %v2812 = vpack.c.b16 %v1812, %v1804
        %v2813 = vpack.c.b16 %v1813, %v1805
        %v2814 = vpack.c.b16 %v1814, %v1806
        %v2815 = vpack.c.b16 %v1815, %v1807
        %v2816 = vpack.c.b16 %v1816, %v1808
        %v2817 = vpack.c.b16 %v1817, %v1809
        %v2818 = vpack.c.b16 %v1826, %v1818
        %v2819 = vpack.c.b16 %v1827, %v1819
        %v2820 = vpack.c.b16 %v1828, %v1820
        %v2821 = vpack.c.b16 %v1829, %v1821
        %v2822 = vpack.c.b16 %v1830, %v1822
        %v2823 = vpack.c.b16 %v1831, %v1823
        %v2824 = vpack.c.b16 %v1832, %v1824
        %v2825 = vpack.c.b16 %v1833, %v1825
        %v2826 = vpack.c.b16 %v1842, %v1834
        %v2827 = vpack.c.b16 %v1843, %v1835
        %v2828 = vpack.c.b16 %v1844, %v1836
        %v2829 = vpack.c.b16 %v1845, %v1837
        %v2830 = vpack.c.b16 %v1846, %v1838
        %v2831 = vpack.c.b16 %v1847, %v1839
        %v2832 = vpack.c.b16 %v1848, %v1840
        %v2833 = vpack.c.b16 %v1849, %v1841
        %v2834 = vpack.c.b16 %v1858, %v1850
        %v2835 = vpack.c.b16 %v1859, %v1851
        %v2836 = vpack.c.b16 %v1860, %v1852
        %v2837 = vpack.c.b16 %v1861, %v1853
        %v2838 = vpack.c.b16 %v1862, %v1854
        %v2839 = vpack.c.b16 %v1863, %v1855
        %v2840 = vpack.c.b16 %v1864, %v1856
        %v2841 = vpack.c.b16 %v1865, %v1857
        %v2842 = vpack.c.b16 %v1874, %v1866
        %v2843 = vpack.c.b16 %v1875, %v1867
        %v2844 = vpack.c.b16 %v1876, %v1868
        %v2845 = vpack.c.b16 %v1877, %v1869
        %v2846 = vpack.c.b16 %v1878, %v1870
        %v2847 = vpack.c.b16 %v1879, %v1871
        %v2848 = vpack.c.b16 %v1880, %v1872
        %v2849 = vpack.c.b16 %v1881, %v1873
        %v2850 = vpack.c.b16 %v1890, %v1882
        %v2851 = vpack.c.b16 %v1891, %v1883
        %v2852 = vpack.c.b16 %v1892, %v1884
        %v2853 = vpack.c.b16 %v1893, %v1885
        %v2854 = vpack.c.b16 %v1894, %v1886
        %v2855 = vpack.c.b16 %v1895, %v1887
        %v2856 = vpack.c.b16 %v1896, %v1888
        %v2857 = vpack.c.b16 %v1897, %v1889
        %v2858 = vpack.c.b16 %v1906, %v1898
        %v2859 = vpack.c.b16 %v1907, %v1899
        %v2860 = vpack.c.b16 %v1908, %v1900
        %v2861 = vpack.c.b16 %v1909, %v1901
        %v2862 = vpack.c.b16 %v1910, %v1902
        %v2863 = vpack.c.b16 %v1911, %v1903
        %v2864 = vpack.c.b16 %v1912, %v1904
        %v2865 = vpack.c.b16 %v1913, %v1905
        %v2866 = vpack.c.b16 %v1922, %v1914
        %v2867 = vpack.c.b16 %v1923, %v1915
        %v2868 = vpack.c.b16 %v1924, %v1916
        %v2869 = vpack.c.b16 %v1925, %v1917
        %v2870 = vpack.c.b16 %v1926, %v1918
        %v2871 = vpack.c.b16 %v1927, %v1919
        %v2872 = vpack.c.b16 %v1928, %v1920
        %v2873 = vpack.c.b16 %v1929, %v1921
        %v2874 = vpack.c.b16 %v1938, %v1930
        %v2875 = vpack.c.b16 %v1939, %v1931
        %v2876 = vpack.c.b16 %v1940, %v1932
        %v2877 = vpack.c.b16 %v1941, %v1933
        %v2878 = vpack.c.b16 %v1942, %v1934
        %v2879 = vpack.c.b16 %v1943, %v1935
        %v2880 = vpack.c.b16 %v1944, %v1936
        %v2881 = vpack.c.b16 %v1945, %v1937
        %v2882 = vpack.c.b16 %v1954, %v1946
        %v2883 = vpack.c.b16 %v1955, %v1947
        %v2884 = vpack.c.b16 %v1956, %v1948
        %v2885 = vpack.c.b16 %v1957, %v1949
        %v2886 = vpack.c.b16 %v1958, %v1950
        %v2887 = vpack.c.b16 %v1959, %v1951
        %v2888 = vpack.c.b16 %v1960, %v1952
        %v2889 = vpack.c.b16 %v1961, %v1953
        %v2890 = vpack.c.b16 %v1970, %v1962
        %v2891 = vpack.c.b16 %v1971, %v1963
        %v2892 = vpack.c.b16 %v1972, %v1964
        %v2893 = vpack.c.b16 %v1973, %v1965
        %v2894 = vpack.c.b16 %v1974, %v1966
        %v2895 = vpack.c.b16 %v1975, %v1967
        %v2896 = vpack.c.b16 %v1976, %v1968
        %v2897 = vpack.c.b16 %v1977, %v1969
        %v2898 = vpack.c.b16 %v1986, %v1978
        %v2899 = vpack.c.b16 %v1987, %v1979
        %v2900 = vpack.c.b16 %v1988, %v1980
        %v2901 = vpack.c.b16 %v1989, %v1981
        %v2902 = vpack.c.b16 %v1990, %v1982
        %v2903 = vpack.c.b16 %v1991, %v1983
        %v2904 = vpack.c.b16 %v1992, %v1984
        %v2905 = vpack.c.b16 %v1993, %v1985
        %v2906 = vpack.c.b16 %v2002, %v1994
        %v2907 = vpack.c.b16 %v2003, %v1995
        %v2908 = vpack.c.b16 %v2004, %v1996
        %v2909 = vpack.c.b16 %v2005, %v1997
        %v2910 = vpack.c.b16 %v2006, %v1998
        %v2911 = vpack.c.b16 %v2007, %v1999
        %v2912 = vpack.c.b16 %v2008, %v2000
        %v2913 = vpack.c.b16 %v2009, %v2001
        %v2914 = vpack.c.b16 %v2018, %v2010
        %v2915 = vpack.c.b16 %v2019, %v2011
        %v2916 = vpack.c.b16 %v2020, %v2012
        %v2917 = vpack.c.b16 %v2021, %v2013
        %v2918 = vpack.c.b16 %v2022, %v2014
        %v2919 = vpack.c.b16 %v2023, %v2015
        %v2920 = vpack.c.b16 %v2024, %v2016
        %v2921 = vpack.c.b16 %v2025, %v2017
        %v2922 = vpack.c.b16 %v2034, %v2026
        %v2923 = vpack.c.b16 %v2035, %v2027
        %v2924 = vpack.c.b16 %v2036, %v2028
        %v2925 = vpack.c.b16 %v2037, %v2029
        %v2926 = vpack.c.b16 %v2038, %v2030
        %v2927 = vpack.c.b16 %v2039, %v2031
        %v2928 = vpack.c.b16 %v2040, %v2032
        %v2929 = vpack.c.b16 %v2041, %v2033
        %v2930 = vpack.c.b16 %v2050, %v2042
        %v2931 = vpack.c.b16 %v2051, %v2043
        %v2932 = vpack.c.b16 %v2052, %v2044
        %v2933 = vpack.c.b16 %v2053, %v2045
        %v2934 = vpack.c.b16 %v2054, %v2046
        %v2935 = vpack.c.b16 %v2055, %v2047
        %v2936 = vpack.c.b16 %v2056, %v2048
        %v2937 = vpack.c.b16 %v2057, %v2049
        %v2938 = vpack.c.b16 %v2066, %v2058
        %v2939 = vpack.c.b16 %v2067, %v2059
        %v2940 = vpack.c.b16 %v2068, %v2060
        %v2941 = vpack.c.b16 %v2069, %v2061
        %v2942 = vpack.c.b16 %v2070, %v2062
        %v2943 = vpack.c.b16 %v2071, %v2063
        %v2944 = vpack.c.b16 %v2072, %v2064
        %v2945 = vpack.c.b16 %v2073, %v2065
        %v2946 = vpack.c.b16 %v2082, %v2074
        %v2947 = vpack.c.b16 %v2083, %v2075
        %v2948 = vpack.c.b16 %v2084, %v2076
        %v2949 = vpack.c.b16 %v2085, %v2077
        %v2950 = vpack.c.b16 %v2086, %v2078
        %v2951 = vpack.c.b16 %v2087, %v2079
        %v2952 = vpack.c.b16 %v2088, %v2080
        %v2953 = vpack.c.b16 %v2089, %v2081
        %v2954 = vpack.c.b16 %v2098, %v2090
        %v2955 = vpack.c.b16 %v2099, %v2091
        %v2956 = vpack.c.b16 %v2100, %v2092
        %v2957 = vpack.c.b16 %v2101, %v2093
        %v2958 = vpack.c.b16 %v2102, %v2094
        %v2959 = vpack.c.b16 %v2103, %v2095
        %v2960 = vpack.c.b16 %v2104, %v2096
        %v2961 = vpack.c.b16 %v2105, %v2097
        %v2962 = vpack.c.b16 %v2114, %v2106
        %v2963 = vpack.c.b16 %v2115, %v2107
        %v2964 = vpack.c.b16 %v2116, %v2108
        %v2965 = vpack.c.b16 %v2117, %v2109
        %v2966 = vpack.c.b16 %v2118, %v2110
        %v2967 = vpack.c.b16 %v2119, %v2111
        %v2968 = vpack.c.b16 %v2120, %v2112
        %v2969 = vpack.c.b16 %v2121, %v2113
        %v2970 = vpack.c.b16 %v2130, %v2122
        %v2971 = vpack.c.b16 %v2131, %v2123
        %v2972 = vpack.c.b16 %v2132, %v2124
        %v2973 = vpack.c.b16 %v2133, %v2125
        %v2974 = vpack.c.b16 %v2134, %v2126
        %v2975 = vpack.c.b16 %v2135, %v2127
        %v2976 = vpack.c.b16 %v2136, %v2128
        %v2977 = vpack.c.b16 %v2137, %v2129
        %v2978 = vpack.c.b16 %v2146, %v2138
        %v2979 = vpack.c.b16 %v2147, %v2139
        %v2980 = vpack.c.b16 %v2148, %v2140
        %v2981 = vpack.c.b16 %v2149, %v2141
        %v2982 = vpack.c.b16 %v2150, %v2142
        %v2983 = vpack.c.b16 %v2151, %v2143
        %v2984 = vpack.c.b16 %v2152, %v2144
        %v2985 = vpack.c.b16 %v2153, %v2145
        %v2986 = vpack.c.b16 %v2162, %v2154
        %v2987 = vpack.c.b16 %v2163, %v2155
        %v2988 = vpack.c.b16 %v2164, %v2156
        %v2989 = vpack.c.b16 %v2165, %v2157
        %v2990 = vpack.c.b16 %v2166, %v2158
        %v2991 = vpack.c.b16 %v2167, %v2159
        %v2992 = vpack.c.b16 %v2168, %v2160
        %v2993 = vpack.c.b16 %v2169, %v2161
        %v2994 = vpack.c.b16 %v2178, %v2170
        %v2995 = vpack.c.b16 %v2179, %v2171
        %v2996 = vpack.c.b16 %v2180, %v2172
        %v2997 = vpack.c.b16 %v2181, %v2173
        %v2998 = vpack.c.b16 %v2182, %v2174
        %v2999 = vpack.c.b16 %v2183, %v2175
        %v3000 = vpack.c.b16 %v2184, %v2176
        %v3001 = vpack.c.b16 %v2185, %v2177
        %v3002 = vpack.c.b16 %v2194, %v2186
        %v3003 = vpack.c.b16 %v2195, %v2187
        %v3004 = vpack.c.b16 %v2196, %v2188
        %v3005 = vpack.c.b16 %v2197, %v2189
        %v3006 = vpack.c.b16 %v2198, %v2190
        %v3007 = vpack.c.b16 %v2199, %v2191
        %v3008 = vpack.c.b16 %v2200, %v2192
        %v3009 = vpack.c.b16 %v2201, %v2193
        %v3010 = vpack.c.b16 %v2210, %v2202
        %v3011 = vpack.c.b16 %v2211, %v2203
        %v3012 = vpack.c.b16 %v2212, %v2204
        %v3013 = vpack.c.b16 %v2213, %v2205
        %v3014 = vpack.c.b16 %v2214, %v2206
        %v3015 = vpack.c.b16 %v2215, %v2207
        %v3016 = vpack.c.b16 %v2216, %v2208
        %v3017 = vpack.c.b16 %v2217, %v2209
        %v3018 = vpack.c.b16 %v2226, %v2218
        %v3019 = vpack.c.b16 %v2227, %v2219
        %v3020 = vpack.c.b16 %v2228, %v2220
        %v3021 = vpack.c.b16 %v2229, %v2221
        %v3022 = vpack.c.b16 %v2230, %v2222
        %v3023 = vpack.c.b16 %v2231, %v2223
        %v3024 = vpack.c.b16 %v2232, %v2224
        %v3025 = vpack.c.b16 %v2233, %v2225
        %v3026 = vpack.c.b16 %v2242, %v2234
        %v3027 = vpack.c.b16 %v2243, %v2235
        %v3028 = vpack.c.b16 %v2244, %v2236
        %v3029 = vpack.c.b16 %v2245, %v2237
        %v3030 = vpack.c.b16 %v2246, %v2238
        %v3031 = vpack.c.b16 %v2247, %v2239
        %v3032 = vpack.c.b16 %v2248, %v2240
        %v3033 = vpack.c.b16 %v2249, %v2241
        %v3034 = vpack.c.b16 %v2258, %v2250
        %v3035 = vpack.c.b16 %v2259, %v2251
        %v3036 = vpack.c.b16 %v2260, %v2252
        %v3037 = vpack.c.b16 %v2261, %v2253
        %v3038 = vpack.c.b16 %v2262, %v2254
        %v3039 = vpack.c.b16 %v2263, %v2255
        %v3040 = vpack.c.b16 %v2264, %v2256
        %v3041 = vpack.c.b16 %v2265, %v2257
        %v3042 = vpack.c.b16 %v2274, %v2266
        %v3043 = vpack.c.b16 %v2275, %v2267
        %v3044 = vpack.c.b16 %v2276, %v2268
        %v3045 = vpack.c.b16 %v2277, %v2269
        %v3046 = vpack.c.b16 %v2278, %v2270
        %v3047 = vpack.c.b16 %v2279, %v2271
        %v3048 = vpack.c.b16 %v2280, %v2272
        %v3049 = vpack.c.b16 %v2281, %v2273
        %v3050 = vpack.c.b16 %v2290, %v2282
        %v3051 = vpack.c.b16 %v2291, %v2283
        %v3052 = vpack.c.b16 %v2292, %v2284
        %v3053 = vpack.c.b16 %v2293, %v2285
        %v3054 = vpack.c.b16 %v2294, %v2286
        %v3055 = vpack.c.b16 %v2295, %v2287
        %v3056 = vpack.c.b16 %v2296, %v2288
        %v3057 = vpack.c.b16 %v2297, %v2289
        %v3058 = vpack.c.b16 %v2306, %v2298
        %v3059 = vpack.c.b16 %v2307, %v2299
        %v3060 = vpack.c.b16 %v2308, %v2300
        %v3061 = vpack.c.b16 %v2309, %v2301
        %v3062 = vpack.c.b16 %v2310, %v2302
        %v3063 = vpack.c.b16 %v2311, %v2303
        %v3064 = vpack.c.b16 %v2312, %v2304
        %v3065 = vpack.c.b16 %v2313, %v2305
        %v3066 = vpack.c.b16 %v2322, %v2314
        %v3067 = vpack.c.b16 %v2323, %v2315
        %v3068 = vpack.c.b16 %v2324, %v2316
        %v3069 = vpack.c.b16 %v2325, %v2317
        %v3070 = vpack.c.b16 %v2326, %v2318
        %v3071 = vpack.c.b16 %v2327, %v2319
        %v3072 = vpack.c.b16 %v2328, %v2320
        %v3073 = vpack.c.b16 %v2329, %v2321
        %v3074 = vpack.c.b16 %v2338, %v2330
        %v3075 = vpack.c.b16 %v2339, %v2331
        %v3076 = vpack.c.b16 %v2340, %v2332
        %v3077 = vpack.c.b16 %v2341, %v2333
        %v3078 = vpack.c.b16 %v2342, %v2334
        %v3079 = vpack.c.b16 %v2343, %v2335
        %v3080 = vpack.c.b16 %v2344, %v2336
        %v3081 = vpack.c.b16 %v2345, %v2337
        %v3082 = vpack.c.b16 %v2354, %v2346
        %v3083 = vpack.c.b16 %v2355, %v2347
        %v3084 = vpack.c.b16 %v2356, %v2348
        %v3085 = vpack.c.b16 %v2357, %v2349
        %v3086 = vpack.c.b16 %v2358, %v2350
        %v3087 = vpack.c.b16 %v2359, %v2351
        %v3088 = vpack.c.b16 %v2360, %v2352
        %v3089 = vpack.c.b16 %v2361, %v2353
        %v3090 = vpack.c.b16 %v2370, %v2362
        %v3091 = vpack.c.b16 %v2371, %v2363
        %v3092 = vpack.c.b16 %v2372, %v2364
        %v3093 = vpack.c.b16 %v2373, %v2365
        %v3094 = vpack.c.b16 %v2374, %v2366
        %v3095 = vpack.c.b16 %v2375, %v2367
        %v3096 = vpack.c.b16 %v2376, %v2368
        %v3097 = vpack.c.b16 %v2377, %v2369
        %v3098 = vpack.c.b16 %v2386, %v2378
        %v3099 = vpack.c.b16 %v2387, %v2379
        %v3100 = vpack.c.b16 %v2388, %v2380
        %v3101 = vpack.c.b16 %v2389, %v2381
        %v3102 = vpack.c.b16 %v2390, %v2382
        %v3103 = vpack.c.b16 %v2391, %v2383
        %v3104 = vpack.c.b16 %v2392, %v2384
        %v3105 = vpack.c.b16 %v2393, %v2385
        %v3106 = vpack.c.b16 %v2402, %v2394
        %v3107 = vpack.c.b16 %v2403, %v2395
        %v3108 = vpack.c.b16 %v2404, %v2396
        %v3109 = vpack.c.b16 %v2405, %v2397
        %v3110 = vpack.c.b16 %v2406, %v2398
        %v3111 = vpack.c.b16 %v2407, %v2399
        %v3112 = vpack.c.b16 %v2408, %v2400
        %v3113 = vpack.c.b16 %v2409, %v2401
        %v3114 = vpack.c.b16 %v2418, %v2410
        %v3115 = vpack.c.b16 %v2419, %v2411
        %v3116 = vpack.c.b16 %v2420, %v2412
        %v3117 = vpack.c.b16 %v2421, %v2413
        %v3118 = vpack.c.b16 %v2422, %v2414
        %v3119 = vpack.c.b16 %v2423, %v2415
        %v3120 = vpack.c.b16 %v2424, %v2416
        %v3121 = vpack.c.b16 %v2425, %v2417
        %v3122 = vpack.c.b16 %v2434, %v2426
        %v3123 = vpack.c.b16 %v2435, %v2427
        %v3124 = vpack.c.b16 %v2436, %v2428
        %v3125 = vpack.c.b16 %v2437, %v2429
        %v3126 = vpack.c.b16 %v2438, %v2430
        %v3127 = vpack.c.b16 %v2439, %v2431
        %v3128 = vpack.c.b16 %v2440, %v2432
        %v3129 = vpack.c.b16 %v2441, %v2433
        %v3130 = vpack.c.b16 %v2450, %v2442
        %v3131 = vpack.c.b16 %v2451, %v2443
        %v3132 = vpack.c.b16 %v2452, %v2444
        %v3133 = vpack.c.b16 %v2453, %v2445
        %v3134 = vpack.c.b16 %v2454, %v2446
        %v3135 = vpack.c.b16 %v2455, %v2447
        %v3136 = vpack.c.b16 %v2456, %v2448
        %v3137 = vpack.c.b16 %v2457, %v2449
        %v3138 = vpack.c.b16 %v2466, %v2458
        %v3139 = vpack.c.b16 %v2467, %v2459
        %v3140 = vpack.c.b16 %v2468, %v2460
        %v3141 = vpack.c.b16 %v2469, %v2461
        %v3142 = vpack.c.b16 %v2470, %v2462
        %v3143 = vpack.c.b16 %v2471, %v2463
        %v3144 = vpack.c.b16 %v2472, %v2464
        %v3145 = vpack.c.b16 %v2473, %v2465
        %v3146 = vpack.c.b16 %v2482, %v2474
        %v3147 = vpack.c.b16 %v2483, %v2475
        %v3148 = vpack.c.b16 %v2484, %v2476
        %v3149 = vpack.c.b16 %v2485, %v2477
        %v3150 = vpack.c.b16 %v2486, %v2478
        %v3151 = vpack.c.b16 %v2487, %v2479
        %v3152 = vpack.c.b16 %v2488, %v2480
        %v3153 = vpack.c.b16 %v2489, %v2481
        %v3154 = vpack.c.b16 %v2498, %v2490
        %v3155 = vpack.c.b16 %v2499, %v2491
        %v3156 = vpack.c.b16 %v2500, %v2492
        %v3157 = vpack.c.b16 %v2501, %v2493
        %v3158 = vpack.c.b16 %v2502, %v2494
        %v3159 = vpack.c.b16 %v2503, %v2495
        %v3160 = vpack.c.b16 %v2504, %v2496
        %v3161 = vpack.c.b16 %v2505, %v2497
        %v3162 = vpack.c.b16 %v2514, %v2506
        %v3163 = vpack.c.b16 %v2515, %v2507
        %v3164 = vpack.c.b16 %v2516, %v2508
        %v3165 = vpack.c.b16 %v2517, %v2509
        %v3166 = vpack.c.b16 %v2518, %v2510
        %v3167 = vpack.c.b16 %v2519, %v2511
        %v3168 = vpack.c.b16 %v2520, %v2512
        %v3169 = vpack.c.b16 %v2521, %v2513
        %v3170 = vpack.c.b16 %v2530, %v2522
        %v3171 = vpack.c.b16 %v2531, %v2523
        %v3172 = vpack.c.b16 %v2532, %v2524
        %v3173 = vpack.c.b16 %v2533, %v2525
        %v3174 = vpack.c.b16 %v2534, %v2526
        %v3175 = vpack.c.b16 %v2535, %v2527
        %v3176 = vpack.c.b16 %v2536, %v2528
        %v3177 = vpack.c.b16 %v2537, %v2529
        %v3178 = vpack.c.b16 %v2546, %v2538
        %v3179 = vpack.c.b16 %v2547, %v2539
        %v3180 = vpack.c.b16 %v2548, %v2540
        %v3181 = vpack.c.b16 %v2549, %v2541
        %v3182 = vpack.c.b16 %v2550, %v2542
        %v3183 = vpack.c.b16 %v2551, %v2543
        %v3184 = vpack.c.b16 %v2552, %v2544
        %v3185 = vpack.c.b16 %v2553, %v2545
        %v3186 = vpack.c.b16 %v2562, %v2554
        %v3187 = vpack.c.b16 %v2563, %v2555
        %v3188 = vpack.c.b16 %v2564, %v2556
        %v3189 = vpack.c.b16 %v2565, %v2557
        %v3190 = vpack.c.b16 %v2566, %v2558
        %v3191 = vpack.c.b16 %v2567, %v2559
        %v3192 = vpack.c.b16 %v2568, %v2560
        %v3193 = vpack.c.b16 %v2569, %v2561
        %v3194 = vpack.c.b16 %v2578, %v2570
        %v3195 = vpack.c.b16 %v2579, %v2571
        %v3196 = vpack.c.b16 %v2580, %v2572
        %v3197 = vpack.c.b16 %v2581, %v2573
        %v3198 = vpack.c.b16 %v2582, %v2574
        %v3199 = vpack.c.b16 %v2583, %v2575
        %v3200 = vpack.c.b16 %v2584, %v2576
        %v3201 = vpack.c.b16 %v2585, %v2577
        %v3202 = vpack.c.b16 %v2594, %v2586
        %v3203 = vpack.c.b16 %v2595, %v2587
        %v3204 = vpack.c.b16 %v2596, %v2588
        %v3205 = vpack.c.b16 %v2597, %v2589
        %v3206 = vpack.c.b16 %v2598, %v2590
        %v3207 = vpack.c.b16 %v2599, %v2591
        %v3208 = vpack.c.b16 %v2600, %v2592
        %v3209 = vpack.c.b16 %v2601, %v2593
        %v3210 = vpack.c.b16 %v2610, %v2602
        %v3211 = vpack.c.b16 %v2611, %v2603
        %v3212 = vpack.c.b16 %v2612, %v2604
        %v3213 = vpack.c.b16 %v2613, %v2605
        %v3214 = vpack.c.b16 %v2614, %v2606
        %v3215 = vpack.c.b16 %v2615, %v2607
        %v3216 = vpack.c.b16 %v2616, %v2608
        %v3217 = vpack.c.b16 %v2617, %v2609
        %v3218 = vpack.c.b16 %v2626, %v2618
        %v3219 = vpack.c.b16 %v2627, %v2619
        %v3220 = vpack.c.b16 %v2628, %v2620
        %v3221 = vpack.c.b16 %v2629, %v2621
        %v3222 = vpack.c.b16 %v2630, %v2622
        %v3223 = vpack.c.b16 %v2631, %v2623
        %v3224 = vpack.c.b16 %v2632, %v2624
        %v3225 = vpack.c.b16 %v2633, %v2625
        %v3226 = vpack.c.b16 %v2642, %v2634
        %v3227 = vpack.c.b16 %v2643, %v2635
        %v3228 = vpack.c.b16 %v2644, %v2636
        %v3229 = vpack.c.b16 %v2645, %v2637
        %v3230 = vpack.c.b16 %v2646, %v2638
        %v3231 = vpack.c.b16 %v2647, %v2639
        %v3232 = vpack.c.b16 %v2648, %v2640
        %v3233 = vpack.c.b16 %v2649, %v2641
        %v3234 = vpack.c.b16 %v2658, %v2650
        %v3235 = vpack.c.b16 %v2659, %v2651
        %v3236 = vpack.c.b16 %v2660, %v2652
        %v3237 = vpack.c.b16 %v2661, %v2653
        %v3238 = vpack.c.b16 %v2662, %v2654
        %v3239 = vpack.c.b16 %v2663, %v2655
        %v3240 = vpack.c.b16 %v2664, %v2656
        %v3241 = vpack.c.b16 %v2665, %v2657
        %v3242 = vpack.c.b16 %v2674, %v2666
        %v3243 = vpack.c.b16 %v2675, %v2667
        %v3244 = vpack.c.b16 %v2676, %v2668
        %v3245 = vpack.c.b16 %v2677, %v2669
        %v3246 = vpack.c.b16 %v2678, %v2670
        %v3247 = vpack.c.b16 %v2679, %v2671
        %v3248 = vpack.c.b16 %v2680, %v2672
        %v3249 = vpack.c.b16 %v2681, %v2673
        %v3250 = vpack.c.b16 %v2690, %v2682
        %v3251 = vpack.c.b16 %v2691, %v2683
        %v3252 = vpack.c.b16 %v2692, %v2684
        %v3253 = vpack.c.b16 %v2693, %v2685
        %v3254 = vpack.c.b16 %v2694, %v2686
        %v3255 = vpack.c.b16 %v2695, %v2687
        %v3256 = vpack.c.b16 %v2696, %v2688
        %v3257 = vpack.c.b16 %v2697, %v2689
        %v3258 = vpack.c.b16 %v2706, %v2698
        %v3259 = vpack.c.b16 %v2707, %v2699
        %v3260 = vpack.c.b16 %v2708, %v2700
        %v3261 = vpack.c.b16 %v2709, %v2701
        %v3262 = vpack.c.b16 %v2710, %v2702
        %v3263 = vpack.c.b16 %v2711, %v2703
        %v3264 = vpack.c.b16 %v2712, %v2704
        %v3265 = vpack.c.b16 %v2713, %v2705
        %v3266 = vpack.c.b16 %v2722, %v2714
        %v3267 = vpack.c.b16 %v2723, %v2715
        %v3268 = vpack.c.b16 %v2724, %v2716
        %v3269 = vpack.c.b16 %v2725, %v2717
        %v3270 = vpack.c.b16 %v2726, %v2718
        %v3271 = vpack.c.b16 %v2727, %v2719
        %v3272 = vpack.c.b16 %v2728, %v2720
        %v3273 = vpack.c.b16 %v2729, %v2721
        %v3274 = vpack.c.b16 %v2738, %v2730
        %v3275 = vpack.c.b16 %v2739, %v2731
        %v3276 = vpack.c.b16 %v2740, %v2732
        %v3277 = vpack.c.b16 %v2741, %v2733
        %v3278 = vpack.c.b16 %v2742, %v2734
        %v3279 = vpack.c.b16 %v2743, %v2735
        %v3280 = vpack.c.b16 %v2744, %v2736
        %v3281 = vpack.c.b16 %v2745, %v2737
        %v3282 = vpack.c.b16 %v2754, %v2746
        %v3283 = vpack.c.b16 %v2755, %v2747
        %v3284 = vpack.c.b16 %v2756, %v2748
        %v3285 = vpack.c.b16 %v2757, %v2749
        %v3286 = vpack.c.b16 %v2758, %v2750
        %v3287 = vpack.c.b16 %v2759, %v2751
        %v3288 = vpack.c.b16 %v2760, %v2752
        %v3289 = vpack.c.b16 %v2761, %v2753
        %v3290 = vpack.c.b16 %v2770, %v2762
        %v3291 = vpack.c.b16 %v2771, %v2763
        %v3292 = vpack.c.b16 %v2772, %v2764
        %v3293 = vpack.c.b16 %v2773, %v2765
        %v3294 = vpack.c.b16 %v2774, %v2766
        %v3295 = vpack.c.b16 %v2775, %v2767
        %v3296 = vpack.c.b16 %v2776, %v2768
        %v3297 = vpack.c.b16 %v2777, %v2769
        %v3298 = vpack.c.b16 %v2786, %v2778
        %v3299 = vpack.c.b16 %v2787, %v2779
        %v3300 = vpack.c.b16 %v2788, %v2780
        %v3301 = vpack.c.b16 %v2789, %v2781
        %v3302 = vpack.c.b16 %v2790, %v2782
        %v3303 = vpack.c.b16 %v2791, %v2783
        %v3304 = vpack.c.b16 %v2792, %v2784
        %v3305 = vpack.c.b16 %v2793, %v2785
        %3818 = vmatprep.subr.bf16.mxu0 %v2851
        %3819 = vmatpush1.bf16.msra.mxu0 %v2850
        %3820 = vmatprep.subr.bf16.mxu0 %v2843
        %3821 = vmatpush1.bf16.msra.mxu0 %v2842
        %3822 = vmatprep.subr.bf16.mxu0 %v2835
        %3823 = vmatpush1.bf16.msra.mxu0 %v2834
        %3824 = vmatprep.subr.bf16.mxu0 %v2827
        %3825 = vmatpush1.bf16.msra.mxu0 %v2826
        %3826 = vmatprep.subr.bf16.mxu0 %v2819
        %3827 = vmatpush1.bf16.msra.mxu0 %v2818
        %3828 = vmatprep.subr.bf16.mxu0 %v2811
        %3829 = vmatpush1.bf16.msra.mxu0 %v2810
        %3830 = vmatprep.subr.bf16.mxu0 %v2803
        %3831 = vmatpush1.bf16.msra.mxu0 %v2802
        %3832 = vmatprep.subr.bf16.mxu0 %v2795
        %3833 = vmatpush1.bf16.msra.mxu0 %v2794
        %3834 = vmatprep.subr.bf16.mxu0 %v2915
        %3835 = vmatpush2.bf16.msra.mxu0 %v2914
        %3836 = vmatprep.subr.bf16.mxu0 %v2907
        %3837 = vmatpush2.bf16.msra.mxu0 %v2906
        %3838 = vmatprep.subr.bf16.mxu0 %v2899
        %3839 = vmatpush2.bf16.msra.mxu0 %v2898
        %3840 = vmatprep.subr.bf16.mxu0 %v2891
        %3841 = vmatpush2.bf16.msra.mxu0 %v2890
        %3842 = vmatprep.subr.bf16.mxu0 %v2883
        %3843 = vmatpush2.bf16.msra.mxu0 %v2882
        %3844 = vmatprep.subr.bf16.mxu0 %v2875
        %3845 = vmatpush2.bf16.msra.mxu0 %v2874
        %3846 = vmatprep.subr.bf16.mxu0 %v2867
        %3847 = vmatpush2.bf16.msra.mxu0 %v2866
        %3848 = vmatprep.subr.bf16.mxu0 %v2859
        %3849 = vmatpush2.bf16.msra.mxu0 %v2858
        %3850 = vmatprep.mubr.bf16.mxu0 %v1243
        %3851 = vmatmul.mubr.bf16.gmra.mxu0 %v1242
        %v3852 = vpop.f32.mrf.mxu0
        %v3853 = vadd.f32 %v1193, %v3852
        %v3854 = vpop.f32.mrf.mxu0
        %v3855 = vadd.f32 %v1197, %v3854
        %v3856 = vpop.f32.mrf.mxu0
        %v3857 = vpop.f32.mrf.mxu0
        %3858 = vdwg.mxu0
        %3859 = vmatprep.subr.bf16.mxu0 %v2979
        %3860 = vmatpush1.bf16.msra.mxu0 %v2978
        %3861 = vmatprep.subr.bf16.mxu0 %v2971
        %3862 = vmatpush1.bf16.msra.mxu0 %v2970
        %3863 = vmatprep.subr.bf16.mxu0 %v2963
        %3864 = vmatpush1.bf16.msra.mxu0 %v2962
        %3865 = vmatprep.subr.bf16.mxu0 %v2955
        %3866 = vmatpush1.bf16.msra.mxu0 %v2954
        %3867 = vmatprep.subr.bf16.mxu0 %v2947
        %3868 = vmatpush1.bf16.msra.mxu0 %v2946
        %3869 = vmatprep.subr.bf16.mxu0 %v2939
        %3870 = vmatpush1.bf16.msra.mxu0 %v2938
        %3871 = vmatprep.subr.bf16.mxu0 %v2931
        %3872 = vmatpush1.bf16.msra.mxu0 %v2930
        %3873 = vmatprep.subr.bf16.mxu0 %v2923
        %3874 = vmatpush1.bf16.msra.mxu0 %v2922
        %3875 = vmatprep.subr.bf16.mxu0 %v3043
        %3876 = vmatpush2.bf16.msra.mxu0 %v3042
        %3877 = vmatprep.subr.bf16.mxu0 %v3035
        %3878 = vmatpush2.bf16.msra.mxu0 %v3034
        %3879 = vmatprep.subr.bf16.mxu0 %v3027
        %3880 = vmatpush2.bf16.msra.mxu0 %v3026
        %3881 = vmatprep.subr.bf16.mxu0 %v3019
        %3882 = vmatpush2.bf16.msra.mxu0 %v3018
        %3883 = vmatprep.subr.bf16.mxu0 %v3011
        %3884 = vmatpush2.bf16.msra.mxu0 %v3010
        %3885 = vmatprep.subr.bf16.mxu0 %v3003
        %3886 = vmatpush2.bf16.msra.mxu0 %v3002
        %3887 = vmatprep.subr.bf16.mxu0 %v2995
        %3888 = vmatpush2.bf16.msra.mxu0 %v2994
        %3889 = vmatprep.subr.bf16.mxu0 %v2987
        %3890 = vmatpush2.bf16.msra.mxu0 %v2986
        %3891 = vmatprep.mubr.bf16.mxu0 %v1245
        %3892 = vmatmul.mubr.bf16.gmra.mxu0 %v1244
        %v3893 = vpop.f32.mrf.mxu0
        %v3894 = vadd.f32 %v3853, %v3893
        %v3895 = vpop.f32.mrf.mxu0
        %v3896 = vadd.f32 %v3855, %v3895
        %v3897 = vpop.f32.mrf.mxu0
        %v3898 = vpop.f32.mrf.mxu0
        %3899 = vdwg.mxu0
        %3900 = vmatprep.subr.bf16.mxu0 %v3107
        %3901 = vmatpush1.bf16.msra.mxu0 %v3106
        %3902 = vmatprep.subr.bf16.mxu0 %v3099
        %3903 = vmatpush1.bf16.msra.mxu0 %v3098
        %3904 = vmatprep.subr.bf16.mxu0 %v3091
        %3905 = vmatpush1.bf16.msra.mxu0 %v3090
        %3906 = vmatprep.subr.bf16.mxu0 %v3083
        %3907 = vmatpush1.bf16.msra.mxu0 %v3082
        %3908 = vmatprep.subr.bf16.mxu0 %v3075
        %3909 = vmatpush1.bf16.msra.mxu0 %v3074
        %3910 = vmatprep.subr.bf16.mxu0 %v3067
        %3911 = vmatpush1.bf16.msra.mxu0 %v3066
        %3912 = vmatprep.subr.bf16.mxu0 %v3059
        %3913 = vmatpush1.bf16.msra.mxu0 %v3058
        %3914 = vmatprep.subr.bf16.mxu0 %v3051
        %3915 = vmatpush1.bf16.msra.mxu0 %v3050
        %3916 = vmatprep.subr.bf16.mxu0 %v3171
        %3917 = vmatpush2.bf16.msra.mxu0 %v3170
        %3918 = vmatprep.subr.bf16.mxu0 %v3163
        %3919 = vmatpush2.bf16.msra.mxu0 %v3162
        %3920 = vmatprep.subr.bf16.mxu0 %v3155
        %3921 = vmatpush2.bf16.msra.mxu0 %v3154
        %3922 = vmatprep.subr.bf16.mxu0 %v3147
        %3923 = vmatpush2.bf16.msra.mxu0 %v3146
        %3924 = vmatprep.subr.bf16.mxu0 %v3139
        %3925 = vmatpush2.bf16.msra.mxu0 %v3138
        %3926 = vmatprep.subr.bf16.mxu0 %v3131
        %3927 = vmatpush2.bf16.msra.mxu0 %v3130
        %3928 = vmatprep.subr.bf16.mxu0 %v3123
        %3929 = vmatpush2.bf16.msra.mxu0 %v3122
        %3930 = vmatprep.subr.bf16.mxu0 %v3115
        %3931 = vmatpush2.bf16.msra.mxu0 %v3114
        %3932 = vmatprep.mubr.bf16.mxu0 %v1247
        %3933 = vmatmul.mubr.bf16.gmra.mxu0 %v1246
        %v3934 = vpop.f32.mrf.mxu0
        %v3935 = vadd.f32 %v3894, %v3934
        %v3936 = vpop.f32.mrf.mxu0
        %v3937 = vadd.f32 %v3896, %v3936
        %v3938 = vpop.f32.mrf.mxu0
        %v3939 = vpop.f32.mrf.mxu0
        %3940 = vdwg.mxu0
        %3941 = vmatprep.subr.bf16.mxu0 %v3235
        %3942 = vmatpush1.bf16.msra.mxu0 %v3234
        %3943 = vmatprep.subr.bf16.mxu0 %v3227
        %3944 = vmatpush1.bf16.msra.mxu0 %v3226
        %3945 = vmatprep.subr.bf16.mxu0 %v3219
        %3946 = vmatpush1.bf16.msra.mxu0 %v3218
        %3947 = vmatprep.subr.bf16.mxu0 %v3211
        %3948 = vmatpush1.bf16.msra.mxu0 %v3210
        %3949 = vmatprep.subr.bf16.mxu0 %v3203
        %3950 = vmatpush1.bf16.msra.mxu0 %v3202
        %3951 = vmatprep.subr.bf16.mxu0 %v3195
        %3952 = vmatpush1.bf16.msra.mxu0 %v3194
        %3953 = vmatprep.subr.bf16.mxu0 %v3187
        %3954 = vmatpush1.bf16.msra.mxu0 %v3186
        %3955 = vmatprep.subr.bf16.mxu0 %v3179
        %3956 = vmatpush1.bf16.msra.mxu0 %v3178
        %3957 = vmatprep.subr.bf16.mxu0 %v3299
        %3958 = vmatpush2.bf16.msra.mxu0 %v3298
        %3959 = vmatprep.subr.bf16.mxu0 %v3291
        %3960 = vmatpush2.bf16.msra.mxu0 %v3290
        %3961 = vmatprep.subr.bf16.mxu0 %v3283
        %3962 = vmatpush2.bf16.msra.mxu0 %v3282
        %3963 = vmatprep.subr.bf16.mxu0 %v3275
        %3964 = vmatpush2.bf16.msra.mxu0 %v3274
        %3965 = vmatprep.subr.bf16.mxu0 %v3267
        %3966 = vmatpush2.bf16.msra.mxu0 %v3266
        %3967 = vmatprep.subr.bf16.mxu0 %v3259
        %3968 = vmatpush2.bf16.msra.mxu0 %v3258
        %3969 = vmatprep.subr.bf16.mxu0 %v3251
        %3970 = vmatpush2.bf16.msra.mxu0 %v3250
        %3971 = vmatprep.subr.bf16.mxu0 %v3243
        %3972 = vmatpush2.bf16.msra.mxu0 %v3242
        %3973 = vmatprep.mubr.bf16.mxu0 %v1249
        %3974 = vmatmul.mubr.bf16.gmra.mxu0 %v1248
        %v3975 = vpop.f32.mrf.mxu0
        %v3976 = vadd.f32 %v3935, %v3975
        %v3977 = vpop.f32.mrf.mxu0
        %v3978 = vadd.f32 %v3937, %v3977
        %v3979 = vpop.f32.mrf.mxu0
        %v3980 = vpop.f32.mrf.mxu0
        %3981 = vdwg.mxu0
        %3982 = vmatprep.subr.bf16.mxu0 %v2853
        %3983 = vmatpush1.bf16.msra.mxu0 %v2852
        %3984 = vmatprep.subr.bf16.mxu0 %v2845
        %3985 = vmatpush1.bf16.msra.mxu0 %v2844
        %3986 = vmatprep.subr.bf16.mxu0 %v2837
        %3987 = vmatpush1.bf16.msra.mxu0 %v2836
        %3988 = vmatprep.subr.bf16.mxu0 %v2829
        %3989 = vmatpush1.bf16.msra.mxu0 %v2828
        %3990 = vmatprep.subr.bf16.mxu0 %v2821
        %3991 = vmatpush1.bf16.msra.mxu0 %v2820
        %3992 = vmatprep.subr.bf16.mxu0 %v2813
        %3993 = vmatpush1.bf16.msra.mxu0 %v2812
        %3994 = vmatprep.subr.bf16.mxu0 %v2805
        %3995 = vmatpush1.bf16.msra.mxu0 %v2804
        %3996 = vmatprep.subr.bf16.mxu0 %v2797
        %3997 = vmatpush1.bf16.msra.mxu0 %v2796
        %3998 = vmatprep.subr.bf16.mxu0 %v2917
        %3999 = vmatpush2.bf16.msra.mxu0 %v2916
        %4000 = vmatprep.subr.bf16.mxu0 %v2909
        %4001 = vmatpush2.bf16.msra.mxu0 %v2908
        %4002 = vmatprep.subr.bf16.mxu0 %v2901
        %4003 = vmatpush2.bf16.msra.mxu0 %v2900
        %4004 = vmatprep.subr.bf16.mxu0 %v2893
        %4005 = vmatpush2.bf16.msra.mxu0 %v2892
        %4006 = vmatprep.subr.bf16.mxu0 %v2885
        %4007 = vmatpush2.bf16.msra.mxu0 %v2884
        %4008 = vmatprep.subr.bf16.mxu0 %v2877
        %4009 = vmatpush2.bf16.msra.mxu0 %v2876
        %4010 = vmatprep.subr.bf16.mxu0 %v2869
        %4011 = vmatpush2.bf16.msra.mxu0 %v2868
        %4012 = vmatprep.subr.bf16.mxu0 %v2861
        %4013 = vmatpush2.bf16.msra.mxu0 %v2860
        %4014 = vmatprep.mubr.bf16.mxu0 %v1243
        %4015 = vmatmul.mubr.bf16.gmra.mxu0 %v1242
        %v4016 = vpop.f32.mrf.mxu0
        %v4017 = vadd.f32 %v1201, %v4016
        %v4018 = vpop.f32.mrf.mxu0
        %v4019 = vadd.f32 %v1205, %v4018
        %v4020 = vpop.f32.mrf.mxu0
        %v4021 = vpop.f32.mrf.mxu0
        %4022 = vdwg.mxu0
        %4023 = vmatprep.subr.bf16.mxu0 %v2981
        %4024 = vmatpush1.bf16.msra.mxu0 %v2980
        %4025 = vmatprep.subr.bf16.mxu0 %v2973
        %4026 = vmatpush1.bf16.msra.mxu0 %v2972
        %4027 = vmatprep.subr.bf16.mxu0 %v2965
        %4028 = vmatpush1.bf16.msra.mxu0 %v2964
        %4029 = vmatprep.subr.bf16.mxu0 %v2957
        %4030 = vmatpush1.bf16.msra.mxu0 %v2956
        %4031 = vmatprep.subr.bf16.mxu0 %v2949
        %4032 = vmatpush1.bf16.msra.mxu0 %v2948
        %4033 = vmatprep.subr.bf16.mxu0 %v2941
        %4034 = vmatpush1.bf16.msra.mxu0 %v2940
        %4035 = vmatprep.subr.bf16.mxu0 %v2933
        %4036 = vmatpush1.bf16.msra.mxu0 %v2932
        %4037 = vmatprep.subr.bf16.mxu0 %v2925
        %4038 = vmatpush1.bf16.msra.mxu0 %v2924
        %4039 = vmatprep.subr.bf16.mxu0 %v3045
        %4040 = vmatpush2.bf16.msra.mxu0 %v3044
        %4041 = vmatprep.subr.bf16.mxu0 %v3037
        %4042 = vmatpush2.bf16.msra.mxu0 %v3036
        %4043 = vmatprep.subr.bf16.mxu0 %v3029
        %4044 = vmatpush2.bf16.msra.mxu0 %v3028
        %4045 = vmatprep.subr.bf16.mxu0 %v3021
        %4046 = vmatpush2.bf16.msra.mxu0 %v3020
        %4047 = vmatprep.subr.bf16.mxu0 %v3013
        %4048 = vmatpush2.bf16.msra.mxu0 %v3012
        %4049 = vmatprep.subr.bf16.mxu0 %v3005
        %4050 = vmatpush2.bf16.msra.mxu0 %v3004
        %4051 = vmatprep.subr.bf16.mxu0 %v2997
        %4052 = vmatpush2.bf16.msra.mxu0 %v2996
        %4053 = vmatprep.subr.bf16.mxu0 %v2989
        %4054 = vmatpush2.bf16.msra.mxu0 %v2988
        %4055 = vmatprep.mubr.bf16.mxu0 %v1245
        %4056 = vmatmul.mubr.bf16.gmra.mxu0 %v1244
        %v4057 = vpop.f32.mrf.mxu0
        %v4058 = vadd.f32 %v4017, %v4057
        %v4059 = vpop.f32.mrf.mxu0
        %v4060 = vadd.f32 %v4019, %v4059
        %v4061 = vpop.f32.mrf.mxu0
        %v4062 = vpop.f32.mrf.mxu0
        %4063 = vdwg.mxu0
        %4064 = vmatprep.subr.bf16.mxu0 %v3109
        %4065 = vmatpush1.bf16.msra.mxu0 %v3108
        %4066 = vmatprep.subr.bf16.mxu0 %v3101
        %4067 = vmatpush1.bf16.msra.mxu0 %v3100
        %4068 = vmatprep.subr.bf16.mxu0 %v3093
        %4069 = vmatpush1.bf16.msra.mxu0 %v3092
        %4070 = vmatprep.subr.bf16.mxu0 %v3085
        %4071 = vmatpush1.bf16.msra.mxu0 %v3084
        %4072 = vmatprep.subr.bf16.mxu0 %v3077
        %4073 = vmatpush1.bf16.msra.mxu0 %v3076
        %4074 = vmatprep.subr.bf16.mxu0 %v3069
        %4075 = vmatpush1.bf16.msra.mxu0 %v3068
        %4076 = vmatprep.subr.bf16.mxu0 %v3061
        %4077 = vmatpush1.bf16.msra.mxu0 %v3060
        %4078 = vmatprep.subr.bf16.mxu0 %v3053
        %4079 = vmatpush1.bf16.msra.mxu0 %v3052
        %4080 = vmatprep.subr.bf16.mxu0 %v3173
        %4081 = vmatpush2.bf16.msra.mxu0 %v3172
        %4082 = vmatprep.subr.bf16.mxu0 %v3165
        %4083 = vmatpush2.bf16.msra.mxu0 %v3164
        %4084 = vmatprep.subr.bf16.mxu0 %v3157
        %4085 = vmatpush2.bf16.msra.mxu0 %v3156
        %4086 = vmatprep.subr.bf16.mxu0 %v3149
        %4087 = vmatpush2.bf16.msra.mxu0 %v3148
        %4088 = vmatprep.subr.bf16.mxu0 %v3141
        %4089 = vmatpush2.bf16.msra.mxu0 %v3140
        %4090 = vmatprep.subr.bf16.mxu0 %v3133
        %4091 = vmatpush2.bf16.msra.mxu0 %v3132
        %4092 = vmatprep.subr.bf16.mxu0 %v3125
        %4093 = vmatpush2.bf16.msra.mxu0 %v3124
        %4094 = vmatprep.subr.bf16.mxu0 %v3117
        %4095 = vmatpush2.bf16.msra.mxu0 %v3116
        %4096 = vmatprep.mubr.bf16.mxu0 %v1247
        %4097 = vmatmul.mubr.bf16.gmra.mxu0 %v1246
        %v4098 = vpop.f32.mrf.mxu0
        %v4099 = vadd.f32 %v4058, %v4098
        %v4100 = vpop.f32.mrf.mxu0
        %v4101 = vadd.f32 %v4060, %v4100
        %v4102 = vpop.f32.mrf.mxu0
        %v4103 = vpop.f32.mrf.mxu0
        %4104 = vdwg.mxu0
        %4105 = vmatprep.subr.bf16.mxu0 %v3237
        %4106 = vmatpush1.bf16.msra.mxu0 %v3236
        %4107 = vmatprep.subr.bf16.mxu0 %v3229
        %4108 = vmatpush1.bf16.msra.mxu0 %v3228
        %4109 = vmatprep.subr.bf16.mxu0 %v3221
        %4110 = vmatpush1.bf16.msra.mxu0 %v3220
        %4111 = vmatprep.subr.bf16.mxu0 %v3213
        %4112 = vmatpush1.bf16.msra.mxu0 %v3212
        %4113 = vmatprep.subr.bf16.mxu0 %v3205
        %4114 = vmatpush1.bf16.msra.mxu0 %v3204
        %4115 = vmatprep.subr.bf16.mxu0 %v3197
        %4116 = vmatpush1.bf16.msra.mxu0 %v3196
        %4117 = vmatprep.subr.bf16.mxu0 %v3189
        %4118 = vmatpush1.bf16.msra.mxu0 %v3188
        %4119 = vmatprep.subr.bf16.mxu0 %v3181
        %4120 = vmatpush1.bf16.msra.mxu0 %v3180
        %4121 = vmatprep.subr.bf16.mxu0 %v3301
        %4122 = vmatpush2.bf16.msra.mxu0 %v3300
        %4123 = vmatprep.subr.bf16.mxu0 %v3293
        %4124 = vmatpush2.bf16.msra.mxu0 %v3292
        %4125 = vmatprep.subr.bf16.mxu0 %v3285
        %4126 = vmatpush2.bf16.msra.mxu0 %v3284
        %4127 = vmatprep.subr.bf16.mxu0 %v3277
        %4128 = vmatpush2.bf16.msra.mxu0 %v3276
        %4129 = vmatprep.subr.bf16.mxu0 %v3269
        %4130 = vmatpush2.bf16.msra.mxu0 %v3268
        %4131 = vmatprep.subr.bf16.mxu0 %v3261
        %4132 = vmatpush2.bf16.msra.mxu0 %v3260
        %4133 = vmatprep.subr.bf16.mxu0 %v3253
        %4134 = vmatpush2.bf16.msra.mxu0 %v3252
        %4135 = vmatprep.subr.bf16.mxu0 %v3245
        %4136 = vmatpush2.bf16.msra.mxu0 %v3244
        %4137 = vmatprep.mubr.bf16.mxu0 %v1249
        %4138 = vmatmul.mubr.bf16.gmra.mxu0 %v1248
        %v4139 = vpop.f32.mrf.mxu0
        %v4140 = vadd.f32 %v4099, %v4139
        %v4141 = vpop.f32.mrf.mxu0
        %v4142 = vadd.f32 %v4101, %v4141
        %v4143 = vpop.f32.mrf.mxu0
        %v4144 = vpop.f32.mrf.mxu0
        %4145 = vdwg.mxu0
        %4146 = vmatprep.subr.bf16.mxu0 %v2855
        %4147 = vmatpush1.bf16.msra.mxu0 %v2854
        %4148 = vmatprep.subr.bf16.mxu0 %v2847
        %4149 = vmatpush1.bf16.msra.mxu0 %v2846
        %4150 = vmatprep.subr.bf16.mxu0 %v2839
        %4151 = vmatpush1.bf16.msra.mxu0 %v2838
        %4152 = vmatprep.subr.bf16.mxu0 %v2831
        %4153 = vmatpush1.bf16.msra.mxu0 %v2830
        %4154 = vmatprep.subr.bf16.mxu0 %v2823
        %4155 = vmatpush1.bf16.msra.mxu0 %v2822
        %4156 = vmatprep.subr.bf16.mxu0 %v2815
        %4157 = vmatpush1.bf16.msra.mxu0 %v2814
        %4158 = vmatprep.subr.bf16.mxu0 %v2807
        %4159 = vmatpush1.bf16.msra.mxu0 %v2806
        %4160 = vmatprep.subr.bf16.mxu0 %v2799
        %4161 = vmatpush1.bf16.msra.mxu0 %v2798
        %4162 = vmatprep.subr.bf16.mxu0 %v2919
        %4163 = vmatpush2.bf16.msra.mxu0 %v2918
        %4164 = vmatprep.subr.bf16.mxu0 %v2911
        %4165 = vmatpush2.bf16.msra.mxu0 %v2910
        %4166 = vmatprep.subr.bf16.mxu0 %v2903
        %4167 = vmatpush2.bf16.msra.mxu0 %v2902
        %4168 = vmatprep.subr.bf16.mxu0 %v2895
        %4169 = vmatpush2.bf16.msra.mxu0 %v2894
        %4170 = vmatprep.subr.bf16.mxu0 %v2887
        %4171 = vmatpush2.bf16.msra.mxu0 %v2886
        %4172 = vmatprep.subr.bf16.mxu0 %v2879
        %4173 = vmatpush2.bf16.msra.mxu0 %v2878
        %4174 = vmatprep.subr.bf16.mxu0 %v2871
        %4175 = vmatpush2.bf16.msra.mxu0 %v2870
        %4176 = vmatprep.subr.bf16.mxu0 %v2863
        %4177 = vmatpush2.bf16.msra.mxu0 %v2862
        %4178 = vmatprep.mubr.bf16.mxu0 %v1243
        %4179 = vmatmul.mubr.bf16.gmra.mxu0 %v1242
        %v4180 = vpop.f32.mrf.mxu0
        %v4181 = vadd.f32 %v1209, %v4180
        %v4182 = vpop.f32.mrf.mxu0
        %v4183 = vadd.f32 %v1213, %v4182
        %v4184 = vpop.f32.mrf.mxu0
        %v4185 = vpop.f32.mrf.mxu0
        %4186 = vdwg.mxu0
        %4187 = vmatprep.subr.bf16.mxu0 %v2983
        %4188 = vmatpush1.bf16.msra.mxu0 %v2982
        %4189 = vmatprep.subr.bf16.mxu0 %v2975
        %4190 = vmatpush1.bf16.msra.mxu0 %v2974
        %4191 = vmatprep.subr.bf16.mxu0 %v2967
        %4192 = vmatpush1.bf16.msra.mxu0 %v2966
        %4193 = vmatprep.subr.bf16.mxu0 %v2959
        %4194 = vmatpush1.bf16.msra.mxu0 %v2958
        %4195 = vmatprep.subr.bf16.mxu0 %v2951
        %4196 = vmatpush1.bf16.msra.mxu0 %v2950
        %4197 = vmatprep.subr.bf16.mxu0 %v2943
        %4198 = vmatpush1.bf16.msra.mxu0 %v2942
        %4199 = vmatprep.subr.bf16.mxu0 %v2935
        %4200 = vmatpush1.bf16.msra.mxu0 %v2934
        %4201 = vmatprep.subr.bf16.mxu0 %v2927
        %4202 = vmatpush1.bf16.msra.mxu0 %v2926
        %4203 = vmatprep.subr.bf16.mxu0 %v3047
        %4204 = vmatpush2.bf16.msra.mxu0 %v3046
        %4205 = vmatprep.subr.bf16.mxu0 %v3039
        %4206 = vmatpush2.bf16.msra.mxu0 %v3038
        %4207 = vmatprep.subr.bf16.mxu0 %v3031
        %4208 = vmatpush2.bf16.msra.mxu0 %v3030
        %4209 = vmatprep.subr.bf16.mxu0 %v3023
        %4210 = vmatpush2.bf16.msra.mxu0 %v3022
        %4211 = vmatprep.subr.bf16.mxu0 %v3015
        %4212 = vmatpush2.bf16.msra.mxu0 %v3014
        %4213 = vmatprep.subr.bf16.mxu0 %v3007
        %4214 = vmatpush2.bf16.msra.mxu0 %v3006
        %4215 = vmatprep.subr.bf16.mxu0 %v2999
        %4216 = vmatpush2.bf16.msra.mxu0 %v2998
        %4217 = vmatprep.subr.bf16.mxu0 %v2991
        %4218 = vmatpush2.bf16.msra.mxu0 %v2990
        %4219 = vmatprep.mubr.bf16.mxu0 %v1245
        %4220 = vmatmul.mubr.bf16.gmra.mxu0 %v1244
        %v4221 = vpop.f32.mrf.mxu0
        %v4222 = vadd.f32 %v4181, %v4221
        %v4223 = vpop.f32.mrf.mxu0
        %v4224 = vadd.f32 %v4183, %v4223
        %v4225 = vpop.f32.mrf.mxu0
        %v4226 = vpop.f32.mrf.mxu0
        %4227 = vdwg.mxu0
        %4228 = vmatprep.subr.bf16.mxu0 %v3111
        %4229 = vmatpush1.bf16.msra.mxu0 %v3110
        %4230 = vmatprep.subr.bf16.mxu0 %v3103
        %4231 = vmatpush1.bf16.msra.mxu0 %v3102
        %4232 = vmatprep.subr.bf16.mxu0 %v3095
        %4233 = vmatpush1.bf16.msra.mxu0 %v3094
        %4234 = vmatprep.subr.bf16.mxu0 %v3087
        %4235 = vmatpush1.bf16.msra.mxu0 %v3086
        %4236 = vmatprep.subr.bf16.mxu0 %v3079
        %4237 = vmatpush1.bf16.msra.mxu0 %v3078
        %4238 = vmatprep.subr.bf16.mxu0 %v3071
        %4239 = vmatpush1.bf16.msra.mxu0 %v3070
        %4240 = vmatprep.subr.bf16.mxu0 %v3063
        %4241 = vmatpush1.bf16.msra.mxu0 %v3062
        %4242 = vmatprep.subr.bf16.mxu0 %v3055
        %4243 = vmatpush1.bf16.msra.mxu0 %v3054
        %4244 = vmatprep.subr.bf16.mxu0 %v3175
        %4245 = vmatpush2.bf16.msra.mxu0 %v3174
        %4246 = vmatprep.subr.bf16.mxu0 %v3167
        %4247 = vmatpush2.bf16.msra.mxu0 %v3166
        %4248 = vmatprep.subr.bf16.mxu0 %v3159
        %4249 = vmatpush2.bf16.msra.mxu0 %v3158
        %4250 = vmatprep.subr.bf16.mxu0 %v3151
        %4251 = vmatpush2.bf16.msra.mxu0 %v3150
        %4252 = vmatprep.subr.bf16.mxu0 %v3143
        %4253 = vmatpush2.bf16.msra.mxu0 %v3142
        %4254 = vmatprep.subr.bf16.mxu0 %v3135
        %4255 = vmatpush2.bf16.msra.mxu0 %v3134
        %4256 = vmatprep.subr.bf16.mxu0 %v3127
        %4257 = vmatpush2.bf16.msra.mxu0 %v3126
        %4258 = vmatprep.subr.bf16.mxu0 %v3119
        %4259 = vmatpush2.bf16.msra.mxu0 %v3118
        %4260 = vmatprep.mubr.bf16.mxu0 %v1247
        %4261 = vmatmul.mubr.bf16.gmra.mxu0 %v1246
        %v4262 = vpop.f32.mrf.mxu0
        %v4263 = vadd.f32 %v4222, %v4262
        %v4264 = vpop.f32.mrf.mxu0
        %v4265 = vadd.f32 %v4224, %v4264
        %v4266 = vpop.f32.mrf.mxu0
        %v4267 = vpop.f32.mrf.mxu0
        %4268 = vdwg.mxu0
        %4269 = vmatprep.subr.bf16.mxu0 %v3239
        %4270 = vmatpush1.bf16.msra.mxu0 %v3238
        %4271 = vmatprep.subr.bf16.mxu0 %v3231
        %4272 = vmatpush1.bf16.msra.mxu0 %v3230
        %4273 = vmatprep.subr.bf16.mxu0 %v3223
        %4274 = vmatpush1.bf16.msra.mxu0 %v3222
        %4275 = vmatprep.subr.bf16.mxu0 %v3215
        %4276 = vmatpush1.bf16.msra.mxu0 %v3214
        %4277 = vmatprep.subr.bf16.mxu0 %v3207
        %4278 = vmatpush1.bf16.msra.mxu0 %v3206
        %4279 = vmatprep.subr.bf16.mxu0 %v3199
        %4280 = vmatpush1.bf16.msra.mxu0 %v3198
        %4281 = vmatprep.subr.bf16.mxu0 %v3191
        %4282 = vmatpush1.bf16.msra.mxu0 %v3190
        %4283 = vmatprep.subr.bf16.mxu0 %v3183
        %4284 = vmatpush1.bf16.msra.mxu0 %v3182
        %4285 = vmatprep.subr.bf16.mxu0 %v3303
        %4286 = vmatpush2.bf16.msra.mxu0 %v3302
        %4287 = vmatprep.subr.bf16.mxu0 %v3295
        %4288 = vmatpush2.bf16.msra.mxu0 %v3294
        %4289 = vmatprep.subr.bf16.mxu0 %v3287
        %4290 = vmatpush2.bf16.msra.mxu0 %v3286
        %4291 = vmatprep.subr.bf16.mxu0 %v3279
        %4292 = vmatpush2.bf16.msra.mxu0 %v3278
        %4293 = vmatprep.subr.bf16.mxu0 %v3271
        %4294 = vmatpush2.bf16.msra.mxu0 %v3270
        %4295 = vmatprep.subr.bf16.mxu0 %v3263
        %4296 = vmatpush2.bf16.msra.mxu0 %v3262
        %4297 = vmatprep.subr.bf16.mxu0 %v3255
        %4298 = vmatpush2.bf16.msra.mxu0 %v3254
        %4299 = vmatprep.subr.bf16.mxu0 %v3247
        %4300 = vmatpush2.bf16.msra.mxu0 %v3246
        %4301 = vmatprep.mubr.bf16.mxu0 %v1249
        %4302 = vmatmul.mubr.bf16.gmra.mxu0 %v1248
        %v4303 = vpop.f32.mrf.mxu0
        %v4304 = vadd.f32 %v4263, %v4303
        %v4305 = vpop.f32.mrf.mxu0
        %v4306 = vadd.f32 %v4265, %v4305
        %v4307 = vpop.f32.mrf.mxu0
        %v4308 = vpop.f32.mrf.mxu0
        %4309 = vdwg.mxu0
        %4310 = vmatprep.subr.bf16.mxu0 %v2857
        %4311 = vmatpush1.bf16.msra.mxu0 %v2856
        %4312 = vmatprep.subr.bf16.mxu0 %v2849
        %4313 = vmatpush1.bf16.msra.mxu0 %v2848
        %4314 = vmatprep.subr.bf16.mxu0 %v2841
        %4315 = vmatpush1.bf16.msra.mxu0 %v2840
        %4316 = vmatprep.subr.bf16.mxu0 %v2833
        %4317 = vmatpush1.bf16.msra.mxu0 %v2832
        %4318 = vmatprep.subr.bf16.mxu0 %v2825
        %4319 = vmatpush1.bf16.msra.mxu0 %v2824
        %4320 = vmatprep.subr.bf16.mxu0 %v2817
        %4321 = vmatpush1.bf16.msra.mxu0 %v2816
        %4322 = vmatprep.subr.bf16.mxu0 %v2809
        %4323 = vmatpush1.bf16.msra.mxu0 %v2808
        %4324 = vmatprep.subr.bf16.mxu0 %v2801
        %4325 = vmatpush1.bf16.msra.mxu0 %v2800
        %4326 = vmatprep.subr.bf16.mxu0 %v2921
        %4327 = vmatpush2.bf16.msra.mxu0 %v2920
        %4328 = vmatprep.subr.bf16.mxu0 %v2913
        %4329 = vmatpush2.bf16.msra.mxu0 %v2912
        %4330 = vmatprep.subr.bf16.mxu0 %v2905
        %4331 = vmatpush2.bf16.msra.mxu0 %v2904
        %4332 = vmatprep.subr.bf16.mxu0 %v2897
        %4333 = vmatpush2.bf16.msra.mxu0 %v2896
        %4334 = vmatprep.subr.bf16.mxu0 %v2889
        %4335 = vmatpush2.bf16.msra.mxu0 %v2888
        %4336 = vmatprep.subr.bf16.mxu0 %v2881
        %4337 = vmatpush2.bf16.msra.mxu0 %v2880
        %4338 = vmatprep.subr.bf16.mxu0 %v2873
        %4339 = vmatpush2.bf16.msra.mxu0 %v2872
        %4340 = vmatprep.subr.bf16.mxu0 %v2865
        %4341 = vmatpush2.bf16.msra.mxu0 %v2864
        %4342 = vmatprep.mubr.bf16.mxu0 %v1243
        %4343 = vmatmul.mubr.bf16.gmra.mxu0 %v1242
        %v4344 = vpop.f32.mrf.mxu0
        %v4345 = vadd.f32 %v1217, %v4344
        %v4346 = vpop.f32.mrf.mxu0
        %v4347 = vadd.f32 %v1221, %v4346
        %v4348 = vpop.f32.mrf.mxu0
        %v4349 = vpop.f32.mrf.mxu0
        %4350 = vdwg.mxu0
        %4351 = vmatprep.subr.bf16.mxu0 %v2985
        %4352 = vmatpush1.bf16.msra.mxu0 %v2984
        %4353 = vmatprep.subr.bf16.mxu0 %v2977
        %4354 = vmatpush1.bf16.msra.mxu0 %v2976
        %4355 = vmatprep.subr.bf16.mxu0 %v2969
        %4356 = vmatpush1.bf16.msra.mxu0 %v2968
        %4357 = vmatprep.subr.bf16.mxu0 %v2961
        %4358 = vmatpush1.bf16.msra.mxu0 %v2960
        %4359 = vmatprep.subr.bf16.mxu0 %v2953
        %4360 = vmatpush1.bf16.msra.mxu0 %v2952
        %4361 = vmatprep.subr.bf16.mxu0 %v2945
        %4362 = vmatpush1.bf16.msra.mxu0 %v2944
        %4363 = vmatprep.subr.bf16.mxu0 %v2937
        %4364 = vmatpush1.bf16.msra.mxu0 %v2936
        %4365 = vmatprep.subr.bf16.mxu0 %v2929
        %4366 = vmatpush1.bf16.msra.mxu0 %v2928
        %4367 = vmatprep.subr.bf16.mxu0 %v3049
        %4368 = vmatpush2.bf16.msra.mxu0 %v3048
        %4369 = vmatprep.subr.bf16.mxu0 %v3041
        %4370 = vmatpush2.bf16.msra.mxu0 %v3040
        %4371 = vmatprep.subr.bf16.mxu0 %v3033
        %4372 = vmatpush2.bf16.msra.mxu0 %v3032
        %4373 = vmatprep.subr.bf16.mxu0 %v3025
        %4374 = vmatpush2.bf16.msra.mxu0 %v3024
        %4375 = vmatprep.subr.bf16.mxu0 %v3017
        %4376 = vmatpush2.bf16.msra.mxu0 %v3016
        %4377 = vmatprep.subr.bf16.mxu0 %v3009
        %4378 = vmatpush2.bf16.msra.mxu0 %v3008
        %4379 = vmatprep.subr.bf16.mxu0 %v3001
        %4380 = vmatpush2.bf16.msra.mxu0 %v3000
        %4381 = vmatprep.subr.bf16.mxu0 %v2993
        %4382 = vmatpush2.bf16.msra.mxu0 %v2992
        %4383 = vmatprep.mubr.bf16.mxu0 %v1245
        %4384 = vmatmul.mubr.bf16.gmra.mxu0 %v1244
        %v4385 = vpop.f32.mrf.mxu0
        %v4386 = vadd.f32 %v4345, %v4385
        %v4387 = vpop.f32.mrf.mxu0
        %v4388 = vadd.f32 %v4347, %v4387
        %v4389 = vpop.f32.mrf.mxu0
        %v4390 = vpop.f32.mrf.mxu0
        %4391 = vdwg.mxu0
        %4392 = vmatprep.subr.bf16.mxu0 %v3113
        %4393 = vmatpush1.bf16.msra.mxu0 %v3112
        %4394 = vmatprep.subr.bf16.mxu0 %v3105
        %4395 = vmatpush1.bf16.msra.mxu0 %v3104
        %4396 = vmatprep.subr.bf16.mxu0 %v3097
        %4397 = vmatpush1.bf16.msra.mxu0 %v3096
        %4398 = vmatprep.subr.bf16.mxu0 %v3089
        %4399 = vmatpush1.bf16.msra.mxu0 %v3088
        %4400 = vmatprep.subr.bf16.mxu0 %v3081
        %4401 = vmatpush1.bf16.msra.mxu0 %v3080
        %4402 = vmatprep.subr.bf16.mxu0 %v3073
        %4403 = vmatpush1.bf16.msra.mxu0 %v3072
        %4404 = vmatprep.subr.bf16.mxu0 %v3065
        %4405 = vmatpush1.bf16.msra.mxu0 %v3064
        %4406 = vmatprep.subr.bf16.mxu0 %v3057
        %4407 = vmatpush1.bf16.msra.mxu0 %v3056
        %4408 = vmatprep.subr.bf16.mxu0 %v3177
        %4409 = vmatpush2.bf16.msra.mxu0 %v3176
        %4410 = vmatprep.subr.bf16.mxu0 %v3169
        %4411 = vmatpush2.bf16.msra.mxu0 %v3168
        %4412 = vmatprep.subr.bf16.mxu0 %v3161
        %4413 = vmatpush2.bf16.msra.mxu0 %v3160
        %4414 = vmatprep.subr.bf16.mxu0 %v3153
        %4415 = vmatpush2.bf16.msra.mxu0 %v3152
        %4416 = vmatprep.subr.bf16.mxu0 %v3145
        %4417 = vmatpush2.bf16.msra.mxu0 %v3144
        %4418 = vmatprep.subr.bf16.mxu0 %v3137
        %4419 = vmatpush2.bf16.msra.mxu0 %v3136
        %4420 = vmatprep.subr.bf16.mxu0 %v3129
        %4421 = vmatpush2.bf16.msra.mxu0 %v3128
        %4422 = vmatprep.subr.bf16.mxu0 %v3121
        %4423 = vmatpush2.bf16.msra.mxu0 %v3120
        %4424 = vmatprep.mubr.bf16.mxu0 %v1247
        %4425 = vmatmul.mubr.bf16.gmra.mxu0 %v1246
        %v4426 = vpop.f32.mrf.mxu0
        %v4427 = vadd.f32 %v4386, %v4426
        %v4428 = vpop.f32.mrf.mxu0
        %v4429 = vadd.f32 %v4388, %v4428
        %v4430 = vpop.f32.mrf.mxu0
        %v4431 = vpop.f32.mrf.mxu0
        %4432 = vdwg.mxu0
        %4433 = vmatprep.subr.bf16.mxu0 %v3241
        %4434 = vmatpush1.bf16.msra.mxu0 %v3240
        %4435 = vmatprep.subr.bf16.mxu0 %v3233
        %4436 = vmatpush1.bf16.msra.mxu0 %v3232
        %4437 = vmatprep.subr.bf16.mxu0 %v3225
        %4438 = vmatpush1.bf16.msra.mxu0 %v3224
        %4439 = vmatprep.subr.bf16.mxu0 %v3217
        %4440 = vmatpush1.bf16.msra.mxu0 %v3216
        %4441 = vmatprep.subr.bf16.mxu0 %v3209
        %4442 = vmatpush1.bf16.msra.mxu0 %v3208
        %4443 = vmatprep.subr.bf16.mxu0 %v3201
        %4444 = vmatpush1.bf16.msra.mxu0 %v3200
        %4445 = vmatprep.subr.bf16.mxu0 %v3193
        %4446 = vmatpush1.bf16.msra.mxu0 %v3192
        %4447 = vmatprep.subr.bf16.mxu0 %v3185
        %4448 = vmatpush1.bf16.msra.mxu0 %v3184
        %4449 = vmatprep.subr.bf16.mxu0 %v3305
        %4450 = vmatpush2.bf16.msra.mxu0 %v3304
        %4451 = vmatprep.subr.bf16.mxu0 %v3297
        %4452 = vmatpush2.bf16.msra.mxu0 %v3296
        %4453 = vmatprep.subr.bf16.mxu0 %v3289
        %4454 = vmatpush2.bf16.msra.mxu0 %v3288
        %4455 = vmatprep.subr.bf16.mxu0 %v3281
        %4456 = vmatpush2.bf16.msra.mxu0 %v3280
        %4457 = vmatprep.subr.bf16.mxu0 %v3273
        %4458 = vmatpush2.bf16.msra.mxu0 %v3272
        %4459 = vmatprep.subr.bf16.mxu0 %v3265
        %4460 = vmatpush2.bf16.msra.mxu0 %v3264
        %4461 = vmatprep.subr.bf16.mxu0 %v3257
        %4462 = vmatpush2.bf16.msra.mxu0 %v3256
        %4463 = vmatprep.subr.bf16.mxu0 %v3249
        %4464 = vmatpush2.bf16.msra.mxu0 %v3248
        %4465 = vmatprep.mubr.bf16.mxu0 %v1249
        %4466 = vmatmul.mubr.bf16.gmra.mxu0 %v1248
        %v4467 = vpop.f32.mrf.mxu0
        %v4468 = vadd.f32 %v4427, %v4467
        %v4469 = vpop.f32.mrf.mxu0
        %v4470 = vadd.f32 %v4429, %v4469
        %v4471 = vpop.f32.mrf.mxu0
        %v4472 = vpop.f32.mrf.mxu0
        %4473 = vdwg.mxu0
        %v4474 = vmax.f32 %v3976, 0.0
        %v4475 = vmax.f32 %v3978, 0.0
        %v4476 = vmax.f32 %v4140, 0.0
        %v4477 = vmax.f32 %v4142, 0.0
        %v4478 = vmax.f32 %v4304, 0.0
        %v4479 = vmax.f32 %v4306, 0.0
        %v4480 = vmax.f32 %v4468, 0.0
        %v4481 = vmax.f32 %v4470, 0.0
        %v4482 = vpack.c.bf16 %v4474, %v4474
        %v4483 = vpack.c.bf16 %v4475, %v4475
        %v4484 = vpack.c.bf16 %v4476, %v4476
        %v4485 = vpack.c.bf16 %v4477, %v4477
        %v4486 = vpack.c.bf16 %v4478, %v4478
        %v4487 = vpack.c.bf16 %v4479, %v4479
        %v4488 = vpack.c.bf16 %v4480, %v4480
        %v4489 = vpack.c.bf16 %v4481, %v4481
        %v4490 = vld [vmem:[%s526] sm:$0xff]
        %v4491 = vld [vmem:[%s526 + $0x8] sm:$0xff]
        %v4492 = vld [vmem:[%s526 + $0x10] sm:$0xff]
        %v4493 = vld [vmem:[%s526 + $0x18] sm:$0xff]
        %v4494 = vld [vmem:[%s526 + $0x20] sm:$0xff]
        %v4495 = vld [vmem:[%s526 + $0x28] sm:$0xff]
        %v4496 = vld [vmem:[%s526 + $0x30] sm:$0xff]
        %v4497 = vld [vmem:[%s526 + $0x38] sm:$0xff]
        %v4498 = vld [vmem:[%s526 + $0x40] sm:$0xff]
        %v4499 = vld [vmem:[%s526 + $0x48] sm:$0xff]
        %v4500 = vld [vmem:[%s526 + $0x50] sm:$0xff]
        %v4501 = vld [vmem:[%s526 + $0x58] sm:$0xff]
        %v4502 = vld [vmem:[%s526 + $0x60] sm:$0xff]
        %v4503 = vld [vmem:[%s526 + $0x68] sm:$0xff]
        %v4504 = vld [vmem:[%s526 + $0x70] sm:$0xff]
        %v4505 = vld [vmem:[%s526 + $0x78] sm:$0xff]
        %v4506 = vld [vmem:[%s526 + $0x80] sm:$0xff]
        %v4507 = vld [vmem:[%s526 + $0x88] sm:$0xff]
        %v4508 = vld [vmem:[%s526 + $0x90] sm:$0xff]
        %v4509 = vld [vmem:[%s526 + $0x98] sm:$0xff]
        %v4510 = vld [vmem:[%s526 + $0xa0] sm:$0xff]
        %v4511 = vld [vmem:[%s526 + $0xa8] sm:$0xff]
        %v4512 = vld [vmem:[%s526 + $0xb0] sm:$0xff]
        %v4513 = vld [vmem:[%s526 + $0xb8] sm:$0xff]
        %v4514 = vld [vmem:[%s526 + $0xc0] sm:$0xff]
        %v4515 = vld [vmem:[%s526 + $0xc8] sm:$0xff]
        %v4516 = vld [vmem:[%s526 + $0xd0] sm:$0xff]
        %v4517 = vld [vmem:[%s526 + $0xd8] sm:$0xff]
        %v4518 = vld [vmem:[%s526 + $0xe0] sm:$0xff]
        %v4519 = vld [vmem:[%s526 + $0xe8] sm:$0xff]
        %v4520 = vld [vmem:[%s526 + $0xf0] sm:$0xff]
        %v4521 = vld [vmem:[%s526 + $0xf8] sm:$0xff]
        %v4522 = vld [vmem:[%s526 + $0x100] sm:$0xff]
        %v4523 = vld [vmem:[%s526 + $0x108] sm:$0xff]
        %v4524 = vld [vmem:[%s526 + $0x110] sm:$0xff]
        %v4525 = vld [vmem:[%s526 + $0x118] sm:$0xff]
        %v4526 = vld [vmem:[%s526 + $0x120] sm:$0xff]
        %v4527 = vld [vmem:[%s526 + $0x128] sm:$0xff]
        %v4528 = vld [vmem:[%s526 + $0x130] sm:$0xff]
        %v4529 = vld [vmem:[%s526 + $0x138] sm:$0xff]
        %v4530 = vld [vmem:[%s526 + $0x140] sm:$0xff]
        %v4531 = vld [vmem:[%s526 + $0x148] sm:$0xff]
        %v4532 = vld [vmem:[%s526 + $0x150] sm:$0xff]
        %v4533 = vld [vmem:[%s526 + $0x158] sm:$0xff]
        %v4534 = vld [vmem:[%s526 + $0x160] sm:$0xff]
        %v4535 = vld [vmem:[%s526 + $0x168] sm:$0xff]
        %v4536 = vld [vmem:[%s526 + $0x170] sm:$0xff]
        %v4537 = vld [vmem:[%s526 + $0x178] sm:$0xff]
        %v4538 = vld [vmem:[%s526 + $0x180] sm:$0xff]
        %v4539 = vld [vmem:[%s526 + $0x188] sm:$0xff]
        %v4540 = vld [vmem:[%s526 + $0x190] sm:$0xff]
        %v4541 = vld [vmem:[%s526 + $0x198] sm:$0xff]
        %v4542 = vld [vmem:[%s526 + $0x1a0] sm:$0xff]
        %v4543 = vld [vmem:[%s526 + $0x1a8] sm:$0xff]
        %v4544 = vld [vmem:[%s526 + $0x1b0] sm:$0xff]
        %v4545 = vld [vmem:[%s526 + $0x1b8] sm:$0xff]
        %v4546 = vld [vmem:[%s526 + $0x1c0] sm:$0xff]
        %v4547 = vld [vmem:[%s526 + $0x1c8] sm:$0xff]
        %v4548 = vld [vmem:[%s526 + $0x1d0] sm:$0xff]
        %v4549 = vld [vmem:[%s526 + $0x1d8] sm:$0xff]
        %v4550 = vld [vmem:[%s526 + $0x1e0] sm:$0xff]
        %v4551 = vld [vmem:[%s526 + $0x1e8] sm:$0xff]
        %v4552 = vld [vmem:[%s526 + $0x1f0] sm:$0xff]
        %v4553 = vld [vmem:[%s526 + $0x1f8] sm:$0xff]
        %v4554 = vld [vmem:[%s526 + $0x200] sm:$0xff]
        %v4555 = vld [vmem:[%s526 + $0x208] sm:$0xff]
        %v4556 = vld [vmem:[%s526 + $0x210] sm:$0xff]
        %v4557 = vld [vmem:[%s526 + $0x218] sm:$0xff]
        %v4558 = vld [vmem:[%s526 + $0x220] sm:$0xff]
        %v4559 = vld [vmem:[%s526 + $0x228] sm:$0xff]
        %v4560 = vld [vmem:[%s526 + $0x230] sm:$0xff]
        %v4561 = vld [vmem:[%s526 + $0x238] sm:$0xff]
        %v4562 = vld [vmem:[%s526 + $0x240] sm:$0xff]
        %v4563 = vld [vmem:[%s526 + $0x248] sm:$0xff]
        %v4564 = vld [vmem:[%s526 + $0x250] sm:$0xff]
        %v4565 = vld [vmem:[%s526 + $0x258] sm:$0xff]
        %v4566 = vld [vmem:[%s526 + $0x260] sm:$0xff]
        %v4567 = vld [vmem:[%s526 + $0x268] sm:$0xff]
        %v4568 = vld [vmem:[%s526 + $0x270] sm:$0xff]
        %v4569 = vld [vmem:[%s526 + $0x278] sm:$0xff]
        %v4570 = vld [vmem:[%s526 + $0x280] sm:$0xff]
        %v4571 = vld [vmem:[%s526 + $0x288] sm:$0xff]
        %v4572 = vld [vmem:[%s526 + $0x290] sm:$0xff]
        %v4573 = vld [vmem:[%s526 + $0x298] sm:$0xff]
        %v4574 = vld [vmem:[%s526 + $0x2a0] sm:$0xff]
        %v4575 = vld [vmem:[%s526 + $0x2a8] sm:$0xff]
        %v4576 = vld [vmem:[%s526 + $0x2b0] sm:$0xff]
        %v4577 = vld [vmem:[%s526 + $0x2b8] sm:$0xff]
        %v4578 = vld [vmem:[%s526 + $0x2c0] sm:$0xff]
        %v4579 = vld [vmem:[%s526 + $0x2c8] sm:$0xff]
        %v4580 = vld [vmem:[%s526 + $0x2d0] sm:$0xff]
        %v4581 = vld [vmem:[%s526 + $0x2d8] sm:$0xff]
        %v4582 = vld [vmem:[%s526 + $0x2e0] sm:$0xff]
        %v4583 = vld [vmem:[%s526 + $0x2e8] sm:$0xff]
        %v4584 = vld [vmem:[%s526 + $0x2f0] sm:$0xff]
        %v4585 = vld [vmem:[%s526 + $0x2f8] sm:$0xff]
        %v4586 = vld [vmem:[%s526 + $0x300] sm:$0xff]
        %v4587 = vld [vmem:[%s526 + $0x308] sm:$0xff]
        %v4588 = vld [vmem:[%s526 + $0x310] sm:$0xff]
        %v4589 = vld [vmem:[%s526 + $0x318] sm:$0xff]
        %v4590 = vld [vmem:[%s526 + $0x320] sm:$0xff]
        %v4591 = vld [vmem:[%s526 + $0x328] sm:$0xff]
        %v4592 = vld [vmem:[%s526 + $0x330] sm:$0xff]
        %v4593 = vld [vmem:[%s526 + $0x338] sm:$0xff]
        %v4594 = vld [vmem:[%s526 + $0x340] sm:$0xff]
        %v4595 = vld [vmem:[%s526 + $0x348] sm:$0xff]
        %v4596 = vld [vmem:[%s526 + $0x350] sm:$0xff]
        %v4597 = vld [vmem:[%s526 + $0x358] sm:$0xff]
        %v4598 = vld [vmem:[%s526 + $0x360] sm:$0xff]
        %v4599 = vld [vmem:[%s526 + $0x368] sm:$0xff]
        %v4600 = vld [vmem:[%s526 + $0x370] sm:$0xff]
        %v4601 = vld [vmem:[%s526 + $0x378] sm:$0xff]
        %v4602 = vld [vmem:[%s526 + $0x380] sm:$0xff]
        %v4603 = vld [vmem:[%s526 + $0x388] sm:$0xff]
        %v4604 = vld [vmem:[%s526 + $0x390] sm:$0xff]
        %v4605 = vld [vmem:[%s526 + $0x398] sm:$0xff]
        %v4606 = vld [vmem:[%s526 + $0x3a0] sm:$0xff]
        %v4607 = vld [vmem:[%s526 + $0x3a8] sm:$0xff]
        %v4608 = vld [vmem:[%s526 + $0x3b0] sm:$0xff]
        %v4609 = vld [vmem:[%s526 + $0x3b8] sm:$0xff]
        %v4610 = vld [vmem:[%s526 + $0x3c0] sm:$0xff]
        %v4611 = vld [vmem:[%s526 + $0x3c8] sm:$0xff]
        %v4612 = vld [vmem:[%s526 + $0x3d0] sm:$0xff]
        %v4613 = vld [vmem:[%s526 + $0x3d8] sm:$0xff]
        %v4614 = vld [vmem:[%s526 + $0x3e0] sm:$0xff]
        %v4615 = vld [vmem:[%s526 + $0x3e8] sm:$0xff]
        %v4616 = vld [vmem:[%s526 + $0x3f0] sm:$0xff]
        %v4617 = vld [vmem:[%s526 + $0x3f8] sm:$0xff]
        %v4618 = vld [vmem:[%s535] sm:$0x3]
        %v4620 = vlaneseq
        %v4621 = vshrl.u32 %v4620, 7
        %v4622 = vsub.s32 0, %v4621
        %v4623 = vrot.slane %v4618, %v4622
        %v4624 = vlaneseq
        %v4625 = vshrl.u32 %v4624, 7
        %v4626 = vsub.s32 1, %v4625
        %v4627 = vrot.slane %v4618, %v4626
        %v4758 = vunpack.c.l.b16 %v4490
        %v4759 = vunpack.c.h.b16 %v4490
        %v4760 = vunpack.c.l.b16 %v4491
        %v4761 = vunpack.c.h.b16 %v4491
        %v4762 = vunpack.c.l.b16 %v4492
        %v4763 = vunpack.c.h.b16 %v4492
        %v4764 = vunpack.c.l.b16 %v4493
        %v4765 = vunpack.c.h.b16 %v4493
        %v4766 = vunpack.c.l.b16 %v4494
        %v4767 = vunpack.c.h.b16 %v4494
        %v4768 = vunpack.c.l.b16 %v4495
        %v4769 = vunpack.c.h.b16 %v4495
        %v4770 = vunpack.c.l.b16 %v4496
        %v4771 = vunpack.c.h.b16 %v4496
        %v4772 = vunpack.c.l.b16 %v4497
        %v4773 = vunpack.c.h.b16 %v4497
        %v4774 = vunpack.c.l.b16 %v4498
        %v4775 = vunpack.c.h.b16 %v4498
        %v4776 = vunpack.c.l.b16 %v4499
        %v4777 = vunpack.c.h.b16 %v4499
        %v4778 = vunpack.c.l.b16 %v4500
        %v4779 = vunpack.c.h.b16 %v4500
        %v4780 = vunpack.c.l.b16 %v4501
        %v4781 = vunpack.c.h.b16 %v4501
        %v4782 = vunpack.c.l.b16 %v4502
        %v4783 = vunpack.c.h.b16 %v4502
        %v4784 = vunpack.c.l.b16 %v4503
        %v4785 = vunpack.c.h.b16 %v4503
        %v4786 = vunpack.c.l.b16 %v4504
        %v4787 = vunpack.c.h.b16 %v4504
        %v4788 = vunpack.c.l.b16 %v4505
        %v4789 = vunpack.c.h.b16 %v4505
        %v4790 = vunpack.c.l.b16 %v4506
        %v4791 = vunpack.c.h.b16 %v4506
        %v4792 = vunpack.c.l.b16 %v4507
        %v4793 = vunpack.c.h.b16 %v4507
        %v4794 = vunpack.c.l.b16 %v4508
        %v4795 = vunpack.c.h.b16 %v4508
        %v4796 = vunpack.c.l.b16 %v4509
        %v4797 = vunpack.c.h.b16 %v4509
        %v4798 = vunpack.c.l.b16 %v4510
        %v4799 = vunpack.c.h.b16 %v4510
        %v4800 = vunpack.c.l.b16 %v4511
        %v4801 = vunpack.c.h.b16 %v4511
        %v4802 = vunpack.c.l.b16 %v4512
        %v4803 = vunpack.c.h.b16 %v4512
        %v4804 = vunpack.c.l.b16 %v4513
        %v4805 = vunpack.c.h.b16 %v4513
        %v4806 = vunpack.c.l.b16 %v4514
        %v4807 = vunpack.c.h.b16 %v4514
        %v4808 = vunpack.c.l.b16 %v4515
        %v4809 = vunpack.c.h.b16 %v4515
        %v4810 = vunpack.c.l.b16 %v4516
        %v4811 = vunpack.c.h.b16 %v4516
        %v4812 = vunpack.c.l.b16 %v4517
        %v4813 = vunpack.c.h.b16 %v4517
        %v4814 = vunpack.c.l.b16 %v4518
        %v4815 = vunpack.c.h.b16 %v4518
        %v4816 = vunpack.c.l.b16 %v4519
        %v4817 = vunpack.c.h.b16 %v4519
        %v4818 = vunpack.c.l.b16 %v4520
        %v4819 = vunpack.c.h.b16 %v4520
        %v4820 = vunpack.c.l.b16 %v4521
        %v4821 = vunpack.c.h.b16 %v4521
        %v4822 = vunpack.c.l.b16 %v4522
        %v4823 = vunpack.c.h.b16 %v4522
        %v4824 = vunpack.c.l.b16 %v4523
        %v4825 = vunpack.c.h.b16 %v4523
        %v4826 = vunpack.c.l.b16 %v4524
        %v4827 = vunpack.c.h.b16 %v4524
        %v4828 = vunpack.c.l.b16 %v4525
        %v4829 = vunpack.c.h.b16 %v4525
        %v4830 = vunpack.c.l.b16 %v4526
        %v4831 = vunpack.c.h.b16 %v4526
        %v4832 = vunpack.c.l.b16 %v4527
        %v4833 = vunpack.c.h.b16 %v4527
        %v4834 = vunpack.c.l.b16 %v4528
        %v4835 = vunpack.c.h.b16 %v4528
        %v4836 = vunpack.c.l.b16 %v4529
        %v4837 = vunpack.c.h.b16 %v4529
        %v4838 = vunpack.c.l.b16 %v4530
        %v4839 = vunpack.c.h.b16 %v4530
        %v4840 = vunpack.c.l.b16 %v4531
        %v4841 = vunpack.c.h.b16 %v4531
        %v4842 = vunpack.c.l.b16 %v4532
        %v4843 = vunpack.c.h.b16 %v4532
        %v4844 = vunpack.c.l.b16 %v4533
        %v4845 = vunpack.c.h.b16 %v4533
        %v4846 = vunpack.c.l.b16 %v4534
        %v4847 = vunpack.c.h.b16 %v4534
        %v4848 = vunpack.c.l.b16 %v4535
        %v4849 = vunpack.c.h.b16 %v4535
        %v4850 = vunpack.c.l.b16 %v4536
        %v4851 = vunpack.c.h.b16 %v4536
        %v4852 = vunpack.c.l.b16 %v4537
        %v4853 = vunpack.c.h.b16 %v4537
        %v4854 = vunpack.c.l.b16 %v4538
        %v4855 = vunpack.c.h.b16 %v4538
        %v4856 = vunpack.c.l.b16 %v4539
        %v4857 = vunpack.c.h.b16 %v4539
        %v4858 = vunpack.c.l.b16 %v4540
        %v4859 = vunpack.c.h.b16 %v4540
        %v4860 = vunpack.c.l.b16 %v4541
        %v4861 = vunpack.c.h.b16 %v4541
        %v4862 = vunpack.c.l.b16 %v4542
        %v4863 = vunpack.c.h.b16 %v4542
        %v4864 = vunpack.c.l.b16 %v4543
        %v4865 = vunpack.c.h.b16 %v4543
        %v4866 = vunpack.c.l.b16 %v4544
        %v4867 = vunpack.c.h.b16 %v4544
        %v4868 = vunpack.c.l.b16 %v4545
        %v4869 = vunpack.c.h.b16 %v4545
        %v4870 = vunpack.c.l.b16 %v4546
        %v4871 = vunpack.c.h.b16 %v4546
        %v4872 = vunpack.c.l.b16 %v4547
        %v4873 = vunpack.c.h.b16 %v4547
        %v4874 = vunpack.c.l.b16 %v4548
        %v4875 = vunpack.c.h.b16 %v4548
        %v4876 = vunpack.c.l.b16 %v4549
        %v4877 = vunpack.c.h.b16 %v4549
        %v4878 = vunpack.c.l.b16 %v4550
        %v4879 = vunpack.c.h.b16 %v4550
        %v4880 = vunpack.c.l.b16 %v4551
        %v4881 = vunpack.c.h.b16 %v4551
        %v4882 = vunpack.c.l.b16 %v4552
        %v4883 = vunpack.c.h.b16 %v4552
        %v4884 = vunpack.c.l.b16 %v4553
        %v4885 = vunpack.c.h.b16 %v4553
        %v4886 = vunpack.c.l.b16 %v4554
        %v4887 = vunpack.c.h.b16 %v4554
        %v4888 = vunpack.c.l.b16 %v4555
        %v4889 = vunpack.c.h.b16 %v4555
        %v4890 = vunpack.c.l.b16 %v4556
        %v4891 = vunpack.c.h.b16 %v4556
        %v4892 = vunpack.c.l.b16 %v4557
        %v4893 = vunpack.c.h.b16 %v4557
        %v4894 = vunpack.c.l.b16 %v4558
        %v4895 = vunpack.c.h.b16 %v4558
        %v4896 = vunpack.c.l.b16 %v4559
        %v4897 = vunpack.c.h.b16 %v4559
        %v4898 = vunpack.c.l.b16 %v4560
        %v4899 = vunpack.c.h.b16 %v4560
        %v4900 = vunpack.c.l.b16 %v4561
        %v4901 = vunpack.c.h.b16 %v4561
        %v4902 = vunpack.c.l.b16 %v4562
        %v4903 = vunpack.c.h.b16 %v4562
        %v4904 = vunpack.c.l.b16 %v4563
        %v4905 = vunpack.c.h.b16 %v4563
        %v4906 = vunpack.c.l.b16 %v4564
        %v4907 = vunpack.c.h.b16 %v4564
        %v4908 = vunpack.c.l.b16 %v4565
        %v4909 = vunpack.c.h.b16 %v4565
        %v4910 = vunpack.c.l.b16 %v4566
        %v4911 = vunpack.c.h.b16 %v4566
        %v4912 = vunpack.c.l.b16 %v4567
        %v4913 = vunpack.c.h.b16 %v4567
        %v4914 = vunpack.c.l.b16 %v4568
        %v4915 = vunpack.c.h.b16 %v4568
        %v4916 = vunpack.c.l.b16 %v4569
        %v4917 = vunpack.c.h.b16 %v4569
        %v4918 = vunpack.c.l.b16 %v4570
        %v4919 = vunpack.c.h.b16 %v4570
        %v4920 = vunpack.c.l.b16 %v4571
        %v4921 = vunpack.c.h.b16 %v4571
        %v4922 = vunpack.c.l.b16 %v4572
        %v4923 = vunpack.c.h.b16 %v4572
        %v4924 = vunpack.c.l.b16 %v4573
        %v4925 = vunpack.c.h.b16 %v4573
        %v4926 = vunpack.c.l.b16 %v4574
        %v4927 = vunpack.c.h.b16 %v4574
        %v4928 = vunpack.c.l.b16 %v4575
        %v4929 = vunpack.c.h.b16 %v4575
        %v4930 = vunpack.c.l.b16 %v4576
        %v4931 = vunpack.c.h.b16 %v4576
        %v4932 = vunpack.c.l.b16 %v4577
        %v4933 = vunpack.c.h.b16 %v4577
        %v4934 = vunpack.c.l.b16 %v4578
        %v4935 = vunpack.c.h.b16 %v4578
        %v4936 = vunpack.c.l.b16 %v4579
        %v4937 = vunpack.c.h.b16 %v4579
        %v4938 = vunpack.c.l.b16 %v4580
        %v4939 = vunpack.c.h.b16 %v4580
        %v4940 = vunpack.c.l.b16 %v4581
        %v4941 = vunpack.c.h.b16 %v4581
        %v4942 = vunpack.c.l.b16 %v4582
        %v4943 = vunpack.c.h.b16 %v4582
        %v4944 = vunpack.c.l.b16 %v4583
        %v4945 = vunpack.c.h.b16 %v4583
        %v4946 = vunpack.c.l.b16 %v4584
        %v4947 = vunpack.c.h.b16 %v4584
        %v4948 = vunpack.c.l.b16 %v4585
        %v4949 = vunpack.c.h.b16 %v4585
        %v4950 = vunpack.c.l.b16 %v4586
        %v4951 = vunpack.c.h.b16 %v4586
        %v4952 = vunpack.c.l.b16 %v4587
        %v4953 = vunpack.c.h.b16 %v4587
        %v4954 = vunpack.c.l.b16 %v4588
        %v4955 = vunpack.c.h.b16 %v4588
        %v4956 = vunpack.c.l.b16 %v4589
        %v4957 = vunpack.c.h.b16 %v4589
        %v4958 = vunpack.c.l.b16 %v4590
        %v4959 = vunpack.c.h.b16 %v4590
        %v4960 = vunpack.c.l.b16 %v4591
        %v4961 = vunpack.c.h.b16 %v4591
        %v4962 = vunpack.c.l.b16 %v4592
        %v4963 = vunpack.c.h.b16 %v4592
        %v4964 = vunpack.c.l.b16 %v4593
        %v4965 = vunpack.c.h.b16 %v4593
        %v4966 = vunpack.c.l.b16 %v4594
        %v4967 = vunpack.c.h.b16 %v4594
        %v4968 = vunpack.c.l.b16 %v4595
        %v4969 = vunpack.c.h.b16 %v4595
        %v4970 = vunpack.c.l.b16 %v4596
        %v4971 = vunpack.c.h.b16 %v4596
        %v4972 = vunpack.c.l.b16 %v4597
        %v4973 = vunpack.c.h.b16 %v4597
        %v4974 = vunpack.c.l.b16 %v4598
        %v4975 = vunpack.c.h.b16 %v4598
        %v4976 = vunpack.c.l.b16 %v4599
        %v4977 = vunpack.c.h.b16 %v4599
        %v4978 = vunpack.c.l.b16 %v4600
        %v4979 = vunpack.c.h.b16 %v4600
        %v4980 = vunpack.c.l.b16 %v4601
        %v4981 = vunpack.c.h.b16 %v4601
        %v4982 = vunpack.c.l.b16 %v4602
        %v4983 = vunpack.c.h.b16 %v4602
        %v4984 = vunpack.c.l.b16 %v4603
        %v4985 = vunpack.c.h.b16 %v4603
        %v4986 = vunpack.c.l.b16 %v4604
        %v4987 = vunpack.c.h.b16 %v4604
        %v4988 = vunpack.c.l.b16 %v4605
        %v4989 = vunpack.c.h.b16 %v4605
        %v4990 = vunpack.c.l.b16 %v4606
        %v4991 = vunpack.c.h.b16 %v4606
        %v4992 = vunpack.c.l.b16 %v4607
        %v4993 = vunpack.c.h.b16 %v4607
        %v4994 = vunpack.c.l.b16 %v4608
        %v4995 = vunpack.c.h.b16 %v4608
        %v4996 = vunpack.c.l.b16 %v4609
        %v4997 = vunpack.c.h.b16 %v4609
        %v4998 = vunpack.c.l.b16 %v4610
        %v4999 = vunpack.c.h.b16 %v4610
        %v5000 = vunpack.c.l.b16 %v4611
        %v5001 = vunpack.c.h.b16 %v4611
        %v5002 = vunpack.c.l.b16 %v4612
        %v5003 = vunpack.c.h.b16 %v4612
        %v5004 = vunpack.c.l.b16 %v4613
        %v5005 = vunpack.c.h.b16 %v4613
        %v5006 = vunpack.c.l.b16 %v4614
        %v5007 = vunpack.c.h.b16 %v4614
        %v5008 = vunpack.c.l.b16 %v4615
        %v5009 = vunpack.c.h.b16 %v4615
        %v5010 = vunpack.c.l.b16 %v4616
        %v5011 = vunpack.c.h.b16 %v4616
        %v5012 = vunpack.c.l.b16 %v4617
        %v5013 = vunpack.c.h.b16 %v4617
        %v5014 = vpack.c.b16 %v4760, %v4758
        %v5015 = vpack.c.b16 %v4761, %v4759
        %v5016 = vpack.c.b16 %v4764, %v4762
        %v5017 = vpack.c.b16 %v4765, %v4763
        %v5018 = vpack.c.b16 %v4768, %v4766
        %v5019 = vpack.c.b16 %v4769, %v4767
        %v5020 = vpack.c.b16 %v4772, %v4770
        %v5021 = vpack.c.b16 %v4773, %v4771
        %v5022 = vpack.c.b16 %v4776, %v4774
        %v5023 = vpack.c.b16 %v4777, %v4775
        %v5024 = vpack.c.b16 %v4780, %v4778
        %v5025 = vpack.c.b16 %v4781, %v4779
        %v5026 = vpack.c.b16 %v4784, %v4782
        %v5027 = vpack.c.b16 %v4785, %v4783
        %v5028 = vpack.c.b16 %v4788, %v4786
        %v5029 = vpack.c.b16 %v4789, %v4787
        %v5030 = vpack.c.b16 %v4792, %v4790
        %v5031 = vpack.c.b16 %v4793, %v4791
        %v5032 = vpack.c.b16 %v4796, %v4794
        %v5033 = vpack.c.b16 %v4797, %v4795
        %v5034 = vpack.c.b16 %v4800, %v4798
        %v5035 = vpack.c.b16 %v4801, %v4799
        %v5036 = vpack.c.b16 %v4804, %v4802
        %v5037 = vpack.c.b16 %v4805, %v4803
        %v5038 = vpack.c.b16 %v4808, %v4806
        %v5039 = vpack.c.b16 %v4809, %v4807
        %v5040 = vpack.c.b16 %v4812, %v4810
        %v5041 = vpack.c.b16 %v4813, %v4811
        %v5042 = vpack.c.b16 %v4816, %v4814
        %v5043 = vpack.c.b16 %v4817, %v4815
        %v5044 = vpack.c.b16 %v4820, %v4818
        %v5045 = vpack.c.b16 %v4821, %v4819
        %v5046 = vpack.c.b16 %v4824, %v4822
        %v5047 = vpack.c.b16 %v4825, %v4823
        %v5048 = vpack.c.b16 %v4828, %v4826
        %v5049 = vpack.c.b16 %v4829, %v4827
        %v5050 = vpack.c.b16 %v4832, %v4830
        %v5051 = vpack.c.b16 %v4833, %v4831
        %v5052 = vpack.c.b16 %v4836, %v4834
        %v5053 = vpack.c.b16 %v4837, %v4835
        %v5054 = vpack.c.b16 %v4840, %v4838
        %v5055 = vpack.c.b16 %v4841, %v4839
        %v5056 = vpack.c.b16 %v4844, %v4842
        %v5057 = vpack.c.b16 %v4845, %v4843
        %v5058 = vpack.c.b16 %v4848, %v4846
        %v5059 = vpack.c.b16 %v4849, %v4847
        %v5060 = vpack.c.b16 %v4852, %v4850
        %v5061 = vpack.c.b16 %v4853, %v4851
        %v5062 = vpack.c.b16 %v4856, %v4854
        %v5063 = vpack.c.b16 %v4857, %v4855
        %v5064 = vpack.c.b16 %v4860, %v4858
        %v5065 = vpack.c.b16 %v4861, %v4859
        %v5066 = vpack.c.b16 %v4864, %v4862
        %v5067 = vpack.c.b16 %v4865, %v4863
        %v5068 = vpack.c.b16 %v4868, %v4866
        %v5069 = vpack.c.b16 %v4869, %v4867
        %v5070 = vpack.c.b16 %v4872, %v4870
        %v5071 = vpack.c.b16 %v4873, %v4871
        %v5072 = vpack.c.b16 %v4876, %v4874
        %v5073 = vpack.c.b16 %v4877, %v4875
        %v5074 = vpack.c.b16 %v4880, %v4878
        %v5075 = vpack.c.b16 %v4881, %v4879
        %v5076 = vpack.c.b16 %v4884, %v4882
        %v5077 = vpack.c.b16 %v4885, %v4883
        %v5078 = vpack.c.b16 %v4888, %v4886
        %v5079 = vpack.c.b16 %v4889, %v4887
        %v5080 = vpack.c.b16 %v4892, %v4890
        %v5081 = vpack.c.b16 %v4893, %v4891
        %v5082 = vpack.c.b16 %v4896, %v4894
        %v5083 = vpack.c.b16 %v4897, %v4895
        %v5084 = vpack.c.b16 %v4900, %v4898
        %v5085 = vpack.c.b16 %v4901, %v4899
        %v5086 = vpack.c.b16 %v4904, %v4902
        %v5087 = vpack.c.b16 %v4905, %v4903
        %v5088 = vpack.c.b16 %v4908, %v4906
        %v5089 = vpack.c.b16 %v4909, %v4907
        %v5090 = vpack.c.b16 %v4912, %v4910
        %v5091 = vpack.c.b16 %v4913, %v4911
        %v5092 = vpack.c.b16 %v4916, %v4914
        %v5093 = vpack.c.b16 %v4917, %v4915
        %v5094 = vpack.c.b16 %v4920, %v4918
        %v5095 = vpack.c.b16 %v4921, %v4919
        %v5096 = vpack.c.b16 %v4924, %v4922
        %v5097 = vpack.c.b16 %v4925, %v4923
        %v5098 = vpack.c.b16 %v4928, %v4926
        %v5099 = vpack.c.b16 %v4929, %v4927
        %v5100 = vpack.c.b16 %v4932, %v4930
        %v5101 = vpack.c.b16 %v4933, %v4931
        %v5102 = vpack.c.b16 %v4936, %v4934
        %v5103 = vpack.c.b16 %v4937, %v4935
        %v5104 = vpack.c.b16 %v4940, %v4938
        %v5105 = vpack.c.b16 %v4941, %v4939
        %v5106 = vpack.c.b16 %v4944, %v4942
        %v5107 = vpack.c.b16 %v4945, %v4943
        %v5108 = vpack.c.b16 %v4948, %v4946
        %v5109 = vpack.c.b16 %v4949, %v4947
        %v5110 = vpack.c.b16 %v4952, %v4950
        %v5111 = vpack.c.b16 %v4953, %v4951
        %v5112 = vpack.c.b16 %v4956, %v4954
        %v5113 = vpack.c.b16 %v4957, %v4955
        %v5114 = vpack.c.b16 %v4960, %v4958
        %v5115 = vpack.c.b16 %v4961, %v4959
        %v5116 = vpack.c.b16 %v4964, %v4962
        %v5117 = vpack.c.b16 %v4965, %v4963
        %v5118 = vpack.c.b16 %v4968, %v4966
        %v5119 = vpack.c.b16 %v4969, %v4967
        %v5120 = vpack.c.b16 %v4972, %v4970
        %v5121 = vpack.c.b16 %v4973, %v4971
        %v5122 = vpack.c.b16 %v4976, %v4974
        %v5123 = vpack.c.b16 %v4977, %v4975
        %v5124 = vpack.c.b16 %v4980, %v4978
        %v5125 = vpack.c.b16 %v4981, %v4979
        %v5126 = vpack.c.b16 %v4984, %v4982
        %v5127 = vpack.c.b16 %v4985, %v4983
        %v5128 = vpack.c.b16 %v4988, %v4986
        %v5129 = vpack.c.b16 %v4989, %v4987
        %v5130 = vpack.c.b16 %v4992, %v4990
        %v5131 = vpack.c.b16 %v4993, %v4991
        %v5132 = vpack.c.b16 %v4996, %v4994
        %v5133 = vpack.c.b16 %v4997, %v4995
        %v5134 = vpack.c.b16 %v5000, %v4998
        %v5135 = vpack.c.b16 %v5001, %v4999
        %v5136 = vpack.c.b16 %v5004, %v5002
        %v5137 = vpack.c.b16 %v5005, %v5003
        %v5138 = vpack.c.b16 %v5008, %v5006
        %v5139 = vpack.c.b16 %v5009, %v5007
        %v5140 = vpack.c.b16 %v5012, %v5010
        %v5141 = vpack.c.b16 %v5013, %v5011
        %5270 = vmatprep.subr.bf16.mxu0 %v5029
        %5271 = vmatpush1.bf16.msra.mxu0 %v5028
        %5272 = vmatprep.subr.bf16.mxu0 %v5027
        %5273 = vmatpush1.bf16.msra.mxu0 %v5026
        %5274 = vmatprep.subr.bf16.mxu0 %v5025
        %5275 = vmatpush1.bf16.msra.mxu0 %v5024
        %5276 = vmatprep.subr.bf16.mxu0 %v5023
        %5277 = vmatpush1.bf16.msra.mxu0 %v5022
        %5278 = vmatprep.subr.bf16.mxu0 %v5021
        %5279 = vmatpush1.bf16.msra.mxu0 %v5020
        %5280 = vmatprep.subr.bf16.mxu0 %v5019
        %5281 = vmatpush1.bf16.msra.mxu0 %v5018
        %5282 = vmatprep.subr.bf16.mxu0 %v5017
        %5283 = vmatpush1.bf16.msra.mxu0 %v5016
        %5284 = vmatprep.subr.bf16.mxu0 %v5015
        %5285 = vmatpush1.bf16.msra.mxu0 %v5014
        %5286 = vmatprep.subr.bf16.mxu0 %v5045
        %5287 = vmatpush2.bf16.msra.mxu0 %v5044
        %5288 = vmatprep.subr.bf16.mxu0 %v5043
        %5289 = vmatpush2.bf16.msra.mxu0 %v5042
        %5290 = vmatprep.subr.bf16.mxu0 %v5041
        %5291 = vmatpush2.bf16.msra.mxu0 %v5040
        %5292 = vmatprep.subr.bf16.mxu0 %v5039
        %5293 = vmatpush2.bf16.msra.mxu0 %v5038
        %5294 = vmatprep.subr.bf16.mxu0 %v5037
        %5295 = vmatpush2.bf16.msra.mxu0 %v5036
        %5296 = vmatprep.subr.bf16.mxu0 %v5035
        %5297 = vmatpush2.bf16.msra.mxu0 %v5034
        %5298 = vmatprep.subr.bf16.mxu0 %v5033
        %5299 = vmatpush2.bf16.msra.mxu0 %v5032
        %5300 = vmatprep.subr.bf16.mxu0 %v5031
        %5301 = vmatpush2.bf16.msra.mxu0 %v5030
        %5302 = vmatprep.mubr.bf16.mxu0 %v4483
        %5303 = vmatmul.mubr.bf16.gmra.mxu0 %v4482
        %v5304 = vpop.f32.mrf.mxu0
        %v5305 = vadd.f32 %v4623, %v5304
        %v5306 = vpop.f32.mrf.mxu0
        %v5307 = vadd.f32 %v4627, %v5306
        %v5308 = vpop.f32.mrf.mxu0
        %v5309 = vpop.f32.mrf.mxu0
        %5310 = vdwg.mxu0
        %5311 = vmatprep.subr.bf16.mxu0 %v5061
        %5312 = vmatpush1.bf16.msra.mxu0 %v5060
        %5313 = vmatprep.subr.bf16.mxu0 %v5059
        %5314 = vmatpush1.bf16.msra.mxu0 %v5058
        %5315 = vmatprep.subr.bf16.mxu0 %v5057
        %5316 = vmatpush1.bf16.msra.mxu0 %v5056
        %5317 = vmatprep.subr.bf16.mxu0 %v5055
        %5318 = vmatpush1.bf16.msra.mxu0 %v5054
        %5319 = vmatprep.subr.bf16.mxu0 %v5053
        %5320 = vmatpush1.bf16.msra.mxu0 %v5052
        %5321 = vmatprep.subr.bf16.mxu0 %v5051
        %5322 = vmatpush1.bf16.msra.mxu0 %v5050
        %5323 = vmatprep.subr.bf16.mxu0 %v5049
        %5324 = vmatpush1.bf16.msra.mxu0 %v5048
        %5325 = vmatprep.subr.bf16.mxu0 %v5047
        %5326 = vmatpush1.bf16.msra.mxu0 %v5046
        %5327 = vmatprep.subr.bf16.mxu0 %v5077
        %5328 = vmatpush2.bf16.msra.mxu0 %v5076
        %5329 = vmatprep.subr.bf16.mxu0 %v5075
        %5330 = vmatpush2.bf16.msra.mxu0 %v5074
        %5331 = vmatprep.subr.bf16.mxu0 %v5073
        %5332 = vmatpush2.bf16.msra.mxu0 %v5072
        %5333 = vmatprep.subr.bf16.mxu0 %v5071
        %5334 = vmatpush2.bf16.msra.mxu0 %v5070
        %5335 = vmatprep.subr.bf16.mxu0 %v5069
        %5336 = vmatpush2.bf16.msra.mxu0 %v5068
        %5337 = vmatprep.subr.bf16.mxu0 %v5067
        %5338 = vmatpush2.bf16.msra.mxu0 %v5066
        %5339 = vmatprep.subr.bf16.mxu0 %v5065
        %5340 = vmatpush2.bf16.msra.mxu0 %v5064
        %5341 = vmatprep.subr.bf16.mxu0 %v5063
        %5342 = vmatpush2.bf16.msra.mxu0 %v5062
        %5343 = vmatprep.mubr.bf16.mxu0 %v4485
        %5344 = vmatmul.mubr.bf16.gmra.mxu0 %v4484
        %v5345 = vpop.f32.mrf.mxu0
        %v5346 = vadd.f32 %v5305, %v5345
        %v5347 = vpop.f32.mrf.mxu0
        %v5348 = vadd.f32 %v5307, %v5347
        %v5349 = vpop.f32.mrf.mxu0
        %v5350 = vpop.f32.mrf.mxu0
        %5351 = vdwg.mxu0
        %5352 = vmatprep.subr.bf16.mxu0 %v5093
        %5353 = vmatpush1.bf16.msra.mxu0 %v5092
        %5354 = vmatprep.subr.bf16.mxu0 %v5091
        %5355 = vmatpush1.bf16.msra.mxu0 %v5090
        %5356 = vmatprep.subr.bf16.mxu0 %v5089
        %5357 = vmatpush1.bf16.msra.mxu0 %v5088
        %5358 = vmatprep.subr.bf16.mxu0 %v5087
        %5359 = vmatpush1.bf16.msra.mxu0 %v5086
        %5360 = vmatprep.subr.bf16.mxu0 %v5085
        %5361 = vmatpush1.bf16.msra.mxu0 %v5084
        %5362 = vmatprep.subr.bf16.mxu0 %v5083
        %5363 = vmatpush1.bf16.msra.mxu0 %v5082
        %5364 = vmatprep.subr.bf16.mxu0 %v5081
        %5365 = vmatpush1.bf16.msra.mxu0 %v5080
        %5366 = vmatprep.subr.bf16.mxu0 %v5079
        %5367 = vmatpush1.bf16.msra.mxu0 %v5078
        %5368 = vmatprep.subr.bf16.mxu0 %v5109
        %5369 = vmatpush2.bf16.msra.mxu0 %v5108
        %5370 = vmatprep.subr.bf16.mxu0 %v5107
        %5371 = vmatpush2.bf16.msra.mxu0 %v5106
        %5372 = vmatprep.subr.bf16.mxu0 %v5105
        %5373 = vmatpush2.bf16.msra.mxu0 %v5104
        %5374 = vmatprep.subr.bf16.mxu0 %v5103
        %5375 = vmatpush2.bf16.msra.mxu0 %v5102
        %5376 = vmatprep.subr.bf16.mxu0 %v5101
        %5377 = vmatpush2.bf16.msra.mxu0 %v5100
        %5378 = vmatprep.subr.bf16.mxu0 %v5099
        %5379 = vmatpush2.bf16.msra.mxu0 %v5098
        %5380 = vmatprep.subr.bf16.mxu0 %v5097
        %5381 = vmatpush2.bf16.msra.mxu0 %v5096
        %5382 = vmatprep.subr.bf16.mxu0 %v5095
        %5383 = vmatpush2.bf16.msra.mxu0 %v5094
        %5384 = vmatprep.mubr.bf16.mxu0 %v4487
        %5385 = vmatmul.mubr.bf16.gmra.mxu0 %v4486
        %v5386 = vpop.f32.mrf.mxu0
        %v5387 = vadd.f32 %v5346, %v5386
        %v5388 = vpop.f32.mrf.mxu0
        %v5389 = vadd.f32 %v5348, %v5388
        %v5390 = vpop.f32.mrf.mxu0
        %v5391 = vpop.f32.mrf.mxu0
        %5392 = vdwg.mxu0
        %5393 = vmatprep.subr.bf16.mxu0 %v5125
        %5394 = vmatpush1.bf16.msra.mxu0 %v5124
        %5395 = vmatprep.subr.bf16.mxu0 %v5123
        %5396 = vmatpush1.bf16.msra.mxu0 %v5122
        %5397 = vmatprep.subr.bf16.mxu0 %v5121
        %5398 = vmatpush1.bf16.msra.mxu0 %v5120
        %5399 = vmatprep.subr.bf16.mxu0 %v5119
        %5400 = vmatpush1.bf16.msra.mxu0 %v5118
        %5401 = vmatprep.subr.bf16.mxu0 %v5117
        %5402 = vmatpush1.bf16.msra.mxu0 %v5116
        %5403 = vmatprep.subr.bf16.mxu0 %v5115
        %5404 = vmatpush1.bf16.msra.mxu0 %v5114
        %5405 = vmatprep.subr.bf16.mxu0 %v5113
        %5406 = vmatpush1.bf16.msra.mxu0 %v5112
        %5407 = vmatprep.subr.bf16.mxu0 %v5111
        %5408 = vmatpush1.bf16.msra.mxu0 %v5110
        %5409 = vmatprep.subr.bf16.mxu0 %v5141
        %5410 = vmatpush2.bf16.msra.mxu0 %v5140
        %5411 = vmatprep.subr.bf16.mxu0 %v5139
        %5412 = vmatpush2.bf16.msra.mxu0 %v5138
        %5413 = vmatprep.subr.bf16.mxu0 %v5137
        %5414 = vmatpush2.bf16.msra.mxu0 %v5136
        %5415 = vmatprep.subr.bf16.mxu0 %v5135
        %5416 = vmatpush2.bf16.msra.mxu0 %v5134
        %5417 = vmatprep.subr.bf16.mxu0 %v5133
        %5418 = vmatpush2.bf16.msra.mxu0 %v5132
        %5419 = vmatprep.subr.bf16.mxu0 %v5131
        %5420 = vmatpush2.bf16.msra.mxu0 %v5130
        %5421 = vmatprep.subr.bf16.mxu0 %v5129
        %5422 = vmatpush2.bf16.msra.mxu0 %v5128
        %5423 = vmatprep.subr.bf16.mxu0 %v5127
        %5424 = vmatpush2.bf16.msra.mxu0 %v5126
        %5425 = vmatprep.mubr.bf16.mxu0 %v4489
        %5426 = vmatmul.mubr.bf16.gmra.mxu0 %v4488
        %v5427 = vpop.f32.mrf.mxu0
        %v5428 = vadd.f32 %v5387, %v5427
        %v5429 = vpop.f32.mrf.mxu0
        %v5430 = vadd.f32 %v5389, %v5429
        %v5431 = vpop.f32.mrf.mxu0
        %v5432 = vpop.f32.mrf.mxu0
        %5433 = vdwg.mxu0
        %v5434 = vpack.c.bf16 %v5428, %v5428
        %v5435 = vpack.c.bf16 %v5430, %v5430
        %v5436 = vld [vmem:[%s544] sm:$0xff]
        %v5437 = vld [vmem:[%s544 + $0x8] sm:$0xff]
        %v5438 = vld [vmem:[%s544 + $0x10] sm:$0xff]
        %v5439 = vld [vmem:[%s544 + $0x18] sm:$0xff]
        %v5440 = vld [vmem:[%s544 + $0x20] sm:$0xff]
        %v5441 = vld [vmem:[%s544 + $0x28] sm:$0xff]
        %v5442 = vld [vmem:[%s544 + $0x30] sm:$0xff]
        %v5443 = vld [vmem:[%s544 + $0x38] sm:$0xff]
        %v5444 = vld [vmem:[%s544 + $0x40] sm:$0xff]
        %v5445 = vld [vmem:[%s544 + $0x48] sm:$0xff]
        %v5446 = vld [vmem:[%s544 + $0x50] sm:$0xff]
        %v5447 = vld [vmem:[%s544 + $0x58] sm:$0xff]
        %v5448 = vld [vmem:[%s544 + $0x60] sm:$0xff]
        %v5449 = vld [vmem:[%s544 + $0x68] sm:$0xff]
        %v5450 = vld [vmem:[%s544 + $0x70] sm:$0xff]
        %v5451 = vld [vmem:[%s544 + $0x78] sm:$0xff]
        %v5452 = vld [vmem:[%s544 + $0x80] sm:$0xff]
        %v5453 = vld [vmem:[%s544 + $0x88] sm:$0xff]
        %v5454 = vld [vmem:[%s544 + $0x90] sm:$0xff]
        %v5455 = vld [vmem:[%s544 + $0x98] sm:$0xff]
        %v5456 = vld [vmem:[%s544 + $0xa0] sm:$0xff]
        %v5457 = vld [vmem:[%s544 + $0xa8] sm:$0xff]
        %v5458 = vld [vmem:[%s544 + $0xb0] sm:$0xff]
        %v5459 = vld [vmem:[%s544 + $0xb8] sm:$0xff]
        %v5460 = vld [vmem:[%s544 + $0xc0] sm:$0xff]
        %v5461 = vld [vmem:[%s544 + $0xc8] sm:$0xff]
        %v5462 = vld [vmem:[%s544 + $0xd0] sm:$0xff]
        %v5463 = vld [vmem:[%s544 + $0xd8] sm:$0xff]
        %v5464 = vld [vmem:[%s544 + $0xe0] sm:$0xff]
        %v5465 = vld [vmem:[%s544 + $0xe8] sm:$0xff]
        %v5466 = vld [vmem:[%s544 + $0xf0] sm:$0xff]
        %v5467 = vld [vmem:[%s544 + $0xf8] sm:$0xff]
        %v5468 = vld [vmem:[%s544 + $0x100] sm:$0xff]
        %v5469 = vld [vmem:[%s544 + $0x108] sm:$0xff]
        %v5470 = vld [vmem:[%s544 + $0x110] sm:$0xff]
        %v5471 = vld [vmem:[%s544 + $0x118] sm:$0xff]
        %v5472 = vld [vmem:[%s544 + $0x120] sm:$0xff]
        %v5473 = vld [vmem:[%s544 + $0x128] sm:$0xff]
        %v5474 = vld [vmem:[%s544 + $0x130] sm:$0xff]
        %v5475 = vld [vmem:[%s544 + $0x138] sm:$0xff]
        %v5476 = vld [vmem:[%s544 + $0x140] sm:$0xff]
        %v5477 = vld [vmem:[%s544 + $0x148] sm:$0xff]
        %v5478 = vld [vmem:[%s544 + $0x150] sm:$0xff]
        %v5479 = vld [vmem:[%s544 + $0x158] sm:$0xff]
        %v5480 = vld [vmem:[%s544 + $0x160] sm:$0xff]
        %v5481 = vld [vmem:[%s544 + $0x168] sm:$0xff]
        %v5482 = vld [vmem:[%s544 + $0x170] sm:$0xff]
        %v5483 = vld [vmem:[%s544 + $0x178] sm:$0xff]
        %v5484 = vld [vmem:[%s544 + $0x180] sm:$0xff]
        %v5485 = vld [vmem:[%s544 + $0x188] sm:$0xff]
        %v5486 = vld [vmem:[%s544 + $0x190] sm:$0xff]
        %v5487 = vld [vmem:[%s544 + $0x198] sm:$0xff]
        %v5488 = vld [vmem:[%s544 + $0x1a0] sm:$0xff]
        %v5489 = vld [vmem:[%s544 + $0x1a8] sm:$0xff]
        %v5490 = vld [vmem:[%s544 + $0x1b0] sm:$0xff]
        %v5491 = vld [vmem:[%s544 + $0x1b8] sm:$0xff]
        %v5492 = vld [vmem:[%s544 + $0x1c0] sm:$0xff]
        %v5493 = vld [vmem:[%s544 + $0x1c8] sm:$0xff]
        %v5494 = vld [vmem:[%s544 + $0x1d0] sm:$0xff]
        %v5495 = vld [vmem:[%s544 + $0x1d8] sm:$0xff]
        %v5496 = vld [vmem:[%s544 + $0x1e0] sm:$0xff]
        %v5497 = vld [vmem:[%s544 + $0x1e8] sm:$0xff]
        %v5498 = vld [vmem:[%s544 + $0x1f0] sm:$0xff]
        %v5499 = vld [vmem:[%s544 + $0x1f8] sm:$0xff]
        %v5500 = vld [vmem:[%s544 + $0x200] sm:$0xff]
        %v5501 = vld [vmem:[%s544 + $0x208] sm:$0xff]
        %v5502 = vld [vmem:[%s544 + $0x210] sm:$0xff]
        %v5503 = vld [vmem:[%s544 + $0x218] sm:$0xff]
        %v5504 = vld [vmem:[%s544 + $0x220] sm:$0xff]
        %v5505 = vld [vmem:[%s544 + $0x228] sm:$0xff]
        %v5506 = vld [vmem:[%s544 + $0x230] sm:$0xff]
        %v5507 = vld [vmem:[%s544 + $0x238] sm:$0xff]
        %v5508 = vld [vmem:[%s544 + $0x240] sm:$0xff]
        %v5509 = vld [vmem:[%s544 + $0x248] sm:$0xff]
        %v5510 = vld [vmem:[%s544 + $0x250] sm:$0xff]
        %v5511 = vld [vmem:[%s544 + $0x258] sm:$0xff]
        %v5512 = vld [vmem:[%s544 + $0x260] sm:$0xff]
        %v5513 = vld [vmem:[%s544 + $0x268] sm:$0xff]
        %v5514 = vld [vmem:[%s544 + $0x270] sm:$0xff]
        %v5515 = vld [vmem:[%s544 + $0x278] sm:$0xff]
        %v5516 = vld [vmem:[%s544 + $0x280] sm:$0xff]
        %v5517 = vld [vmem:[%s544 + $0x288] sm:$0xff]
        %v5518 = vld [vmem:[%s544 + $0x290] sm:$0xff]
        %v5519 = vld [vmem:[%s544 + $0x298] sm:$0xff]
        %v5520 = vld [vmem:[%s544 + $0x2a0] sm:$0xff]
        %v5521 = vld [vmem:[%s544 + $0x2a8] sm:$0xff]
        %v5522 = vld [vmem:[%s544 + $0x2b0] sm:$0xff]
        %v5523 = vld [vmem:[%s544 + $0x2b8] sm:$0xff]
        %v5524 = vld [vmem:[%s544 + $0x2c0] sm:$0xff]
        %v5525 = vld [vmem:[%s544 + $0x2c8] sm:$0xff]
        %v5526 = vld [vmem:[%s544 + $0x2d0] sm:$0xff]
        %v5527 = vld [vmem:[%s544 + $0x2d8] sm:$0xff]
        %v5528 = vld [vmem:[%s544 + $0x2e0] sm:$0xff]
        %v5529 = vld [vmem:[%s544 + $0x2e8] sm:$0xff]
        %v5530 = vld [vmem:[%s544 + $0x2f0] sm:$0xff]
        %v5531 = vld [vmem:[%s544 + $0x2f8] sm:$0xff]
        %v5532 = vld [vmem:[%s544 + $0x300] sm:$0xff]
        %v5533 = vld [vmem:[%s544 + $0x308] sm:$0xff]
        %v5534 = vld [vmem:[%s544 + $0x310] sm:$0xff]
        %v5535 = vld [vmem:[%s544 + $0x318] sm:$0xff]
        %v5536 = vld [vmem:[%s544 + $0x320] sm:$0xff]
        %v5537 = vld [vmem:[%s544 + $0x328] sm:$0xff]
        %v5538 = vld [vmem:[%s544 + $0x330] sm:$0xff]
        %v5539 = vld [vmem:[%s544 + $0x338] sm:$0xff]
        %v5540 = vld [vmem:[%s544 + $0x340] sm:$0xff]
        %v5541 = vld [vmem:[%s544 + $0x348] sm:$0xff]
        %v5542 = vld [vmem:[%s544 + $0x350] sm:$0xff]
        %v5543 = vld [vmem:[%s544 + $0x358] sm:$0xff]
        %v5544 = vld [vmem:[%s544 + $0x360] sm:$0xff]
        %v5545 = vld [vmem:[%s544 + $0x368] sm:$0xff]
        %v5546 = vld [vmem:[%s544 + $0x370] sm:$0xff]
        %v5547 = vld [vmem:[%s544 + $0x378] sm:$0xff]
        %v5548 = vld [vmem:[%s544 + $0x380] sm:$0xff]
        %v5549 = vld [vmem:[%s544 + $0x388] sm:$0xff]
        %v5550 = vld [vmem:[%s544 + $0x390] sm:$0xff]
        %v5551 = vld [vmem:[%s544 + $0x398] sm:$0xff]
        %v5552 = vld [vmem:[%s544 + $0x3a0] sm:$0xff]
        %v5553 = vld [vmem:[%s544 + $0x3a8] sm:$0xff]
        %v5554 = vld [vmem:[%s544 + $0x3b0] sm:$0xff]
        %v5555 = vld [vmem:[%s544 + $0x3b8] sm:$0xff]
        %v5556 = vld [vmem:[%s544 + $0x3c0] sm:$0xff]
        %v5557 = vld [vmem:[%s544 + $0x3c8] sm:$0xff]
        %v5558 = vld [vmem:[%s544 + $0x3d0] sm:$0xff]
        %v5559 = vld [vmem:[%s544 + $0x3d8] sm:$0xff]
        %v5560 = vld [vmem:[%s544 + $0x3e0] sm:$0xff]
        %v5561 = vld [vmem:[%s544 + $0x3e8] sm:$0xff]
        %v5562 = vld [vmem:[%s544 + $0x3f0] sm:$0xff]
        %v5563 = vld [vmem:[%s544 + $0x3f8] sm:$0xff]
        %v5564 = vld [vmem:[%s553] sm:$0xff]
        %v5566 = vlaneseq
        %v5567 = vshrl.u32 %v5566, 7
        %v5568 = vsub.s32 0, %v5567
        %v5569 = vrot.slane %v5564, %v5568
        %v5570 = vlaneseq
        %v5571 = vshrl.u32 %v5570, 7
        %v5572 = vsub.s32 1, %v5571
        %v5573 = vrot.slane %v5564, %v5572
        %v5574 = vlaneseq
        %v5575 = vshrl.u32 %v5574, 7
        %v5576 = vsub.s32 2, %v5575
        %v5577 = vrot.slane %v5564, %v5576
        %v5578 = vlaneseq
        %v5579 = vshrl.u32 %v5578, 7
        %v5580 = vsub.s32 3, %v5579
        %v5581 = vrot.slane %v5564, %v5580
        %v5582 = vlaneseq
        %v5583 = vshrl.u32 %v5582, 7
        %v5584 = vsub.s32 4, %v5583
        %v5585 = vrot.slane %v5564, %v5584
        %v5586 = vlaneseq
        %v5587 = vshrl.u32 %v5586, 7
        %v5588 = vsub.s32 5, %v5587
        %v5589 = vrot.slane %v5564, %v5588
        %v5590 = vlaneseq
        %v5591 = vshrl.u32 %v5590, 7
        %v5592 = vsub.s32 6, %v5591
        %v5593 = vrot.slane %v5564, %v5592
        %v5594 = vlaneseq
        %v5595 = vshrl.u32 %v5594, 7
        %v5596 = vsub.s32 7, %v5595
        %v5597 = vrot.slane %v5564, %v5596
        %v5734 = vunpack.c.l.b16 %v5436
        %v5735 = vunpack.c.h.b16 %v5436
        %v5736 = vunpack.c.l.b16 %v5437
        %v5737 = vunpack.c.h.b16 %v5437
        %v5738 = vunpack.c.l.b16 %v5438
        %v5739 = vunpack.c.h.b16 %v5438
        %v5740 = vunpack.c.l.b16 %v5439
        %v5741 = vunpack.c.h.b16 %v5439
        %v5742 = vunpack.c.l.b16 %v5440
        %v5743 = vunpack.c.h.b16 %v5440
        %v5744 = vunpack.c.l.b16 %v5441
        %v5745 = vunpack.c.h.b16 %v5441
        %v5746 = vunpack.c.l.b16 %v5442
        %v5747 = vunpack.c.h.b16 %v5442
        %v5748 = vunpack.c.l.b16 %v5443
        %v5749 = vunpack.c.h.b16 %v5443
        %v5750 = vunpack.c.l.b16 %v5444
        %v5751 = vunpack.c.h.b16 %v5444
        %v5752 = vunpack.c.l.b16 %v5445
        %v5753 = vunpack.c.h.b16 %v5445
        %v5754 = vunpack.c.l.b16 %v5446
        %v5755 = vunpack.c.h.b16 %v5446
        %v5756 = vunpack.c.l.b16 %v5447
        %v5757 = vunpack.c.h.b16 %v5447
        %v5758 = vunpack.c.l.b16 %v5448
        %v5759 = vunpack.c.h.b16 %v5448
        %v5760 = vunpack.c.l.b16 %v5449
        %v5761 = vunpack.c.h.b16 %v5449
        %v5762 = vunpack.c.l.b16 %v5450
        %v5763 = vunpack.c.h.b16 %v5450
        %v5764 = vunpack.c.l.b16 %v5451
        %v5765 = vunpack.c.h.b16 %v5451
        %v5766 = vunpack.c.l.b16 %v5452
        %v5767 = vunpack.c.h.b16 %v5452
        %v5768 = vunpack.c.l.b16 %v5453
        %v5769 = vunpack.c.h.b16 %v5453
        %v5770 = vunpack.c.l.b16 %v5454
        %v5771 = vunpack.c.h.b16 %v5454
        %v5772 = vunpack.c.l.b16 %v5455
        %v5773 = vunpack.c.h.b16 %v5455
        %v5774 = vunpack.c.l.b16 %v5456
        %v5775 = vunpack.c.h.b16 %v5456
        %v5776 = vunpack.c.l.b16 %v5457
        %v5777 = vunpack.c.h.b16 %v5457
        %v5778 = vunpack.c.l.b16 %v5458
        %v5779 = vunpack.c.h.b16 %v5458
        %v5780 = vunpack.c.l.b16 %v5459
        %v5781 = vunpack.c.h.b16 %v5459
        %v5782 = vunpack.c.l.b16 %v5460
        %v5783 = vunpack.c.h.b16 %v5460
        %v5784 = vunpack.c.l.b16 %v5461
        %v5785 = vunpack.c.h.b16 %v5461
        %v5786 = vunpack.c.l.b16 %v5462
        %v5787 = vunpack.c.h.b16 %v5462
        %v5788 = vunpack.c.l.b16 %v5463
        %v5789 = vunpack.c.h.b16 %v5463
        %v5790 = vunpack.c.l.b16 %v5464
        %v5791 = vunpack.c.h.b16 %v5464
        %v5792 = vunpack.c.l.b16 %v5465
        %v5793 = vunpack.c.h.b16 %v5465
        %v5794 = vunpack.c.l.b16 %v5466
        %v5795 = vunpack.c.h.b16 %v5466
        %v5796 = vunpack.c.l.b16 %v5467
        %v5797 = vunpack.c.h.b16 %v5467
        %v5798 = vunpack.c.l.b16 %v5468
        %v5799 = vunpack.c.h.b16 %v5468
        %v5800 = vunpack.c.l.b16 %v5469
        %v5801 = vunpack.c.h.b16 %v5469
        %v5802 = vunpack.c.l.b16 %v5470
        %v5803 = vunpack.c.h.b16 %v5470
        %v5804 = vunpack.c.l.b16 %v5471
        %v5805 = vunpack.c.h.b16 %v5471
        %v5806 = vunpack.c.l.b16 %v5472
        %v5807 = vunpack.c.h.b16 %v5472
        %v5808 = vunpack.c.l.b16 %v5473
        %v5809 = vunpack.c.h.b16 %v5473
        %v5810 = vunpack.c.l.b16 %v5474
        %v5811 = vunpack.c.h.b16 %v5474
        %v5812 = vunpack.c.l.b16 %v5475
        %v5813 = vunpack.c.h.b16 %v5475
        %v5814 = vunpack.c.l.b16 %v5476
        %v5815 = vunpack.c.h.b16 %v5476
        %v5816 = vunpack.c.l.b16 %v5477
        %v5817 = vunpack.c.h.b16 %v5477
        %v5818 = vunpack.c.l.b16 %v5478
        %v5819 = vunpack.c.h.b16 %v5478
        %v5820 = vunpack.c.l.b16 %v5479
        %v5821 = vunpack.c.h.b16 %v5479
        %v5822 = vunpack.c.l.b16 %v5480
        %v5823 = vunpack.c.h.b16 %v5480
        %v5824 = vunpack.c.l.b16 %v5481
        %v5825 = vunpack.c.h.b16 %v5481
        %v5826 = vunpack.c.l.b16 %v5482
        %v5827 = vunpack.c.h.b16 %v5482
        %v5828 = vunpack.c.l.b16 %v5483
        %v5829 = vunpack.c.h.b16 %v5483
        %v5830 = vunpack.c.l.b16 %v5484
        %v5831 = vunpack.c.h.b16 %v5484
        %v5832 = vunpack.c.l.b16 %v5485
        %v5833 = vunpack.c.h.b16 %v5485
        %v5834 = vunpack.c.l.b16 %v5486
        %v5835 = vunpack.c.h.b16 %v5486
        %v5836 = vunpack.c.l.b16 %v5487
        %v5837 = vunpack.c.h.b16 %v5487
        %v5838 = vunpack.c.l.b16 %v5488
        %v5839 = vunpack.c.h.b16 %v5488
        %v5840 = vunpack.c.l.b16 %v5489
        %v5841 = vunpack.c.h.b16 %v5489
        %v5842 = vunpack.c.l.b16 %v5490
        %v5843 = vunpack.c.h.b16 %v5490
        %v5844 = vunpack.c.l.b16 %v5491
        %v5845 = vunpack.c.h.b16 %v5491
        %v5846 = vunpack.c.l.b16 %v5492
        %v5847 = vunpack.c.h.b16 %v5492
        %v5848 = vunpack.c.l.b16 %v5493
        %v5849 = vunpack.c.h.b16 %v5493
        %v5850 = vunpack.c.l.b16 %v5494
        %v5851 = vunpack.c.h.b16 %v5494
        %v5852 = vunpack.c.l.b16 %v5495
        %v5853 = vunpack.c.h.b16 %v5495
        %v5854 = vunpack.c.l.b16 %v5496
        %v5855 = vunpack.c.h.b16 %v5496
        %v5856 = vunpack.c.l.b16 %v5497
        %v5857 = vunpack.c.h.b16 %v5497
        %v5858 = vunpack.c.l.b16 %v5498
        %v5859 = vunpack.c.h.b16 %v5498
        %v5860 = vunpack.c.l.b16 %v5499
        %v5861 = vunpack.c.h.b16 %v5499
        %v5862 = vunpack.c.l.b16 %v5500
        %v5863 = vunpack.c.h.b16 %v5500
        %v5864 = vunpack.c.l.b16 %v5501
        %v5865 = vunpack.c.h.b16 %v5501
        %v5866 = vunpack.c.l.b16 %v5502
        %v5867 = vunpack.c.h.b16 %v5502
        %v5868 = vunpack.c.l.b16 %v5503
        %v5869 = vunpack.c.h.b16 %v5503
        %v5870 = vunpack.c.l.b16 %v5504
        %v5871 = vunpack.c.h.b16 %v5504
        %v5872 = vunpack.c.l.b16 %v5505
        %v5873 = vunpack.c.h.b16 %v5505
        %v5874 = vunpack.c.l.b16 %v5506
        %v5875 = vunpack.c.h.b16 %v5506
        %v5876 = vunpack.c.l.b16 %v5507
        %v5877 = vunpack.c.h.b16 %v5507
        %v5878 = vunpack.c.l.b16 %v5508
        %v5879 = vunpack.c.h.b16 %v5508
        %v5880 = vunpack.c.l.b16 %v5509
        %v5881 = vunpack.c.h.b16 %v5509
        %v5882 = vunpack.c.l.b16 %v5510
        %v5883 = vunpack.c.h.b16 %v5510
        %v5884 = vunpack.c.l.b16 %v5511
        %v5885 = vunpack.c.h.b16 %v5511
        %v5886 = vunpack.c.l.b16 %v5512
        %v5887 = vunpack.c.h.b16 %v5512
        %v5888 = vunpack.c.l.b16 %v5513
        %v5889 = vunpack.c.h.b16 %v5513
        %v5890 = vunpack.c.l.b16 %v5514
        %v5891 = vunpack.c.h.b16 %v5514
        %v5892 = vunpack.c.l.b16 %v5515
        %v5893 = vunpack.c.h.b16 %v5515
        %v5894 = vunpack.c.l.b16 %v5516
        %v5895 = vunpack.c.h.b16 %v5516
        %v5896 = vunpack.c.l.b16 %v5517
        %v5897 = vunpack.c.h.b16 %v5517
        %v5898 = vunpack.c.l.b16 %v5518
        %v5899 = vunpack.c.h.b16 %v5518
        %v5900 = vunpack.c.l.b16 %v5519
        %v5901 = vunpack.c.h.b16 %v5519
        %v5902 = vunpack.c.l.b16 %v5520
        %v5903 = vunpack.c.h.b16 %v5520
        %v5904 = vunpack.c.l.b16 %v5521
        %v5905 = vunpack.c.h.b16 %v5521
        %v5906 = vunpack.c.l.b16 %v5522
        %v5907 = vunpack.c.h.b16 %v5522
        %v5908 = vunpack.c.l.b16 %v5523
        %v5909 = vunpack.c.h.b16 %v5523
        %v5910 = vunpack.c.l.b16 %v5524
        %v5911 = vunpack.c.h.b16 %v5524
        %v5912 = vunpack.c.l.b16 %v5525
        %v5913 = vunpack.c.h.b16 %v5525
        %v5914 = vunpack.c.l.b16 %v5526
        %v5915 = vunpack.c.h.b16 %v5526
        %v5916 = vunpack.c.l.b16 %v5527
        %v5917 = vunpack.c.h.b16 %v5527
        %v5918 = vunpack.c.l.b16 %v5528
        %v5919 = vunpack.c.h.b16 %v5528
        %v5920 = vunpack.c.l.b16 %v5529
        %v5921 = vunpack.c.h.b16 %v5529
        %v5922 = vunpack.c.l.b16 %v5530
        %v5923 = vunpack.c.h.b16 %v5530
        %v5924 = vunpack.c.l.b16 %v5531
        %v5925 = vunpack.c.h.b16 %v5531
        %v5926 = vunpack.c.l.b16 %v5532
        %v5927 = vunpack.c.h.b16 %v5532
        %v5928 = vunpack.c.l.b16 %v5533
        %v5929 = vunpack.c.h.b16 %v5533
        %v5930 = vunpack.c.l.b16 %v5534
        %v5931 = vunpack.c.h.b16 %v5534
        %v5932 = vunpack.c.l.b16 %v5535
        %v5933 = vunpack.c.h.b16 %v5535
        %v5934 = vunpack.c.l.b16 %v5536
        %v5935 = vunpack.c.h.b16 %v5536
        %v5936 = vunpack.c.l.b16 %v5537
        %v5937 = vunpack.c.h.b16 %v5537
        %v5938 = vunpack.c.l.b16 %v5538
        %v5939 = vunpack.c.h.b16 %v5538
        %v5940 = vunpack.c.l.b16 %v5539
        %v5941 = vunpack.c.h.b16 %v5539
        %v5942 = vunpack.c.l.b16 %v5540
        %v5943 = vunpack.c.h.b16 %v5540
        %v5944 = vunpack.c.l.b16 %v5541
        %v5945 = vunpack.c.h.b16 %v5541
        %v5946 = vunpack.c.l.b16 %v5542
        %v5947 = vunpack.c.h.b16 %v5542
        %v5948 = vunpack.c.l.b16 %v5543
        %v5949 = vunpack.c.h.b16 %v5543
        %v5950 = vunpack.c.l.b16 %v5544
        %v5951 = vunpack.c.h.b16 %v5544
        %v5952 = vunpack.c.l.b16 %v5545
        %v5953 = vunpack.c.h.b16 %v5545
        %v5954 = vunpack.c.l.b16 %v5546
        %v5955 = vunpack.c.h.b16 %v5546
        %v5956 = vunpack.c.l.b16 %v5547
        %v5957 = vunpack.c.h.b16 %v5547
        %v5958 = vunpack.c.l.b16 %v5548
        %v5959 = vunpack.c.h.b16 %v5548
        %v5960 = vunpack.c.l.b16 %v5549
        %v5961 = vunpack.c.h.b16 %v5549
        %v5962 = vunpack.c.l.b16 %v5550
        %v5963 = vunpack.c.h.b16 %v5550
        %v5964 = vunpack.c.l.b16 %v5551
        %v5965 = vunpack.c.h.b16 %v5551
        %v5966 = vunpack.c.l.b16 %v5552
        %v5967 = vunpack.c.h.b16 %v5552
        %v5968 = vunpack.c.l.b16 %v5553
        %v5969 = vunpack.c.h.b16 %v5553
        %v5970 = vunpack.c.l.b16 %v5554
        %v5971 = vunpack.c.h.b16 %v5554
        %v5972 = vunpack.c.l.b16 %v5555
        %v5973 = vunpack.c.h.b16 %v5555
        %v5974 = vunpack.c.l.b16 %v5556
        %v5975 = vunpack.c.h.b16 %v5556
        %v5976 = vunpack.c.l.b16 %v5557
        %v5977 = vunpack.c.h.b16 %v5557
        %v5978 = vunpack.c.l.b16 %v5558
        %v5979 = vunpack.c.h.b16 %v5558
        %v5980 = vunpack.c.l.b16 %v5559
        %v5981 = vunpack.c.h.b16 %v5559
        %v5982 = vunpack.c.l.b16 %v5560
        %v5983 = vunpack.c.h.b16 %v5560
        %v5984 = vunpack.c.l.b16 %v5561
        %v5985 = vunpack.c.h.b16 %v5561
        %v5986 = vunpack.c.l.b16 %v5562
        %v5987 = vunpack.c.h.b16 %v5562
        %v5988 = vunpack.c.l.b16 %v5563
        %v5989 = vunpack.c.h.b16 %v5563
        %v5990 = vpack.c.b16 %v5742, %v5734
        %v5991 = vpack.c.b16 %v5743, %v5735
        %v5992 = vpack.c.b16 %v5744, %v5736
        %v5993 = vpack.c.b16 %v5745, %v5737
        %v5994 = vpack.c.b16 %v5746, %v5738
        %v5995 = vpack.c.b16 %v5747, %v5739
        %v5996 = vpack.c.b16 %v5748, %v5740
        %v5997 = vpack.c.b16 %v5749, %v5741
        %v5998 = vpack.c.b16 %v5758, %v5750
        %v5999 = vpack.c.b16 %v5759, %v5751
        %v6000 = vpack.c.b16 %v5760, %v5752
        %v6001 = vpack.c.b16 %v5761, %v5753
        %v6002 = vpack.c.b16 %v5762, %v5754
        %v6003 = vpack.c.b16 %v5763, %v5755
        %v6004 = vpack.c.b16 %v5764, %v5756
        %v6005 = vpack.c.b16 %v5765, %v5757
        %v6006 = vpack.c.b16 %v5774, %v5766
        %v6007 = vpack.c.b16 %v5775, %v5767
        %v6008 = vpack.c.b16 %v5776, %v5768
        %v6009 = vpack.c.b16 %v5777, %v5769
        %v6010 = vpack.c.b16 %v5778, %v5770
        %v6011 = vpack.c.b16 %v5779, %v5771
        %v6012 = vpack.c.b16 %v5780, %v5772
        %v6013 = vpack.c.b16 %v5781, %v5773
        %v6014 = vpack.c.b16 %v5790, %v5782
        %v6015 = vpack.c.b16 %v5791, %v5783
        %v6016 = vpack.c.b16 %v5792, %v5784
        %v6017 = vpack.c.b16 %v5793, %v5785
        %v6018 = vpack.c.b16 %v5794, %v5786
        %v6019 = vpack.c.b16 %v5795, %v5787
        %v6020 = vpack.c.b16 %v5796, %v5788
        %v6021 = vpack.c.b16 %v5797, %v5789
        %v6022 = vpack.c.b16 %v5806, %v5798
        %v6023 = vpack.c.b16 %v5807, %v5799
        %v6024 = vpack.c.b16 %v5808, %v5800
        %v6025 = vpack.c.b16 %v5809, %v5801
        %v6026 = vpack.c.b16 %v5810, %v5802
        %v6027 = vpack.c.b16 %v5811, %v5803
        %v6028 = vpack.c.b16 %v5812, %v5804
        %v6029 = vpack.c.b16 %v5813, %v5805
        %v6030 = vpack.c.b16 %v5822, %v5814
        %v6031 = vpack.c.b16 %v5823, %v5815
        %v6032 = vpack.c.b16 %v5824, %v5816
        %v6033 = vpack.c.b16 %v5825, %v5817
        %v6034 = vpack.c.b16 %v5826, %v5818
        %v6035 = vpack.c.b16 %v5827, %v5819
        %v6036 = vpack.c.b16 %v5828, %v5820
        %v6037 = vpack.c.b16 %v5829, %v5821
        %v6038 = vpack.c.b16 %v5838, %v5830
        %v6039 = vpack.c.b16 %v5839, %v5831
        %v6040 = vpack.c.b16 %v5840, %v5832
        %v6041 = vpack.c.b16 %v5841, %v5833
        %v6042 = vpack.c.b16 %v5842, %v5834
        %v6043 = vpack.c.b16 %v5843, %v5835
        %v6044 = vpack.c.b16 %v5844, %v5836
        %v6045 = vpack.c.b16 %v5845, %v5837
        %v6046 = vpack.c.b16 %v5854, %v5846
        %v6047 = vpack.c.b16 %v5855, %v5847
        %v6048 = vpack.c.b16 %v5856, %v5848
        %v6049 = vpack.c.b16 %v5857, %v5849
        %v6050 = vpack.c.b16 %v5858, %v5850
        %v6051 = vpack.c.b16 %v5859, %v5851
        %v6052 = vpack.c.b16 %v5860, %v5852
        %v6053 = vpack.c.b16 %v5861, %v5853
        %v6054 = vpack.c.b16 %v5870, %v5862
        %v6055 = vpack.c.b16 %v5871, %v5863
        %v6056 = vpack.c.b16 %v5872, %v5864
        %v6057 = vpack.c.b16 %v5873, %v5865
        %v6058 = vpack.c.b16 %v5874, %v5866
        %v6059 = vpack.c.b16 %v5875, %v5867
        %v6060 = vpack.c.b16 %v5876, %v5868
        %v6061 = vpack.c.b16 %v5877, %v5869
        %v6062 = vpack.c.b16 %v5886, %v5878
        %v6063 = vpack.c.b16 %v5887, %v5879
        %v6064 = vpack.c.b16 %v5888, %v5880
        %v6065 = vpack.c.b16 %v5889, %v5881
        %v6066 = vpack.c.b16 %v5890, %v5882
        %v6067 = vpack.c.b16 %v5891, %v5883
        %v6068 = vpack.c.b16 %v5892, %v5884
        %v6069 = vpack.c.b16 %v5893, %v5885
        %v6070 = vpack.c.b16 %v5902, %v5894
        %v6071 = vpack.c.b16 %v5903, %v5895
        %v6072 = vpack.c.b16 %v5904, %v5896
        %v6073 = vpack.c.b16 %v5905, %v5897
        %v6074 = vpack.c.b16 %v5906, %v5898
        %v6075 = vpack.c.b16 %v5907, %v5899
        %v6076 = vpack.c.b16 %v5908, %v5900
        %v6077 = vpack.c.b16 %v5909, %v5901
        %v6078 = vpack.c.b16 %v5918, %v5910
        %v6079 = vpack.c.b16 %v5919, %v5911
        %v6080 = vpack.c.b16 %v5920, %v5912
        %v6081 = vpack.c.b16 %v5921, %v5913
        %v6082 = vpack.c.b16 %v5922, %v5914
        %v6083 = vpack.c.b16 %v5923, %v5915
        %v6084 = vpack.c.b16 %v5924, %v5916
        %v6085 = vpack.c.b16 %v5925, %v5917
        %v6086 = vpack.c.b16 %v5934, %v5926
        %v6087 = vpack.c.b16 %v5935, %v5927
        %v6088 = vpack.c.b16 %v5936, %v5928
        %v6089 = vpack.c.b16 %v5937, %v5929
        %v6090 = vpack.c.b16 %v5938, %v5930
        %v6091 = vpack.c.b16 %v5939, %v5931
        %v6092 = vpack.c.b16 %v5940, %v5932
        %v6093 = vpack.c.b16 %v5941, %v5933
        %v6094 = vpack.c.b16 %v5950, %v5942
        %v6095 = vpack.c.b16 %v5951, %v5943
        %v6096 = vpack.c.b16 %v5952, %v5944
        %v6097 = vpack.c.b16 %v5953, %v5945
        %v6098 = vpack.c.b16 %v5954, %v5946
        %v6099 = vpack.c.b16 %v5955, %v5947
        %v6100 = vpack.c.b16 %v5956, %v5948
        %v6101 = vpack.c.b16 %v5957, %v5949
        %v6102 = vpack.c.b16 %v5966, %v5958
        %v6103 = vpack.c.b16 %v5967, %v5959
        %v6104 = vpack.c.b16 %v5968, %v5960
        %v6105 = vpack.c.b16 %v5969, %v5961
        %v6106 = vpack.c.b16 %v5970, %v5962
        %v6107 = vpack.c.b16 %v5971, %v5963
        %v6108 = vpack.c.b16 %v5972, %v5964
        %v6109 = vpack.c.b16 %v5973, %v5965
        %v6110 = vpack.c.b16 %v5982, %v5974
        %v6111 = vpack.c.b16 %v5983, %v5975
        %v6112 = vpack.c.b16 %v5984, %v5976
        %v6113 = vpack.c.b16 %v5985, %v5977
        %v6114 = vpack.c.b16 %v5986, %v5978
        %v6115 = vpack.c.b16 %v5987, %v5979
        %v6116 = vpack.c.b16 %v5988, %v5980
        %v6117 = vpack.c.b16 %v5989, %v5981
        %6246 = vmatprep.subr.bf16.mxu0 %v6047
        %6247 = vmatpush1.bf16.msra.mxu0 %v6046
        %6248 = vmatprep.subr.bf16.mxu0 %v6039
        %6249 = vmatpush1.bf16.msra.mxu0 %v6038
        %6250 = vmatprep.subr.bf16.mxu0 %v6031
        %6251 = vmatpush1.bf16.msra.mxu0 %v6030
        %6252 = vmatprep.subr.bf16.mxu0 %v6023
        %6253 = vmatpush1.bf16.msra.mxu0 %v6022
        %6254 = vmatprep.subr.bf16.mxu0 %v6015
        %6255 = vmatpush1.bf16.msra.mxu0 %v6014
        %6256 = vmatprep.subr.bf16.mxu0 %v6007
        %6257 = vmatpush1.bf16.msra.mxu0 %v6006
        %6258 = vmatprep.subr.bf16.mxu0 %v5999
        %6259 = vmatpush1.bf16.msra.mxu0 %v5998
        %6260 = vmatprep.subr.bf16.mxu0 %v5991
        %6261 = vmatpush1.bf16.msra.mxu0 %v5990
        %6262 = vmatprep.subr.bf16.mxu0 %v6111
        %6263 = vmatpush2.bf16.msra.mxu0 %v6110
        %6264 = vmatprep.subr.bf16.mxu0 %v6103
        %6265 = vmatpush2.bf16.msra.mxu0 %v6102
        %6266 = vmatprep.subr.bf16.mxu0 %v6095
        %6267 = vmatpush2.bf16.msra.mxu0 %v6094
        %6268 = vmatprep.subr.bf16.mxu0 %v6087
        %6269 = vmatpush2.bf16.msra.mxu0 %v6086
        %6270 = vmatprep.subr.bf16.mxu0 %v6079
        %6271 = vmatpush2.bf16.msra.mxu0 %v6078
        %6272 = vmatprep.subr.bf16.mxu0 %v6071
        %6273 = vmatpush2.bf16.msra.mxu0 %v6070
        %6274 = vmatprep.subr.bf16.mxu0 %v6063
        %6275 = vmatpush2.bf16.msra.mxu0 %v6062
        %6276 = vmatprep.subr.bf16.mxu0 %v6055
        %6277 = vmatpush2.bf16.msra.mxu0 %v6054
        %6278 = vmatprep.mubr.bf16.mxu0 %v5435
        %6279 = vmatmul.mubr.bf16.gmra.mxu0 %v5434
        %v6280 = vpop.f32.mrf.mxu0
        %v6281 = vadd.f32 %v5569, %v6280
        %v6282 = vpop.f32.mrf.mxu0
        %v6283 = vadd.f32 %v5573, %v6282
        %v6284 = vpop.f32.mrf.mxu0
        %v6285 = vpop.f32.mrf.mxu0
        %6286 = vdwg.mxu0
        %6287 = vmatprep.subr.bf16.mxu0 %v6049
        %6288 = vmatpush1.bf16.msra.mxu0 %v6048
        %6289 = vmatprep.subr.bf16.mxu0 %v6041
        %6290 = vmatpush1.bf16.msra.mxu0 %v6040
        %6291 = vmatprep.subr.bf16.mxu0 %v6033
        %6292 = vmatpush1.bf16.msra.mxu0 %v6032
        %6293 = vmatprep.subr.bf16.mxu0 %v6025
        %6294 = vmatpush1.bf16.msra.mxu0 %v6024
        %6295 = vmatprep.subr.bf16.mxu0 %v6017
        %6296 = vmatpush1.bf16.msra.mxu0 %v6016
        %6297 = vmatprep.subr.bf16.mxu0 %v6009
        %6298 = vmatpush1.bf16.msra.mxu0 %v6008
        %6299 = vmatprep.subr.bf16.mxu0 %v6001
        %6300 = vmatpush1.bf16.msra.mxu0 %v6000
        %6301 = vmatprep.subr.bf16.mxu0 %v5993
        %6302 = vmatpush1.bf16.msra.mxu0 %v5992
        %6303 = vmatprep.subr.bf16.mxu0 %v6113
        %6304 = vmatpush2.bf16.msra.mxu0 %v6112
        %6305 = vmatprep.subr.bf16.mxu0 %v6105
        %6306 = vmatpush2.bf16.msra.mxu0 %v6104
        %6307 = vmatprep.subr.bf16.mxu0 %v6097
        %6308 = vmatpush2.bf16.msra.mxu0 %v6096
        %6309 = vmatprep.subr.bf16.mxu0 %v6089
        %6310 = vmatpush2.bf16.msra.mxu0 %v6088
        %6311 = vmatprep.subr.bf16.mxu0 %v6081
        %6312 = vmatpush2.bf16.msra.mxu0 %v6080
        %6313 = vmatprep.subr.bf16.mxu0 %v6073
        %6314 = vmatpush2.bf16.msra.mxu0 %v6072
        %6315 = vmatprep.subr.bf16.mxu0 %v6065
        %6316 = vmatpush2.bf16.msra.mxu0 %v6064
        %6317 = vmatprep.subr.bf16.mxu0 %v6057
        %6318 = vmatpush2.bf16.msra.mxu0 %v6056
        %6319 = vmatprep.mubr.bf16.mxu0 %v5435
        %6320 = vmatmul.mubr.bf16.gmra.mxu0 %v5434
        %v6321 = vpop.f32.mrf.mxu0
        %v6322 = vadd.f32 %v5577, %v6321
        %v6323 = vpop.f32.mrf.mxu0
        %v6324 = vadd.f32 %v5581, %v6323
        %v6325 = vpop.f32.mrf.mxu0
        %v6326 = vpop.f32.mrf.mxu0
        %6327 = vdwg.mxu0
        %6328 = vmatprep.subr.bf16.mxu0 %v6051
        %6329 = vmatpush1.bf16.msra.mxu0 %v6050
        %6330 = vmatprep.subr.bf16.mxu0 %v6043
        %6331 = vmatpush1.bf16.msra.mxu0 %v6042
        %6332 = vmatprep.subr.bf16.mxu0 %v6035
        %6333 = vmatpush1.bf16.msra.mxu0 %v6034
        %6334 = vmatprep.subr.bf16.mxu0 %v6027
        %6335 = vmatpush1.bf16.msra.mxu0 %v6026
        %6336 = vmatprep.subr.bf16.mxu0 %v6019
        %6337 = vmatpush1.bf16.msra.mxu0 %v6018
        %6338 = vmatprep.subr.bf16.mxu0 %v6011
        %6339 = vmatpush1.bf16.msra.mxu0 %v6010
        %6340 = vmatprep.subr.bf16.mxu0 %v6003
        %6341 = vmatpush1.bf16.msra.mxu0 %v6002
        %6342 = vmatprep.subr.bf16.mxu0 %v5995
        %6343 = vmatpush1.bf16.msra.mxu0 %v5994
        %6344 = vmatprep.subr.bf16.mxu0 %v6115
        %6345 = vmatpush2.bf16.msra.mxu0 %v6114
        %6346 = vmatprep.subr.bf16.mxu0 %v6107
        %6347 = vmatpush2.bf16.msra.mxu0 %v6106
        %6348 = vmatprep.subr.bf16.mxu0 %v6099
        %6349 = vmatpush2.bf16.msra.mxu0 %v6098
        %6350 = vmatprep.subr.bf16.mxu0 %v6091
        %6351 = vmatpush2.bf16.msra.mxu0 %v6090
        %6352 = vmatprep.subr.bf16.mxu0 %v6083
        %6353 = vmatpush2.bf16.msra.mxu0 %v6082
        %6354 = vmatprep.subr.bf16.mxu0 %v6075
        %6355 = vmatpush2.bf16.msra.mxu0 %v6074
        %6356 = vmatprep.subr.bf16.mxu0 %v6067
        %6357 = vmatpush2.bf16.msra.mxu0 %v6066
        %6358 = vmatprep.subr.bf16.mxu0 %v6059
        %6359 = vmatpush2.bf16.msra.mxu0 %v6058
        %6360 = vmatprep.mubr.bf16.mxu0 %v5435
        %6361 = vmatmul.mubr.bf16.gmra.mxu0 %v5434
        %v6362 = vpop.f32.mrf.mxu0
        %v6363 = vadd.f32 %v5585, %v6362
        %v6364 = vpop.f32.mrf.mxu0
        %v6365 = vadd.f32 %v5589, %v6364
        %v6366 = vpop.f32.mrf.mxu0
        %v6367 = vpop.f32.mrf.mxu0
        %6368 = vdwg.mxu0
        %6369 = vmatprep.subr.bf16.mxu0 %v6053
        %6370 = vmatpush1.bf16.msra.mxu0 %v6052
        %6371 = vmatprep.subr.bf16.mxu0 %v6045
        %6372 = vmatpush1.bf16.msra.mxu0 %v6044
        %6373 = vmatprep.subr.bf16.mxu0 %v6037
        %6374 = vmatpush1.bf16.msra.mxu0 %v6036
        %6375 = vmatprep.subr.bf16.mxu0 %v6029
        %6376 = vmatpush1.bf16.msra.mxu0 %v6028
        %6377 = vmatprep.subr.bf16.mxu0 %v6021
        %6378 = vmatpush1.bf16.msra.mxu0 %v6020
        %6379 = vmatprep.subr.bf16.mxu0 %v6013
        %6380 = vmatpush1.bf16.msra.mxu0 %v6012
        %6381 = vmatprep.subr.bf16.mxu0 %v6005
        %6382 = vmatpush1.bf16.msra.mxu0 %v6004
        %6383 = vmatprep.subr.bf16.mxu0 %v5997
        %6384 = vmatpush1.bf16.msra.mxu0 %v5996
        %6385 = vmatprep.subr.bf16.mxu0 %v6117
        %6386 = vmatpush2.bf16.msra.mxu0 %v6116
        %6387 = vmatprep.subr.bf16.mxu0 %v6109
        %6388 = vmatpush2.bf16.msra.mxu0 %v6108
        %6389 = vmatprep.subr.bf16.mxu0 %v6101
        %6390 = vmatpush2.bf16.msra.mxu0 %v6100
        %6391 = vmatprep.subr.bf16.mxu0 %v6093
        %6392 = vmatpush2.bf16.msra.mxu0 %v6092
        %6393 = vmatprep.subr.bf16.mxu0 %v6085
        %6394 = vmatpush2.bf16.msra.mxu0 %v6084
        %6395 = vmatprep.subr.bf16.mxu0 %v6077
        %6396 = vmatpush2.bf16.msra.mxu0 %v6076
        %6397 = vmatprep.subr.bf16.mxu0 %v6069
        %6398 = vmatpush2.bf16.msra.mxu0 %v6068
        %6399 = vmatprep.subr.bf16.mxu0 %v6061
        %6400 = vmatpush2.bf16.msra.mxu0 %v6060
        %6401 = vmatprep.mubr.bf16.mxu0 %v5435
        %6402 = vmatmul.mubr.bf16.gmra.mxu0 %v5434
        %v6403 = vpop.f32.mrf.mxu0
        %v6404 = vadd.f32 %v5593, %v6403
        %v6405 = vpop.f32.mrf.mxu0
        %v6406 = vadd.f32 %v5597, %v6405
        %v6407 = vpop.f32.mrf.mxu0
        %v6408 = vpop.f32.mrf.mxu0
        %6409 = vdwg.mxu0
        %v6410 = vmax.f32 %v6281, 0.0
        %v6411 = vmax.f32 %v6283, 0.0
        %v6412 = vmax.f32 %v6322, 0.0
        %v6413 = vmax.f32 %v6324, 0.0
        %v6414 = vmax.f32 %v6363, 0.0
        %v6415 = vmax.f32 %v6365, 0.0
        %v6416 = vmax.f32 %v6404, 0.0
        %v6417 = vmax.f32 %v6406, 0.0
        %v6418 = vpack.c.bf16 %v6410, %v6410
        %v6419 = vpack.c.bf16 %v6411, %v6411
        %v6420 = vpack.c.bf16 %v6412, %v6412
        %v6421 = vpack.c.bf16 %v6413, %v6413
        %v6422 = vpack.c.bf16 %v6414, %v6414
        %v6423 = vpack.c.bf16 %v6415, %v6415
        %v6424 = vpack.c.bf16 %v6416, %v6416
        %v6425 = vpack.c.bf16 %v6417, %v6417
        %v6426 = vld [vmem:[%s562] sm:$0xff]
        %v6427 = vld [vmem:[%s562 + $0x8] sm:$0xff]
        %v6428 = vld [vmem:[%s562 + $0x10] sm:$0xff]
        %v6429 = vld [vmem:[%s562 + $0x18] sm:$0xff]
        %v6430 = vld [vmem:[%s562 + $0x20] sm:$0xff]
        %v6431 = vld [vmem:[%s562 + $0x28] sm:$0xff]
        %v6432 = vld [vmem:[%s562 + $0x30] sm:$0xff]
        %v6433 = vld [vmem:[%s562 + $0x38] sm:$0xff]
        %v6434 = vld [vmem:[%s562 + $0x40] sm:$0xff]
        %v6435 = vld [vmem:[%s562 + $0x48] sm:$0xff]
        %v6436 = vld [vmem:[%s562 + $0x50] sm:$0xff]
        %v6437 = vld [vmem:[%s562 + $0x58] sm:$0xff]
        %v6438 = vld [vmem:[%s562 + $0x60] sm:$0xff]
        %v6439 = vld [vmem:[%s562 + $0x68] sm:$0xff]
        %v6440 = vld [vmem:[%s562 + $0x70] sm:$0xff]
        %v6441 = vld [vmem:[%s562 + $0x78] sm:$0xff]
        %v6442 = vld [vmem:[%s562 + $0x80] sm:$0xff]
        %v6443 = vld [vmem:[%s562 + $0x88] sm:$0xff]
        %v6444 = vld [vmem:[%s562 + $0x90] sm:$0xff]
        %v6445 = vld [vmem:[%s562 + $0x98] sm:$0xff]
        %v6446 = vld [vmem:[%s562 + $0xa0] sm:$0xff]
        %v6447 = vld [vmem:[%s562 + $0xa8] sm:$0xff]
        %v6448 = vld [vmem:[%s562 + $0xb0] sm:$0xff]
        %v6449 = vld [vmem:[%s562 + $0xb8] sm:$0xff]
        %v6450 = vld [vmem:[%s562 + $0xc0] sm:$0xff]
        %v6451 = vld [vmem:[%s562 + $0xc8] sm:$0xff]
        %v6452 = vld [vmem:[%s562 + $0xd0] sm:$0xff]
        %v6453 = vld [vmem:[%s562 + $0xd8] sm:$0xff]
        %v6454 = vld [vmem:[%s562 + $0xe0] sm:$0xff]
        %v6455 = vld [vmem:[%s562 + $0xe8] sm:$0xff]
        %v6456 = vld [vmem:[%s562 + $0xf0] sm:$0xff]
        %v6457 = vld [vmem:[%s562 + $0xf8] sm:$0xff]
        %v6458 = vld [vmem:[%s562 + $0x100] sm:$0xff]
        %v6459 = vld [vmem:[%s562 + $0x108] sm:$0xff]
        %v6460 = vld [vmem:[%s562 + $0x110] sm:$0xff]
        %v6461 = vld [vmem:[%s562 + $0x118] sm:$0xff]
        %v6462 = vld [vmem:[%s562 + $0x120] sm:$0xff]
        %v6463 = vld [vmem:[%s562 + $0x128] sm:$0xff]
        %v6464 = vld [vmem:[%s562 + $0x130] sm:$0xff]
        %v6465 = vld [vmem:[%s562 + $0x138] sm:$0xff]
        %v6466 = vld [vmem:[%s562 + $0x140] sm:$0xff]
        %v6467 = vld [vmem:[%s562 + $0x148] sm:$0xff]
        %v6468 = vld [vmem:[%s562 + $0x150] sm:$0xff]
        %v6469 = vld [vmem:[%s562 + $0x158] sm:$0xff]
        %v6470 = vld [vmem:[%s562 + $0x160] sm:$0xff]
        %v6471 = vld [vmem:[%s562 + $0x168] sm:$0xff]
        %v6472 = vld [vmem:[%s562 + $0x170] sm:$0xff]
        %v6473 = vld [vmem:[%s562 + $0x178] sm:$0xff]
        %v6474 = vld [vmem:[%s562 + $0x180] sm:$0xff]
        %v6475 = vld [vmem:[%s562 + $0x188] sm:$0xff]
        %v6476 = vld [vmem:[%s562 + $0x190] sm:$0xff]
        %v6477 = vld [vmem:[%s562 + $0x198] sm:$0xff]
        %v6478 = vld [vmem:[%s562 + $0x1a0] sm:$0xff]
        %v6479 = vld [vmem:[%s562 + $0x1a8] sm:$0xff]
        %v6480 = vld [vmem:[%s562 + $0x1b0] sm:$0xff]
        %v6481 = vld [vmem:[%s562 + $0x1b8] sm:$0xff]
        %v6482 = vld [vmem:[%s562 + $0x1c0] sm:$0xff]
        %v6483 = vld [vmem:[%s562 + $0x1c8] sm:$0xff]
        %v6484 = vld [vmem:[%s562 + $0x1d0] sm:$0xff]
        %v6485 = vld [vmem:[%s562 + $0x1d8] sm:$0xff]
        %v6486 = vld [vmem:[%s562 + $0x1e0] sm:$0xff]
        %v6487 = vld [vmem:[%s562 + $0x1e8] sm:$0xff]
        %v6488 = vld [vmem:[%s562 + $0x1f0] sm:$0xff]
        %v6489 = vld [vmem:[%s562 + $0x1f8] sm:$0xff]
        %v6490 = vld [vmem:[%s562 + $0x200] sm:$0xff]
        %v6491 = vld [vmem:[%s562 + $0x208] sm:$0xff]
        %v6492 = vld [vmem:[%s562 + $0x210] sm:$0xff]
        %v6493 = vld [vmem:[%s562 + $0x218] sm:$0xff]
        %v6494 = vld [vmem:[%s562 + $0x220] sm:$0xff]
        %v6495 = vld [vmem:[%s562 + $0x228] sm:$0xff]
        %v6496 = vld [vmem:[%s562 + $0x230] sm:$0xff]
        %v6497 = vld [vmem:[%s562 + $0x238] sm:$0xff]
        %v6498 = vld [vmem:[%s562 + $0x240] sm:$0xff]
        %v6499 = vld [vmem:[%s562 + $0x248] sm:$0xff]
        %v6500 = vld [vmem:[%s562 + $0x250] sm:$0xff]
        %v6501 = vld [vmem:[%s562 + $0x258] sm:$0xff]
        %v6502 = vld [vmem:[%s562 + $0x260] sm:$0xff]
        %v6503 = vld [vmem:[%s562 + $0x268] sm:$0xff]
        %v6504 = vld [vmem:[%s562 + $0x270] sm:$0xff]
        %v6505 = vld [vmem:[%s562 + $0x278] sm:$0xff]
        %v6506 = vld [vmem:[%s562 + $0x280] sm:$0xff]
        %v6507 = vld [vmem:[%s562 + $0x288] sm:$0xff]
        %v6508 = vld [vmem:[%s562 + $0x290] sm:$0xff]
        %v6509 = vld [vmem:[%s562 + $0x298] sm:$0xff]
        %v6510 = vld [vmem:[%s562 + $0x2a0] sm:$0xff]
        %v6511 = vld [vmem:[%s562 + $0x2a8] sm:$0xff]
        %v6512 = vld [vmem:[%s562 + $0x2b0] sm:$0xff]
        %v6513 = vld [vmem:[%s562 + $0x2b8] sm:$0xff]
        %v6514 = vld [vmem:[%s562 + $0x2c0] sm:$0xff]
        %v6515 = vld [vmem:[%s562 + $0x2c8] sm:$0xff]
        %v6516 = vld [vmem:[%s562 + $0x2d0] sm:$0xff]
        %v6517 = vld [vmem:[%s562 + $0x2d8] sm:$0xff]
        %v6518 = vld [vmem:[%s562 + $0x2e0] sm:$0xff]
        %v6519 = vld [vmem:[%s562 + $0x2e8] sm:$0xff]
        %v6520 = vld [vmem:[%s562 + $0x2f0] sm:$0xff]
        %v6521 = vld [vmem:[%s562 + $0x2f8] sm:$0xff]
        %v6522 = vld [vmem:[%s562 + $0x300] sm:$0xff]
        %v6523 = vld [vmem:[%s562 + $0x308] sm:$0xff]
        %v6524 = vld [vmem:[%s562 + $0x310] sm:$0xff]
        %v6525 = vld [vmem:[%s562 + $0x318] sm:$0xff]
        %v6526 = vld [vmem:[%s562 + $0x320] sm:$0xff]
        %v6527 = vld [vmem:[%s562 + $0x328] sm:$0xff]
        %v6528 = vld [vmem:[%s562 + $0x330] sm:$0xff]
        %v6529 = vld [vmem:[%s562 + $0x338] sm:$0xff]
        %v6530 = vld [vmem:[%s562 + $0x340] sm:$0xff]
        %v6531 = vld [vmem:[%s562 + $0x348] sm:$0xff]
        %v6532 = vld [vmem:[%s562 + $0x350] sm:$0xff]
        %v6533 = vld [vmem:[%s562 + $0x358] sm:$0xff]
        %v6534 = vld [vmem:[%s562 + $0x360] sm:$0xff]
        %v6535 = vld [vmem:[%s562 + $0x368] sm:$0xff]
        %v6536 = vld [vmem:[%s562 + $0x370] sm:$0xff]
        %v6537 = vld [vmem:[%s562 + $0x378] sm:$0xff]
        %v6538 = vld [vmem:[%s562 + $0x380] sm:$0xff]
        %v6539 = vld [vmem:[%s562 + $0x388] sm:$0xff]
        %v6540 = vld [vmem:[%s562 + $0x390] sm:$0xff]
        %v6541 = vld [vmem:[%s562 + $0x398] sm:$0xff]
        %v6542 = vld [vmem:[%s562 + $0x3a0] sm:$0xff]
        %v6543 = vld [vmem:[%s562 + $0x3a8] sm:$0xff]
        %v6544 = vld [vmem:[%s562 + $0x3b0] sm:$0xff]
        %v6545 = vld [vmem:[%s562 + $0x3b8] sm:$0xff]
        %v6546 = vld [vmem:[%s562 + $0x3c0] sm:$0xff]
        %v6547 = vld [vmem:[%s562 + $0x3c8] sm:$0xff]
        %v6548 = vld [vmem:[%s562 + $0x3d0] sm:$0xff]
        %v6549 = vld [vmem:[%s562 + $0x3d8] sm:$0xff]
        %v6550 = vld [vmem:[%s562 + $0x3e0] sm:$0xff]
        %v6551 = vld [vmem:[%s562 + $0x3e8] sm:$0xff]
        %v6552 = vld [vmem:[%s562 + $0x3f0] sm:$0xff]
        %v6553 = vld [vmem:[%s562 + $0x3f8] sm:$0xff]
        %v6554 = vld [vmem:[%s562 + $0x400] sm:$0xff]
        %v6555 = vld [vmem:[%s562 + $0x408] sm:$0xff]
        %v6556 = vld [vmem:[%s562 + $0x410] sm:$0xff]
        %v6557 = vld [vmem:[%s562 + $0x418] sm:$0xff]
        %v6558 = vld [vmem:[%s562 + $0x420] sm:$0xff]
        %v6559 = vld [vmem:[%s562 + $0x428] sm:$0xff]
        %v6560 = vld [vmem:[%s562 + $0x430] sm:$0xff]
        %v6561 = vld [vmem:[%s562 + $0x438] sm:$0xff]
        %v6562 = vld [vmem:[%s562 + $0x440] sm:$0xff]
        %v6563 = vld [vmem:[%s562 + $0x448] sm:$0xff]
        %v6564 = vld [vmem:[%s562 + $0x450] sm:$0xff]
        %v6565 = vld [vmem:[%s562 + $0x458] sm:$0xff]
        %v6566 = vld [vmem:[%s562 + $0x460] sm:$0xff]
        %v6567 = vld [vmem:[%s562 + $0x468] sm:$0xff]
        %v6568 = vld [vmem:[%s562 + $0x470] sm:$0xff]
        %v6569 = vld [vmem:[%s562 + $0x478] sm:$0xff]
        %v6570 = vld [vmem:[%s562 + $0x480] sm:$0xff]
        %v6571 = vld [vmem:[%s562 + $0x488] sm:$0xff]
        %v6572 = vld [vmem:[%s562 + $0x490] sm:$0xff]
        %v6573 = vld [vmem:[%s562 + $0x498] sm:$0xff]
        %v6574 = vld [vmem:[%s562 + $0x4a0] sm:$0xff]
        %v6575 = vld [vmem:[%s562 + $0x4a8] sm:$0xff]
        %v6576 = vld [vmem:[%s562 + $0x4b0] sm:$0xff]
        %v6577 = vld [vmem:[%s562 + $0x4b8] sm:$0xff]
        %v6578 = vld [vmem:[%s562 + $0x4c0] sm:$0xff]
        %v6579 = vld [vmem:[%s562 + $0x4c8] sm:$0xff]
        %v6580 = vld [vmem:[%s562 + $0x4d0] sm:$0xff]
        %v6581 = vld [vmem:[%s562 + $0x4d8] sm:$0xff]
        %v6582 = vld [vmem:[%s562 + $0x4e0] sm:$0xff]
        %v6583 = vld [vmem:[%s562 + $0x4e8] sm:$0xff]
        %v6584 = vld [vmem:[%s562 + $0x4f0] sm:$0xff]
        %v6585 = vld [vmem:[%s562 + $0x4f8] sm:$0xff]
        %v6586 = vld [vmem:[%s562 + $0x500] sm:$0xff]
        %v6587 = vld [vmem:[%s562 + $0x508] sm:$0xff]
        %v6588 = vld [vmem:[%s562 + $0x510] sm:$0xff]
        %v6589 = vld [vmem:[%s562 + $0x518] sm:$0xff]
        %v6590 = vld [vmem:[%s562 + $0x520] sm:$0xff]
        %v6591 = vld [vmem:[%s562 + $0x528] sm:$0xff]
        %v6592 = vld [vmem:[%s562 + $0x530] sm:$0xff]
        %v6593 = vld [vmem:[%s562 + $0x538] sm:$0xff]
        %v6594 = vld [vmem:[%s562 + $0x540] sm:$0xff]
        %v6595 = vld [vmem:[%s562 + $0x548] sm:$0xff]
        %v6596 = vld [vmem:[%s562 + $0x550] sm:$0xff]
        %v6597 = vld [vmem:[%s562 + $0x558] sm:$0xff]
        %v6598 = vld [vmem:[%s562 + $0x560] sm:$0xff]
        %v6599 = vld [vmem:[%s562 + $0x568] sm:$0xff]
        %v6600 = vld [vmem:[%s562 + $0x570] sm:$0xff]
        %v6601 = vld [vmem:[%s562 + $0x578] sm:$0xff]
        %v6602 = vld [vmem:[%s562 + $0x580] sm:$0xff]
        %v6603 = vld [vmem:[%s562 + $0x588] sm:$0xff]
        %v6604 = vld [vmem:[%s562 + $0x590] sm:$0xff]
        %v6605 = vld [vmem:[%s562 + $0x598] sm:$0xff]
        %v6606 = vld [vmem:[%s562 + $0x5a0] sm:$0xff]
        %v6607 = vld [vmem:[%s562 + $0x5a8] sm:$0xff]
        %v6608 = vld [vmem:[%s562 + $0x5b0] sm:$0xff]
        %v6609 = vld [vmem:[%s562 + $0x5b8] sm:$0xff]
        %v6610 = vld [vmem:[%s562 + $0x5c0] sm:$0xff]
        %v6611 = vld [vmem:[%s562 + $0x5c8] sm:$0xff]
        %v6612 = vld [vmem:[%s562 + $0x5d0] sm:$0xff]
        %v6613 = vld [vmem:[%s562 + $0x5d8] sm:$0xff]
        %v6614 = vld [vmem:[%s562 + $0x5e0] sm:$0xff]
        %v6615 = vld [vmem:[%s562 + $0x5e8] sm:$0xff]
        %v6616 = vld [vmem:[%s562 + $0x5f0] sm:$0xff]
        %v6617 = vld [vmem:[%s562 + $0x5f8] sm:$0xff]
        %v6618 = vld [vmem:[%s562 + $0x600] sm:$0xff]
        %v6619 = vld [vmem:[%s562 + $0x608] sm:$0xff]
        %v6620 = vld [vmem:[%s562 + $0x610] sm:$0xff]
        %v6621 = vld [vmem:[%s562 + $0x618] sm:$0xff]
        %v6622 = vld [vmem:[%s562 + $0x620] sm:$0xff]
        %v6623 = vld [vmem:[%s562 + $0x628] sm:$0xff]
        %v6624 = vld [vmem:[%s562 + $0x630] sm:$0xff]
        %v6625 = vld [vmem:[%s562 + $0x638] sm:$0xff]
        %v6626 = vld [vmem:[%s562 + $0x640] sm:$0xff]
        %v6627 = vld [vmem:[%s562 + $0x648] sm:$0xff]
        %v6628 = vld [vmem:[%s562 + $0x650] sm:$0xff]
        %v6629 = vld [vmem:[%s562 + $0x658] sm:$0xff]
        %v6630 = vld [vmem:[%s562 + $0x660] sm:$0xff]
        %v6631 = vld [vmem:[%s562 + $0x668] sm:$0xff]
        %v6632 = vld [vmem:[%s562 + $0x670] sm:$0xff]
        %v6633 = vld [vmem:[%s562 + $0x678] sm:$0xff]
        %v6634 = vld [vmem:[%s562 + $0x680] sm:$0xff]
        %v6635 = vld [vmem:[%s562 + $0x688] sm:$0xff]
        %v6636 = vld [vmem:[%s562 + $0x690] sm:$0xff]
        %v6637 = vld [vmem:[%s562 + $0x698] sm:$0xff]
        %v6638 = vld [vmem:[%s562 + $0x6a0] sm:$0xff]
        %v6639 = vld [vmem:[%s562 + $0x6a8] sm:$0xff]
        %v6640 = vld [vmem:[%s562 + $0x6b0] sm:$0xff]
        %v6641 = vld [vmem:[%s562 + $0x6b8] sm:$0xff]
        %v6642 = vld [vmem:[%s562 + $0x6c0] sm:$0xff]
        %v6643 = vld [vmem:[%s562 + $0x6c8] sm:$0xff]
        %v6644 = vld [vmem:[%s562 + $0x6d0] sm:$0xff]
        %v6645 = vld [vmem:[%s562 + $0x6d8] sm:$0xff]
        %v6646 = vld [vmem:[%s562 + $0x6e0] sm:$0xff]
        %v6647 = vld [vmem:[%s562 + $0x6e8] sm:$0xff]
        %v6648 = vld [vmem:[%s562 + $0x6f0] sm:$0xff]
        %v6649 = vld [vmem:[%s562 + $0x6f8] sm:$0xff]
        %v6650 = vld [vmem:[%s562 + $0x700] sm:$0xff]
        %v6651 = vld [vmem:[%s562 + $0x708] sm:$0xff]
        %v6652 = vld [vmem:[%s562 + $0x710] sm:$0xff]
        %v6653 = vld [vmem:[%s562 + $0x718] sm:$0xff]
        %v6654 = vld [vmem:[%s562 + $0x720] sm:$0xff]
        %v6655 = vld [vmem:[%s562 + $0x728] sm:$0xff]
        %v6656 = vld [vmem:[%s562 + $0x730] sm:$0xff]
        %v6657 = vld [vmem:[%s562 + $0x738] sm:$0xff]
        %v6658 = vld [vmem:[%s562 + $0x740] sm:$0xff]
        %v6659 = vld [vmem:[%s562 + $0x748] sm:$0xff]
        %v6660 = vld [vmem:[%s562 + $0x750] sm:$0xff]
        %v6661 = vld [vmem:[%s562 + $0x758] sm:$0xff]
        %v6662 = vld [vmem:[%s562 + $0x760] sm:$0xff]
        %v6663 = vld [vmem:[%s562 + $0x768] sm:$0xff]
        %v6664 = vld [vmem:[%s562 + $0x770] sm:$0xff]
        %v6665 = vld [vmem:[%s562 + $0x778] sm:$0xff]
        %v6666 = vld [vmem:[%s562 + $0x780] sm:$0xff]
        %v6667 = vld [vmem:[%s562 + $0x788] sm:$0xff]
        %v6668 = vld [vmem:[%s562 + $0x790] sm:$0xff]
        %v6669 = vld [vmem:[%s562 + $0x798] sm:$0xff]
        %v6670 = vld [vmem:[%s562 + $0x7a0] sm:$0xff]
        %v6671 = vld [vmem:[%s562 + $0x7a8] sm:$0xff]
        %v6672 = vld [vmem:[%s562 + $0x7b0] sm:$0xff]
        %v6673 = vld [vmem:[%s562 + $0x7b8] sm:$0xff]
        %v6674 = vld [vmem:[%s562 + $0x7c0] sm:$0xff]
        %v6675 = vld [vmem:[%s562 + $0x7c8] sm:$0xff]
        %v6676 = vld [vmem:[%s562 + $0x7d0] sm:$0xff]
        %v6677 = vld [vmem:[%s562 + $0x7d8] sm:$0xff]
        %v6678 = vld [vmem:[%s562 + $0x7e0] sm:$0xff]
        %v6679 = vld [vmem:[%s562 + $0x7e8] sm:$0xff]
        %v6680 = vld [vmem:[%s562 + $0x7f0] sm:$0xff]
        %v6681 = vld [vmem:[%s562 + $0x7f8] sm:$0xff]
        %v6682 = vld [vmem:[%s562 + $0x800] sm:$0xff]
        %v6683 = vld [vmem:[%s562 + $0x808] sm:$0xff]
        %v6684 = vld [vmem:[%s562 + $0x810] sm:$0xff]
        %v6685 = vld [vmem:[%s562 + $0x818] sm:$0xff]
        %v6686 = vld [vmem:[%s562 + $0x820] sm:$0xff]
        %v6687 = vld [vmem:[%s562 + $0x828] sm:$0xff]
        %v6688 = vld [vmem:[%s562 + $0x830] sm:$0xff]
        %v6689 = vld [vmem:[%s562 + $0x838] sm:$0xff]
        %v6690 = vld [vmem:[%s562 + $0x840] sm:$0xff]
        %v6691 = vld [vmem:[%s562 + $0x848] sm:$0xff]
        %v6692 = vld [vmem:[%s562 + $0x850] sm:$0xff]
        %v6693 = vld [vmem:[%s562 + $0x858] sm:$0xff]
        %v6694 = vld [vmem:[%s562 + $0x860] sm:$0xff]
        %v6695 = vld [vmem:[%s562 + $0x868] sm:$0xff]
        %v6696 = vld [vmem:[%s562 + $0x870] sm:$0xff]
        %v6697 = vld [vmem:[%s562 + $0x878] sm:$0xff]
        %v6698 = vld [vmem:[%s562 + $0x880] sm:$0xff]
        %v6699 = vld [vmem:[%s562 + $0x888] sm:$0xff]
        %v6700 = vld [vmem:[%s562 + $0x890] sm:$0xff]
        %v6701 = vld [vmem:[%s562 + $0x898] sm:$0xff]
        %v6702 = vld [vmem:[%s562 + $0x8a0] sm:$0xff]
        %v6703 = vld [vmem:[%s562 + $0x8a8] sm:$0xff]
        %v6704 = vld [vmem:[%s562 + $0x8b0] sm:$0xff]
        %v6705 = vld [vmem:[%s562 + $0x8b8] sm:$0xff]
        %v6706 = vld [vmem:[%s562 + $0x8c0] sm:$0xff]
        %v6707 = vld [vmem:[%s562 + $0x8c8] sm:$0xff]
        %v6708 = vld [vmem:[%s562 + $0x8d0] sm:$0xff]
        %v6709 = vld [vmem:[%s562 + $0x8d8] sm:$0xff]
        %v6710 = vld [vmem:[%s562 + $0x8e0] sm:$0xff]
        %v6711 = vld [vmem:[%s562 + $0x8e8] sm:$0xff]
        %v6712 = vld [vmem:[%s562 + $0x8f0] sm:$0xff]
        %v6713 = vld [vmem:[%s562 + $0x8f8] sm:$0xff]
        %v6714 = vld [vmem:[%s562 + $0x900] sm:$0xff]
        %v6715 = vld [vmem:[%s562 + $0x908] sm:$0xff]
        %v6716 = vld [vmem:[%s562 + $0x910] sm:$0xff]
        %v6717 = vld [vmem:[%s562 + $0x918] sm:$0xff]
        %v6718 = vld [vmem:[%s562 + $0x920] sm:$0xff]
        %v6719 = vld [vmem:[%s562 + $0x928] sm:$0xff]
        %v6720 = vld [vmem:[%s562 + $0x930] sm:$0xff]
        %v6721 = vld [vmem:[%s562 + $0x938] sm:$0xff]
        %v6722 = vld [vmem:[%s562 + $0x940] sm:$0xff]
        %v6723 = vld [vmem:[%s562 + $0x948] sm:$0xff]
        %v6724 = vld [vmem:[%s562 + $0x950] sm:$0xff]
        %v6725 = vld [vmem:[%s562 + $0x958] sm:$0xff]
        %v6726 = vld [vmem:[%s562 + $0x960] sm:$0xff]
        %v6727 = vld [vmem:[%s562 + $0x968] sm:$0xff]
        %v6728 = vld [vmem:[%s562 + $0x970] sm:$0xff]
        %v6729 = vld [vmem:[%s562 + $0x978] sm:$0xff]
        %v6730 = vld [vmem:[%s562 + $0x980] sm:$0xff]
        %v6731 = vld [vmem:[%s562 + $0x988] sm:$0xff]
        %v6732 = vld [vmem:[%s562 + $0x990] sm:$0xff]
        %v6733 = vld [vmem:[%s562 + $0x998] sm:$0xff]
        %v6734 = vld [vmem:[%s562 + $0x9a0] sm:$0xff]
        %v6735 = vld [vmem:[%s562 + $0x9a8] sm:$0xff]
        %v6736 = vld [vmem:[%s562 + $0x9b0] sm:$0xff]
        %v6737 = vld [vmem:[%s562 + $0x9b8] sm:$0xff]
        %v6738 = vld [vmem:[%s562 + $0x9c0] sm:$0xff]
        %v6739 = vld [vmem:[%s562 + $0x9c8] sm:$0xff]
        %v6740 = vld [vmem:[%s562 + $0x9d0] sm:$0xff]
        %v6741 = vld [vmem:[%s562 + $0x9d8] sm:$0xff]
        %v6742 = vld [vmem:[%s562 + $0x9e0] sm:$0xff]
        %v6743 = vld [vmem:[%s562 + $0x9e8] sm:$0xff]
        %v6744 = vld [vmem:[%s562 + $0x9f0] sm:$0xff]
        %v6745 = vld [vmem:[%s562 + $0x9f8] sm:$0xff]
        %v6746 = vld [vmem:[%s562 + $0xa00] sm:$0xff]
        %v6747 = vld [vmem:[%s562 + $0xa08] sm:$0xff]
        %v6748 = vld [vmem:[%s562 + $0xa10] sm:$0xff]
        %v6749 = vld [vmem:[%s562 + $0xa18] sm:$0xff]
        %v6750 = vld [vmem:[%s562 + $0xa20] sm:$0xff]
        %v6751 = vld [vmem:[%s562 + $0xa28] sm:$0xff]
        %v6752 = vld [vmem:[%s562 + $0xa30] sm:$0xff]
        %v6753 = vld [vmem:[%s562 + $0xa38] sm:$0xff]
        %v6754 = vld [vmem:[%s562 + $0xa40] sm:$0xff]
        %v6755 = vld [vmem:[%s562 + $0xa48] sm:$0xff]
        %v6756 = vld [vmem:[%s562 + $0xa50] sm:$0xff]
        %v6757 = vld [vmem:[%s562 + $0xa58] sm:$0xff]
        %v6758 = vld [vmem:[%s562 + $0xa60] sm:$0xff]
        %v6759 = vld [vmem:[%s562 + $0xa68] sm:$0xff]
        %v6760 = vld [vmem:[%s562 + $0xa70] sm:$0xff]
        %v6761 = vld [vmem:[%s562 + $0xa78] sm:$0xff]
        %v6762 = vld [vmem:[%s562 + $0xa80] sm:$0xff]
        %v6763 = vld [vmem:[%s562 + $0xa88] sm:$0xff]
        %v6764 = vld [vmem:[%s562 + $0xa90] sm:$0xff]
        %v6765 = vld [vmem:[%s562 + $0xa98] sm:$0xff]
        %v6766 = vld [vmem:[%s562 + $0xaa0] sm:$0xff]
        %v6767 = vld [vmem:[%s562 + $0xaa8] sm:$0xff]
        %v6768 = vld [vmem:[%s562 + $0xab0] sm:$0xff]
        %v6769 = vld [vmem:[%s562 + $0xab8] sm:$0xff]
        %v6770 = vld [vmem:[%s562 + $0xac0] sm:$0xff]
        %v6771 = vld [vmem:[%s562 + $0xac8] sm:$0xff]
        %v6772 = vld [vmem:[%s562 + $0xad0] sm:$0xff]
        %v6773 = vld [vmem:[%s562 + $0xad8] sm:$0xff]
        %v6774 = vld [vmem:[%s562 + $0xae0] sm:$0xff]
        %v6775 = vld [vmem:[%s562 + $0xae8] sm:$0xff]
        %v6776 = vld [vmem:[%s562 + $0xaf0] sm:$0xff]
        %v6777 = vld [vmem:[%s562 + $0xaf8] sm:$0xff]
        %v6778 = vld [vmem:[%s562 + $0xb00] sm:$0xff]
        %v6779 = vld [vmem:[%s562 + $0xb08] sm:$0xff]
        %v6780 = vld [vmem:[%s562 + $0xb10] sm:$0xff]
        %v6781 = vld [vmem:[%s562 + $0xb18] sm:$0xff]
        %v6782 = vld [vmem:[%s562 + $0xb20] sm:$0xff]
        %v6783 = vld [vmem:[%s562 + $0xb28] sm:$0xff]
        %v6784 = vld [vmem:[%s562 + $0xb30] sm:$0xff]
        %v6785 = vld [vmem:[%s562 + $0xb38] sm:$0xff]
        %v6786 = vld [vmem:[%s562 + $0xb40] sm:$0xff]
        %v6787 = vld [vmem:[%s562 + $0xb48] sm:$0xff]
        %v6788 = vld [vmem:[%s562 + $0xb50] sm:$0xff]
        %v6789 = vld [vmem:[%s562 + $0xb58] sm:$0xff]
        %v6790 = vld [vmem:[%s562 + $0xb60] sm:$0xff]
        %v6791 = vld [vmem:[%s562 + $0xb68] sm:$0xff]
        %v6792 = vld [vmem:[%s562 + $0xb70] sm:$0xff]
        %v6793 = vld [vmem:[%s562 + $0xb78] sm:$0xff]
        %v6794 = vld [vmem:[%s562 + $0xb80] sm:$0xff]
        %v6795 = vld [vmem:[%s562 + $0xb88] sm:$0xff]
        %v6796 = vld [vmem:[%s562 + $0xb90] sm:$0xff]
        %v6797 = vld [vmem:[%s562 + $0xb98] sm:$0xff]
        %v6798 = vld [vmem:[%s562 + $0xba0] sm:$0xff]
        %v6799 = vld [vmem:[%s562 + $0xba8] sm:$0xff]
        %v6800 = vld [vmem:[%s562 + $0xbb0] sm:$0xff]
        %v6801 = vld [vmem:[%s562 + $0xbb8] sm:$0xff]
        %v6802 = vld [vmem:[%s562 + $0xbc0] sm:$0xff]
        %v6803 = vld [vmem:[%s562 + $0xbc8] sm:$0xff]
        %v6804 = vld [vmem:[%s562 + $0xbd0] sm:$0xff]
        %v6805 = vld [vmem:[%s562 + $0xbd8] sm:$0xff]
        %v6806 = vld [vmem:[%s562 + $0xbe0] sm:$0xff]
        %v6807 = vld [vmem:[%s562 + $0xbe8] sm:$0xff]
        %v6808 = vld [vmem:[%s562 + $0xbf0] sm:$0xff]
        %v6809 = vld [vmem:[%s562 + $0xbf8] sm:$0xff]
        %v6810 = vld [vmem:[%s562 + $0xc00] sm:$0xff]
        %v6811 = vld [vmem:[%s562 + $0xc08] sm:$0xff]
        %v6812 = vld [vmem:[%s562 + $0xc10] sm:$0xff]
        %v6813 = vld [vmem:[%s562 + $0xc18] sm:$0xff]
        %v6814 = vld [vmem:[%s562 + $0xc20] sm:$0xff]
        %v6815 = vld [vmem:[%s562 + $0xc28] sm:$0xff]
        %v6816 = vld [vmem:[%s562 + $0xc30] sm:$0xff]
        %v6817 = vld [vmem:[%s562 + $0xc38] sm:$0xff]
        %v6818 = vld [vmem:[%s562 + $0xc40] sm:$0xff]
        %v6819 = vld [vmem:[%s562 + $0xc48] sm:$0xff]
        %v6820 = vld [vmem:[%s562 + $0xc50] sm:$0xff]
        %v6821 = vld [vmem:[%s562 + $0xc58] sm:$0xff]
        %v6822 = vld [vmem:[%s562 + $0xc60] sm:$0xff]
        %v6823 = vld [vmem:[%s562 + $0xc68] sm:$0xff]
        %v6824 = vld [vmem:[%s562 + $0xc70] sm:$0xff]
        %v6825 = vld [vmem:[%s562 + $0xc78] sm:$0xff]
        %v6826 = vld [vmem:[%s562 + $0xc80] sm:$0xff]
        %v6827 = vld [vmem:[%s562 + $0xc88] sm:$0xff]
        %v6828 = vld [vmem:[%s562 + $0xc90] sm:$0xff]
        %v6829 = vld [vmem:[%s562 + $0xc98] sm:$0xff]
        %v6830 = vld [vmem:[%s562 + $0xca0] sm:$0xff]
        %v6831 = vld [vmem:[%s562 + $0xca8] sm:$0xff]
        %v6832 = vld [vmem:[%s562 + $0xcb0] sm:$0xff]
        %v6833 = vld [vmem:[%s562 + $0xcb8] sm:$0xff]
        %v6834 = vld [vmem:[%s562 + $0xcc0] sm:$0xff]
        %v6835 = vld [vmem:[%s562 + $0xcc8] sm:$0xff]
        %v6836 = vld [vmem:[%s562 + $0xcd0] sm:$0xff]
        %v6837 = vld [vmem:[%s562 + $0xcd8] sm:$0xff]
        %v6838 = vld [vmem:[%s562 + $0xce0] sm:$0xff]
        %v6839 = vld [vmem:[%s562 + $0xce8] sm:$0xff]
        %v6840 = vld [vmem:[%s562 + $0xcf0] sm:$0xff]
        %v6841 = vld [vmem:[%s562 + $0xcf8] sm:$0xff]
        %v6842 = vld [vmem:[%s562 + $0xd00] sm:$0xff]
        %v6843 = vld [vmem:[%s562 + $0xd08] sm:$0xff]
        %v6844 = vld [vmem:[%s562 + $0xd10] sm:$0xff]
        %v6845 = vld [vmem:[%s562 + $0xd18] sm:$0xff]
        %v6846 = vld [vmem:[%s562 + $0xd20] sm:$0xff]
        %v6847 = vld [vmem:[%s562 + $0xd28] sm:$0xff]
        %v6848 = vld [vmem:[%s562 + $0xd30] sm:$0xff]
        %v6849 = vld [vmem:[%s562 + $0xd38] sm:$0xff]
        %v6850 = vld [vmem:[%s562 + $0xd40] sm:$0xff]
        %v6851 = vld [vmem:[%s562 + $0xd48] sm:$0xff]
        %v6852 = vld [vmem:[%s562 + $0xd50] sm:$0xff]
        %v6853 = vld [vmem:[%s562 + $0xd58] sm:$0xff]
        %v6854 = vld [vmem:[%s562 + $0xd60] sm:$0xff]
        %v6855 = vld [vmem:[%s562 + $0xd68] sm:$0xff]
        %v6856 = vld [vmem:[%s562 + $0xd70] sm:$0xff]
        %v6857 = vld [vmem:[%s562 + $0xd78] sm:$0xff]
        %v6858 = vld [vmem:[%s562 + $0xd80] sm:$0xff]
        %v6859 = vld [vmem:[%s562 + $0xd88] sm:$0xff]
        %v6860 = vld [vmem:[%s562 + $0xd90] sm:$0xff]
        %v6861 = vld [vmem:[%s562 + $0xd98] sm:$0xff]
        %v6862 = vld [vmem:[%s562 + $0xda0] sm:$0xff]
        %v6863 = vld [vmem:[%s562 + $0xda8] sm:$0xff]
        %v6864 = vld [vmem:[%s562 + $0xdb0] sm:$0xff]
        %v6865 = vld [vmem:[%s562 + $0xdb8] sm:$0xff]
        %v6866 = vld [vmem:[%s562 + $0xdc0] sm:$0xff]
        %v6867 = vld [vmem:[%s562 + $0xdc8] sm:$0xff]
        %v6868 = vld [vmem:[%s562 + $0xdd0] sm:$0xff]
        %v6869 = vld [vmem:[%s562 + $0xdd8] sm:$0xff]
        %v6870 = vld [vmem:[%s562 + $0xde0] sm:$0xff]
        %v6871 = vld [vmem:[%s562 + $0xde8] sm:$0xff]
        %v6872 = vld [vmem:[%s562 + $0xdf0] sm:$0xff]
        %v6873 = vld [vmem:[%s562 + $0xdf8] sm:$0xff]
        %v6874 = vld [vmem:[%s562 + $0xe00] sm:$0xff]
        %v6875 = vld [vmem:[%s562 + $0xe08] sm:$0xff]
        %v6876 = vld [vmem:[%s562 + $0xe10] sm:$0xff]
        %v6877 = vld [vmem:[%s562 + $0xe18] sm:$0xff]
        %v6878 = vld [vmem:[%s562 + $0xe20] sm:$0xff]
        %v6879 = vld [vmem:[%s562 + $0xe28] sm:$0xff]
        %v6880 = vld [vmem:[%s562 + $0xe30] sm:$0xff]
        %v6881 = vld [vmem:[%s562 + $0xe38] sm:$0xff]
        %v6882 = vld [vmem:[%s562 + $0xe40] sm:$0xff]
        %v6883 = vld [vmem:[%s562 + $0xe48] sm:$0xff]
        %v6884 = vld [vmem:[%s562 + $0xe50] sm:$0xff]
        %v6885 = vld [vmem:[%s562 + $0xe58] sm:$0xff]
        %v6886 = vld [vmem:[%s562 + $0xe60] sm:$0xff]
        %v6887 = vld [vmem:[%s562 + $0xe68] sm:$0xff]
        %v6888 = vld [vmem:[%s562 + $0xe70] sm:$0xff]
        %v6889 = vld [vmem:[%s562 + $0xe78] sm:$0xff]
        %v6890 = vld [vmem:[%s562 + $0xe80] sm:$0xff]
        %v6891 = vld [vmem:[%s562 + $0xe88] sm:$0xff]
        %v6892 = vld [vmem:[%s562 + $0xe90] sm:$0xff]
        %v6893 = vld [vmem:[%s562 + $0xe98] sm:$0xff]
        %v6894 = vld [vmem:[%s562 + $0xea0] sm:$0xff]
        %v6895 = vld [vmem:[%s562 + $0xea8] sm:$0xff]
        %v6896 = vld [vmem:[%s562 + $0xeb0] sm:$0xff]
        %v6897 = vld [vmem:[%s562 + $0xeb8] sm:$0xff]
        %v6898 = vld [vmem:[%s562 + $0xec0] sm:$0xff]
        %v6899 = vld [vmem:[%s562 + $0xec8] sm:$0xff]
        %v6900 = vld [vmem:[%s562 + $0xed0] sm:$0xff]
        %v6901 = vld [vmem:[%s562 + $0xed8] sm:$0xff]
        %v6902 = vld [vmem:[%s562 + $0xee0] sm:$0xff]
        %v6903 = vld [vmem:[%s562 + $0xee8] sm:$0xff]
        %v6904 = vld [vmem:[%s562 + $0xef0] sm:$0xff]
        %v6905 = vld [vmem:[%s562 + $0xef8] sm:$0xff]
        %v6906 = vld [vmem:[%s562 + $0xf00] sm:$0xff]
        %v6907 = vld [vmem:[%s562 + $0xf08] sm:$0xff]
        %v6908 = vld [vmem:[%s562 + $0xf10] sm:$0xff]
        %v6909 = vld [vmem:[%s562 + $0xf18] sm:$0xff]
        %v6910 = vld [vmem:[%s562 + $0xf20] sm:$0xff]
        %v6911 = vld [vmem:[%s562 + $0xf28] sm:$0xff]
        %v6912 = vld [vmem:[%s562 + $0xf30] sm:$0xff]
        %v6913 = vld [vmem:[%s562 + $0xf38] sm:$0xff]
        %v6914 = vld [vmem:[%s562 + $0xf40] sm:$0xff]
        %v6915 = vld [vmem:[%s562 + $0xf48] sm:$0xff]
        %v6916 = vld [vmem:[%s562 + $0xf50] sm:$0xff]
        %v6917 = vld [vmem:[%s562 + $0xf58] sm:$0xff]
        %v6918 = vld [vmem:[%s562 + $0xf60] sm:$0xff]
        %v6919 = vld [vmem:[%s562 + $0xf68] sm:$0xff]
        %v6920 = vld [vmem:[%s562 + $0xf70] sm:$0xff]
        %v6921 = vld [vmem:[%s562 + $0xf78] sm:$0xff]
        %v6922 = vld [vmem:[%s562 + $0xf80] sm:$0xff]
        %v6923 = vld [vmem:[%s562 + $0xf88] sm:$0xff]
        %v6924 = vld [vmem:[%s562 + $0xf90] sm:$0xff]
        %v6925 = vld [vmem:[%s562 + $0xf98] sm:$0xff]
        %v6926 = vld [vmem:[%s562 + $0xfa0] sm:$0xff]
        %v6927 = vld [vmem:[%s562 + $0xfa8] sm:$0xff]
        %v6928 = vld [vmem:[%s562 + $0xfb0] sm:$0xff]
        %v6929 = vld [vmem:[%s562 + $0xfb8] sm:$0xff]
        %v6930 = vld [vmem:[%s562 + $0xfc0] sm:$0xff]
        %v6931 = vld [vmem:[%s562 + $0xfc8] sm:$0xff]
        %v6932 = vld [vmem:[%s562 + $0xfd0] sm:$0xff]
        %v6933 = vld [vmem:[%s562 + $0xfd8] sm:$0xff]
        %v6934 = vld [vmem:[%s562 + $0xfe0] sm:$0xff]
        %v6935 = vld [vmem:[%s562 + $0xfe8] sm:$0xff]
        %v6936 = vld [vmem:[%s562 + $0xff0] sm:$0xff]
        %v6937 = vld [vmem:[%s562 + $0xff8] sm:$0xff]
        %v6938 = vld [vmem:[%s571] sm:$0xff]
        %v6940 = vlaneseq
        %v6941 = vshrl.u32 %v6940, 7
        %v6942 = vsub.s32 0, %v6941
        %v6943 = vrot.slane %v6938, %v6942
        %v6944 = vlaneseq
        %v6945 = vshrl.u32 %v6944, 7
        %v6946 = vsub.s32 1, %v6945
        %v6947 = vrot.slane %v6938, %v6946
        %v6948 = vlaneseq
        %v6949 = vshrl.u32 %v6948, 7
        %v6950 = vsub.s32 2, %v6949
        %v6951 = vrot.slane %v6938, %v6950
        %v6952 = vlaneseq
        %v6953 = vshrl.u32 %v6952, 7
        %v6954 = vsub.s32 3, %v6953
        %v6955 = vrot.slane %v6938, %v6954
        %v6956 = vlaneseq
        %v6957 = vshrl.u32 %v6956, 7
        %v6958 = vsub.s32 4, %v6957
        %v6959 = vrot.slane %v6938, %v6958
        %v6960 = vlaneseq
        %v6961 = vshrl.u32 %v6960, 7
        %v6962 = vsub.s32 5, %v6961
        %v6963 = vrot.slane %v6938, %v6962
        %v6964 = vlaneseq
        %v6965 = vshrl.u32 %v6964, 7
        %v6966 = vsub.s32 6, %v6965
        %v6967 = vrot.slane %v6938, %v6966
        %v6968 = vlaneseq
        %v6969 = vshrl.u32 %v6968, 7
        %v6970 = vsub.s32 7, %v6969
        %v6971 = vrot.slane %v6938, %v6970
        %v7492 = vunpack.c.l.b16 %v6426
        %v7493 = vunpack.c.h.b16 %v6426
        %v7494 = vunpack.c.l.b16 %v6427
        %v7495 = vunpack.c.h.b16 %v6427
        %v7496 = vunpack.c.l.b16 %v6428
        %v7497 = vunpack.c.h.b16 %v6428
        %v7498 = vunpack.c.l.b16 %v6429
        %v7499 = vunpack.c.h.b16 %v6429
        %v7500 = vunpack.c.l.b16 %v6430
        %v7501 = vunpack.c.h.b16 %v6430
        %v7502 = vunpack.c.l.b16 %v6431
        %v7503 = vunpack.c.h.b16 %v6431
        %v7504 = vunpack.c.l.b16 %v6432
        %v7505 = vunpack.c.h.b16 %v6432
        %v7506 = vunpack.c.l.b16 %v6433
        %v7507 = vunpack.c.h.b16 %v6433
        %v7508 = vunpack.c.l.b16 %v6434
        %v7509 = vunpack.c.h.b16 %v6434
        %v7510 = vunpack.c.l.b16 %v6435
        %v7511 = vunpack.c.h.b16 %v6435
        %v7512 = vunpack.c.l.b16 %v6436
        %v7513 = vunpack.c.h.b16 %v6436
        %v7514 = vunpack.c.l.b16 %v6437
        %v7515 = vunpack.c.h.b16 %v6437
        %v7516 = vunpack.c.l.b16 %v6438
        %v7517 = vunpack.c.h.b16 %v6438
        %v7518 = vunpack.c.l.b16 %v6439
        %v7519 = vunpack.c.h.b16 %v6439
        %v7520 = vunpack.c.l.b16 %v6440
        %v7521 = vunpack.c.h.b16 %v6440
        %v7522 = vunpack.c.l.b16 %v6441
        %v7523 = vunpack.c.h.b16 %v6441
        %v7524 = vunpack.c.l.b16 %v6442
        %v7525 = vunpack.c.h.b16 %v6442
        %v7526 = vunpack.c.l.b16 %v6443
        %v7527 = vunpack.c.h.b16 %v6443
        %v7528 = vunpack.c.l.b16 %v6444
        %v7529 = vunpack.c.h.b16 %v6444
        %v7530 = vunpack.c.l.b16 %v6445
        %v7531 = vunpack.c.h.b16 %v6445
        %v7532 = vunpack.c.l.b16 %v6446
        %v7533 = vunpack.c.h.b16 %v6446
        %v7534 = vunpack.c.l.b16 %v6447
        %v7535 = vunpack.c.h.b16 %v6447
        %v7536 = vunpack.c.l.b16 %v6448
        %v7537 = vunpack.c.h.b16 %v6448
        %v7538 = vunpack.c.l.b16 %v6449
        %v7539 = vunpack.c.h.b16 %v6449
        %v7540 = vunpack.c.l.b16 %v6450
        %v7541 = vunpack.c.h.b16 %v6450
        %v7542 = vunpack.c.l.b16 %v6451
        %v7543 = vunpack.c.h.b16 %v6451
        %v7544 = vunpack.c.l.b16 %v6452
        %v7545 = vunpack.c.h.b16 %v6452
        %v7546 = vunpack.c.l.b16 %v6453
        %v7547 = vunpack.c.h.b16 %v6453
        %v7548 = vunpack.c.l.b16 %v6454
        %v7549 = vunpack.c.h.b16 %v6454
        %v7550 = vunpack.c.l.b16 %v6455
        %v7551 = vunpack.c.h.b16 %v6455
        %v7552 = vunpack.c.l.b16 %v6456
        %v7553 = vunpack.c.h.b16 %v6456
        %v7554 = vunpack.c.l.b16 %v6457
        %v7555 = vunpack.c.h.b16 %v6457
        %v7556 = vunpack.c.l.b16 %v6458
        %v7557 = vunpack.c.h.b16 %v6458
        %v7558 = vunpack.c.l.b16 %v6459
        %v7559 = vunpack.c.h.b16 %v6459
        %v7560 = vunpack.c.l.b16 %v6460
        %v7561 = vunpack.c.h.b16 %v6460
        %v7562 = vunpack.c.l.b16 %v6461
        %v7563 = vunpack.c.h.b16 %v6461
        %v7564 = vunpack.c.l.b16 %v6462
        %v7565 = vunpack.c.h.b16 %v6462
        %v7566 = vunpack.c.l.b16 %v6463
        %v7567 = vunpack.c.h.b16 %v6463
        %v7568 = vunpack.c.l.b16 %v6464
        %v7569 = vunpack.c.h.b16 %v6464
        %v7570 = vunpack.c.l.b16 %v6465
        %v7571 = vunpack.c.h.b16 %v6465
        %v7572 = vunpack.c.l.b16 %v6466
        %v7573 = vunpack.c.h.b16 %v6466
        %v7574 = vunpack.c.l.b16 %v6467
        %v7575 = vunpack.c.h.b16 %v6467
        %v7576 = vunpack.c.l.b16 %v6468
        %v7577 = vunpack.c.h.b16 %v6468
        %v7578 = vunpack.c.l.b16 %v6469
        %v7579 = vunpack.c.h.b16 %v6469
        %v7580 = vunpack.c.l.b16 %v6470
        %v7581 = vunpack.c.h.b16 %v6470
        %v7582 = vunpack.c.l.b16 %v6471
        %v7583 = vunpack.c.h.b16 %v6471
        %v7584 = vunpack.c.l.b16 %v6472
        %v7585 = vunpack.c.h.b16 %v6472
        %v7586 = vunpack.c.l.b16 %v6473
        %v7587 = vunpack.c.h.b16 %v6473
        %v7588 = vunpack.c.l.b16 %v6474
        %v7589 = vunpack.c.h.b16 %v6474
        %v7590 = vunpack.c.l.b16 %v6475
        %v7591 = vunpack.c.h.b16 %v6475
        %v7592 = vunpack.c.l.b16 %v6476
        %v7593 = vunpack.c.h.b16 %v6476
        %v7594 = vunpack.c.l.b16 %v6477
        %v7595 = vunpack.c.h.b16 %v6477
        %v7596 = vunpack.c.l.b16 %v6478
        %v7597 = vunpack.c.h.b16 %v6478
        %v7598 = vunpack.c.l.b16 %v6479
        %v7599 = vunpack.c.h.b16 %v6479
        %v7600 = vunpack.c.l.b16 %v6480
        %v7601 = vunpack.c.h.b16 %v6480
        %v7602 = vunpack.c.l.b16 %v6481
        %v7603 = vunpack.c.h.b16 %v6481
        %v7604 = vunpack.c.l.b16 %v6482
        %v7605 = vunpack.c.h.b16 %v6482
        %v7606 = vunpack.c.l.b16 %v6483
        %v7607 = vunpack.c.h.b16 %v6483
        %v7608 = vunpack.c.l.b16 %v6484
        %v7609 = vunpack.c.h.b16 %v6484
        %v7610 = vunpack.c.l.b16 %v6485
        %v7611 = vunpack.c.h.b16 %v6485
        %v7612 = vunpack.c.l.b16 %v6486
        %v7613 = vunpack.c.h.b16 %v6486
        %v7614 = vunpack.c.l.b16 %v6487
        %v7615 = vunpack.c.h.b16 %v6487
        %v7616 = vunpack.c.l.b16 %v6488
        %v7617 = vunpack.c.h.b16 %v6488
        %v7618 = vunpack.c.l.b16 %v6489
        %v7619 = vunpack.c.h.b16 %v6489
        %v7620 = vunpack.c.l.b16 %v6490
        %v7621 = vunpack.c.h.b16 %v6490
        %v7622 = vunpack.c.l.b16 %v6491
        %v7623 = vunpack.c.h.b16 %v6491
        %v7624 = vunpack.c.l.b16 %v6492
        %v7625 = vunpack.c.h.b16 %v6492
        %v7626 = vunpack.c.l.b16 %v6493
        %v7627 = vunpack.c.h.b16 %v6493
        %v7628 = vunpack.c.l.b16 %v6494
        %v7629 = vunpack.c.h.b16 %v6494
        %v7630 = vunpack.c.l.b16 %v6495
        %v7631 = vunpack.c.h.b16 %v6495
        %v7632 = vunpack.c.l.b16 %v6496
        %v7633 = vunpack.c.h.b16 %v6496
        %v7634 = vunpack.c.l.b16 %v6497
        %v7635 = vunpack.c.h.b16 %v6497
        %v7636 = vunpack.c.l.b16 %v6498
        %v7637 = vunpack.c.h.b16 %v6498
        %v7638 = vunpack.c.l.b16 %v6499
        %v7639 = vunpack.c.h.b16 %v6499
        %v7640 = vunpack.c.l.b16 %v6500
        %v7641 = vunpack.c.h.b16 %v6500
        %v7642 = vunpack.c.l.b16 %v6501
        %v7643 = vunpack.c.h.b16 %v6501
        %v7644 = vunpack.c.l.b16 %v6502
        %v7645 = vunpack.c.h.b16 %v6502
        %v7646 = vunpack.c.l.b16 %v6503
        %v7647 = vunpack.c.h.b16 %v6503
        %v7648 = vunpack.c.l.b16 %v6504
        %v7649 = vunpack.c.h.b16 %v6504
        %v7650 = vunpack.c.l.b16 %v6505
        %v7651 = vunpack.c.h.b16 %v6505
        %v7652 = vunpack.c.l.b16 %v6506
        %v7653 = vunpack.c.h.b16 %v6506
        %v7654 = vunpack.c.l.b16 %v6507
        %v7655 = vunpack.c.h.b16 %v6507
        %v7656 = vunpack.c.l.b16 %v6508
        %v7657 = vunpack.c.h.b16 %v6508
        %v7658 = vunpack.c.l.b16 %v6509
        %v7659 = vunpack.c.h.b16 %v6509
        %v7660 = vunpack.c.l.b16 %v6510
        %v7661 = vunpack.c.h.b16 %v6510
        %v7662 = vunpack.c.l.b16 %v6511
        %v7663 = vunpack.c.h.b16 %v6511
        %v7664 = vunpack.c.l.b16 %v6512
        %v7665 = vunpack.c.h.b16 %v6512
        %v7666 = vunpack.c.l.b16 %v6513
        %v7667 = vunpack.c.h.b16 %v6513
        %v7668 = vunpack.c.l.b16 %v6514
        %v7669 = vunpack.c.h.b16 %v6514
        %v7670 = vunpack.c.l.b16 %v6515
        %v7671 = vunpack.c.h.b16 %v6515
        %v7672 = vunpack.c.l.b16 %v6516
        %v7673 = vunpack.c.h.b16 %v6516
        %v7674 = vunpack.c.l.b16 %v6517
        %v7675 = vunpack.c.h.b16 %v6517
        %v7676 = vunpack.c.l.b16 %v6518
        %v7677 = vunpack.c.h.b16 %v6518
        %v7678 = vunpack.c.l.b16 %v6519
        %v7679 = vunpack.c.h.b16 %v6519
        %v7680 = vunpack.c.l.b16 %v6520
        %v7681 = vunpack.c.h.b16 %v6520
        %v7682 = vunpack.c.l.b16 %v6521
        %v7683 = vunpack.c.h.b16 %v6521
        %v7684 = vunpack.c.l.b16 %v6522
        %v7685 = vunpack.c.h.b16 %v6522
        %v7686 = vunpack.c.l.b16 %v6523
        %v7687 = vunpack.c.h.b16 %v6523
        %v7688 = vunpack.c.l.b16 %v6524
        %v7689 = vunpack.c.h.b16 %v6524
        %v7690 = vunpack.c.l.b16 %v6525
        %v7691 = vunpack.c.h.b16 %v6525
        %v7692 = vunpack.c.l.b16 %v6526
        %v7693 = vunpack.c.h.b16 %v6526
        %v7694 = vunpack.c.l.b16 %v6527
        %v7695 = vunpack.c.h.b16 %v6527
        %v7696 = vunpack.c.l.b16 %v6528
        %v7697 = vunpack.c.h.b16 %v6528
        %v7698 = vunpack.c.l.b16 %v6529
        %v7699 = vunpack.c.h.b16 %v6529
        %v7700 = vunpack.c.l.b16 %v6530
        %v7701 = vunpack.c.h.b16 %v6530
        %v7702 = vunpack.c.l.b16 %v6531
        %v7703 = vunpack.c.h.b16 %v6531
        %v7704 = vunpack.c.l.b16 %v6532
        %v7705 = vunpack.c.h.b16 %v6532
        %v7706 = vunpack.c.l.b16 %v6533
        %v7707 = vunpack.c.h.b16 %v6533
        %v7708 = vunpack.c.l.b16 %v6534
        %v7709 = vunpack.c.h.b16 %v6534
        %v7710 = vunpack.c.l.b16 %v6535
        %v7711 = vunpack.c.h.b16 %v6535
        %v7712 = vunpack.c.l.b16 %v6536
        %v7713 = vunpack.c.h.b16 %v6536
        %v7714 = vunpack.c.l.b16 %v6537
        %v7715 = vunpack.c.h.b16 %v6537
        %v7716 = vunpack.c.l.b16 %v6538
        %v7717 = vunpack.c.h.b16 %v6538
        %v7718 = vunpack.c.l.b16 %v6539
        %v7719 = vunpack.c.h.b16 %v6539
        %v7720 = vunpack.c.l.b16 %v6540
        %v7721 = vunpack.c.h.b16 %v6540
        %v7722 = vunpack.c.l.b16 %v6541
        %v7723 = vunpack.c.h.b16 %v6541
        %v7724 = vunpack.c.l.b16 %v6542
        %v7725 = vunpack.c.h.b16 %v6542
        %v7726 = vunpack.c.l.b16 %v6543
        %v7727 = vunpack.c.h.b16 %v6543
        %v7728 = vunpack.c.l.b16 %v6544
        %v7729 = vunpack.c.h.b16 %v6544
        %v7730 = vunpack.c.l.b16 %v6545
        %v7731 = vunpack.c.h.b16 %v6545
        %v7732 = vunpack.c.l.b16 %v6546
        %v7733 = vunpack.c.h.b16 %v6546
        %v7734 = vunpack.c.l.b16 %v6547
        %v7735 = vunpack.c.h.b16 %v6547
        %v7736 = vunpack.c.l.b16 %v6548
        %v7737 = vunpack.c.h.b16 %v6548
        %v7738 = vunpack.c.l.b16 %v6549
        %v7739 = vunpack.c.h.b16 %v6549
        %v7740 = vunpack.c.l.b16 %v6550
        %v7741 = vunpack.c.h.b16 %v6550
        %v7742 = vunpack.c.l.b16 %v6551
        %v7743 = vunpack.c.h.b16 %v6551
        %v7744 = vunpack.c.l.b16 %v6552
        %v7745 = vunpack.c.h.b16 %v6552
        %v7746 = vunpack.c.l.b16 %v6553
        %v7747 = vunpack.c.h.b16 %v6553
        %v7748 = vunpack.c.l.b16 %v6554
        %v7749 = vunpack.c.h.b16 %v6554
        %v7750 = vunpack.c.l.b16 %v6555
        %v7751 = vunpack.c.h.b16 %v6555
        %v7752 = vunpack.c.l.b16 %v6556
        %v7753 = vunpack.c.h.b16 %v6556
        %v7754 = vunpack.c.l.b16 %v6557
        %v7755 = vunpack.c.h.b16 %v6557
        %v7756 = vunpack.c.l.b16 %v6558
        %v7757 = vunpack.c.h.b16 %v6558
        %v7758 = vunpack.c.l.b16 %v6559
        %v7759 = vunpack.c.h.b16 %v6559
        %v7760 = vunpack.c.l.b16 %v6560
        %v7761 = vunpack.c.h.b16 %v6560
        %v7762 = vunpack.c.l.b16 %v6561
        %v7763 = vunpack.c.h.b16 %v6561
        %v7764 = vunpack.c.l.b16 %v6562
        %v7765 = vunpack.c.h.b16 %v6562
        %v7766 = vunpack.c.l.b16 %v6563
        %v7767 = vunpack.c.h.b16 %v6563
        %v7768 = vunpack.c.l.b16 %v6564
        %v7769 = vunpack.c.h.b16 %v6564
        %v7770 = vunpack.c.l.b16 %v6565
        %v7771 = vunpack.c.h.b16 %v6565
        %v7772 = vunpack.c.l.b16 %v6566
        %v7773 = vunpack.c.h.b16 %v6566
        %v7774 = vunpack.c.l.b16 %v6567
        %v7775 = vunpack.c.h.b16 %v6567
        %v7776 = vunpack.c.l.b16 %v6568
        %v7777 = vunpack.c.h.b16 %v6568
        %v7778 = vunpack.c.l.b16 %v6569
        %v7779 = vunpack.c.h.b16 %v6569
        %v7780 = vunpack.c.l.b16 %v6570
        %v7781 = vunpack.c.h.b16 %v6570
        %v7782 = vunpack.c.l.b16 %v6571
        %v7783 = vunpack.c.h.b16 %v6571
        %v7784 = vunpack.c.l.b16 %v6572
        %v7785 = vunpack.c.h.b16 %v6572
        %v7786 = vunpack.c.l.b16 %v6573
        %v7787 = vunpack.c.h.b16 %v6573
        %v7788 = vunpack.c.l.b16 %v6574
        %v7789 = vunpack.c.h.b16 %v6574
        %v7790 = vunpack.c.l.b16 %v6575
        %v7791 = vunpack.c.h.b16 %v6575
        %v7792 = vunpack.c.l.b16 %v6576
        %v7793 = vunpack.c.h.b16 %v6576
        %v7794 = vunpack.c.l.b16 %v6577
        %v7795 = vunpack.c.h.b16 %v6577
        %v7796 = vunpack.c.l.b16 %v6578
        %v7797 = vunpack.c.h.b16 %v6578
        %v7798 = vunpack.c.l.b16 %v6579
        %v7799 = vunpack.c.h.b16 %v6579
        %v7800 = vunpack.c.l.b16 %v6580
        %v7801 = vunpack.c.h.b16 %v6580
        %v7802 = vunpack.c.l.b16 %v6581
        %v7803 = vunpack.c.h.b16 %v6581
        %v7804 = vunpack.c.l.b16 %v6582
        %v7805 = vunpack.c.h.b16 %v6582
        %v7806 = vunpack.c.l.b16 %v6583
        %v7807 = vunpack.c.h.b16 %v6583
        %v7808 = vunpack.c.l.b16 %v6584
        %v7809 = vunpack.c.h.b16 %v6584
        %v7810 = vunpack.c.l.b16 %v6585
        %v7811 = vunpack.c.h.b16 %v6585
        %v7812 = vunpack.c.l.b16 %v6586
        %v7813 = vunpack.c.h.b16 %v6586
        %v7814 = vunpack.c.l.b16 %v6587
        %v7815 = vunpack.c.h.b16 %v6587
        %v7816 = vunpack.c.l.b16 %v6588
        %v7817 = vunpack.c.h.b16 %v6588
        %v7818 = vunpack.c.l.b16 %v6589
        %v7819 = vunpack.c.h.b16 %v6589
        %v7820 = vunpack.c.l.b16 %v6590
        %v7821 = vunpack.c.h.b16 %v6590
        %v7822 = vunpack.c.l.b16 %v6591
        %v7823 = vunpack.c.h.b16 %v6591
        %v7824 = vunpack.c.l.b16 %v6592
        %v7825 = vunpack.c.h.b16 %v6592
        %v7826 = vunpack.c.l.b16 %v6593
        %v7827 = vunpack.c.h.b16 %v6593
        %v7828 = vunpack.c.l.b16 %v6594
        %v7829 = vunpack.c.h.b16 %v6594
        %v7830 = vunpack.c.l.b16 %v6595
        %v7831 = vunpack.c.h.b16 %v6595
        %v7832 = vunpack.c.l.b16 %v6596
        %v7833 = vunpack.c.h.b16 %v6596
        %v7834 = vunpack.c.l.b16 %v6597
        %v7835 = vunpack.c.h.b16 %v6597
        %v7836 = vunpack.c.l.b16 %v6598
        %v7837 = vunpack.c.h.b16 %v6598
        %v7838 = vunpack.c.l.b16 %v6599
        %v7839 = vunpack.c.h.b16 %v6599
        %v7840 = vunpack.c.l.b16 %v6600
        %v7841 = vunpack.c.h.b16 %v6600
        %v7842 = vunpack.c.l.b16 %v6601
        %v7843 = vunpack.c.h.b16 %v6601
        %v7844 = vunpack.c.l.b16 %v6602
        %v7845 = vunpack.c.h.b16 %v6602
        %v7846 = vunpack.c.l.b16 %v6603
        %v7847 = vunpack.c.h.b16 %v6603
        %v7848 = vunpack.c.l.b16 %v6604
        %v7849 = vunpack.c.h.b16 %v6604
        %v7850 = vunpack.c.l.b16 %v6605
        %v7851 = vunpack.c.h.b16 %v6605
        %v7852 = vunpack.c.l.b16 %v6606
        %v7853 = vunpack.c.h.b16 %v6606
        %v7854 = vunpack.c.l.b16 %v6607
        %v7855 = vunpack.c.h.b16 %v6607
        %v7856 = vunpack.c.l.b16 %v6608
        %v7857 = vunpack.c.h.b16 %v6608
        %v7858 = vunpack.c.l.b16 %v6609
        %v7859 = vunpack.c.h.b16 %v6609
        %v7860 = vunpack.c.l.b16 %v6610
        %v7861 = vunpack.c.h.b16 %v6610
        %v7862 = vunpack.c.l.b16 %v6611
        %v7863 = vunpack.c.h.b16 %v6611
        %v7864 = vunpack.c.l.b16 %v6612
        %v7865 = vunpack.c.h.b16 %v6612
        %v7866 = vunpack.c.l.b16 %v6613
        %v7867 = vunpack.c.h.b16 %v6613
        %v7868 = vunpack.c.l.b16 %v6614
        %v7869 = vunpack.c.h.b16 %v6614
        %v7870 = vunpack.c.l.b16 %v6615
        %v7871 = vunpack.c.h.b16 %v6615
        %v7872 = vunpack.c.l.b16 %v6616
        %v7873 = vunpack.c.h.b16 %v6616
        %v7874 = vunpack.c.l.b16 %v6617
        %v7875 = vunpack.c.h.b16 %v6617
        %v7876 = vunpack.c.l.b16 %v6618
        %v7877 = vunpack.c.h.b16 %v6618
        %v7878 = vunpack.c.l.b16 %v6619
        %v7879 = vunpack.c.h.b16 %v6619
        %v7880 = vunpack.c.l.b16 %v6620
        %v7881 = vunpack.c.h.b16 %v6620
        %v7882 = vunpack.c.l.b16 %v6621
        %v7883 = vunpack.c.h.b16 %v6621
        %v7884 = vunpack.c.l.b16 %v6622
        %v7885 = vunpack.c.h.b16 %v6622
        %v7886 = vunpack.c.l.b16 %v6623
        %v7887 = vunpack.c.h.b16 %v6623
        %v7888 = vunpack.c.l.b16 %v6624
        %v7889 = vunpack.c.h.b16 %v6624
        %v7890 = vunpack.c.l.b16 %v6625
        %v7891 = vunpack.c.h.b16 %v6625
        %v7892 = vunpack.c.l.b16 %v6626
        %v7893 = vunpack.c.h.b16 %v6626
        %v7894 = vunpack.c.l.b16 %v6627
        %v7895 = vunpack.c.h.b16 %v6627
        %v7896 = vunpack.c.l.b16 %v6628
        %v7897 = vunpack.c.h.b16 %v6628
        %v7898 = vunpack.c.l.b16 %v6629
        %v7899 = vunpack.c.h.b16 %v6629
        %v7900 = vunpack.c.l.b16 %v6630
        %v7901 = vunpack.c.h.b16 %v6630
        %v7902 = vunpack.c.l.b16 %v6631
        %v7903 = vunpack.c.h.b16 %v6631
        %v7904 = vunpack.c.l.b16 %v6632
        %v7905 = vunpack.c.h.b16 %v6632
        %v7906 = vunpack.c.l.b16 %v6633
        %v7907 = vunpack.c.h.b16 %v6633
        %v7908 = vunpack.c.l.b16 %v6634
        %v7909 = vunpack.c.h.b16 %v6634
        %v7910 = vunpack.c.l.b16 %v6635
        %v7911 = vunpack.c.h.b16 %v6635
        %v7912 = vunpack.c.l.b16 %v6636
        %v7913 = vunpack.c.h.b16 %v6636
        %v7914 = vunpack.c.l.b16 %v6637
        %v7915 = vunpack.c.h.b16 %v6637
        %v7916 = vunpack.c.l.b16 %v6638
        %v7917 = vunpack.c.h.b16 %v6638
        %v7918 = vunpack.c.l.b16 %v6639
        %v7919 = vunpack.c.h.b16 %v6639
        %v7920 = vunpack.c.l.b16 %v6640
        %v7921 = vunpack.c.h.b16 %v6640
        %v7922 = vunpack.c.l.b16 %v6641
        %v7923 = vunpack.c.h.b16 %v6641
        %v7924 = vunpack.c.l.b16 %v6642
        %v7925 = vunpack.c.h.b16 %v6642
        %v7926 = vunpack.c.l.b16 %v6643
        %v7927 = vunpack.c.h.b16 %v6643
        %v7928 = vunpack.c.l.b16 %v6644
        %v7929 = vunpack.c.h.b16 %v6644
        %v7930 = vunpack.c.l.b16 %v6645
        %v7931 = vunpack.c.h.b16 %v6645
        %v7932 = vunpack.c.l.b16 %v6646
        %v7933 = vunpack.c.h.b16 %v6646
        %v7934 = vunpack.c.l.b16 %v6647
        %v7935 = vunpack.c.h.b16 %v6647
        %v7936 = vunpack.c.l.b16 %v6648
        %v7937 = vunpack.c.h.b16 %v6648
        %v7938 = vunpack.c.l.b16 %v6649
        %v7939 = vunpack.c.h.b16 %v6649
        %v7940 = vunpack.c.l.b16 %v6650
        %v7941 = vunpack.c.h.b16 %v6650
        %v7942 = vunpack.c.l.b16 %v6651
        %v7943 = vunpack.c.h.b16 %v6651
        %v7944 = vunpack.c.l.b16 %v6652
        %v7945 = vunpack.c.h.b16 %v6652
        %v7946 = vunpack.c.l.b16 %v6653
        %v7947 = vunpack.c.h.b16 %v6653
        %v7948 = vunpack.c.l.b16 %v6654
        %v7949 = vunpack.c.h.b16 %v6654
        %v7950 = vunpack.c.l.b16 %v6655
        %v7951 = vunpack.c.h.b16 %v6655
        %v7952 = vunpack.c.l.b16 %v6656
        %v7953 = vunpack.c.h.b16 %v6656
        %v7954 = vunpack.c.l.b16 %v6657
        %v7955 = vunpack.c.h.b16 %v6657
        %v7956 = vunpack.c.l.b16 %v6658
        %v7957 = vunpack.c.h.b16 %v6658
        %v7958 = vunpack.c.l.b16 %v6659
        %v7959 = vunpack.c.h.b16 %v6659
        %v7960 = vunpack.c.l.b16 %v6660
        %v7961 = vunpack.c.h.b16 %v6660
        %v7962 = vunpack.c.l.b16 %v6661
        %v7963 = vunpack.c.h.b16 %v6661
        %v7964 = vunpack.c.l.b16 %v6662
        %v7965 = vunpack.c.h.b16 %v6662
        %v7966 = vunpack.c.l.b16 %v6663
        %v7967 = vunpack.c.h.b16 %v6663
        %v7968 = vunpack.c.l.b16 %v6664
        %v7969 = vunpack.c.h.b16 %v6664
        %v7970 = vunpack.c.l.b16 %v6665
        %v7971 = vunpack.c.h.b16 %v6665
        %v7972 = vunpack.c.l.b16 %v6666
        %v7973 = vunpack.c.h.b16 %v6666
        %v7974 = vunpack.c.l.b16 %v6667
        %v7975 = vunpack.c.h.b16 %v6667
        %v7976 = vunpack.c.l.b16 %v6668
        %v7977 = vunpack.c.h.b16 %v6668
        %v7978 = vunpack.c.l.b16 %v6669
        %v7979 = vunpack.c.h.b16 %v6669
        %v7980 = vunpack.c.l.b16 %v6670
        %v7981 = vunpack.c.h.b16 %v6670
        %v7982 = vunpack.c.l.b16 %v6671
        %v7983 = vunpack.c.h.b16 %v6671
        %v7984 = vunpack.c.l.b16 %v6672
        %v7985 = vunpack.c.h.b16 %v6672
        %v7986 = vunpack.c.l.b16 %v6673
        %v7987 = vunpack.c.h.b16 %v6673
        %v7988 = vunpack.c.l.b16 %v6674
        %v7989 = vunpack.c.h.b16 %v6674
        %v7990 = vunpack.c.l.b16 %v6675
        %v7991 = vunpack.c.h.b16 %v6675
        %v7992 = vunpack.c.l.b16 %v6676
        %v7993 = vunpack.c.h.b16 %v6676
        %v7994 = vunpack.c.l.b16 %v6677
        %v7995 = vunpack.c.h.b16 %v6677
        %v7996 = vunpack.c.l.b16 %v6678
        %v7997 = vunpack.c.h.b16 %v6678
        %v7998 = vunpack.c.l.b16 %v6679
        %v7999 = vunpack.c.h.b16 %v6679
        %v8000 = vunpack.c.l.b16 %v6680
        %v8001 = vunpack.c.h.b16 %v6680
        %v8002 = vunpack.c.l.b16 %v6681
        %v8003 = vunpack.c.h.b16 %v6681
        %v8004 = vunpack.c.l.b16 %v6682
        %v8005 = vunpack.c.h.b16 %v6682
        %v8006 = vunpack.c.l.b16 %v6683
        %v8007 = vunpack.c.h.b16 %v6683
        %v8008 = vunpack.c.l.b16 %v6684
        %v8009 = vunpack.c.h.b16 %v6684
        %v8010 = vunpack.c.l.b16 %v6685
        %v8011 = vunpack.c.h.b16 %v6685
        %v8012 = vunpack.c.l.b16 %v6686
        %v8013 = vunpack.c.h.b16 %v6686
        %v8014 = vunpack.c.l.b16 %v6687
        %v8015 = vunpack.c.h.b16 %v6687
        %v8016 = vunpack.c.l.b16 %v6688
        %v8017 = vunpack.c.h.b16 %v6688
        %v8018 = vunpack.c.l.b16 %v6689
        %v8019 = vunpack.c.h.b16 %v6689
        %v8020 = vunpack.c.l.b16 %v6690
        %v8021 = vunpack.c.h.b16 %v6690
        %v8022 = vunpack.c.l.b16 %v6691
        %v8023 = vunpack.c.h.b16 %v6691
        %v8024 = vunpack.c.l.b16 %v6692
        %v8025 = vunpack.c.h.b16 %v6692
        %v8026 = vunpack.c.l.b16 %v6693
        %v8027 = vunpack.c.h.b16 %v6693
        %v8028 = vunpack.c.l.b16 %v6694
        %v8029 = vunpack.c.h.b16 %v6694
        %v8030 = vunpack.c.l.b16 %v6695
        %v8031 = vunpack.c.h.b16 %v6695
        %v8032 = vunpack.c.l.b16 %v6696
        %v8033 = vunpack.c.h.b16 %v6696
        %v8034 = vunpack.c.l.b16 %v6697
        %v8035 = vunpack.c.h.b16 %v6697
        %v8036 = vunpack.c.l.b16 %v6698
        %v8037 = vunpack.c.h.b16 %v6698
        %v8038 = vunpack.c.l.b16 %v6699
        %v8039 = vunpack.c.h.b16 %v6699
        %v8040 = vunpack.c.l.b16 %v6700
        %v8041 = vunpack.c.h.b16 %v6700
        %v8042 = vunpack.c.l.b16 %v6701
        %v8043 = vunpack.c.h.b16 %v6701
        %v8044 = vunpack.c.l.b16 %v6702
        %v8045 = vunpack.c.h.b16 %v6702
        %v8046 = vunpack.c.l.b16 %v6703
        %v8047 = vunpack.c.h.b16 %v6703
        %v8048 = vunpack.c.l.b16 %v6704
        %v8049 = vunpack.c.h.b16 %v6704
        %v8050 = vunpack.c.l.b16 %v6705
        %v8051 = vunpack.c.h.b16 %v6705
        %v8052 = vunpack.c.l.b16 %v6706
        %v8053 = vunpack.c.h.b16 %v6706
        %v8054 = vunpack.c.l.b16 %v6707
        %v8055 = vunpack.c.h.b16 %v6707
        %v8056 = vunpack.c.l.b16 %v6708
        %v8057 = vunpack.c.h.b16 %v6708
        %v8058 = vunpack.c.l.b16 %v6709
        %v8059 = vunpack.c.h.b16 %v6709
        %v8060 = vunpack.c.l.b16 %v6710
        %v8061 = vunpack.c.h.b16 %v6710
        %v8062 = vunpack.c.l.b16 %v6711
        %v8063 = vunpack.c.h.b16 %v6711
        %v8064 = vunpack.c.l.b16 %v6712
        %v8065 = vunpack.c.h.b16 %v6712
        %v8066 = vunpack.c.l.b16 %v6713
        %v8067 = vunpack.c.h.b16 %v6713
        %v8068 = vunpack.c.l.b16 %v6714
        %v8069 = vunpack.c.h.b16 %v6714
        %v8070 = vunpack.c.l.b16 %v6715
        %v8071 = vunpack.c.h.b16 %v6715
        %v8072 = vunpack.c.l.b16 %v6716
        %v8073 = vunpack.c.h.b16 %v6716
        %v8074 = vunpack.c.l.b16 %v6717
        %v8075 = vunpack.c.h.b16 %v6717
        %v8076 = vunpack.c.l.b16 %v6718
        %v8077 = vunpack.c.h.b16 %v6718
        %v8078 = vunpack.c.l.b16 %v6719
        %v8079 = vunpack.c.h.b16 %v6719
        %v8080 = vunpack.c.l.b16 %v6720
        %v8081 = vunpack.c.h.b16 %v6720
        %v8082 = vunpack.c.l.b16 %v6721
        %v8083 = vunpack.c.h.b16 %v6721
        %v8084 = vunpack.c.l.b16 %v6722
        %v8085 = vunpack.c.h.b16 %v6722
        %v8086 = vunpack.c.l.b16 %v6723
        %v8087 = vunpack.c.h.b16 %v6723
        %v8088 = vunpack.c.l.b16 %v6724
        %v8089 = vunpack.c.h.b16 %v6724
        %v8090 = vunpack.c.l.b16 %v6725
        %v8091 = vunpack.c.h.b16 %v6725
        %v8092 = vunpack.c.l.b16 %v6726
        %v8093 = vunpack.c.h.b16 %v6726
        %v8094 = vunpack.c.l.b16 %v6727
        %v8095 = vunpack.c.h.b16 %v6727
        %v8096 = vunpack.c.l.b16 %v6728
        %v8097 = vunpack.c.h.b16 %v6728
        %v8098 = vunpack.c.l.b16 %v6729
        %v8099 = vunpack.c.h.b16 %v6729
        %v8100 = vunpack.c.l.b16 %v6730
        %v8101 = vunpack.c.h.b16 %v6730
        %v8102 = vunpack.c.l.b16 %v6731
        %v8103 = vunpack.c.h.b16 %v6731
        %v8104 = vunpack.c.l.b16 %v6732
        %v8105 = vunpack.c.h.b16 %v6732
        %v8106 = vunpack.c.l.b16 %v6733
        %v8107 = vunpack.c.h.b16 %v6733
        %v8108 = vunpack.c.l.b16 %v6734
        %v8109 = vunpack.c.h.b16 %v6734
        %v8110 = vunpack.c.l.b16 %v6735
        %v8111 = vunpack.c.h.b16 %v6735
        %v8112 = vunpack.c.l.b16 %v6736
        %v8113 = vunpack.c.h.b16 %v6736
        %v8114 = vunpack.c.l.b16 %v6737
        %v8115 = vunpack.c.h.b16 %v6737
        %v8116 = vunpack.c.l.b16 %v6738
        %v8117 = vunpack.c.h.b16 %v6738
        %v8118 = vunpack.c.l.b16 %v6739
        %v8119 = vunpack.c.h.b16 %v6739
        %v8120 = vunpack.c.l.b16 %v6740
        %v8121 = vunpack.c.h.b16 %v6740
        %v8122 = vunpack.c.l.b16 %v6741
        %v8123 = vunpack.c.h.b16 %v6741
        %v8124 = vunpack.c.l.b16 %v6742
        %v8125 = vunpack.c.h.b16 %v6742
        %v8126 = vunpack.c.l.b16 %v6743
        %v8127 = vunpack.c.h.b16 %v6743
        %v8128 = vunpack.c.l.b16 %v6744
        %v8129 = vunpack.c.h.b16 %v6744
        %v8130 = vunpack.c.l.b16 %v6745
        %v8131 = vunpack.c.h.b16 %v6745
        %v8132 = vunpack.c.l.b16 %v6746
        %v8133 = vunpack.c.h.b16 %v6746
        %v8134 = vunpack.c.l.b16 %v6747
        %v8135 = vunpack.c.h.b16 %v6747
        %v8136 = vunpack.c.l.b16 %v6748
        %v8137 = vunpack.c.h.b16 %v6748
        %v8138 = vunpack.c.l.b16 %v6749
        %v8139 = vunpack.c.h.b16 %v6749
        %v8140 = vunpack.c.l.b16 %v6750
        %v8141 = vunpack.c.h.b16 %v6750
        %v8142 = vunpack.c.l.b16 %v6751
        %v8143 = vunpack.c.h.b16 %v6751
        %v8144 = vunpack.c.l.b16 %v6752
        %v8145 = vunpack.c.h.b16 %v6752
        %v8146 = vunpack.c.l.b16 %v6753
        %v8147 = vunpack.c.h.b16 %v6753
        %v8148 = vunpack.c.l.b16 %v6754
        %v8149 = vunpack.c.h.b16 %v6754
        %v8150 = vunpack.c.l.b16 %v6755
        %v8151 = vunpack.c.h.b16 %v6755
        %v8152 = vunpack.c.l.b16 %v6756
        %v8153 = vunpack.c.h.b16 %v6756
        %v8154 = vunpack.c.l.b16 %v6757
        %v8155 = vunpack.c.h.b16 %v6757
        %v8156 = vunpack.c.l.b16 %v6758
        %v8157 = vunpack.c.h.b16 %v6758
        %v8158 = vunpack.c.l.b16 %v6759
        %v8159 = vunpack.c.h.b16 %v6759
        %v8160 = vunpack.c.l.b16 %v6760
        %v8161 = vunpack.c.h.b16 %v6760
        %v8162 = vunpack.c.l.b16 %v6761
        %v8163 = vunpack.c.h.b16 %v6761
        %v8164 = vunpack.c.l.b16 %v6762
        %v8165 = vunpack.c.h.b16 %v6762
        %v8166 = vunpack.c.l.b16 %v6763
        %v8167 = vunpack.c.h.b16 %v6763
        %v8168 = vunpack.c.l.b16 %v6764
        %v8169 = vunpack.c.h.b16 %v6764
        %v8170 = vunpack.c.l.b16 %v6765
        %v8171 = vunpack.c.h.b16 %v6765
        %v8172 = vunpack.c.l.b16 %v6766
        %v8173 = vunpack.c.h.b16 %v6766
        %v8174 = vunpack.c.l.b16 %v6767
        %v8175 = vunpack.c.h.b16 %v6767
        %v8176 = vunpack.c.l.b16 %v6768
        %v8177 = vunpack.c.h.b16 %v6768
        %v8178 = vunpack.c.l.b16 %v6769
        %v8179 = vunpack.c.h.b16 %v6769
        %v8180 = vunpack.c.l.b16 %v6770
        %v8181 = vunpack.c.h.b16 %v6770
        %v8182 = vunpack.c.l.b16 %v6771
        %v8183 = vunpack.c.h.b16 %v6771
        %v8184 = vunpack.c.l.b16 %v6772
        %v8185 = vunpack.c.h.b16 %v6772
        %v8186 = vunpack.c.l.b16 %v6773
        %v8187 = vunpack.c.h.b16 %v6773
        %v8188 = vunpack.c.l.b16 %v6774
        %v8189 = vunpack.c.h.b16 %v6774
        %v8190 = vunpack.c.l.b16 %v6775
        %v8191 = vunpack.c.h.b16 %v6775
        %v8192 = vunpack.c.l.b16 %v6776
        %v8193 = vunpack.c.h.b16 %v6776
        %v8194 = vunpack.c.l.b16 %v6777
        %v8195 = vunpack.c.h.b16 %v6777
        %v8196 = vunpack.c.l.b16 %v6778
        %v8197 = vunpack.c.h.b16 %v6778
        %v8198 = vunpack.c.l.b16 %v6779
        %v8199 = vunpack.c.h.b16 %v6779
        %v8200 = vunpack.c.l.b16 %v6780
        %v8201 = vunpack.c.h.b16 %v6780
        %v8202 = vunpack.c.l.b16 %v6781
        %v8203 = vunpack.c.h.b16 %v6781
        %v8204 = vunpack.c.l.b16 %v6782
        %v8205 = vunpack.c.h.b16 %v6782
        %v8206 = vunpack.c.l.b16 %v6783
        %v8207 = vunpack.c.h.b16 %v6783
        %v8208 = vunpack.c.l.b16 %v6784
        %v8209 = vunpack.c.h.b16 %v6784
        %v8210 = vunpack.c.l.b16 %v6785
        %v8211 = vunpack.c.h.b16 %v6785
        %v8212 = vunpack.c.l.b16 %v6786
        %v8213 = vunpack.c.h.b16 %v6786
        %v8214 = vunpack.c.l.b16 %v6787
        %v8215 = vunpack.c.h.b16 %v6787
        %v8216 = vunpack.c.l.b16 %v6788
        %v8217 = vunpack.c.h.b16 %v6788
        %v8218 = vunpack.c.l.b16 %v6789
        %v8219 = vunpack.c.h.b16 %v6789
        %v8220 = vunpack.c.l.b16 %v6790
        %v8221 = vunpack.c.h.b16 %v6790
        %v8222 = vunpack.c.l.b16 %v6791
        %v8223 = vunpack.c.h.b16 %v6791
        %v8224 = vunpack.c.l.b16 %v6792
        %v8225 = vunpack.c.h.b16 %v6792
        %v8226 = vunpack.c.l.b16 %v6793
        %v8227 = vunpack.c.h.b16 %v6793
        %v8228 = vunpack.c.l.b16 %v6794
        %v8229 = vunpack.c.h.b16 %v6794
        %v8230 = vunpack.c.l.b16 %v6795
        %v8231 = vunpack.c.h.b16 %v6795
        %v8232 = vunpack.c.l.b16 %v6796
        %v8233 = vunpack.c.h.b16 %v6796
        %v8234 = vunpack.c.l.b16 %v6797
        %v8235 = vunpack.c.h.b16 %v6797
        %v8236 = vunpack.c.l.b16 %v6798
        %v8237 = vunpack.c.h.b16 %v6798
        %v8238 = vunpack.c.l.b16 %v6799
        %v8239 = vunpack.c.h.b16 %v6799
        %v8240 = vunpack.c.l.b16 %v6800
        %v8241 = vunpack.c.h.b16 %v6800
        %v8242 = vunpack.c.l.b16 %v6801
        %v8243 = vunpack.c.h.b16 %v6801
        %v8244 = vunpack.c.l.b16 %v6802
        %v8245 = vunpack.c.h.b16 %v6802
        %v8246 = vunpack.c.l.b16 %v6803
        %v8247 = vunpack.c.h.b16 %v6803
        %v8248 = vunpack.c.l.b16 %v6804
        %v8249 = vunpack.c.h.b16 %v6804
        %v8250 = vunpack.c.l.b16 %v6805
        %v8251 = vunpack.c.h.b16 %v6805
        %v8252 = vunpack.c.l.b16 %v6806
        %v8253 = vunpack.c.h.b16 %v6806
        %v8254 = vunpack.c.l.b16 %v6807
        %v8255 = vunpack.c.h.b16 %v6807
        %v8256 = vunpack.c.l.b16 %v6808
        %v8257 = vunpack.c.h.b16 %v6808
        %v8258 = vunpack.c.l.b16 %v6809
        %v8259 = vunpack.c.h.b16 %v6809
        %v8260 = vunpack.c.l.b16 %v6810
        %v8261 = vunpack.c.h.b16 %v6810
        %v8262 = vunpack.c.l.b16 %v6811
        %v8263 = vunpack.c.h.b16 %v6811
        %v8264 = vunpack.c.l.b16 %v6812
        %v8265 = vunpack.c.h.b16 %v6812
        %v8266 = vunpack.c.l.b16 %v6813
        %v8267 = vunpack.c.h.b16 %v6813
        %v8268 = vunpack.c.l.b16 %v6814
        %v8269 = vunpack.c.h.b16 %v6814
        %v8270 = vunpack.c.l.b16 %v6815
        %v8271 = vunpack.c.h.b16 %v6815
        %v8272 = vunpack.c.l.b16 %v6816
        %v8273 = vunpack.c.h.b16 %v6816
        %v8274 = vunpack.c.l.b16 %v6817
        %v8275 = vunpack.c.h.b16 %v6817
        %v8276 = vunpack.c.l.b16 %v6818
        %v8277 = vunpack.c.h.b16 %v6818
        %v8278 = vunpack.c.l.b16 %v6819
        %v8279 = vunpack.c.h.b16 %v6819
        %v8280 = vunpack.c.l.b16 %v6820
        %v8281 = vunpack.c.h.b16 %v6820
        %v8282 = vunpack.c.l.b16 %v6821
        %v8283 = vunpack.c.h.b16 %v6821
        %v8284 = vunpack.c.l.b16 %v6822
        %v8285 = vunpack.c.h.b16 %v6822
        %v8286 = vunpack.c.l.b16 %v6823
        %v8287 = vunpack.c.h.b16 %v6823
        %v8288 = vunpack.c.l.b16 %v6824
        %v8289 = vunpack.c.h.b16 %v6824
        %v8290 = vunpack.c.l.b16 %v6825
        %v8291 = vunpack.c.h.b16 %v6825
        %v8292 = vunpack.c.l.b16 %v6826
        %v8293 = vunpack.c.h.b16 %v6826
        %v8294 = vunpack.c.l.b16 %v6827
        %v8295 = vunpack.c.h.b16 %v6827
        %v8296 = vunpack.c.l.b16 %v6828
        %v8297 = vunpack.c.h.b16 %v6828
        %v8298 = vunpack.c.l.b16 %v6829
        %v8299 = vunpack.c.h.b16 %v6829
        %v8300 = vunpack.c.l.b16 %v6830
        %v8301 = vunpack.c.h.b16 %v6830
        %v8302 = vunpack.c.l.b16 %v6831
        %v8303 = vunpack.c.h.b16 %v6831
        %v8304 = vunpack.c.l.b16 %v6832
        %v8305 = vunpack.c.h.b16 %v6832
        %v8306 = vunpack.c.l.b16 %v6833
        %v8307 = vunpack.c.h.b16 %v6833
        %v8308 = vunpack.c.l.b16 %v6834
        %v8309 = vunpack.c.h.b16 %v6834
        %v8310 = vunpack.c.l.b16 %v6835
        %v8311 = vunpack.c.h.b16 %v6835
        %v8312 = vunpack.c.l.b16 %v6836
        %v8313 = vunpack.c.h.b16 %v6836
        %v8314 = vunpack.c.l.b16 %v6837
        %v8315 = vunpack.c.h.b16 %v6837
        %v8316 = vunpack.c.l.b16 %v6838
        %v8317 = vunpack.c.h.b16 %v6838
        %v8318 = vunpack.c.l.b16 %v6839
        %v8319 = vunpack.c.h.b16 %v6839
        %v8320 = vunpack.c.l.b16 %v6840
        %v8321 = vunpack.c.h.b16 %v6840
        %v8322 = vunpack.c.l.b16 %v6841
        %v8323 = vunpack.c.h.b16 %v6841
        %v8324 = vunpack.c.l.b16 %v6842
        %v8325 = vunpack.c.h.b16 %v6842
        %v8326 = vunpack.c.l.b16 %v6843
        %v8327 = vunpack.c.h.b16 %v6843
        %v8328 = vunpack.c.l.b16 %v6844
        %v8329 = vunpack.c.h.b16 %v6844
        %v8330 = vunpack.c.l.b16 %v6845
        %v8331 = vunpack.c.h.b16 %v6845
        %v8332 = vunpack.c.l.b16 %v6846
        %v8333 = vunpack.c.h.b16 %v6846
        %v8334 = vunpack.c.l.b16 %v6847
        %v8335 = vunpack.c.h.b16 %v6847
        %v8336 = vunpack.c.l.b16 %v6848
        %v8337 = vunpack.c.h.b16 %v6848
        %v8338 = vunpack.c.l.b16 %v6849
        %v8339 = vunpack.c.h.b16 %v6849
        %v8340 = vunpack.c.l.b16 %v6850
        %v8341 = vunpack.c.h.b16 %v6850
        %v8342 = vunpack.c.l.b16 %v6851
        %v8343 = vunpack.c.h.b16 %v6851
        %v8344 = vunpack.c.l.b16 %v6852
        %v8345 = vunpack.c.h.b16 %v6852
        %v8346 = vunpack.c.l.b16 %v6853
        %v8347 = vunpack.c.h.b16 %v6853
        %v8348 = vunpack.c.l.b16 %v6854
        %v8349 = vunpack.c.h.b16 %v6854
        %v8350 = vunpack.c.l.b16 %v6855
        %v8351 = vunpack.c.h.b16 %v6855
        %v8352 = vunpack.c.l.b16 %v6856
        %v8353 = vunpack.c.h.b16 %v6856
        %v8354 = vunpack.c.l.b16 %v6857
        %v8355 = vunpack.c.h.b16 %v6857
        %v8356 = vunpack.c.l.b16 %v6858
        %v8357 = vunpack.c.h.b16 %v6858
        %v8358 = vunpack.c.l.b16 %v6859
        %v8359 = vunpack.c.h.b16 %v6859
        %v8360 = vunpack.c.l.b16 %v6860
        %v8361 = vunpack.c.h.b16 %v6860
        %v8362 = vunpack.c.l.b16 %v6861
        %v8363 = vunpack.c.h.b16 %v6861
        %v8364 = vunpack.c.l.b16 %v6862
        %v8365 = vunpack.c.h.b16 %v6862
        %v8366 = vunpack.c.l.b16 %v6863
        %v8367 = vunpack.c.h.b16 %v6863
        %v8368 = vunpack.c.l.b16 %v6864
        %v8369 = vunpack.c.h.b16 %v6864
        %v8370 = vunpack.c.l.b16 %v6865
        %v8371 = vunpack.c.h.b16 %v6865
        %v8372 = vunpack.c.l.b16 %v6866
        %v8373 = vunpack.c.h.b16 %v6866
        %v8374 = vunpack.c.l.b16 %v6867
        %v8375 = vunpack.c.h.b16 %v6867
        %v8376 = vunpack.c.l.b16 %v6868
        %v8377 = vunpack.c.h.b16 %v6868
        %v8378 = vunpack.c.l.b16 %v6869
        %v8379 = vunpack.c.h.b16 %v6869
        %v8380 = vunpack.c.l.b16 %v6870
        %v8381 = vunpack.c.h.b16 %v6870
        %v8382 = vunpack.c.l.b16 %v6871
        %v8383 = vunpack.c.h.b16 %v6871
        %v8384 = vunpack.c.l.b16 %v6872
        %v8385 = vunpack.c.h.b16 %v6872
        %v8386 = vunpack.c.l.b16 %v6873
        %v8387 = vunpack.c.h.b16 %v6873
        %v8388 = vunpack.c.l.b16 %v6874
        %v8389 = vunpack.c.h.b16 %v6874
        %v8390 = vunpack.c.l.b16 %v6875
        %v8391 = vunpack.c.h.b16 %v6875
        %v8392 = vunpack.c.l.b16 %v6876
        %v8393 = vunpack.c.h.b16 %v6876
        %v8394 = vunpack.c.l.b16 %v6877
        %v8395 = vunpack.c.h.b16 %v6877
        %v8396 = vunpack.c.l.b16 %v6878
        %v8397 = vunpack.c.h.b16 %v6878
        %v8398 = vunpack.c.l.b16 %v6879
        %v8399 = vunpack.c.h.b16 %v6879
        %v8400 = vunpack.c.l.b16 %v6880
        %v8401 = vunpack.c.h.b16 %v6880
        %v8402 = vunpack.c.l.b16 %v6881
        %v8403 = vunpack.c.h.b16 %v6881
        %v8404 = vunpack.c.l.b16 %v6882
        %v8405 = vunpack.c.h.b16 %v6882
        %v8406 = vunpack.c.l.b16 %v6883
        %v8407 = vunpack.c.h.b16 %v6883
        %v8408 = vunpack.c.l.b16 %v6884
        %v8409 = vunpack.c.h.b16 %v6884
        %v8410 = vunpack.c.l.b16 %v6885
        %v8411 = vunpack.c.h.b16 %v6885
        %v8412 = vunpack.c.l.b16 %v6886
        %v8413 = vunpack.c.h.b16 %v6886
        %v8414 = vunpack.c.l.b16 %v6887
        %v8415 = vunpack.c.h.b16 %v6887
        %v8416 = vunpack.c.l.b16 %v6888
        %v8417 = vunpack.c.h.b16 %v6888
        %v8418 = vunpack.c.l.b16 %v6889
        %v8419 = vunpack.c.h.b16 %v6889
        %v8420 = vunpack.c.l.b16 %v6890
        %v8421 = vunpack.c.h.b16 %v6890
        %v8422 = vunpack.c.l.b16 %v6891
        %v8423 = vunpack.c.h.b16 %v6891
        %v8424 = vunpack.c.l.b16 %v6892
        %v8425 = vunpack.c.h.b16 %v6892
        %v8426 = vunpack.c.l.b16 %v6893
        %v8427 = vunpack.c.h.b16 %v6893
        %v8428 = vunpack.c.l.b16 %v6894
        %v8429 = vunpack.c.h.b16 %v6894
        %v8430 = vunpack.c.l.b16 %v6895
        %v8431 = vunpack.c.h.b16 %v6895
        %v8432 = vunpack.c.l.b16 %v6896
        %v8433 = vunpack.c.h.b16 %v6896
        %v8434 = vunpack.c.l.b16 %v6897
        %v8435 = vunpack.c.h.b16 %v6897
        %v8436 = vunpack.c.l.b16 %v6898
        %v8437 = vunpack.c.h.b16 %v6898
        %v8438 = vunpack.c.l.b16 %v6899
        %v8439 = vunpack.c.h.b16 %v6899
        %v8440 = vunpack.c.l.b16 %v6900
        %v8441 = vunpack.c.h.b16 %v6900
        %v8442 = vunpack.c.l.b16 %v6901
        %v8443 = vunpack.c.h.b16 %v6901
        %v8444 = vunpack.c.l.b16 %v6902
        %v8445 = vunpack.c.h.b16 %v6902
        %v8446 = vunpack.c.l.b16 %v6903
        %v8447 = vunpack.c.h.b16 %v6903
        %v8448 = vunpack.c.l.b16 %v6904
        %v8449 = vunpack.c.h.b16 %v6904
        %v8450 = vunpack.c.l.b16 %v6905
        %v8451 = vunpack.c.h.b16 %v6905
        %v8452 = vunpack.c.l.b16 %v6906
        %v8453 = vunpack.c.h.b16 %v6906
        %v8454 = vunpack.c.l.b16 %v6907
        %v8455 = vunpack.c.h.b16 %v6907
        %v8456 = vunpack.c.l.b16 %v6908
        %v8457 = vunpack.c.h.b16 %v6908
        %v8458 = vunpack.c.l.b16 %v6909
        %v8459 = vunpack.c.h.b16 %v6909
        %v8460 = vunpack.c.l.b16 %v6910
        %v8461 = vunpack.c.h.b16 %v6910
        %v8462 = vunpack.c.l.b16 %v6911
        %v8463 = vunpack.c.h.b16 %v6911
        %v8464 = vunpack.c.l.b16 %v6912
        %v8465 = vunpack.c.h.b16 %v6912
        %v8466 = vunpack.c.l.b16 %v6913
        %v8467 = vunpack.c.h.b16 %v6913
        %v8468 = vunpack.c.l.b16 %v6914
        %v8469 = vunpack.c.h.b16 %v6914
        %v8470 = vunpack.c.l.b16 %v6915
        %v8471 = vunpack.c.h.b16 %v6915
        %v8472 = vunpack.c.l.b16 %v6916
        %v8473 = vunpack.c.h.b16 %v6916
        %v8474 = vunpack.c.l.b16 %v6917
        %v8475 = vunpack.c.h.b16 %v6917
        %v8476 = vunpack.c.l.b16 %v6918
        %v8477 = vunpack.c.h.b16 %v6918
        %v8478 = vunpack.c.l.b16 %v6919
        %v8479 = vunpack.c.h.b16 %v6919
        %v8480 = vunpack.c.l.b16 %v6920
        %v8481 = vunpack.c.h.b16 %v6920
        %v8482 = vunpack.c.l.b16 %v6921
        %v8483 = vunpack.c.h.b16 %v6921
        %v8484 = vunpack.c.l.b16 %v6922
        %v8485 = vunpack.c.h.b16 %v6922
        %v8486 = vunpack.c.l.b16 %v6923
        %v8487 = vunpack.c.h.b16 %v6923
        %v8488 = vunpack.c.l.b16 %v6924
        %v8489 = vunpack.c.h.b16 %v6924
        %v8490 = vunpack.c.l.b16 %v6925
        %v8491 = vunpack.c.h.b16 %v6925
        %v8492 = vunpack.c.l.b16 %v6926
        %v8493 = vunpack.c.h.b16 %v6926
        %v8494 = vunpack.c.l.b16 %v6927
        %v8495 = vunpack.c.h.b16 %v6927
        %v8496 = vunpack.c.l.b16 %v6928
        %v8497 = vunpack.c.h.b16 %v6928
        %v8498 = vunpack.c.l.b16 %v6929
        %v8499 = vunpack.c.h.b16 %v6929
        %v8500 = vunpack.c.l.b16 %v6930
        %v8501 = vunpack.c.h.b16 %v6930
        %v8502 = vunpack.c.l.b16 %v6931
        %v8503 = vunpack.c.h.b16 %v6931
        %v8504 = vunpack.c.l.b16 %v6932
        %v8505 = vunpack.c.h.b16 %v6932
        %v8506 = vunpack.c.l.b16 %v6933
        %v8507 = vunpack.c.h.b16 %v6933
        %v8508 = vunpack.c.l.b16 %v6934
        %v8509 = vunpack.c.h.b16 %v6934
        %v8510 = vunpack.c.l.b16 %v6935
        %v8511 = vunpack.c.h.b16 %v6935
        %v8512 = vunpack.c.l.b16 %v6936
        %v8513 = vunpack.c.h.b16 %v6936
        %v8514 = vunpack.c.l.b16 %v6937
        %v8515 = vunpack.c.h.b16 %v6937
        %v8516 = vpack.c.b16 %v7500, %v7492
        %v8517 = vpack.c.b16 %v7501, %v7493
        %v8518 = vpack.c.b16 %v7502, %v7494
        %v8519 = vpack.c.b16 %v7503, %v7495
        %v8520 = vpack.c.b16 %v7504, %v7496
        %v8521 = vpack.c.b16 %v7505, %v7497
        %v8522 = vpack.c.b16 %v7506, %v7498
        %v8523 = vpack.c.b16 %v7507, %v7499
        %v8524 = vpack.c.b16 %v7516, %v7508
        %v8525 = vpack.c.b16 %v7517, %v7509
        %v8526 = vpack.c.b16 %v7518, %v7510
        %v8527 = vpack.c.b16 %v7519, %v7511
        %v8528 = vpack.c.b16 %v7520, %v7512
        %v8529 = vpack.c.b16 %v7521, %v7513
        %v8530 = vpack.c.b16 %v7522, %v7514
        %v8531 = vpack.c.b16 %v7523, %v7515
        %v8532 = vpack.c.b16 %v7532, %v7524
        %v8533 = vpack.c.b16 %v7533, %v7525
        %v8534 = vpack.c.b16 %v7534, %v7526
        %v8535 = vpack.c.b16 %v7535, %v7527
        %v8536 = vpack.c.b16 %v7536, %v7528
        %v8537 = vpack.c.b16 %v7537, %v7529
        %v8538 = vpack.c.b16 %v7538, %v7530
        %v8539 = vpack.c.b16 %v7539, %v7531
        %v8540 = vpack.c.b16 %v7548, %v7540
        %v8541 = vpack.c.b16 %v7549, %v7541
        %v8542 = vpack.c.b16 %v7550, %v7542
        %v8543 = vpack.c.b16 %v7551, %v7543
        %v8544 = vpack.c.b16 %v7552, %v7544
        %v8545 = vpack.c.b16 %v7553, %v7545
        %v8546 = vpack.c.b16 %v7554, %v7546
        %v8547 = vpack.c.b16 %v7555, %v7547
        %v8548 = vpack.c.b16 %v7564, %v7556
        %v8549 = vpack.c.b16 %v7565, %v7557
        %v8550 = vpack.c.b16 %v7566, %v7558
        %v8551 = vpack.c.b16 %v7567, %v7559
        %v8552 = vpack.c.b16 %v7568, %v7560
        %v8553 = vpack.c.b16 %v7569, %v7561
        %v8554 = vpack.c.b16 %v7570, %v7562
        %v8555 = vpack.c.b16 %v7571, %v7563
        %v8556 = vpack.c.b16 %v7580, %v7572
        %v8557 = vpack.c.b16 %v7581, %v7573
        %v8558 = vpack.c.b16 %v7582, %v7574
        %v8559 = vpack.c.b16 %v7583, %v7575
        %v8560 = vpack.c.b16 %v7584, %v7576
        %v8561 = vpack.c.b16 %v7585, %v7577
        %v8562 = vpack.c.b16 %v7586, %v7578
        %v8563 = vpack.c.b16 %v7587, %v7579
        %v8564 = vpack.c.b16 %v7596, %v7588
        %v8565 = vpack.c.b16 %v7597, %v7589
        %v8566 = vpack.c.b16 %v7598, %v7590
        %v8567 = vpack.c.b16 %v7599, %v7591
        %v8568 = vpack.c.b16 %v7600, %v7592
        %v8569 = vpack.c.b16 %v7601, %v7593
        %v8570 = vpack.c.b16 %v7602, %v7594
        %v8571 = vpack.c.b16 %v7603, %v7595
        %v8572 = vpack.c.b16 %v7612, %v7604
        %v8573 = vpack.c.b16 %v7613, %v7605
        %v8574 = vpack.c.b16 %v7614, %v7606
        %v8575 = vpack.c.b16 %v7615, %v7607
        %v8576 = vpack.c.b16 %v7616, %v7608
        %v8577 = vpack.c.b16 %v7617, %v7609
        %v8578 = vpack.c.b16 %v7618, %v7610
        %v8579 = vpack.c.b16 %v7619, %v7611
        %v8580 = vpack.c.b16 %v7628, %v7620
        %v8581 = vpack.c.b16 %v7629, %v7621
        %v8582 = vpack.c.b16 %v7630, %v7622
        %v8583 = vpack.c.b16 %v7631, %v7623
        %v8584 = vpack.c.b16 %v7632, %v7624
        %v8585 = vpack.c.b16 %v7633, %v7625
        %v8586 = vpack.c.b16 %v7634, %v7626
        %v8587 = vpack.c.b16 %v7635, %v7627
        %v8588 = vpack.c.b16 %v7644, %v7636
        %v8589 = vpack.c.b16 %v7645, %v7637
        %v8590 = vpack.c.b16 %v7646, %v7638
        %v8591 = vpack.c.b16 %v7647, %v7639
        %v8592 = vpack.c.b16 %v7648, %v7640
        %v8593 = vpack.c.b16 %v7649, %v7641
        %v8594 = vpack.c.b16 %v7650, %v7642
        %v8595 = vpack.c.b16 %v7651, %v7643
        %v8596 = vpack.c.b16 %v7660, %v7652
        %v8597 = vpack.c.b16 %v7661, %v7653
        %v8598 = vpack.c.b16 %v7662, %v7654
        %v8599 = vpack.c.b16 %v7663, %v7655
        %v8600 = vpack.c.b16 %v7664, %v7656
        %v8601 = vpack.c.b16 %v7665, %v7657
        %v8602 = vpack.c.b16 %v7666, %v7658
        %v8603 = vpack.c.b16 %v7667, %v7659
        %v8604 = vpack.c.b16 %v7676, %v7668
        %v8605 = vpack.c.b16 %v7677, %v7669
        %v8606 = vpack.c.b16 %v7678, %v7670
        %v8607 = vpack.c.b16 %v7679, %v7671
        %v8608 = vpack.c.b16 %v7680, %v7672
        %v8609 = vpack.c.b16 %v7681, %v7673
        %v8610 = vpack.c.b16 %v7682, %v7674
        %v8611 = vpack.c.b16 %v7683, %v7675
        %v8612 = vpack.c.b16 %v7692, %v7684
        %v8613 = vpack.c.b16 %v7693, %v7685
        %v8614 = vpack.c.b16 %v7694, %v7686
        %v8615 = vpack.c.b16 %v7695, %v7687
        %v8616 = vpack.c.b16 %v7696, %v7688
        %v8617 = vpack.c.b16 %v7697, %v7689
        %v8618 = vpack.c.b16 %v7698, %v7690
        %v8619 = vpack.c.b16 %v7699, %v7691
        %v8620 = vpack.c.b16 %v7708, %v7700
        %v8621 = vpack.c.b16 %v7709, %v7701
        %v8622 = vpack.c.b16 %v7710, %v7702
        %v8623 = vpack.c.b16 %v7711, %v7703
        %v8624 = vpack.c.b16 %v7712, %v7704
        %v8625 = vpack.c.b16 %v7713, %v7705
        %v8626 = vpack.c.b16 %v7714, %v7706
        %v8627 = vpack.c.b16 %v7715, %v7707
        %v8628 = vpack.c.b16 %v7724, %v7716
        %v8629 = vpack.c.b16 %v7725, %v7717
        %v8630 = vpack.c.b16 %v7726, %v7718
        %v8631 = vpack.c.b16 %v7727, %v7719
        %v8632 = vpack.c.b16 %v7728, %v7720
        %v8633 = vpack.c.b16 %v7729, %v7721
        %v8634 = vpack.c.b16 %v7730, %v7722
        %v8635 = vpack.c.b16 %v7731, %v7723
        %v8636 = vpack.c.b16 %v7740, %v7732
        %v8637 = vpack.c.b16 %v7741, %v7733
        %v8638 = vpack.c.b16 %v7742, %v7734
        %v8639 = vpack.c.b16 %v7743, %v7735
        %v8640 = vpack.c.b16 %v7744, %v7736
        %v8641 = vpack.c.b16 %v7745, %v7737
        %v8642 = vpack.c.b16 %v7746, %v7738
        %v8643 = vpack.c.b16 %v7747, %v7739
        %v8644 = vpack.c.b16 %v7756, %v7748
        %v8645 = vpack.c.b16 %v7757, %v7749
        %v8646 = vpack.c.b16 %v7758, %v7750
        %v8647 = vpack.c.b16 %v7759, %v7751
        %v8648 = vpack.c.b16 %v7760, %v7752
        %v8649 = vpack.c.b16 %v7761, %v7753
        %v8650 = vpack.c.b16 %v7762, %v7754
        %v8651 = vpack.c.b16 %v7763, %v7755
        %v8652 = vpack.c.b16 %v7772, %v7764
        %v8653 = vpack.c.b16 %v7773, %v7765
        %v8654 = vpack.c.b16 %v7774, %v7766
        %v8655 = vpack.c.b16 %v7775, %v7767
        %v8656 = vpack.c.b16 %v7776, %v7768
        %v8657 = vpack.c.b16 %v7777, %v7769
        %v8658 = vpack.c.b16 %v7778, %v7770
        %v8659 = vpack.c.b16 %v7779, %v7771
        %v8660 = vpack.c.b16 %v7788, %v7780
        %v8661 = vpack.c.b16 %v7789, %v7781
        %v8662 = vpack.c.b16 %v7790, %v7782
        %v8663 = vpack.c.b16 %v7791, %v7783
        %v8664 = vpack.c.b16 %v7792, %v7784
        %v8665 = vpack.c.b16 %v7793, %v7785
        %v8666 = vpack.c.b16 %v7794, %v7786
        %v8667 = vpack.c.b16 %v7795, %v7787
        %v8668 = vpack.c.b16 %v7804, %v7796
        %v8669 = vpack.c.b16 %v7805, %v7797
        %v8670 = vpack.c.b16 %v7806, %v7798
        %v8671 = vpack.c.b16 %v7807, %v7799
        %v8672 = vpack.c.b16 %v7808, %v7800
        %v8673 = vpack.c.b16 %v7809, %v7801
        %v8674 = vpack.c.b16 %v7810, %v7802
        %v8675 = vpack.c.b16 %v7811, %v7803
        %v8676 = vpack.c.b16 %v7820, %v7812
        %v8677 = vpack.c.b16 %v7821, %v7813
        %v8678 = vpack.c.b16 %v7822, %v7814
        %v8679 = vpack.c.b16 %v7823, %v7815
        %v8680 = vpack.c.b16 %v7824, %v7816
        %v8681 = vpack.c.b16 %v7825, %v7817
        %v8682 = vpack.c.b16 %v7826, %v7818
        %v8683 = vpack.c.b16 %v7827, %v7819
        %v8684 = vpack.c.b16 %v7836, %v7828
        %v8685 = vpack.c.b16 %v7837, %v7829
        %v8686 = vpack.c.b16 %v7838, %v7830
        %v8687 = vpack.c.b16 %v7839, %v7831
        %v8688 = vpack.c.b16 %v7840, %v7832
        %v8689 = vpack.c.b16 %v7841, %v7833
        %v8690 = vpack.c.b16 %v7842, %v7834
        %v8691 = vpack.c.b16 %v7843, %v7835
        %v8692 = vpack.c.b16 %v7852, %v7844
        %v8693 = vpack.c.b16 %v7853, %v7845
        %v8694 = vpack.c.b16 %v7854, %v7846
        %v8695 = vpack.c.b16 %v7855, %v7847
        %v8696 = vpack.c.b16 %v7856, %v7848
        %v8697 = vpack.c.b16 %v7857, %v7849
        %v8698 = vpack.c.b16 %v7858, %v7850
        %v8699 = vpack.c.b16 %v7859, %v7851
        %v8700 = vpack.c.b16 %v7868, %v7860
        %v8701 = vpack.c.b16 %v7869, %v7861
        %v8702 = vpack.c.b16 %v7870, %v7862
        %v8703 = vpack.c.b16 %v7871, %v7863
        %v8704 = vpack.c.b16 %v7872, %v7864
        %v8705 = vpack.c.b16 %v7873, %v7865
        %v8706 = vpack.c.b16 %v7874, %v7866
        %v8707 = vpack.c.b16 %v7875, %v7867
        %v8708 = vpack.c.b16 %v7884, %v7876
        %v8709 = vpack.c.b16 %v7885, %v7877
        %v8710 = vpack.c.b16 %v7886, %v7878
        %v8711 = vpack.c.b16 %v7887, %v7879
        %v8712 = vpack.c.b16 %v7888, %v7880
        %v8713 = vpack.c.b16 %v7889, %v7881
        %v8714 = vpack.c.b16 %v7890, %v7882
        %v8715 = vpack.c.b16 %v7891, %v7883
        %v8716 = vpack.c.b16 %v7900, %v7892
        %v8717 = vpack.c.b16 %v7901, %v7893
        %v8718 = vpack.c.b16 %v7902, %v7894
        %v8719 = vpack.c.b16 %v7903, %v7895
        %v8720 = vpack.c.b16 %v7904, %v7896
        %v8721 = vpack.c.b16 %v7905, %v7897
        %v8722 = vpack.c.b16 %v7906, %v7898
        %v8723 = vpack.c.b16 %v7907, %v7899
        %v8724 = vpack.c.b16 %v7916, %v7908
        %v8725 = vpack.c.b16 %v7917, %v7909
        %v8726 = vpack.c.b16 %v7918, %v7910
        %v8727 = vpack.c.b16 %v7919, %v7911
        %v8728 = vpack.c.b16 %v7920, %v7912
        %v8729 = vpack.c.b16 %v7921, %v7913
        %v8730 = vpack.c.b16 %v7922, %v7914
        %v8731 = vpack.c.b16 %v7923, %v7915
        %v8732 = vpack.c.b16 %v7932, %v7924
        %v8733 = vpack.c.b16 %v7933, %v7925
        %v8734 = vpack.c.b16 %v7934, %v7926
        %v8735 = vpack.c.b16 %v7935, %v7927
        %v8736 = vpack.c.b16 %v7936, %v7928
        %v8737 = vpack.c.b16 %v7937, %v7929
        %v8738 = vpack.c.b16 %v7938, %v7930
        %v8739 = vpack.c.b16 %v7939, %v7931
        %v8740 = vpack.c.b16 %v7948, %v7940
        %v8741 = vpack.c.b16 %v7949, %v7941
        %v8742 = vpack.c.b16 %v7950, %v7942
        %v8743 = vpack.c.b16 %v7951, %v7943
        %v8744 = vpack.c.b16 %v7952, %v7944
        %v8745 = vpack.c.b16 %v7953, %v7945
        %v8746 = vpack.c.b16 %v7954, %v7946
        %v8747 = vpack.c.b16 %v7955, %v7947
        %v8748 = vpack.c.b16 %v7964, %v7956
        %v8749 = vpack.c.b16 %v7965, %v7957
        %v8750 = vpack.c.b16 %v7966, %v7958
        %v8751 = vpack.c.b16 %v7967, %v7959
        %v8752 = vpack.c.b16 %v7968, %v7960
        %v8753 = vpack.c.b16 %v7969, %v7961
        %v8754 = vpack.c.b16 %v7970, %v7962
        %v8755 = vpack.c.b16 %v7971, %v7963
        %v8756 = vpack.c.b16 %v7980, %v7972
        %v8757 = vpack.c.b16 %v7981, %v7973
        %v8758 = vpack.c.b16 %v7982, %v7974
        %v8759 = vpack.c.b16 %v7983, %v7975
        %v8760 = vpack.c.b16 %v7984, %v7976
        %v8761 = vpack.c.b16 %v7985, %v7977
        %v8762 = vpack.c.b16 %v7986, %v7978
        %v8763 = vpack.c.b16 %v7987, %v7979
        %v8764 = vpack.c.b16 %v7996, %v7988
        %v8765 = vpack.c.b16 %v7997, %v7989
        %v8766 = vpack.c.b16 %v7998, %v7990
        %v8767 = vpack.c.b16 %v7999, %v7991
        %v8768 = vpack.c.b16 %v8000, %v7992
        %v8769 = vpack.c.b16 %v8001, %v7993
        %v8770 = vpack.c.b16 %v8002, %v7994
        %v8771 = vpack.c.b16 %v8003, %v7995
        %v8772 = vpack.c.b16 %v8012, %v8004
        %v8773 = vpack.c.b16 %v8013, %v8005
        %v8774 = vpack.c.b16 %v8014, %v8006
        %v8775 = vpack.c.b16 %v8015, %v8007
        %v8776 = vpack.c.b16 %v8016, %v8008
        %v8777 = vpack.c.b16 %v8017, %v8009
        %v8778 = vpack.c.b16 %v8018, %v8010
        %v8779 = vpack.c.b16 %v8019, %v8011
        %v8780 = vpack.c.b16 %v8028, %v8020
        %v8781 = vpack.c.b16 %v8029, %v8021
        %v8782 = vpack.c.b16 %v8030, %v8022
        %v8783 = vpack.c.b16 %v8031, %v8023
        %v8784 = vpack.c.b16 %v8032, %v8024
        %v8785 = vpack.c.b16 %v8033, %v8025
        %v8786 = vpack.c.b16 %v8034, %v8026
        %v8787 = vpack.c.b16 %v8035, %v8027
        %v8788 = vpack.c.b16 %v8044, %v8036
        %v8789 = vpack.c.b16 %v8045, %v8037
        %v8790 = vpack.c.b16 %v8046, %v8038
        %v8791 = vpack.c.b16 %v8047, %v8039
        %v8792 = vpack.c.b16 %v8048, %v8040
        %v8793 = vpack.c.b16 %v8049, %v8041
        %v8794 = vpack.c.b16 %v8050, %v8042
        %v8795 = vpack.c.b16 %v8051, %v8043
        %v8796 = vpack.c.b16 %v8060, %v8052
        %v8797 = vpack.c.b16 %v8061, %v8053
        %v8798 = vpack.c.b16 %v8062, %v8054
        %v8799 = vpack.c.b16 %v8063, %v8055
        %v8800 = vpack.c.b16 %v8064, %v8056
        %v8801 = vpack.c.b16 %v8065, %v8057
        %v8802 = vpack.c.b16 %v8066, %v8058
        %v8803 = vpack.c.b16 %v8067, %v8059
        %v8804 = vpack.c.b16 %v8076, %v8068
        %v8805 = vpack.c.b16 %v8077, %v8069
        %v8806 = vpack.c.b16 %v8078, %v8070
        %v8807 = vpack.c.b16 %v8079, %v8071
        %v8808 = vpack.c.b16 %v8080, %v8072
        %v8809 = vpack.c.b16 %v8081, %v8073
        %v8810 = vpack.c.b16 %v8082, %v8074
        %v8811 = vpack.c.b16 %v8083, %v8075
        %v8812 = vpack.c.b16 %v8092, %v8084
        %v8813 = vpack.c.b16 %v8093, %v8085
        %v8814 = vpack.c.b16 %v8094, %v8086
        %v8815 = vpack.c.b16 %v8095, %v8087
        %v8816 = vpack.c.b16 %v8096, %v8088
        %v8817 = vpack.c.b16 %v8097, %v8089
        %v8818 = vpack.c.b16 %v8098, %v8090
        %v8819 = vpack.c.b16 %v8099, %v8091
        %v8820 = vpack.c.b16 %v8108, %v8100
        %v8821 = vpack.c.b16 %v8109, %v8101
        %v8822 = vpack.c.b16 %v8110, %v8102
        %v8823 = vpack.c.b16 %v8111, %v8103
        %v8824 = vpack.c.b16 %v8112, %v8104
        %v8825 = vpack.c.b16 %v8113, %v8105
        %v8826 = vpack.c.b16 %v8114, %v8106
        %v8827 = vpack.c.b16 %v8115, %v8107
        %v8828 = vpack.c.b16 %v8124, %v8116
        %v8829 = vpack.c.b16 %v8125, %v8117
        %v8830 = vpack.c.b16 %v8126, %v8118
        %v8831 = vpack.c.b16 %v8127, %v8119
        %v8832 = vpack.c.b16 %v8128, %v8120
        %v8833 = vpack.c.b16 %v8129, %v8121
        %v8834 = vpack.c.b16 %v8130, %v8122
        %v8835 = vpack.c.b16 %v8131, %v8123
        %v8836 = vpack.c.b16 %v8140, %v8132
        %v8837 = vpack.c.b16 %v8141, %v8133
        %v8838 = vpack.c.b16 %v8142, %v8134
        %v8839 = vpack.c.b16 %v8143, %v8135
        %v8840 = vpack.c.b16 %v8144, %v8136
        %v8841 = vpack.c.b16 %v8145, %v8137
        %v8842 = vpack.c.b16 %v8146, %v8138
        %v8843 = vpack.c.b16 %v8147, %v8139
        %v8844 = vpack.c.b16 %v8156, %v8148
        %v8845 = vpack.c.b16 %v8157, %v8149
        %v8846 = vpack.c.b16 %v8158, %v8150
        %v8847 = vpack.c.b16 %v8159, %v8151
        %v8848 = vpack.c.b16 %v8160, %v8152
        %v8849 = vpack.c.b16 %v8161, %v8153
        %v8850 = vpack.c.b16 %v8162, %v8154
        %v8851 = vpack.c.b16 %v8163, %v8155
        %v8852 = vpack.c.b16 %v8172, %v8164
        %v8853 = vpack.c.b16 %v8173, %v8165
        %v8854 = vpack.c.b16 %v8174, %v8166
        %v8855 = vpack.c.b16 %v8175, %v8167
        %v8856 = vpack.c.b16 %v8176, %v8168
        %v8857 = vpack.c.b16 %v8177, %v8169
        %v8858 = vpack.c.b16 %v8178, %v8170
        %v8859 = vpack.c.b16 %v8179, %v8171
        %v8860 = vpack.c.b16 %v8188, %v8180
        %v8861 = vpack.c.b16 %v8189, %v8181
        %v8862 = vpack.c.b16 %v8190, %v8182
        %v8863 = vpack.c.b16 %v8191, %v8183
        %v8864 = vpack.c.b16 %v8192, %v8184
        %v8865 = vpack.c.b16 %v8193, %v8185
        %v8866 = vpack.c.b16 %v8194, %v8186
        %v8867 = vpack.c.b16 %v8195, %v8187
        %v8868 = vpack.c.b16 %v8204, %v8196
        %v8869 = vpack.c.b16 %v8205, %v8197
        %v8870 = vpack.c.b16 %v8206, %v8198
        %v8871 = vpack.c.b16 %v8207, %v8199
        %v8872 = vpack.c.b16 %v8208, %v8200
        %v8873 = vpack.c.b16 %v8209, %v8201
        %v8874 = vpack.c.b16 %v8210, %v8202
        %v8875 = vpack.c.b16 %v8211, %v8203
        %v8876 = vpack.c.b16 %v8220, %v8212
        %v8877 = vpack.c.b16 %v8221, %v8213
        %v8878 = vpack.c.b16 %v8222, %v8214
        %v8879 = vpack.c.b16 %v8223, %v8215
        %v8880 = vpack.c.b16 %v8224, %v8216
        %v8881 = vpack.c.b16 %v8225, %v8217
        %v8882 = vpack.c.b16 %v8226, %v8218
        %v8883 = vpack.c.b16 %v8227, %v8219
        %v8884 = vpack.c.b16 %v8236, %v8228
        %v8885 = vpack.c.b16 %v8237, %v8229
        %v8886 = vpack.c.b16 %v8238, %v8230
        %v8887 = vpack.c.b16 %v8239, %v8231
        %v8888 = vpack.c.b16 %v8240, %v8232
        %v8889 = vpack.c.b16 %v8241, %v8233
        %v8890 = vpack.c.b16 %v8242, %v8234
        %v8891 = vpack.c.b16 %v8243, %v8235
        %v8892 = vpack.c.b16 %v8252, %v8244
        %v8893 = vpack.c.b16 %v8253, %v8245
        %v8894 = vpack.c.b16 %v8254, %v8246
        %v8895 = vpack.c.b16 %v8255, %v8247
        %v8896 = vpack.c.b16 %v8256, %v8248
        %v8897 = vpack.c.b16 %v8257, %v8249
        %v8898 = vpack.c.b16 %v8258, %v8250
        %v8899 = vpack.c.b16 %v8259, %v8251
        %v8900 = vpack.c.b16 %v8268, %v8260
        %v8901 = vpack.c.b16 %v8269, %v8261
        %v8902 = vpack.c.b16 %v8270, %v8262
        %v8903 = vpack.c.b16 %v8271, %v8263
        %v8904 = vpack.c.b16 %v8272, %v8264
        %v8905 = vpack.c.b16 %v8273, %v8265
        %v8906 = vpack.c.b16 %v8274, %v8266
        %v8907 = vpack.c.b16 %v8275, %v8267
        %v8908 = vpack.c.b16 %v8284, %v8276
        %v8909 = vpack.c.b16 %v8285, %v8277
        %v8910 = vpack.c.b16 %v8286, %v8278
        %v8911 = vpack.c.b16 %v8287, %v8279
        %v8912 = vpack.c.b16 %v8288, %v8280
        %v8913 = vpack.c.b16 %v8289, %v8281
        %v8914 = vpack.c.b16 %v8290, %v8282
        %v8915 = vpack.c.b16 %v8291, %v8283
        %v8916 = vpack.c.b16 %v8300, %v8292
        %v8917 = vpack.c.b16 %v8301, %v8293
        %v8918 = vpack.c.b16 %v8302, %v8294
        %v8919 = vpack.c.b16 %v8303, %v8295
        %v8920 = vpack.c.b16 %v8304, %v8296
        %v8921 = vpack.c.b16 %v8305, %v8297
        %v8922 = vpack.c.b16 %v8306, %v8298
        %v8923 = vpack.c.b16 %v8307, %v8299
        %v8924 = vpack.c.b16 %v8316, %v8308
        %v8925 = vpack.c.b16 %v8317, %v8309
        %v8926 = vpack.c.b16 %v8318, %v8310
        %v8927 = vpack.c.b16 %v8319, %v8311
        %v8928 = vpack.c.b16 %v8320, %v8312
        %v8929 = vpack.c.b16 %v8321, %v8313
        %v8930 = vpack.c.b16 %v8322, %v8314
        %v8931 = vpack.c.b16 %v8323, %v8315
        %v8932 = vpack.c.b16 %v8332, %v8324
        %v8933 = vpack.c.b16 %v8333, %v8325
        %v8934 = vpack.c.b16 %v8334, %v8326
        %v8935 = vpack.c.b16 %v8335, %v8327
        %v8936 = vpack.c.b16 %v8336, %v8328
        %v8937 = vpack.c.b16 %v8337, %v8329
        %v8938 = vpack.c.b16 %v8338, %v8330
        %v8939 = vpack.c.b16 %v8339, %v8331
        %v8940 = vpack.c.b16 %v8348, %v8340
        %v8941 = vpack.c.b16 %v8349, %v8341
        %v8942 = vpack.c.b16 %v8350, %v8342
        %v8943 = vpack.c.b16 %v8351, %v8343
        %v8944 = vpack.c.b16 %v8352, %v8344
        %v8945 = vpack.c.b16 %v8353, %v8345
        %v8946 = vpack.c.b16 %v8354, %v8346
        %v8947 = vpack.c.b16 %v8355, %v8347
        %v8948 = vpack.c.b16 %v8364, %v8356
        %v8949 = vpack.c.b16 %v8365, %v8357
        %v8950 = vpack.c.b16 %v8366, %v8358
        %v8951 = vpack.c.b16 %v8367, %v8359
        %v8952 = vpack.c.b16 %v8368, %v8360
        %v8953 = vpack.c.b16 %v8369, %v8361
        %v8954 = vpack.c.b16 %v8370, %v8362
        %v8955 = vpack.c.b16 %v8371, %v8363
        %v8956 = vpack.c.b16 %v8380, %v8372
        %v8957 = vpack.c.b16 %v8381, %v8373
        %v8958 = vpack.c.b16 %v8382, %v8374
        %v8959 = vpack.c.b16 %v8383, %v8375
        %v8960 = vpack.c.b16 %v8384, %v8376
        %v8961 = vpack.c.b16 %v8385, %v8377
        %v8962 = vpack.c.b16 %v8386, %v8378
        %v8963 = vpack.c.b16 %v8387, %v8379
        %v8964 = vpack.c.b16 %v8396, %v8388
        %v8965 = vpack.c.b16 %v8397, %v8389
        %v8966 = vpack.c.b16 %v8398, %v8390
        %v8967 = vpack.c.b16 %v8399, %v8391
        %v8968 = vpack.c.b16 %v8400, %v8392
        %v8969 = vpack.c.b16 %v8401, %v8393
        %v8970 = vpack.c.b16 %v8402, %v8394
        %v8971 = vpack.c.b16 %v8403, %v8395
        %v8972 = vpack.c.b16 %v8412, %v8404
        %v8973 = vpack.c.b16 %v8413, %v8405
        %v8974 = vpack.c.b16 %v8414, %v8406
        %v8975 = vpack.c.b16 %v8415, %v8407
        %v8976 = vpack.c.b16 %v8416, %v8408
        %v8977 = vpack.c.b16 %v8417, %v8409
        %v8978 = vpack.c.b16 %v8418, %v8410
        %v8979 = vpack.c.b16 %v8419, %v8411
        %v8980 = vpack.c.b16 %v8428, %v8420
        %v8981 = vpack.c.b16 %v8429, %v8421
        %v8982 = vpack.c.b16 %v8430, %v8422
        %v8983 = vpack.c.b16 %v8431, %v8423
        %v8984 = vpack.c.b16 %v8432, %v8424
        %v8985 = vpack.c.b16 %v8433, %v8425
        %v8986 = vpack.c.b16 %v8434, %v8426
        %v8987 = vpack.c.b16 %v8435, %v8427
        %v8988 = vpack.c.b16 %v8444, %v8436
        %v8989 = vpack.c.b16 %v8445, %v8437
        %v8990 = vpack.c.b16 %v8446, %v8438
        %v8991 = vpack.c.b16 %v8447, %v8439
        %v8992 = vpack.c.b16 %v8448, %v8440
        %v8993 = vpack.c.b16 %v8449, %v8441
        %v8994 = vpack.c.b16 %v8450, %v8442
        %v8995 = vpack.c.b16 %v8451, %v8443
        %v8996 = vpack.c.b16 %v8460, %v8452
        %v8997 = vpack.c.b16 %v8461, %v8453
        %v8998 = vpack.c.b16 %v8462, %v8454
        %v8999 = vpack.c.b16 %v8463, %v8455
        %v9000 = vpack.c.b16 %v8464, %v8456
        %v9001 = vpack.c.b16 %v8465, %v8457
        %v9002 = vpack.c.b16 %v8466, %v8458
        %v9003 = vpack.c.b16 %v8467, %v8459
        %v9004 = vpack.c.b16 %v8476, %v8468
        %v9005 = vpack.c.b16 %v8477, %v8469
        %v9006 = vpack.c.b16 %v8478, %v8470
        %v9007 = vpack.c.b16 %v8479, %v8471
        %v9008 = vpack.c.b16 %v8480, %v8472
        %v9009 = vpack.c.b16 %v8481, %v8473
        %v9010 = vpack.c.b16 %v8482, %v8474
        %v9011 = vpack.c.b16 %v8483, %v8475
        %v9012 = vpack.c.b16 %v8492, %v8484
        %v9013 = vpack.c.b16 %v8493, %v8485
        %v9014 = vpack.c.b16 %v8494, %v8486
        %v9015 = vpack.c.b16 %v8495, %v8487
        %v9016 = vpack.c.b16 %v8496, %v8488
        %v9017 = vpack.c.b16 %v8497, %v8489
        %v9018 = vpack.c.b16 %v8498, %v8490
        %v9019 = vpack.c.b16 %v8499, %v8491
        %v9020 = vpack.c.b16 %v8508, %v8500
        %v9021 = vpack.c.b16 %v8509, %v8501
        %v9022 = vpack.c.b16 %v8510, %v8502
        %v9023 = vpack.c.b16 %v8511, %v8503
        %v9024 = vpack.c.b16 %v8512, %v8504
        %v9025 = vpack.c.b16 %v8513, %v8505
        %v9026 = vpack.c.b16 %v8514, %v8506
        %v9027 = vpack.c.b16 %v8515, %v8507
        %9540 = vmatprep.subr.bf16.mxu0 %v8573
        %9541 = vmatpush1.bf16.msra.mxu0 %v8572
        %9542 = vmatprep.subr.bf16.mxu0 %v8565
        %9543 = vmatpush1.bf16.msra.mxu0 %v8564
        %9544 = vmatprep.subr.bf16.mxu0 %v8557
        %9545 = vmatpush1.bf16.msra.mxu0 %v8556
        %9546 = vmatprep.subr.bf16.mxu0 %v8549
        %9547 = vmatpush1.bf16.msra.mxu0 %v8548
        %9548 = vmatprep.subr.bf16.mxu0 %v8541
        %9549 = vmatpush1.bf16.msra.mxu0 %v8540
        %9550 = vmatprep.subr.bf16.mxu0 %v8533
        %9551 = vmatpush1.bf16.msra.mxu0 %v8532
        %9552 = vmatprep.subr.bf16.mxu0 %v8525
        %9553 = vmatpush1.bf16.msra.mxu0 %v8524
        %9554 = vmatprep.subr.bf16.mxu0 %v8517
        %9555 = vmatpush1.bf16.msra.mxu0 %v8516
        %9556 = vmatprep.subr.bf16.mxu0 %v8637
        %9557 = vmatpush2.bf16.msra.mxu0 %v8636
        %9558 = vmatprep.subr.bf16.mxu0 %v8629
        %9559 = vmatpush2.bf16.msra.mxu0 %v8628
        %9560 = vmatprep.subr.bf16.mxu0 %v8621
        %9561 = vmatpush2.bf16.msra.mxu0 %v8620
        %9562 = vmatprep.subr.bf16.mxu0 %v8613
        %9563 = vmatpush2.bf16.msra.mxu0 %v8612
        %9564 = vmatprep.subr.bf16.mxu0 %v8605
        %9565 = vmatpush2.bf16.msra.mxu0 %v8604
        %9566 = vmatprep.subr.bf16.mxu0 %v8597
        %9567 = vmatpush2.bf16.msra.mxu0 %v8596
        %9568 = vmatprep.subr.bf16.mxu0 %v8589
        %9569 = vmatpush2.bf16.msra.mxu0 %v8588
        %9570 = vmatprep.subr.bf16.mxu0 %v8581
        %9571 = vmatpush2.bf16.msra.mxu0 %v8580
        %9572 = vmatprep.mubr.bf16.mxu0 %v6419
        %9573 = vmatmul.mubr.bf16.gmra.mxu0 %v6418
        %v9574 = vpop.f32.mrf.mxu0
        %v9575 = vadd.f32 %v6943, %v9574
        %v9576 = vpop.f32.mrf.mxu0
        %v9577 = vadd.f32 %v6947, %v9576
        %v9578 = vpop.f32.mrf.mxu0
        %v9579 = vpop.f32.mrf.mxu0
        %9580 = vdwg.mxu0
        %9581 = vmatprep.subr.bf16.mxu0 %v8701
        %9582 = vmatpush1.bf16.msra.mxu0 %v8700
        %9583 = vmatprep.subr.bf16.mxu0 %v8693
        %9584 = vmatpush1.bf16.msra.mxu0 %v8692
        %9585 = vmatprep.subr.bf16.mxu0 %v8685
        %9586 = vmatpush1.bf16.msra.mxu0 %v8684
        %9587 = vmatprep.subr.bf16.mxu0 %v8677
        %9588 = vmatpush1.bf16.msra.mxu0 %v8676
        %9589 = vmatprep.subr.bf16.mxu0 %v8669
        %9590 = vmatpush1.bf16.msra.mxu0 %v8668
        %9591 = vmatprep.subr.bf16.mxu0 %v8661
        %9592 = vmatpush1.bf16.msra.mxu0 %v8660
        %9593 = vmatprep.subr.bf16.mxu0 %v8653
        %9594 = vmatpush1.bf16.msra.mxu0 %v8652
        %9595 = vmatprep.subr.bf16.mxu0 %v8645
        %9596 = vmatpush1.bf16.msra.mxu0 %v8644
        %9597 = vmatprep.subr.bf16.mxu0 %v8765
        %9598 = vmatpush2.bf16.msra.mxu0 %v8764
        %9599 = vmatprep.subr.bf16.mxu0 %v8757
        %9600 = vmatpush2.bf16.msra.mxu0 %v8756
        %9601 = vmatprep.subr.bf16.mxu0 %v8749
        %9602 = vmatpush2.bf16.msra.mxu0 %v8748
        %9603 = vmatprep.subr.bf16.mxu0 %v8741
        %9604 = vmatpush2.bf16.msra.mxu0 %v8740
        %9605 = vmatprep.subr.bf16.mxu0 %v8733
        %9606 = vmatpush2.bf16.msra.mxu0 %v8732
        %9607 = vmatprep.subr.bf16.mxu0 %v8725
        %9608 = vmatpush2.bf16.msra.mxu0 %v8724
        %9609 = vmatprep.subr.bf16.mxu0 %v8717
        %9610 = vmatpush2.bf16.msra.mxu0 %v8716
        %9611 = vmatprep.subr.bf16.mxu0 %v8709
        %9612 = vmatpush2.bf16.msra.mxu0 %v8708
        %9613 = vmatprep.mubr.bf16.mxu0 %v6421
        %9614 = vmatmul.mubr.bf16.gmra.mxu0 %v6420
        %v9615 = vpop.f32.mrf.mxu0
        %v9616 = vadd.f32 %v9575, %v9615
        %v9617 = vpop.f32.mrf.mxu0
        %v9618 = vadd.f32 %v9577, %v9617
        %v9619 = vpop.f32.mrf.mxu0
        %v9620 = vpop.f32.mrf.mxu0
        %9621 = vdwg.mxu0
        %9622 = vmatprep.subr.bf16.mxu0 %v8829
        %9623 = vmatpush1.bf16.msra.mxu0 %v8828
        %9624 = vmatprep.subr.bf16.mxu0 %v8821
        %9625 = vmatpush1.bf16.msra.mxu0 %v8820
        %9626 = vmatprep.subr.bf16.mxu0 %v8813
        %9627 = vmatpush1.bf16.msra.mxu0 %v8812
        %9628 = vmatprep.subr.bf16.mxu0 %v8805
        %9629 = vmatpush1.bf16.msra.mxu0 %v8804
        %9630 = vmatprep.subr.bf16.mxu0 %v8797
        %9631 = vmatpush1.bf16.msra.mxu0 %v8796
        %9632 = vmatprep.subr.bf16.mxu0 %v8789
        %9633 = vmatpush1.bf16.msra.mxu0 %v8788
        %9634 = vmatprep.subr.bf16.mxu0 %v8781
        %9635 = vmatpush1.bf16.msra.mxu0 %v8780
        %9636 = vmatprep.subr.bf16.mxu0 %v8773
        %9637 = vmatpush1.bf16.msra.mxu0 %v8772
        %9638 = vmatprep.subr.bf16.mxu0 %v8893
        %9639 = vmatpush2.bf16.msra.mxu0 %v8892
        %9640 = vmatprep.subr.bf16.mxu0 %v8885
        %9641 = vmatpush2.bf16.msra.mxu0 %v8884
        %9642 = vmatprep.subr.bf16.mxu0 %v8877
        %9643 = vmatpush2.bf16.msra.mxu0 %v8876
        %9644 = vmatprep.subr.bf16.mxu0 %v8869
        %9645 = vmatpush2.bf16.msra.mxu0 %v8868
        %9646 = vmatprep.subr.bf16.mxu0 %v8861
        %9647 = vmatpush2.bf16.msra.mxu0 %v8860
        %9648 = vmatprep.subr.bf16.mxu0 %v8853
        %9649 = vmatpush2.bf16.msra.mxu0 %v8852
        %9650 = vmatprep.subr.bf16.mxu0 %v8845
        %9651 = vmatpush2.bf16.msra.mxu0 %v8844
        %9652 = vmatprep.subr.bf16.mxu0 %v8837
        %9653 = vmatpush2.bf16.msra.mxu0 %v8836
        %9654 = vmatprep.mubr.bf16.mxu0 %v6423
        %9655 = vmatmul.mubr.bf16.gmra.mxu0 %v6422
        %v9656 = vpop.f32.mrf.mxu0
        %v9657 = vadd.f32 %v9616, %v9656
        %v9658 = vpop.f32.mrf.mxu0
        %v9659 = vadd.f32 %v9618, %v9658
        %v9660 = vpop.f32.mrf.mxu0
        %v9661 = vpop.f32.mrf.mxu0
        %9662 = vdwg.mxu0
        %9663 = vmatprep.subr.bf16.mxu0 %v8957
        %9664 = vmatpush1.bf16.msra.mxu0 %v8956
        %9665 = vmatprep.subr.bf16.mxu0 %v8949
        %9666 = vmatpush1.bf16.msra.mxu0 %v8948
        %9667 = vmatprep.subr.bf16.mxu0 %v8941
        %9668 = vmatpush1.bf16.msra.mxu0 %v8940
        %9669 = vmatprep.subr.bf16.mxu0 %v8933
        %9670 = vmatpush1.bf16.msra.mxu0 %v8932
        %9671 = vmatprep.subr.bf16.mxu0 %v8925
        %9672 = vmatpush1.bf16.msra.mxu0 %v8924
        %9673 = vmatprep.subr.bf16.mxu0 %v8917
        %9674 = vmatpush1.bf16.msra.mxu0 %v8916
        %9675 = vmatprep.subr.bf16.mxu0 %v8909
        %9676 = vmatpush1.bf16.msra.mxu0 %v8908
        %9677 = vmatprep.subr.bf16.mxu0 %v8901
        %9678 = vmatpush1.bf16.msra.mxu0 %v8900
        %9679 = vmatprep.subr.bf16.mxu0 %v9021
        %9680 = vmatpush2.bf16.msra.mxu0 %v9020
        %9681 = vmatprep.subr.bf16.mxu0 %v9013
        %9682 = vmatpush2.bf16.msra.mxu0 %v9012
        %9683 = vmatprep.subr.bf16.mxu0 %v9005
        %9684 = vmatpush2.bf16.msra.mxu0 %v9004
        %9685 = vmatprep.subr.bf16.mxu0 %v8997
        %9686 = vmatpush2.bf16.msra.mxu0 %v8996
        %9687 = vmatprep.subr.bf16.mxu0 %v8989
        %9688 = vmatpush2.bf16.msra.mxu0 %v8988
        %9689 = vmatprep.subr.bf16.mxu0 %v8981
        %9690 = vmatpush2.bf16.msra.mxu0 %v8980
        %9691 = vmatprep.subr.bf16.mxu0 %v8973
        %9692 = vmatpush2.bf16.msra.mxu0 %v8972
        %9693 = vmatprep.subr.bf16.mxu0 %v8965
        %9694 = vmatpush2.bf16.msra.mxu0 %v8964
        %9695 = vmatprep.mubr.bf16.mxu0 %v6425
        %9696 = vmatmul.mubr.bf16.gmra.mxu0 %v6424
        %v9697 = vpop.f32.mrf.mxu0
        %v9698 = vadd.f32 %v9657, %v9697
        %v9699 = vpop.f32.mrf.mxu0
        %v9700 = vadd.f32 %v9659, %v9699
        %v9701 = vpop.f32.mrf.mxu0
        %v9702 = vpop.f32.mrf.mxu0
        %9703 = vdwg.mxu0
        %9704 = vmatprep.subr.bf16.mxu0 %v8575
        %9705 = vmatpush1.bf16.msra.mxu0 %v8574
        %9706 = vmatprep.subr.bf16.mxu0 %v8567
        %9707 = vmatpush1.bf16.msra.mxu0 %v8566
        %9708 = vmatprep.subr.bf16.mxu0 %v8559
        %9709 = vmatpush1.bf16.msra.mxu0 %v8558
        %9710 = vmatprep.subr.bf16.mxu0 %v8551
        %9711 = vmatpush1.bf16.msra.mxu0 %v8550
        %9712 = vmatprep.subr.bf16.mxu0 %v8543
        %9713 = vmatpush1.bf16.msra.mxu0 %v8542
        %9714 = vmatprep.subr.bf16.mxu0 %v8535
        %9715 = vmatpush1.bf16.msra.mxu0 %v8534
        %9716 = vmatprep.subr.bf16.mxu0 %v8527
        %9717 = vmatpush1.bf16.msra.mxu0 %v8526
        %9718 = vmatprep.subr.bf16.mxu0 %v8519
        %9719 = vmatpush1.bf16.msra.mxu0 %v8518
        %9720 = vmatprep.subr.bf16.mxu0 %v8639
        %9721 = vmatpush2.bf16.msra.mxu0 %v8638
        %9722 = vmatprep.subr.bf16.mxu0 %v8631
        %9723 = vmatpush2.bf16.msra.mxu0 %v8630
        %9724 = vmatprep.subr.bf16.mxu0 %v8623
        %9725 = vmatpush2.bf16.msra.mxu0 %v8622
        %9726 = vmatprep.subr.bf16.mxu0 %v8615
        %9727 = vmatpush2.bf16.msra.mxu0 %v8614
        %9728 = vmatprep.subr.bf16.mxu0 %v8607
        %9729 = vmatpush2.bf16.msra.mxu0 %v8606
        %9730 = vmatprep.subr.bf16.mxu0 %v8599
        %9731 = vmatpush2.bf16.msra.mxu0 %v8598
        %9732 = vmatprep.subr.bf16.mxu0 %v8591
        %9733 = vmatpush2.bf16.msra.mxu0 %v8590
        %9734 = vmatprep.subr.bf16.mxu0 %v8583
        %9735 = vmatpush2.bf16.msra.mxu0 %v8582
        %9736 = vmatprep.mubr.bf16.mxu0 %v6419
        %9737 = vmatmul.mubr.bf16.gmra.mxu0 %v6418
        %v9738 = vpop.f32.mrf.mxu0
        %v9739 = vadd.f32 %v6951, %v9738
        %v9740 = vpop.f32.mrf.mxu0
        %v9741 = vadd.f32 %v6955, %v9740
        %v9742 = vpop.f32.mrf.mxu0
        %v9743 = vpop.f32.mrf.mxu0
        %9744 = vdwg.mxu0
        %9745 = vmatprep.subr.bf16.mxu0 %v8703
        %9746 = vmatpush1.bf16.msra.mxu0 %v8702
        %9747 = vmatprep.subr.bf16.mxu0 %v8695
        %9748 = vmatpush1.bf16.msra.mxu0 %v8694
        %9749 = vmatprep.subr.bf16.mxu0 %v8687
        %9750 = vmatpush1.bf16.msra.mxu0 %v8686
        %9751 = vmatprep.subr.bf16.mxu0 %v8679
        %9752 = vmatpush1.bf16.msra.mxu0 %v8678
        %9753 = vmatprep.subr.bf16.mxu0 %v8671
        %9754 = vmatpush1.bf16.msra.mxu0 %v8670
        %9755 = vmatprep.subr.bf16.mxu0 %v8663
        %9756 = vmatpush1.bf16.msra.mxu0 %v8662
        %9757 = vmatprep.subr.bf16.mxu0 %v8655
        %9758 = vmatpush1.bf16.msra.mxu0 %v8654
        %9759 = vmatprep.subr.bf16.mxu0 %v8647
        %9760 = vmatpush1.bf16.msra.mxu0 %v8646
        %9761 = vmatprep.subr.bf16.mxu0 %v8767
        %9762 = vmatpush2.bf16.msra.mxu0 %v8766
        %9763 = vmatprep.subr.bf16.mxu0 %v8759
        %9764 = vmatpush2.bf16.msra.mxu0 %v8758
        %9765 = vmatprep.subr.bf16.mxu0 %v8751
        %9766 = vmatpush2.bf16.msra.mxu0 %v8750
        %9767 = vmatprep.subr.bf16.mxu0 %v8743
        %9768 = vmatpush2.bf16.msra.mxu0 %v8742
        %9769 = vmatprep.subr.bf16.mxu0 %v8735
        %9770 = vmatpush2.bf16.msra.mxu0 %v8734
        %9771 = vmatprep.subr.bf16.mxu0 %v8727
        %9772 = vmatpush2.bf16.msra.mxu0 %v8726
        %9773 = vmatprep.subr.bf16.mxu0 %v8719
        %9774 = vmatpush2.bf16.msra.mxu0 %v8718
        %9775 = vmatprep.subr.bf16.mxu0 %v8711
        %9776 = vmatpush2.bf16.msra.mxu0 %v8710
        %9777 = vmatprep.mubr.bf16.mxu0 %v6421
        %9778 = vmatmul.mubr.bf16.gmra.mxu0 %v6420
        %v9779 = vpop.f32.mrf.mxu0
        %v9780 = vadd.f32 %v9739, %v9779
        %v9781 = vpop.f32.mrf.mxu0
        %v9782 = vadd.f32 %v9741, %v9781
        %v9783 = vpop.f32.mrf.mxu0
        %v9784 = vpop.f32.mrf.mxu0
        %9785 = vdwg.mxu0
        %9786 = vmatprep.subr.bf16.mxu0 %v8831
        %9787 = vmatpush1.bf16.msra.mxu0 %v8830
        %9788 = vmatprep.subr.bf16.mxu0 %v8823
        %9789 = vmatpush1.bf16.msra.mxu0 %v8822
        %9790 = vmatprep.subr.bf16.mxu0 %v8815
        %9791 = vmatpush1.bf16.msra.mxu0 %v8814
        %9792 = vmatprep.subr.bf16.mxu0 %v8807
        %9793 = vmatpush1.bf16.msra.mxu0 %v8806
        %9794 = vmatprep.subr.bf16.mxu0 %v8799
        %9795 = vmatpush1.bf16.msra.mxu0 %v8798
        %9796 = vmatprep.subr.bf16.mxu0 %v8791
        %9797 = vmatpush1.bf16.msra.mxu0 %v8790
        %9798 = vmatprep.subr.bf16.mxu0 %v8783
        %9799 = vmatpush1.bf16.msra.mxu0 %v8782
        %9800 = vmatprep.subr.bf16.mxu0 %v8775
        %9801 = vmatpush1.bf16.msra.mxu0 %v8774
        %9802 = vmatprep.subr.bf16.mxu0 %v8895
        %9803 = vmatpush2.bf16.msra.mxu0 %v8894
        %9804 = vmatprep.subr.bf16.mxu0 %v8887
        %9805 = vmatpush2.bf16.msra.mxu0 %v8886
        %9806 = vmatprep.subr.bf16.mxu0 %v8879
        %9807 = vmatpush2.bf16.msra.mxu0 %v8878
        %9808 = vmatprep.subr.bf16.mxu0 %v8871
        %9809 = vmatpush2.bf16.msra.mxu0 %v8870
        %9810 = vmatprep.subr.bf16.mxu0 %v8863
        %9811 = vmatpush2.bf16.msra.mxu0 %v8862
        %9812 = vmatprep.subr.bf16.mxu0 %v8855
        %9813 = vmatpush2.bf16.msra.mxu0 %v8854
        %9814 = vmatprep.subr.bf16.mxu0 %v8847
        %9815 = vmatpush2.bf16.msra.mxu0 %v8846
        %9816 = vmatprep.subr.bf16.mxu0 %v8839
        %9817 = vmatpush2.bf16.msra.mxu0 %v8838
        %9818 = vmatprep.mubr.bf16.mxu0 %v6423
        %9819 = vmatmul.mubr.bf16.gmra.mxu0 %v6422
        %v9820 = vpop.f32.mrf.mxu0
        %v9821 = vadd.f32 %v9780, %v9820
        %v9822 = vpop.f32.mrf.mxu0
        %v9823 = vadd.f32 %v9782, %v9822
        %v9824 = vpop.f32.mrf.mxu0
        %v9825 = vpop.f32.mrf.mxu0
        %9826 = vdwg.mxu0
        %9827 = vmatprep.subr.bf16.mxu0 %v8959
        %9828 = vmatpush1.bf16.msra.mxu0 %v8958
        %9829 = vmatprep.subr.bf16.mxu0 %v8951
        %9830 = vmatpush1.bf16.msra.mxu0 %v8950
        %9831 = vmatprep.subr.bf16.mxu0 %v8943
        %9832 = vmatpush1.bf16.msra.mxu0 %v8942
        %9833 = vmatprep.subr.bf16.mxu0 %v8935
        %9834 = vmatpush1.bf16.msra.mxu0 %v8934
        %9835 = vmatprep.subr.bf16.mxu0 %v8927
        %9836 = vmatpush1.bf16.msra.mxu0 %v8926
        %9837 = vmatprep.subr.bf16.mxu0 %v8919
        %9838 = vmatpush1.bf16.msra.mxu0 %v8918
        %9839 = vmatprep.subr.bf16.mxu0 %v8911
        %9840 = vmatpush1.bf16.msra.mxu0 %v8910
        %9841 = vmatprep.subr.bf16.mxu0 %v8903
        %9842 = vmatpush1.bf16.msra.mxu0 %v8902
        %9843 = vmatprep.subr.bf16.mxu0 %v9023
        %9844 = vmatpush2.bf16.msra.mxu0 %v9022
        %9845 = vmatprep.subr.bf16.mxu0 %v9015
        %9846 = vmatpush2.bf16.msra.mxu0 %v9014
        %9847 = vmatprep.subr.bf16.mxu0 %v9007
        %9848 = vmatpush2.bf16.msra.mxu0 %v9006
        %9849 = vmatprep.subr.bf16.mxu0 %v8999
        %9850 = vmatpush2.bf16.msra.mxu0 %v8998
        %9851 = vmatprep.subr.bf16.mxu0 %v8991
        %9852 = vmatpush2.bf16.msra.mxu0 %v8990
        %9853 = vmatprep.subr.bf16.mxu0 %v8983
        %9854 = vmatpush2.bf16.msra.mxu0 %v8982
        %9855 = vmatprep.subr.bf16.mxu0 %v8975
        %9856 = vmatpush2.bf16.msra.mxu0 %v8974
        %9857 = vmatprep.subr.bf16.mxu0 %v8967
        %9858 = vmatpush2.bf16.msra.mxu0 %v8966
        %9859 = vmatprep.mubr.bf16.mxu0 %v6425
        %9860 = vmatmul.mubr.bf16.gmra.mxu0 %v6424
        %v9861 = vpop.f32.mrf.mxu0
        %v9862 = vadd.f32 %v9821, %v9861
        %v9863 = vpop.f32.mrf.mxu0
        %v9864 = vadd.f32 %v9823, %v9863
        %v9865 = vpop.f32.mrf.mxu0
        %v9866 = vpop.f32.mrf.mxu0
        %9867 = vdwg.mxu0
        %9868 = vmatprep.subr.bf16.mxu0 %v8577
        %9869 = vmatpush1.bf16.msra.mxu0 %v8576
        %9870 = vmatprep.subr.bf16.mxu0 %v8569
        %9871 = vmatpush1.bf16.msra.mxu0 %v8568
        %9872 = vmatprep.subr.bf16.mxu0 %v8561
        %9873 = vmatpush1.bf16.msra.mxu0 %v8560
        %9874 = vmatprep.subr.bf16.mxu0 %v8553
        %9875 = vmatpush1.bf16.msra.mxu0 %v8552
        %9876 = vmatprep.subr.bf16.mxu0 %v8545
        %9877 = vmatpush1.bf16.msra.mxu0 %v8544
        %9878 = vmatprep.subr.bf16.mxu0 %v8537
        %9879 = vmatpush1.bf16.msra.mxu0 %v8536
        %9880 = vmatprep.subr.bf16.mxu0 %v8529
        %9881 = vmatpush1.bf16.msra.mxu0 %v8528
        %9882 = vmatprep.subr.bf16.mxu0 %v8521
        %9883 = vmatpush1.bf16.msra.mxu0 %v8520
        %9884 = vmatprep.subr.bf16.mxu0 %v8641
        %9885 = vmatpush2.bf16.msra.mxu0 %v8640
        %9886 = vmatprep.subr.bf16.mxu0 %v8633
        %9887 = vmatpush2.bf16.msra.mxu0 %v8632
        %9888 = vmatprep.subr.bf16.mxu0 %v8625
        %9889 = vmatpush2.bf16.msra.mxu0 %v8624
        %9890 = vmatprep.subr.bf16.mxu0 %v8617
        %9891 = vmatpush2.bf16.msra.mxu0 %v8616
        %9892 = vmatprep.subr.bf16.mxu0 %v8609
        %9893 = vmatpush2.bf16.msra.mxu0 %v8608
        %9894 = vmatprep.subr.bf16.mxu0 %v8601
        %9895 = vmatpush2.bf16.msra.mxu0 %v8600
        %9896 = vmatprep.subr.bf16.mxu0 %v8593
        %9897 = vmatpush2.bf16.msra.mxu0 %v8592
        %9898 = vmatprep.subr.bf16.mxu0 %v8585
        %9899 = vmatpush2.bf16.msra.mxu0 %v8584
        %9900 = vmatprep.mubr.bf16.mxu0 %v6419
        %9901 = vmatmul.mubr.bf16.gmra.mxu0 %v6418
        %v9902 = vpop.f32.mrf.mxu0
        %v9903 = vadd.f32 %v6959, %v9902
        %v9904 = vpop.f32.mrf.mxu0
        %v9905 = vadd.f32 %v6963, %v9904
        %v9906 = vpop.f32.mrf.mxu0
        %v9907 = vpop.f32.mrf.mxu0
        %9908 = vdwg.mxu0
        %9909 = vmatprep.subr.bf16.mxu0 %v8705
        %9910 = vmatpush1.bf16.msra.mxu0 %v8704
        %9911 = vmatprep.subr.bf16.mxu0 %v8697
        %9912 = vmatpush1.bf16.msra.mxu0 %v8696
        %9913 = vmatprep.subr.bf16.mxu0 %v8689
        %9914 = vmatpush1.bf16.msra.mxu0 %v8688
        %9915 = vmatprep.subr.bf16.mxu0 %v8681
        %9916 = vmatpush1.bf16.msra.mxu0 %v8680
        %9917 = vmatprep.subr.bf16.mxu0 %v8673
        %9918 = vmatpush1.bf16.msra.mxu0 %v8672
        %9919 = vmatprep.subr.bf16.mxu0 %v8665
        %9920 = vmatpush1.bf16.msra.mxu0 %v8664
        %9921 = vmatprep.subr.bf16.mxu0 %v8657
        %9922 = vmatpush1.bf16.msra.mxu0 %v8656
        %9923 = vmatprep.subr.bf16.mxu0 %v8649
        %9924 = vmatpush1.bf16.msra.mxu0 %v8648
        %9925 = vmatprep.subr.bf16.mxu0 %v8769
        %9926 = vmatpush2.bf16.msra.mxu0 %v8768
        %9927 = vmatprep.subr.bf16.mxu0 %v8761
        %9928 = vmatpush2.bf16.msra.mxu0 %v8760
        %9929 = vmatprep.subr.bf16.mxu0 %v8753
        %9930 = vmatpush2.bf16.msra.mxu0 %v8752
        %9931 = vmatprep.subr.bf16.mxu0 %v8745
        %9932 = vmatpush2.bf16.msra.mxu0 %v8744
        %9933 = vmatprep.subr.bf16.mxu0 %v8737
        %9934 = vmatpush2.bf16.msra.mxu0 %v8736
        %9935 = vmatprep.subr.bf16.mxu0 %v8729
        %9936 = vmatpush2.bf16.msra.mxu0 %v8728
        %9937 = vmatprep.subr.bf16.mxu0 %v8721
        %9938 = vmatpush2.bf16.msra.mxu0 %v8720
        %9939 = vmatprep.subr.bf16.mxu0 %v8713
        %9940 = vmatpush2.bf16.msra.mxu0 %v8712
        %9941 = vmatprep.mubr.bf16.mxu0 %v6421
        %9942 = vmatmul.mubr.bf16.gmra.mxu0 %v6420
        %v9943 = vpop.f32.mrf.mxu0
        %v9944 = vadd.f32 %v9903, %v9943
        %v9945 = vpop.f32.mrf.mxu0
        %v9946 = vadd.f32 %v9905, %v9945
        %v9947 = vpop.f32.mrf.mxu0
        %v9948 = vpop.f32.mrf.mxu0
        %9949 = vdwg.mxu0
        %9950 = vmatprep.subr.bf16.mxu0 %v8833
        %9951 = vmatpush1.bf16.msra.mxu0 %v8832
        %9952 = vmatprep.subr.bf16.mxu0 %v8825
        %9953 = vmatpush1.bf16.msra.mxu0 %v8824
        %9954 = vmatprep.subr.bf16.mxu0 %v8817
        %9955 = vmatpush1.bf16.msra.mxu0 %v8816
        %9956 = vmatprep.subr.bf16.mxu0 %v8809
        %9957 = vmatpush1.bf16.msra.mxu0 %v8808
        %9958 = vmatprep.subr.bf16.mxu0 %v8801
        %9959 = vmatpush1.bf16.msra.mxu0 %v8800
        %9960 = vmatprep.subr.bf16.mxu0 %v8793
        %9961 = vmatpush1.bf16.msra.mxu0 %v8792
        %9962 = vmatprep.subr.bf16.mxu0 %v8785
        %9963 = vmatpush1.bf16.msra.mxu0 %v8784
        %9964 = vmatprep.subr.bf16.mxu0 %v8777
        %9965 = vmatpush1.bf16.msra.mxu0 %v8776
        %9966 = vmatprep.subr.bf16.mxu0 %v8897
        %9967 = vmatpush2.bf16.msra.mxu0 %v8896
        %9968 = vmatprep.subr.bf16.mxu0 %v8889
        %9969 = vmatpush2.bf16.msra.mxu0 %v8888
        %9970 = vmatprep.subr.bf16.mxu0 %v8881
        %9971 = vmatpush2.bf16.msra.mxu0 %v8880
        %9972 = vmatprep.subr.bf16.mxu0 %v8873
        %9973 = vmatpush2.bf16.msra.mxu0 %v8872
        %9974 = vmatprep.subr.bf16.mxu0 %v8865
        %9975 = vmatpush2.bf16.msra.mxu0 %v8864
        %9976 = vmatprep.subr.bf16.mxu0 %v8857
        %9977 = vmatpush2.bf16.msra.mxu0 %v8856
        %9978 = vmatprep.subr.bf16.mxu0 %v8849
        %9979 = vmatpush2.bf16.msra.mxu0 %v8848
        %9980 = vmatprep.subr.bf16.mxu0 %v8841
        %9981 = vmatpush2.bf16.msra.mxu0 %v8840
        %9982 = vmatprep.mubr.bf16.mxu0 %v6423
        %9983 = vmatmul.mubr.bf16.gmra.mxu0 %v6422
        %v9984 = vpop.f32.mrf.mxu0
        %v9985 = vadd.f32 %v9944, %v9984
        %v9986 = vpop.f32.mrf.mxu0
        %v9987 = vadd.f32 %v9946, %v9986
        %v9988 = vpop.f32.mrf.mxu0
        %v9989 = vpop.f32.mrf.mxu0
        %9990 = vdwg.mxu0
        %9991 = vmatprep.subr.bf16.mxu0 %v8961
        %9992 = vmatpush1.bf16.msra.mxu0 %v8960
        %9993 = vmatprep.subr.bf16.mxu0 %v8953
        %9994 = vmatpush1.bf16.msra.mxu0 %v8952
        %9995 = vmatprep.subr.bf16.mxu0 %v8945
        %9996 = vmatpush1.bf16.msra.mxu0 %v8944
        %9997 = vmatprep.subr.bf16.mxu0 %v8937
        %9998 = vmatpush1.bf16.msra.mxu0 %v8936
        %9999 = vmatprep.subr.bf16.mxu0 %v8929
        %10000 = vmatpush1.bf16.msra.mxu0 %v8928
        %10001 = vmatprep.subr.bf16.mxu0 %v8921
        %10002 = vmatpush1.bf16.msra.mxu0 %v8920
        %10003 = vmatprep.subr.bf16.mxu0 %v8913
        %10004 = vmatpush1.bf16.msra.mxu0 %v8912
        %10005 = vmatprep.subr.bf16.mxu0 %v8905
        %10006 = vmatpush1.bf16.msra.mxu0 %v8904
        %10007 = vmatprep.subr.bf16.mxu0 %v9025
        %10008 = vmatpush2.bf16.msra.mxu0 %v9024
        %10009 = vmatprep.subr.bf16.mxu0 %v9017
        %10010 = vmatpush2.bf16.msra.mxu0 %v9016
        %10011 = vmatprep.subr.bf16.mxu0 %v9009
        %10012 = vmatpush2.bf16.msra.mxu0 %v9008
        %10013 = vmatprep.subr.bf16.mxu0 %v9001
        %10014 = vmatpush2.bf16.msra.mxu0 %v9000
        %10015 = vmatprep.subr.bf16.mxu0 %v8993
        %10016 = vmatpush2.bf16.msra.mxu0 %v8992
        %10017 = vmatprep.subr.bf16.mxu0 %v8985
        %10018 = vmatpush2.bf16.msra.mxu0 %v8984
        %10019 = vmatprep.subr.bf16.mxu0 %v8977
        %10020 = vmatpush2.bf16.msra.mxu0 %v8976
        %10021 = vmatprep.subr.bf16.mxu0 %v8969
        %10022 = vmatpush2.bf16.msra.mxu0 %v8968
        %10023 = vmatprep.mubr.bf16.mxu0 %v6425
        %10024 = vmatmul.mubr.bf16.gmra.mxu0 %v6424
        %v10025 = vpop.f32.mrf.mxu0
        %v10026 = vadd.f32 %v9985, %v10025
        %v10027 = vpop.f32.mrf.mxu0
        %v10028 = vadd.f32 %v9987, %v10027
        %v10029 = vpop.f32.mrf.mxu0
        %v10030 = vpop.f32.mrf.mxu0
        %10031 = vdwg.mxu0
        %10032 = vmatprep.subr.bf16.mxu0 %v8579
        %10033 = vmatpush1.bf16.msra.mxu0 %v8578
        %10034 = vmatprep.subr.bf16.mxu0 %v8571
        %10035 = vmatpush1.bf16.msra.mxu0 %v8570
        %10036 = vmatprep.subr.bf16.mxu0 %v8563
        %10037 = vmatpush1.bf16.msra.mxu0 %v8562
        %10038 = vmatprep.subr.bf16.mxu0 %v8555
        %10039 = vmatpush1.bf16.msra.mxu0 %v8554
        %10040 = vmatprep.subr.bf16.mxu0 %v8547
        %10041 = vmatpush1.bf16.msra.mxu0 %v8546
        %10042 = vmatprep.subr.bf16.mxu0 %v8539
        %10043 = vmatpush1.bf16.msra.mxu0 %v8538
        %10044 = vmatprep.subr.bf16.mxu0 %v8531
        %10045 = vmatpush1.bf16.msra.mxu0 %v8530
        %10046 = vmatprep.subr.bf16.mxu0 %v8523
        %10047 = vmatpush1.bf16.msra.mxu0 %v8522
        %10048 = vmatprep.subr.bf16.mxu0 %v8643
        %10049 = vmatpush2.bf16.msra.mxu0 %v8642
        %10050 = vmatprep.subr.bf16.mxu0 %v8635
        %10051 = vmatpush2.bf16.msra.mxu0 %v8634
        %10052 = vmatprep.subr.bf16.mxu0 %v8627
        %10053 = vmatpush2.bf16.msra.mxu0 %v8626
        %10054 = vmatprep.subr.bf16.mxu0 %v8619
        %10055 = vmatpush2.bf16.msra.mxu0 %v8618
        %10056 = vmatprep.subr.bf16.mxu0 %v8611
        %10057 = vmatpush2.bf16.msra.mxu0 %v8610
        %10058 = vmatprep.subr.bf16.mxu0 %v8603
        %10059 = vmatpush2.bf16.msra.mxu0 %v8602
        %10060 = vmatprep.subr.bf16.mxu0 %v8595
        %10061 = vmatpush2.bf16.msra.mxu0 %v8594
        %10062 = vmatprep.subr.bf16.mxu0 %v8587
        %10063 = vmatpush2.bf16.msra.mxu0 %v8586
        %10064 = vmatprep.mubr.bf16.mxu0 %v6419
        %10065 = vmatmul.mubr.bf16.gmra.mxu0 %v6418
        %v10066 = vpop.f32.mrf.mxu0
        %v10067 = vadd.f32 %v6967, %v10066
        %v10068 = vpop.f32.mrf.mxu0
        %v10069 = vadd.f32 %v6971, %v10068
        %v10070 = vpop.f32.mrf.mxu0
        %v10071 = vpop.f32.mrf.mxu0
        %10072 = vdwg.mxu0
        %10073 = vmatprep.subr.bf16.mxu0 %v8707
        %10074 = vmatpush1.bf16.msra.mxu0 %v8706
        %10075 = vmatprep.subr.bf16.mxu0 %v8699
        %10076 = vmatpush1.bf16.msra.mxu0 %v8698
        %10077 = vmatprep.subr.bf16.mxu0 %v8691
        %10078 = vmatpush1.bf16.msra.mxu0 %v8690
        %10079 = vmatprep.subr.bf16.mxu0 %v8683
        %10080 = vmatpush1.bf16.msra.mxu0 %v8682
        %10081 = vmatprep.subr.bf16.mxu0 %v8675
        %10082 = vmatpush1.bf16.msra.mxu0 %v8674
        %10083 = vmatprep.subr.bf16.mxu0 %v8667
        %10084 = vmatpush1.bf16.msra.mxu0 %v8666
        %10085 = vmatprep.subr.bf16.mxu0 %v8659
        %10086 = vmatpush1.bf16.msra.mxu0 %v8658
        %10087 = vmatprep.subr.bf16.mxu0 %v8651
        %10088 = vmatpush1.bf16.msra.mxu0 %v8650
        %10089 = vmatprep.subr.bf16.mxu0 %v8771
        %10090 = vmatpush2.bf16.msra.mxu0 %v8770
        %10091 = vmatprep.subr.bf16.mxu0 %v8763
        %10092 = vmatpush2.bf16.msra.mxu0 %v8762
        %10093 = vmatprep.subr.bf16.mxu0 %v8755
        %10094 = vmatpush2.bf16.msra.mxu0 %v8754
        %10095 = vmatprep.subr.bf16.mxu0 %v8747
        %10096 = vmatpush2.bf16.msra.mxu0 %v8746
        %10097 = vmatprep.subr.bf16.mxu0 %v8739
        %10098 = vmatpush2.bf16.msra.mxu0 %v8738
        %10099 = vmatprep.subr.bf16.mxu0 %v8731
        %10100 = vmatpush2.bf16.msra.mxu0 %v8730
        %10101 = vmatprep.subr.bf16.mxu0 %v8723
        %10102 = vmatpush2.bf16.msra.mxu0 %v8722
        %10103 = vmatprep.subr.bf16.mxu0 %v8715
        %10104 = vmatpush2.bf16.msra.mxu0 %v8714
        %10105 = vmatprep.mubr.bf16.mxu0 %v6421
        %10106 = vmatmul.mubr.bf16.gmra.mxu0 %v6420
        %v10107 = vpop.f32.mrf.mxu0
        %v10108 = vadd.f32 %v10067, %v10107
        %v10109 = vpop.f32.mrf.mxu0
        %v10110 = vadd.f32 %v10069, %v10109
        %v10111 = vpop.f32.mrf.mxu0
        %v10112 = vpop.f32.mrf.mxu0
        %10113 = vdwg.mxu0
        %10114 = vmatprep.subr.bf16.mxu0 %v8835
        %10115 = vmatpush1.bf16.msra.mxu0 %v8834
        %10116 = vmatprep.subr.bf16.mxu0 %v8827
        %10117 = vmatpush1.bf16.msra.mxu0 %v8826
        %10118 = vmatprep.subr.bf16.mxu0 %v8819
        %10119 = vmatpush1.bf16.msra.mxu0 %v8818
        %10120 = vmatprep.subr.bf16.mxu0 %v8811
        %10121 = vmatpush1.bf16.msra.mxu0 %v8810
        %10122 = vmatprep.subr.bf16.mxu0 %v8803
        %10123 = vmatpush1.bf16.msra.mxu0 %v8802
        %10124 = vmatprep.subr.bf16.mxu0 %v8795
        %10125 = vmatpush1.bf16.msra.mxu0 %v8794
        %10126 = vmatprep.subr.bf16.mxu0 %v8787
        %10127 = vmatpush1.bf16.msra.mxu0 %v8786
        %10128 = vmatprep.subr.bf16.mxu0 %v8779
        %10129 = vmatpush1.bf16.msra.mxu0 %v8778
        %10130 = vmatprep.subr.bf16.mxu0 %v8899
        %10131 = vmatpush2.bf16.msra.mxu0 %v8898
        %10132 = vmatprep.subr.bf16.mxu0 %v8891
        %10133 = vmatpush2.bf16.msra.mxu0 %v8890
        %10134 = vmatprep.subr.bf16.mxu0 %v8883
        %10135 = vmatpush2.bf16.msra.mxu0 %v8882
        %10136 = vmatprep.subr.bf16.mxu0 %v8875
        %10137 = vmatpush2.bf16.msra.mxu0 %v8874
        %10138 = vmatprep.subr.bf16.mxu0 %v8867
        %10139 = vmatpush2.bf16.msra.mxu0 %v8866
        %10140 = vmatprep.subr.bf16.mxu0 %v8859
        %10141 = vmatpush2.bf16.msra.mxu0 %v8858
        %10142 = vmatprep.subr.bf16.mxu0 %v8851
        %10143 = vmatpush2.bf16.msra.mxu0 %v8850
        %10144 = vmatprep.subr.bf16.mxu0 %v8843
        %10145 = vmatpush2.bf16.msra.mxu0 %v8842
        %10146 = vmatprep.mubr.bf16.mxu0 %v6423
        %10147 = vmatmul.mubr.bf16.gmra.mxu0 %v6422
        %v10148 = vpop.f32.mrf.mxu0
        %v10149 = vadd.f32 %v10108, %v10148
        %v10150 = vpop.f32.mrf.mxu0
        %v10151 = vadd.f32 %v10110, %v10150
        %v10152 = vpop.f32.mrf.mxu0
        %v10153 = vpop.f32.mrf.mxu0
        %10154 = vdwg.mxu0
        %10155 = vmatprep.subr.bf16.mxu0 %v8963
        %10156 = vmatpush1.bf16.msra.mxu0 %v8962
        %10157 = vmatprep.subr.bf16.mxu0 %v8955
        %10158 = vmatpush1.bf16.msra.mxu0 %v8954
        %10159 = vmatprep.subr.bf16.mxu0 %v8947
        %10160 = vmatpush1.bf16.msra.mxu0 %v8946
        %10161 = vmatprep.subr.bf16.mxu0 %v8939
        %10162 = vmatpush1.bf16.msra.mxu0 %v8938
        %10163 = vmatprep.subr.bf16.mxu0 %v8931
        %10164 = vmatpush1.bf16.msra.mxu0 %v8930
        %10165 = vmatprep.subr.bf16.mxu0 %v8923
        %10166 = vmatpush1.bf16.msra.mxu0 %v8922
        %10167 = vmatprep.subr.bf16.mxu0 %v8915
        %10168 = vmatpush1.bf16.msra.mxu0 %v8914
        %10169 = vmatprep.subr.bf16.mxu0 %v8907
        %10170 = vmatpush1.bf16.msra.mxu0 %v8906
        %10171 = vmatprep.subr.bf16.mxu0 %v9027
        %10172 = vmatpush2.bf16.msra.mxu0 %v9026
        %10173 = vmatprep.subr.bf16.mxu0 %v9019
        %10174 = vmatpush2.bf16.msra.mxu0 %v9018
        %10175 = vmatprep.subr.bf16.mxu0 %v9011
        %10176 = vmatpush2.bf16.msra.mxu0 %v9010
        %10177 = vmatprep.subr.bf16.mxu0 %v9003
        %10178 = vmatpush2.bf16.msra.mxu0 %v9002
        %10179 = vmatprep.subr.bf16.mxu0 %v8995
        %10180 = vmatpush2.bf16.msra.mxu0 %v8994
        %10181 = vmatprep.subr.bf16.mxu0 %v8987
        %10182 = vmatpush2.bf16.msra.mxu0 %v8986
        %10183 = vmatprep.subr.bf16.mxu0 %v8979
        %10184 = vmatpush2.bf16.msra.mxu0 %v8978
        %10185 = vmatprep.subr.bf16.mxu0 %v8971
        %10186 = vmatpush2.bf16.msra.mxu0 %v8970
        %10187 = vmatprep.mubr.bf16.mxu0 %v6425
        %10188 = vmatmul.mubr.bf16.gmra.mxu0 %v6424
        %v10189 = vpop.f32.mrf.mxu0
        %v10190 = vadd.f32 %v10149, %v10189
        %v10191 = vpop.f32.mrf.mxu0
        %v10192 = vadd.f32 %v10151, %v10191
        %v10193 = vpop.f32.mrf.mxu0
        %v10194 = vpop.f32.mrf.mxu0
        %10195 = vdwg.mxu0
        %10196 = vst [vmem:[%s671] sm:$0xff] %v9698
        %10197 = vst [vmem:[%s671 + $0x8] sm:$0xff] %v9700
        %10198 = vst [vmem:[%s671 + $0x10] sm:$0xff] %v9862
        %10199 = vst [vmem:[%s671 + $0x18] sm:$0xff] %v9864
        %10200 = vst [vmem:[%s671 + $0x20] sm:$0xff] %v10026
        %10201 = vst [vmem:[%s671 + $0x28] sm:$0xff] %v10028
        %10202 = vst [vmem:[%s671 + $0x30] sm:$0xff] %v10190
        %10203 = vst [vmem:[%s671 + $0x38] sm:$0xff] %v10192
        %p10204 = scmp.lt.s32.totalorder %s39, 1
        %s10205 = scalar_select %p10204, %s39, 1
        %p10206 = scmp.lt.s32.totalorder %s40, 0
        %s10207 = scalar_select %p10206, %s40, 0
        %s10208 = smul.addr %s10207, 8
        %s10209 = smul.addr %s10205, 8
        %s10210 = sadd.s32 %s10208, %s10209
        %s10211 = smul.addr %s10210, 8
        %s10212 = scalar_lea.vmem %s9, %s10211
        // Predicated region
        $region89: #{netfc2_forward.1} parent=55 // pred_check
          %p10213 = pneg %p303
        $region90: #{netfc2_forward.1} parent=55 // pred_check_branch
          %10215 = sbr.rel (%p10213) target = $region92
        $region91: #{netfc2_forward.1} parent=55 // pred_region
          _
        $region92: #{netfc2_forward.1} parent=55 // pred_fallthru
          _
      $region56: #{netfc2_forward.1} parent=5 // pred_fallthru
        _
      %p10216 = scmp.le.s32.totalorder 2, %s30
      // Predicated region
      $region93: #{netfc2_forward.1} parent=5 // pred_check
        %p10217 = pneg %p10216
      $region94: #{netfc2_forward.1} parent=5 // pred_check_branch
        %10219 = sbr.rel (%p10217) target = $region96
      $region95: #{netfc2_forward.1} parent=5 // pred_region
        %s10220 = ssub.s32 %s30, 2
        // Predicated region
        $region97: #{netfc2_forward.1} parent=95 // pred_check
          %p10221 = pneg %p309
        $region98: #{netfc2_forward.1} parent=95 // pred_check_branch
          %10223 = sbr.rel (%p10221) target = $region100
        $region99: #{netfc2_forward.1} parent=95 // pred_region
          %p10224 = scmp.lt.s32.totalorder %s41, 1
          %s10225 = scalar_select %p10224, %s41, 1
          %p10226 = scmp.lt.s32.totalorder %s42, 0
          %s10227 = scalar_select %p10226, %s42, 0
          %s10228 = smul.addr %s10227, 8
          %s10229 = smul.addr %s10225, 8
          %s10230 = sadd.s32 %s10228, %s10229
          %s10231 = smul.addr %s10230, 8
          %s10232 = scalar_lea.vmem %s9, %s10231
        $region100: #{netfc2_forward.1} parent=95 // pred_fallthru
          _
      $region96: #{netfc2_forward.1} parent=5 // pred_fallthru
        _
    $region6: #{netfc2_forward.1} parent=1 // loop_footer
      %s34 = sadd.s32 1, %s30
    $region7: #{netfc2_forward.1} parent=1 // loop_footer_branch
      %29 = sbr.rel target = $region3
    $region8: #{netfc2_forward.1} parent=1 // loop_exit
      _
    %10233 = vsyncpa [#allocation3], 1
    %s10234 = scalar_lea.sflag [#allocation3], 1
    %10235 = vsyncpa %s10234, 1
    %10236 = vsyncpa [#allocation5], 1
    %s10237 = scalar_lea.sflag [#allocation5], 1
    %10238 = vsyncpa %s10237, 1
    %10239 = vsyncpa [#allocation8], 1
    %s10240 = scalar_lea.sflag [#allocation8], 1
    %10241 = vsyncpa %s10240, 1
    %10242 = vsyncpa [#allocation11], 1
    %s10243 = scalar_lea.sflag [#allocation11], 1
    %10244 = vsyncpa %s10243, 1
    %10245 = vsyncpa [#allocation14], 1
    %s10246 = scalar_lea.sflag [#allocation14], 1
    %10247 = vsyncpa %s10246, 1

</llo_original>
